<compile_context>
chip_gen: v6e
topology: v6e:2x2x1
jax: 0.10.0
libtpu: 0.0.40
codegen_flags: <defaults>
</compile_context>

<pallas_src>
import functools

import jax
import jax.numpy as jnp
from jax import lax
from jax.experimental import pallas as pl
from jax.experimental.pallas import tpu as pltpu


def upconv_kernel(x_hbm, w_ref, b_ref, o_ref, xbuf, sem, *, Wp2, TP, slab):
    # x_hbm : (N, R, Cp) flat zero-padded low-res rows in HBM (memory_space=ANY).
    # w_ref : (4, 4*Cp, Cp) per-phase fused 2x2 taps, K-order (da, db) = 00,01,10,11.
    # b_ref : (1, Cp) f32 bias (zero in padded lanes).
    # o_ref : (1, 2, 2, 1, M, Cp) per-phase flattened output rows, M = TP * Wp2;
    #         the last 2 columns of every row are junk, cropped by the wrapper.
    # xbuf  : (slab, Cp) VMEM scratch, slab = (TP + 2) * Wp2 + 2 (halo + col slack).
    n = pl.program_id(0)
    rt = pl.program_id(1)
    cp = pltpu.make_async_copy(
        x_hbm.at[n, pl.ds(rt * (TP * Wp2), slab), :], xbuf, sem)
    cp.start()
    cp.wait()

    M = TP * Wp2
    bias = b_ref[...].astype(jnp.float32)                       # (1, Cp)
    for a in range(2):                                          # output row phase
        for b in range(2):                                      # output col phase
            offs = [(a + da) * Wp2 + (b + db)
                    for da in (0, 1) for db in (0, 1)]          # static flat offsets
            win = jnp.concatenate([xbuf[o:o + M, :] for o in offs], axis=-1)  # (M, 4*Cp)
            acc = jnp.dot(win, w_ref[a * 2 + b],
                          preferred_element_type=jnp.float32)   # (M, Cp) f32 on MXU
            o_ref[0, a, b, 0] = (acc + bias).astype(o_ref.dtype)


def _round_up(v, m):
    return (v + m - 1) // m * m


def _effective_taps(w_oihw):
    """PyTorch (O, I, 3, 3) conv weight -> (16, I, O) effective 2x2 sub-pixel
    taps, ordered t = (a*2 + b)*4 + (da*2 + db)."""
    w = jnp.transpose(w_oihw, (2, 3, 1, 0)).astype(jnp.float32)   # (kh, kw, in, out)
    groups = ((0,), (1, 2)), ((0, 1), (2,))                       # [phase][delta] -> k's
    taps = []
    for a in range(2):
        for b in range(2):
            for da in range(2):
                for db in range(2):
                    taps.append(sum(w[kh, kw]
                                    for kh in groups[a][da]
                                    for kw in groups[b][db]))
    return jnp.stack(taps, axis=0)                                # (16, I, O)


def _vmem_plan(N, H, W, Cp, c_it, o_it, rows_per_tile):
    """Row-tile size + scoped-VMEM limit, accounting for the resident weights."""
    Wp2 = W + 2
    try:
        cap = pltpu.get_tpu_info().vmem_capacity_bytes            # 64 MiB v7x, 128 MiB v5e/v6e
    except Exception:
        cap = 64 << 20
    limit = int(min(cap * 3 // 4, 96 << 20))
    weight_bytes = 16 * Cp * Cp * c_it + Cp * 4                   # fused taps + f32 bias
    # Per low-res row: 1x input slab (sync DMA, single buffer), 2x pipelined
    # 4-phase output rows, plus in-kernel temporaries (lane-concat window and
    # the f32 matmul result before the cast).
    per_row = Wp2 * Cp * (9 * c_it + 8 * o_it + 8)
    budget = max(limit - 2 * weight_bytes - (8 << 20), 2 << 20)
    TP = int(max(1, min(H, budget // per_row)))
    if rows_per_tile is not None:
        TP = int(max(1, min(rows_per_tile, H)))
    elif N < 2 and H >= 2:
        # At least two "parallel" row tiles so both v7x TensorCores get work.
        TP = min(TP, -(-H // 2))
    n_tiles = -(-H // TP)
    return Wp2, TP, n_tiles, limit


def upsample_forward(x_nchw, w_oihw, bias, *, rows_per_tile=None, compute_dtype=None):
    """F.interpolate(x, scale_factor=2, mode='nearest') followed by Conv2d(C, C, 3, padding=1)."""
    N, C, H, W = x_nchw.shape
    out_dtype = x_nchw.dtype
    cdt = jnp.dtype(compute_dtype) if compute_dtype is not None else jnp.dtype(out_dtype)
    c_it = cdt.itemsize
    o_it = jnp.dtype(out_dtype).itemsize
    Cp = _round_up(C, 128)

    Wp2, TP, n_tiles, vmem_limit = _vmem_plan(N, H, W, Cp, c_it, o_it, rows_per_tile)
    Hpad = n_tiles * TP
    M = TP * Wp2
    slab = (TP + 2) * Wp2 + 2          # flat rows DMA'd per grid step (2-row halo + 2 slack)

    # ---- glue (one fused transpose+pad pass): NCHW -> flat, zero-padded rows ----
    x = x_nchw.astype(cdt)
    x = jnp.transpose(x, (0, 2, 3, 1))                                  # (N, H, W, C)
    x = jnp.pad(x, ((0, 0), (1, Hpad + 2 - H), (1, 1), (0, Cp - C)))    # (N, Hpad+3, Wp2, Cp)
    x_flat = x.reshape(N, (Hpad + 3) * Wp2, Cp)                         # free reshape

    # ---- effective weights: (4 phases, K = 4*Cp, Cp) in compute dtype ----
    w_eff = _effective_taps(w_oihw)                                     # (16, C, C)
    w_eff = jnp.pad(w_eff, ((0, 0), (0, Cp - C), (0, Cp - C)))
    w_eff = w_eff.reshape(4, 4 * Cp, Cp).astype(cdt)
    b2 = jnp.pad(bias.reshape(1, C), ((0, 0), (0, Cp - C))).astype(jnp.float32)

    kernel = functools.partial(upconv_kernel, Wp2=Wp2, TP=TP, slab=slab)
    flops = 2 * N * n_tiles * 4 * M * (4 * Cp) * Cp
    bytes_accessed = (N * n_tiles * slab * Cp * c_it        # input slabs (incl. halo re-read)
                      + 16 * Cp * Cp * c_it + Cp * 4        # weights + bias
                      + N * n_tiles * 4 * M * Cp * o_it)    # phase outputs

    def run(single_buffered_weights):
        wmode = ({"pipeline_mode": pl.Buffered(1)} if single_buffered_weights else {})
        out = pl.pallas_call(
            kernel,
            out_shape=jax.ShapeDtypeStruct((N, 2, 2, n_tiles, M, Cp), out_dtype),
            grid_spec=pltpu.PrefetchScalarGridSpec(
                num_scalar_prefetch=0,
                grid=(N, n_tiles),
                in_specs=[
                    pl.BlockSpec(memory_space=pl.ANY),                            # flat input, manual DMA
                    pl.BlockSpec((4, 4 * Cp, Cp), lambda n, rt: (0, 0, 0), **wmode),
                    pl.BlockSpec((1, Cp), lambda n, rt: (0, 0), **wmode),
                ],
                out_specs=pl.BlockSpec((1, 2, 2, 1, M, Cp),
                                       lambda n, rt: (n, 0, 0, rt, 0, 0)),
                scratch_shapes=[pltpu.VMEM((slab, Cp), cdt),
                                pltpu.SemaphoreType.DMA(())],
            ),
            compiler_params=pltpu.CompilerParams(
                dimension_semantics=("parallel", "parallel"),
                vmem_limit_bytes=vmem_limit),
            cost_estimate=pl.CostEstimate(flops=flops, transcendentals=0,
                                          bytes_accessed=bytes_accessed),
        )(x_flat, w_eff, b2)
        return jax.block_until_ready(out)

    try:
        out = run(single_buffered_weights=True)
    except Exception:
        # pipeline_mode=pl.Buffered(1) unsupported on this JAX build: fall back
        # to default (double-buffered) weight BlockSpecs. Any unrelated failure
        # will re-raise from this second call.
        out = run(single_buffered_weights=False)

    # ---- glue: interleave the 4 phases, crop junk cols/rows/lanes, back to NCHW ----
    out = out.reshape(N, 2, 2, n_tiles, TP, Wp2, Cp)[:, :, :, :, :, :W, :C]
    out = jnp.transpose(out, (0, 6, 3, 4, 1, 5, 2))     # (n, c, rt, p, a, q, b)
    out = out.reshape(N, C, 2 * Hpad, 2 * W)
    return out[:, :, :2 * H, :]


def reference_forward(x_nchw, w_oihw, bias):
    """Pure-JAX reference (correctness check)."""
    x = jnp.transpose(x_nchw, (0, 2, 3, 1))
    xu = jnp.repeat(jnp.repeat(x, 2, axis=1), 2, axis=2)
    w_hwio = jnp.transpose(w_oihw, (2, 3, 1, 0))
    y = lax.conv_general_dilated(
        xu, w_hwio, window_strides=(1, 1), padding=((1, 1), (1, 1)),
        dimension_numbers=("NHWC", "HWIO", "NHWC"))
    y = y + bias.reshape(1, 1, 1, -1)
    return jnp.transpose(y, (0, 3, 1, 2))


if __name__ == "__main__":
    N, C, H, W = 2, 4, 16, 16
    key = jax.random.PRNGKey(0)
    kx, kw, kb = jax.random.split(key, 3)

    x = jax.random.normal(kx, (N, C, H, W), dtype=jnp.float32)
    # Deterministic "Conv2d(C, C, 3, padding=1)" parameters.
    conv_w = jax.random.normal(kw, (C, C, 3, 3), dtype=jnp.float32) * 0.1
    conv_b = jax.random.normal(kb, (C,), dtype=jnp.float32) * 0.1

    ref = reference_forward(x, conv_w, conv_b)

    # f32 compute path, auto-sized row tile.
    out = jax.block_until_ready(upsample_forward(x, conv_w, conv_b))
    assert out.shape == (N, C, 2 * H, 2 * W), out.shape
    assert jnp.allclose(out, ref, atol=2e-4, rtol=2e-4), float(
        jnp.max(jnp.abs(out - ref)))

    # Forced multi-tile run (ragged last tile) exercising the row-tiled DMA path.
    out2 = jax.block_until_ready(
        upsample_forward(x, conv_w, conv_b, rows_per_tile=5))
    assert jnp.allclose(out2, ref, atol=2e-4, rtol=2e-4), float(
        jnp.max(jnp.abs(out2 - ref)))

    # bf16 MXU path (inputs/weights bf16, f32 accumulation) -- looser tolerance.
    out3 = jax.block_until_ready(
        upsample_forward(x, conv_w, conv_b, compute_dtype=jnp.bfloat16))
    assert jnp.allclose(out3, ref, atol=5e-2, rtol=5e-2), float(
        jnp.max(jnp.abs(out3 - ref)))

    print("KERNEL_OK")
</pallas_src>

<mosaic_0001>
module attributes {stable_mosaic.version = 11 : i64} {
  func.func @upconv_kernel(%arg0: i32, %arg1: i32, %arg2: memref<2x342x128xf32, #tpu.memory_space<any>>, %arg3: memref<4x512x128xf32, #tpu.memory_space<vmem>>, %arg4: memref<1x128xf32, #tpu.memory_space<vmem>>, %arg5: memref<1x2x2x1x288x128xf32, #tpu.memory_space<vmem>>, %arg6: memref<326x128xf32, #tpu.memory_space<vmem>>, %arg7: memref<!tpu.dma_semaphore, #tpu.memory_space<semaphore_mem>>) attributes {dimension_semantics = [#tpu.dimension_semantics<parallel>, #tpu.dimension_semantics<parallel>], iteration_bounds = array<i64: 2, 1>, scalar_prefetch = 0 : i64, scratch_operands = 2 : i64, tpu.core_type = #tpu.core_type<tc>, window_params = [{}, {pipeline_mode = #tpu.pipeline_mode<synchronous>, transform_indices = @transform_1, window_bounds = array<i64: 4, 512, 128>}, {pipeline_mode = #tpu.pipeline_mode<synchronous>, transform_indices = @transform_2, window_bounds = array<i64: 1, 128>}, {transform_indices = @transform_3, window_bounds = array<i64: 1, 2, 2, 1, 288, 128>}]} {
    %c288_i32 = arith.constant 288 : i32
    %0 = arith.muli %arg1, %c288_i32 : i32
    %c0_i32 = arith.constant 0 : i32
    %1 = tpu.memref_slice %arg2[%arg0, %0, %c0_i32] : memref<2x342x128xf32, #tpu.memory_space<any>> -> memref<1x326x128xf32, #tpu.memory_space<any>>
    %2 = tpu.memref_squeeze %1 : memref<1x326x128xf32, #tpu.memory_space<any>> -> memref<326x128xf32, #tpu.memory_space<any>>
    tpu.enqueue_dma source(%2 : memref<326x128xf32, #tpu.memory_space<any>>) target(%arg6 : memref<326x128xf32, #tpu.memory_space<vmem>>) target_semaphore(%arg7 : memref<!tpu.dma_semaphore, #tpu.memory_space<semaphore_mem>>)
    %c0_i32_0 = arith.constant 0 : i32
    %3 = tpu.memref_slice %arg2[%arg0, %0, %c0_i32_0] : memref<2x342x128xf32, #tpu.memory_space<any>> -> memref<1x326x128xf32, #tpu.memory_space<any>>
    %4 = tpu.memref_squeeze %3 : memref<1x326x128xf32, #tpu.memory_space<any>> -> memref<326x128xf32, #tpu.memory_space<any>>
    tpu.wait_dma2 semaphore(%arg7 : memref<!tpu.dma_semaphore, #tpu.memory_space<semaphore_mem>>) src(%4 : memref<326x128xf32, #tpu.memory_space<any>>) dst(%arg6 : memref<326x128xf32, #tpu.memory_space<vmem>>)
    %c0 = arith.constant 0 : index
    %c0_1 = arith.constant 0 : index
    %5 = vector.load %arg4[%c0, %c0_1] : memref<1x128xf32, #tpu.memory_space<vmem>>, vector<1x128xf32>
    %c0_2 = arith.constant 0 : index
    %c0_3 = arith.constant 0 : index
    %6 = vector.load %arg6[%c0_2, %c0_3] : memref<326x128xf32, #tpu.memory_space<vmem>>, vector<288x128xf32>
    %c1 = arith.constant 1 : index
    %c0_4 = arith.constant 0 : index
    %7 = vector.load %arg6[%c1, %c0_4] : memref<326x128xf32, #tpu.memory_space<vmem>>, vector<288x128xf32>
    %c18 = arith.constant 18 : index
    %c0_5 = arith.constant 0 : index
    %8 = vector.load %arg6[%c18, %c0_5] : memref<326x128xf32, #tpu.memory_space<vmem>>, vector<288x128xf32>
    %c19 = arith.constant 19 : index
    %c0_6 = arith.constant 0 : index
    %9 = vector.load %arg6[%c19, %c0_6] : memref<326x128xf32, #tpu.memory_space<vmem>>, vector<288x128xf32>
    %10 = tpu.concatenate %6, %7, %8, %9 in 1 : vector<288x128xf32>, vector<288x128xf32>, vector<288x128xf32>, vector<288x128xf32> -> vector<288x512xf32>
    %c0_7 = arith.constant 0 : index
    %c0_8 = arith.constant 0 : index
    %c0_9 = arith.constant 0 : index
    %11 = vector.load %arg3[%c0_7, %c0_8, %c0_9] : memref<4x512x128xf32, #tpu.memory_space<vmem>>, vector<1x512x128xf32>
    %12 = vector.shape_cast %11 : vector<1x512x128xf32> to vector<512x128xf32>
    %cst = arith.constant dense<0.000000e+00> : vector<288x128xf32>
    %13 = tpu.matmul %10, %12, %cst {dimension_numbers = #tpu.dot_dimension_numbers<[1], [0], [0], [1], [0, 0, 1, 1], [], []>} : vector<288x512xf32>, vector<512x128xf32>, vector<288x128xf32> -> vector<288x128xf32>
    %14 = vector.broadcast %5 : vector<1x128xf32> to vector<288x128xf32>
    %15 = arith.addf %13, %14 : vector<288x128xf32>
    %c0_10 = arith.constant 0 : index
    %c0_11 = arith.constant 0 : index
    %c0_12 = arith.constant 0 : index
    %c0_13 = arith.constant 0 : index
    %c0_14 = arith.constant 0 : index
    %c0_15 = arith.constant 0 : index
    %16 = vector.load %arg5[%c0_10, %c0_11, %c0_12, %c0_13, %c0_14, %c0_15] : memref<1x2x2x1x288x128xf32, #tpu.memory_space<vmem>>, vector<1x1x1x1x288x128xf32>
    %17 = vector.shape_cast %16 : vector<1x1x1x1x288x128xf32> to vector<288x128xf32>
    %18 = vector.shape_cast %15 : vector<288x128xf32> to vector<1x1x1x1x288x128xf32>
    tpu.vector_store %arg5[%c0_10, %c0_11, %c0_12, %c0_13, %c0_14, %c0_15], %18 {strides = array<i32>} : memref<1x2x2x1x288x128xf32, #tpu.memory_space<vmem>>, vector<1x1x1x1x288x128xf32>,
    %c1_16 = arith.constant 1 : index
    %c0_17 = arith.constant 0 : index
    %19 = vector.load %arg6[%c1_16, %c0_17] : memref<326x128xf32, #tpu.memory_space<vmem>>, vector<288x128xf32>
    %c2 = arith.constant 2 : index
    %c0_18 = arith.constant 0 : index
    %20 = vector.load %arg6[%c2, %c0_18] : memref<326x128xf32, #tpu.memory_space<vmem>>, vector<288x128xf32>
    %c19_19 = arith.constant 19 : index
    %c0_20 = arith.constant 0 : index
    %21 = vector.load %arg6[%c19_19, %c0_20] : memref<326x128xf32, #tpu.memory_space<vmem>>, vector<288x128xf32>
    %c20 = arith.constant 20 : index
    %c0_21 = arith.constant 0 : index
    %22 = vector.load %arg6[%c20, %c0_21] : memref<326x128xf32, #tpu.memory_space<vmem>>, vector<288x128xf32>
    %23 = tpu.concatenate %19, %20, %21, %22 in 1 : vector<288x128xf32>, vector<288x128xf32>, vector<288x128xf32>, vector<288x128xf32> -> vector<288x512xf32>
    %c1_22 = arith.constant 1 : index
    %c0_23 = arith.constant 0 : index
    %c0_24 = arith.constant 0 : index
    %24 = vector.load %arg3[%c1_22, %c0_23, %c0_24] : memref<4x512x128xf32, #tpu.memory_space<vmem>>, vector<1x512x128xf32>
    %25 = vector.shape_cast %24 : vector<1x512x128xf32> to vector<512x128xf32>
    %cst_25 = arith.constant dense<0.000000e+00> : vector<288x128xf32>
    %26 = tpu.matmul %23, %25, %cst_25 {dimension_numbers = #tpu.dot_dimension_numbers<[1], [0], [0], [1], [0, 0, 1, 1], [], []>} : vector<288x512xf32>, vector<512x128xf32>, vector<288x128xf32> -> vector<288x128xf32>
    %27 = vector.broadcast %5 : vector<1x128xf32> to vector<288x128xf32>
    %28 = arith.addf %26, %27 : vector<288x128xf32>
    %c0_26 = arith.constant 0 : index
    %c0_27 = arith.constant 0 : index
    %c1_28 = arith.constant 1 : index
    %c0_29 = arith.constant 0 : index
    %c0_30 = arith.constant 0 : index
    %c0_31 = arith.constant 0 : index
    %29 = vector.load %arg5[%c0_26, %c0_27, %c1_28, %c0_29, %c0_30, %c0_31] : memref<1x2x2x1x288x128xf32, #tpu.memory_space<vmem>>, vector<1x1x1x1x288x128xf32>
    %30 = vector.shape_cast %29 : vector<1x1x1x1x288x128xf32> to vector<288x128xf32>
    %31 = vector.shape_cast %28 : vector<288x128xf32> to vector<1x1x1x1x288x128xf32>
    tpu.vector_store %arg5[%c0_26, %c0_27, %c1_28, %c0_29, %c0_30, %c0_31], %31 {strides = array<i32>} : memref<1x2x2x1x288x128xf32, #tpu.memory_space<vmem>>, vector<1x1x1x1x288x128xf32>,
    %c18_32 = arith.constant 18 : index
    %c0_33 = arith.constant 0 : index
    %32 = vector.load %arg6[%c18_32, %c0_33] : memref<326x128xf32, #tpu.memory_space<vmem>>, vector<288x128xf32>
    %c19_34 = arith.constant 19 : index
    %c0_35 = arith.constant 0 : index
    %33 = vector.load %arg6[%c19_34, %c0_35] : memref<326x128xf32, #tpu.memory_space<vmem>>, vector<288x128xf32>
    %c36 = arith.constant 36 : index
    %c0_36 = arith.constant 0 : index
    %34 = vector.load %arg6[%c36, %c0_36] : memref<326x128xf32, #tpu.memory_space<vmem>>, vector<288x128xf32>
    %c37 = arith.constant 37 : index
    %c0_37 = arith.constant 0 : index
    %35 = vector.load %arg6[%c37, %c0_37] : memref<326x128xf32, #tpu.memory_space<vmem>>, vector<288x128xf32>
    %36 = tpu.concatenate %32, %33, %34, %35 in 1 : vector<288x128xf32>, vector<288x128xf32>, vector<288x128xf32>, vector<288x128xf32> -> vector<288x512xf32>
    %c2_38 = arith.constant 2 : index
    %c0_39 = arith.constant 0 : index
    %c0_40 = arith.constant 0 : index
    %37 = vector.load %arg3[%c2_38, %c0_39, %c0_40] : memref<4x512x128xf32, #tpu.memory_space<vmem>>, vector<1x512x128xf32>
    %38 = vector.shape_cast %37 : vector<1x512x128xf32> to vector<512x128xf32>
    %cst_41 = arith.constant dense<0.000000e+00> : vector<288x128xf32>
    %39 = tpu.matmul %36, %38, %cst_41 {dimension_numbers = #tpu.dot_dimension_numbers<[1], [0], [0], [1], [0, 0, 1, 1], [], []>} : vector<288x512xf32>, vector<512x128xf32>, vector<288x128xf32> -> vector<288x128xf32>
    %40 = vector.broadcast %5 : vector<1x128xf32> to vector<288x128xf32>
    %41 = arith.addf %39, %40 : vector<288x128xf32>
    %c0_42 = arith.constant 0 : index
    %c1_43 = arith.constant 1 : index
    %c0_44 = arith.constant 0 : index
    %c0_45 = arith.constant 0 : index
    %c0_46 = arith.constant 0 : index
    %c0_47 = arith.constant 0 : index
    %42 = vector.load %arg5[%c0_42, %c1_43, %c0_44, %c0_45, %c0_46, %c0_47] : memref<1x2x2x1x288x128xf32, #tpu.memory_space<vmem>>, vector<1x1x1x1x288x128xf32>
    %43 = vector.shape_cast %42 : vector<1x1x1x1x288x128xf32> to vector<288x128xf32>
    %44 = vector.shape_cast %41 : vector<288x128xf32> to vector<1x1x1x1x288x128xf32>
    tpu.vector_store %arg5[%c0_42, %c1_43, %c0_44, %c0_45, %c0_46, %c0_47], %44 {strides = array<i32>} : memref<1x2x2x1x288x128xf32, #tpu.memory_space<vmem>>, vector<1x1x1x1x288x128xf32>,
    %c19_48 = arith.constant 19 : index
    %c0_49 = arith.constant 0 : index
    %45 = vector.load %arg6[%c19_48, %c0_49] : memref<326x128xf32, #tpu.memory_space<vmem>>, vector<288x128xf32>
    %c20_50 = arith.constant 20 : index
    %c0_51 = arith.constant 0 : index
    %46 = vector.load %arg6[%c20_50, %c0_51] : memref<326x128xf32, #tpu.memory_space<vmem>>, vector<288x128xf32>
    %c37_52 = arith.constant 37 : index
    %c0_53 = arith.constant 0 : index
    %47 = vector.load %arg6[%c37_52, %c0_53] : memref<326x128xf32, #tpu.memory_space<vmem>>, vector<288x128xf32>
    %c38 = arith.constant 38 : index
    %c0_54 = arith.constant 0 : index
    %48 = vector.load %arg6[%c38, %c0_54] : memref<326x128xf32, #tpu.memory_space<vmem>>, vector<288x128xf32>
    %49 = tpu.concatenate %45, %46, %47, %48 in 1 : vector<288x128xf32>, vector<288x128xf32>, vector<288x128xf32>, vector<288x128xf32> -> vector<288x512xf32>
    %c3 = arith.constant 3 : index
    %c0_55 = arith.constant 0 : index
    %c0_56 = arith.constant 0 : index
    %50 = vector.load %arg3[%c3, %c0_55, %c0_56] : memref<4x512x128xf32, #tpu.memory_space<vmem>>, vector<1x512x128xf32>
    %51 = vector.shape_cast %50 : vector<1x512x128xf32> to vector<512x128xf32>
    %cst_57 = arith.constant dense<0.000000e+00> : vector<288x128xf32>
    %52 = tpu.matmul %49, %51, %cst_57 {dimension_numbers = #tpu.dot_dimension_numbers<[1], [0], [0], [1], [0, 0, 1, 1], [], []>} : vector<288x512xf32>, vector<512x128xf32>, vector<288x128xf32> -> vector<288x128xf32>
    %53 = vector.broadcast %5 : vector<1x128xf32> to vector<288x128xf32>
    %54 = arith.addf %52, %53 : vector<288x128xf32>
    %c0_58 = arith.constant 0 : index
    %c1_59 = arith.constant 1 : index
    %c1_60 = arith.constant 1 : index
    %c0_61 = arith.constant 0 : index
    %c0_62 = arith.constant 0 : index
    %c0_63 = arith.constant 0 : index
    %55 = vector.load %arg5[%c0_58, %c1_59, %c1_60, %c0_61, %c0_62, %c0_63] : memref<1x2x2x1x288x128xf32, #tpu.memory_space<vmem>>, vector<1x1x1x1x288x128xf32>
    %56 = vector.shape_cast %55 : vector<1x1x1x1x288x128xf32> to vector<288x128xf32>
    %57 = vector.shape_cast %54 : vector<288x128xf32> to vector<1x1x1x1x288x128xf32>
    tpu.vector_store %arg5[%c0_58, %c1_59, %c1_60, %c0_61, %c0_62, %c0_63], %57 {strides = array<i32>} : memref<1x2x2x1x288x128xf32, #tpu.memory_space<vmem>>, vector<1x1x1x1x288x128xf32>,
    return
  }
  func.func @transform_1(%arg0: i32, %arg1: i32) -> (i32, i32, i32) {
    %c0_i32 = arith.constant 0 : i32
    %c0_i32_0 = arith.constant 0 : i32
    %c0_i32_1 = arith.constant 0 : i32
    %c0_i32_2 = arith.constant 0 : i32
    return %c0_i32, %c0_i32_0, %c0_i32_1 : i32, i32, i32
  }
  func.func @transform_2(%arg0: i32, %arg1: i32) -> (i32, i32) {
    %c0_i32 = arith.constant 0 : i32
    %c0_i32_0 = arith.constant 0 : i32
    %c0_i32_1 = arith.constant 0 : i32
    return %c0_i32, %c0_i32_0 : i32, i32
  }
  func.func @transform_3(%arg0: i32, %arg1: i32) -> (i32, i32, i32, i32, i32, i32) {
    %c0_i32 = arith.constant 0 : i32
    %c0_i32_0 = arith.constant 0 : i32
    %c0_i32_1 = arith.constant 0 : i32
    %c0_i32_2 = arith.constant 0 : i32
    %c0_i32_3 = arith.constant 0 : i32
    return %arg0, %c0_i32, %c0_i32_0, %arg1, %c0_i32_1, %c0_i32_2 : i32, i32, i32, i32, i32, i32
  }
}

module attributes {stable_mosaic.version = 11 : i64} {
  func.func @upconv_kernel(%arg0: i32, %arg1: i32, %arg2: memref<2x342x128xf32, #tpu.memory_space<any>>, %arg3: memref<4x512x128xf32, #tpu.memory_space<vmem>>, %arg4: memref<1x128xf32, #tpu.memory_space<vmem>>, %arg5: memref<1x2x2x1x288x128xf32, #tpu.memory_space<vmem>>, %arg6: memref<326x128xf32, #tpu.memory_space<vmem>>, %arg7: memref<!tpu.dma_semaphore, #tpu.memory_space<semaphore_mem>>) attributes {dimension_semantics = [#tpu.dimension_semantics<parallel>, #tpu.dimension_semantics<parallel>], iteration_bounds = array<i64: 2, 1>, scalar_prefetch = 0 : i64, scratch_operands = 2 : i64, tpu.core_type = #tpu.core_type<tc>, window_params = [{}, {pipeline_mode = #tpu.pipeline_mode<synchronous>, transform_indices = @transform_1, window_bounds = array<i64: 4, 512, 128>}, {pipeline_mode = #tpu.pipeline_mode<synchronous>, transform_indices = @transform_2, window_bounds = array<i64: 1, 128>}, {transform_indices = @transform_3, window_bounds = array<i64: 1, 2, 2, 1, 288, 128>}]} {
    %c288_i32 = arith.constant 288 : i32
    %0 = arith.muli %arg1, %c288_i32 : i32
    %c0_i32 = arith.constant 0 : i32
    %1 = tpu.memref_slice %arg2[%arg0, %0, %c0_i32] : memref<2x342x128xf32, #tpu.memory_space<any>> -> memref<1x326x128xf32, #tpu.memory_space<any>>
    %2 = tpu.memref_squeeze %1 : memref<1x326x128xf32, #tpu.memory_space<any>> -> memref<326x128xf32, #tpu.memory_space<any>>
    tpu.enqueue_dma source(%2 : memref<326x128xf32, #tpu.memory_space<any>>) target(%arg6 : memref<326x128xf32, #tpu.memory_space<vmem>>) target_semaphore(%arg7 : memref<!tpu.dma_semaphore, #tpu.memory_space<semaphore_mem>>)
    %c0_i32_0 = arith.constant 0 : i32
    %3 = tpu.memref_slice %arg2[%arg0, %0, %c0_i32_0] : memref<2x342x128xf32, #tpu.memory_space<any>> -> memref<1x326x128xf32, #tpu.memory_space<any>>
    %4 = tpu.memref_squeeze %3 : memref<1x326x128xf32, #tpu.memory_space<any>> -> memref<326x128xf32, #tpu.memory_space<any>>
    tpu.wait_dma2 semaphore(%arg7 : memref<!tpu.dma_semaphore, #tpu.memory_space<semaphore_mem>>) src(%4 : memref<326x128xf32, #tpu.memory_space<any>>) dst(%arg6 : memref<326x128xf32, #tpu.memory_space<vmem>>)
    %c0 = arith.constant 0 : index
    %c0_1 = arith.constant 0 : index
    %5 = vector.load %arg4[%c0, %c0_1] : memref<1x128xf32, #tpu.memory_space<vmem>>, vector<1x128xf32>
    %c0_2 = arith.constant 0 : index
    %c0_3 = arith.constant 0 : index
    %6 = vector.load %arg6[%c0_2, %c0_3] : memref<326x128xf32, #tpu.memory_space<vmem>>, vector<288x128xf32>
    %c1 = arith.constant 1 : index
    %c0_4 = arith.constant 0 : index
    %7 = vector.load %arg6[%c1, %c0_4] : memref<326x128xf32, #tpu.memory_space<vmem>>, vector<288x128xf32>
    %c18 = arith.constant 18 : index
    %c0_5 = arith.constant 0 : index
    %8 = vector.load %arg6[%c18, %c0_5] : memref<326x128xf32, #tpu.memory_space<vmem>>, vector<288x128xf32>
    %c19 = arith.constant 19 : index
    %c0_6 = arith.constant 0 : index
    %9 = vector.load %arg6[%c19, %c0_6] : memref<326x128xf32, #tpu.memory_space<vmem>>, vector<288x128xf32>
    %10 = tpu.concatenate %6, %7, %8, %9 in 1 : vector<288x128xf32>, vector<288x128xf32>, vector<288x128xf32>, vector<288x128xf32> -> vector<288x512xf32>
    %c0_7 = arith.constant 0 : index
    %c0_8 = arith.constant 0 : index
    %c0_9 = arith.constant 0 : index
    %11 = vector.load %arg3[%c0_7, %c0_8, %c0_9] : memref<4x512x128xf32, #tpu.memory_space<vmem>>, vector<1x512x128xf32>
    %12 = vector.shape_cast %11 : vector<1x512x128xf32> to vector<512x128xf32>
    %cst = arith.constant dense<0.000000e+00> : vector<288x128xf32>
    %13 = tpu.matmul %10, %12, %cst {dimension_numbers = #tpu.dot_dimension_numbers<[1], [0], [0], [1], [0, 0, 1, 1], [], []>} : vector<288x512xf32>, vector<512x128xf32>, vector<288x128xf32> -> vector<288x128xf32>
    %14 = vector.broadcast %5 : vector<1x128xf32> to vector<288x128xf32>
    %15 = arith.addf %13, %14 : vector<288x128xf32>
    %c0_10 = arith.constant 0 : index
    %c0_11 = arith.constant 0 : index
    %c0_12 = arith.constant 0 : index
    %c0_13 = arith.constant 0 : index
    %c0_14 = arith.constant 0 : index
    %c0_15 = arith.constant 0 : index
    %16 = vector.load %arg5[%c0_10, %c0_11, %c0_12, %c0_13, %c0_14, %c0_15] : memref<1x2x2x1x288x128xf32, #tpu.memory_space<vmem>>, vector<1x1x1x1x288x128xf32>
    %17 = vector.shape_cast %16 : vector<1x1x1x1x288x128xf32> to vector<288x128xf32>
    %18 = vector.shape_cast %15 : vector<288x128xf32> to vector<1x1x1x1x288x128xf32>
    tpu.vector_store %arg5[%c0_10, %c0_11, %c0_12, %c0_13, %c0_14, %c0_15], %18 {strides = array<i32>} : memref<1x2x2x1x288x128xf32, #tpu.memory_space<vmem>>, vector<1x1x1x1x288x128xf32>,
    %c1_16 = arith.constant 1 : index
    %c0_17 = arith.constant 0 : index
    %19 = vector.load %arg6[%c1_16, %c0_17] : memref<326x128xf32, #tpu.memory_space<vmem>>, vector<288x128xf32>
    %c2 = arith.constant 2 : index
    %c0_18 = arith.constant 0 : index
    %20 = vector.load %arg6[%c2, %c0_18] : memref<326x128xf32, #tpu.memory_space<vmem>>, vector<288x128xf32>
    %c19_19 = arith.constant 19 : index
    %c0_20 = arith.constant 0 : index
    %21 = vector.load %arg6[%c19_19, %c0_20] : memref<326x128xf32, #tpu.memory_space<vmem>>, vector<288x128xf32>
    %c20 = arith.constant 20 : index
    %c0_21 = arith.constant 0 : index
    %22 = vector.load %arg6[%c20, %c0_21] : memref<326x128xf32, #tpu.memory_space<vmem>>, vector<288x128xf32>
    %23 = tpu.concatenate %19, %20, %21, %22 in 1 : vector<288x128xf32>, vector<288x128xf32>, vector<288x128xf32>, vector<288x128xf32> -> vector<288x512xf32>
    %c1_22 = arith.constant 1 : index
    %c0_23 = arith.constant 0 : index
    %c0_24 = arith.constant 0 : index
    %24 = vector.load %arg3[%c1_22, %c0_23, %c0_24] : memref<4x512x128xf32, #tpu.memory_space<vmem>>, vector<1x512x128xf32>
    %25 = vector.shape_cast %24 : vector<1x512x128xf32> to vector<512x128xf32>
    %cst_25 = arith.constant dense<0.000000e+00> : vector<288x128xf32>
    %26 = tpu.matmul %23, %25, %cst_25 {dimension_numbers = #tpu.dot_dimension_numbers<[1], [0], [0], [1], [0, 0, 1, 1], [], []>} : vector<288x512xf32>, vector<512x128xf32>, vector<288x128xf32> -> vector<288x128xf32>
    %27 = vector.broadcast %5 : vector<1x128xf32> to vector<288x128xf32>
    %28 = arith.addf %26, %27 : vector<288x128xf32>
    %c0_26 = arith.constant 0 : index
    %c0_27 = arith.constant 0 : index
    %c1_28 = arith.constant 1 : index
    %c0_29 = arith.constant 0 : index
    %c0_30 = arith.constant 0 : index
    %c0_31 = arith.constant 0 : index
    %29 = vector.load %arg5[%c0_26, %c0_27, %c1_28, %c0_29, %c0_30, %c0_31] : memref<1x2x2x1x288x128xf32, #tpu.memory_space<vmem>>, vector<1x1x1x1x288x128xf32>
    %30 = vector.shape_cast %29 : vector<1x1x1x1x288x128xf32> to vector<288x128xf32>
    %31 = vector.shape_cast %28 : vector<288x128xf32> to vector<1x1x1x1x288x128xf32>
    tpu.vector_store %arg5[%c0_26, %c0_27, %c1_28, %c0_29, %c0_30, %c0_31], %31 {strides = array<i32>} : memref<1x2x2x1x288x128xf32, #tpu.memory_space<vmem>>, vector<1x1x1x1x288x128xf32>,
    %c18_32 = arith.constant 18 : index
    %c0_33 = arith.constant 0 : index
    %32 = vector.load %arg6[%c18_32, %c0_33] : memref<326x128xf32, #tpu.memory_space<vmem>>, vector<288x128xf32>
    %c19_34 = arith.constant 19 : index
    %c0_35 = arith.constant 0 : index
    %33 = vector.load %arg6[%c19_34, %c0_35] : memref<326x128xf32, #tpu.memory_space<vmem>>, vector<288x128xf32>
    %c36 = arith.constant 36 : index
    %c0_36 = arith.constant 0 : index
    %34 = vector.load %arg6[%c36, %c0_36] : memref<326x128xf32, #tpu.memory_space<vmem>>, vector<288x128xf32>
    %c37 = arith.constant 37 : index
    %c0_37 = arith.constant 0 : index
    %35 = vector.load %arg6[%c37, %c0_37] : memref<326x128xf32, #tpu.memory_space<vmem>>, vector<288x128xf32>
    %36 = tpu.concatenate %32, %33, %34, %35 in 1 : vector<288x128xf32>, vector<288x128xf32>, vector<288x128xf32>, vector<288x128xf32> -> vector<288x512xf32>
    %c2_38 = arith.constant 2 : index
    %c0_39 = arith.constant 0 : index
    %c0_40 = arith.constant 0 : index
    %37 = vector.load %arg3[%c2_38, %c0_39, %c0_40] : memref<4x512x128xf32, #tpu.memory_space<vmem>>, vector<1x512x128xf32>
    %38 = vector.shape_cast %37 : vector<1x512x128xf32> to vector<512x128xf32>
    %cst_41 = arith.constant dense<0.000000e+00> : vector<288x128xf32>
    %39 = tpu.matmul %36, %38, %cst_41 {dimension_numbers = #tpu.dot_dimension_numbers<[1], [0], [0], [1], [0, 0, 1, 1], [], []>} : vector<288x512xf32>, vector<512x128xf32>, vector<288x128xf32> -> vector<288x128xf32>
    %40 = vector.broadcast %5 : vector<1x128xf32> to vector<288x128xf32>
    %41 = arith.addf %39, %40 : vector<288x128xf32>
    %c0_42 = arith.constant 0 : index
    %c1_43 = arith.constant 1 : index
    %c0_44 = arith.constant 0 : index
    %c0_45 = arith.constant 0 : index
    %c0_46 = arith.constant 0 : index
    %c0_47 = arith.constant 0 : index
    %42 = vector.load %arg5[%c0_42, %c1_43, %c0_44, %c0_45, %c0_46, %c0_47] : memref<1x2x2x1x288x128xf32, #tpu.memory_space<vmem>>, vector<1x1x1x1x288x128xf32>
    %43 = vector.shape_cast %42 : vector<1x1x1x1x288x128xf32> to vector<288x128xf32>
    %44 = vector.shape_cast %41 : vector<288x128xf32> to vector<1x1x1x1x288x128xf32>
    tpu.vector_store %arg5[%c0_42, %c1_43, %c0_44, %c0_45, %c0_46, %c0_47], %44 {strides = array<i32>} : memref<1x2x2x1x288x128xf32, #tpu.memory_space<vmem>>, vector<1x1x1x1x288x128xf32>,
    %c19_48 = arith.constant 19 : index
    %c0_49 = arith.constant 0 : index
    %45 = vector.load %arg6[%c19_48, %c0_49] : memref<326x128xf32, #tpu.memory_space<vmem>>, vector<288x128xf32>
    %c20_50 = arith.constant 20 : index
    %c0_51 = arith.constant 0 : index
    %46 = vector.load %arg6[%c20_50, %c0_51] : memref<326x128xf32, #tpu.memory_space<vmem>>, vector<288x128xf32>
    %c37_52 = arith.constant 37 : index
    %c0_53 = arith.constant 0 : index
    %47 = vector.load %arg6[%c37_52, %c0_53] : memref<326x128xf32, #tpu.memory_space<vmem>>, vector<288x128xf32>
    %c38 = arith.constant 38 : index
    %c0_54 = arith.constant 0 : index
    %48 = vector.load %arg6[%c38, %c0_54] : memref<326x128xf32, #tpu.memory_space<vmem>>, vector<288x128xf32>
    %49 = tpu.concatenate %45, %46, %47, %48 in 1 : vector<288x128xf32>, vector<288x128xf32>, vector<288x128xf32>, vector<288x128xf32> -> vector<288x512xf32>
    %c3 = arith.constant 3 : index
    %c0_55 = arith.constant 0 : index
    %c0_56 = arith.constant 0 : index
    %50 = vector.load %arg3[%c3, %c0_55, %c0_56] : memref<4x512x128xf32, #tpu.memory_space<vmem>>, vector<1x512x128xf32>
    %51 = vector.shape_cast %50 : vector<1x512x128xf32> to vector<512x128xf32>
    %cst_57 = arith.constant dense<0.000000e+00> : vector<288x128xf32>
    %52 = tpu.matmul %49, %51, %cst_57 {dimension_numbers = #tpu.dot_dimension_numbers<[1], [0], [0], [1], [0, 0, 1, 1], [], []>} : vector<288x512xf32>, vector<512x128xf32>, vector<288x128xf32> -> vector<288x128xf32>
    %53 = vector.broadcast %5 : vector<1x128xf32> to vector<288x128xf32>
    %54 = arith.addf %52, %53 : vector<288x128xf32>
    %c0_58 = arith.constant 0 : index
    %c1_59 = arith.constant 1 : index
    %c1_60 = arith.constant 1 : index
    %c0_61 = arith.constant 0 : index
    %c0_62 = arith.constant 0 : index
    %c0_63 = arith.constant 0 : index
    %55 = vector.load %arg5[%c0_58, %c1_59, %c1_60, %c0_61, %c0_62, %c0_63] : memref<1x2x2x1x288x128xf32, #tpu.memory_space<vmem>>, vector<1x1x1x1x288x128xf32>
    %56 = vector.shape_cast %55 : vector<1x1x1x1x288x128xf32> to vector<288x128xf32>
    %57 = vector.shape_cast %54 : vector<288x128xf32> to vector<1x1x1x1x288x128xf32>
    tpu.vector_store %arg5[%c0_58, %c1_59, %c1_60, %c0_61, %c0_62, %c0_63], %57 {strides = array<i32>} : memref<1x2x2x1x288x128xf32, #tpu.memory_space<vmem>>, vector<1x1x1x1x288x128xf32>,
    return
  }
  func.func @transform_1(%arg0: i32, %arg1: i32) -> (i32, i32, i32) {
    %c0_i32 = arith.constant 0 : i32
    %c0_i32_0 = arith.constant 0 : i32
    %c0_i32_1 = arith.constant 0 : i32
    %c0_i32_2 = arith.constant 0 : i32
    return %c0_i32, %c0_i32_0, %c0_i32_1 : i32, i32, i32
  }
  func.func @transform_2(%arg0: i32, %arg1: i32) -> (i32, i32) {
    %c0_i32 = arith.constant 0 : i32
    %c0_i32_0 = arith.constant 0 : i32
    %c0_i32_1 = arith.constant 0 : i32
    return %c0_i32, %c0_i32_0 : i32, i32
  }
  func.func @transform_3(%arg0: i32, %arg1: i32) -> (i32, i32, i32, i32, i32, i32) {
    %c0_i32 = arith.constant 0 : i32
    %c0_i32_0 = arith.constant 0 : i32
    %c0_i32_1 = arith.constant 0 : i32
    %c0_i32_2 = arith.constant 0 : i32
    %c0_i32_3 = arith.constant 0 : i32
    return %arg0, %c0_i32, %c0_i32_0, %arg1, %c0_i32_1, %c0_i32_2 : i32, i32, i32, i32, i32, i32
  }
}

</mosaic_0001>

<llo_original>
// kernel: tpu_custom_call.1
$region0: #{tpu_custom_call.1}
  #allocation0 [shape = 'u32[]', space=smem, size = 0x4, offset = 0x4, fixed_abs, tag = 'smem constant byte address 0x4 - core index']
  #allocation1 [shape = 'u32[144,128]{1,0:T(1,128)}', space=vmem, size = 0x12000, scoped, tag = 'internal scratch']
  #allocation2 [shape = 'f32[326,128]{1,0:T(8,128)}', space=vmem, size = 0x29000, scoped, tag = 'scratch operand']
  #allocation3 [shape = 's32[1]{0}', space=sflag, size = 0x4, scoped, tag = 'scratch operand']
  #allocation10 [shape = 's32[]', space=sflag, size = 0x4, offset = 0, fixed_abs, tag = 'sflag constant byte address 0x0 - dummy sync flag']
  %s0 = inlined_call_operand.vmem [shape: f32[2,342,128], index: 0, kind: input, shape index: {}]
  %s1 = inlined_call_operand.hbm [shape: f32[4,512,128], index: 1, kind: input, shape index: {}]
  %s2 = inlined_call_operand.hbm [shape: f32[1,128], index: 2, kind: input, shape index: {}]
  %s3 = inlined_call_operand.hbm [shape: f32[2,2,2,1,288,128], index: 3, kind: output, shape index: {}]
  %s4 = sld [smem:[#allocation0]]
  $region86: #{tpu_custom_call.1} parent=0
    _
  %s6 = ssub.s32 1, %s4
  %s7 = scalar_select 0, %s6, %s4
  $region1: #{tpu_custom_call.1} parent=0
    #allocation4 [shape = 'u8[1048576]{0}', space=vmem, size = 0x100000, scoped, tag = 'input window, operand 1, single buffered']
    #allocation5 [shape = 's32[2]{0}', space=sflag, size = 0x8, scoped, tag = 'scoped memory for tpu_custom_call.1']
    #allocation6 [shape = 's32[2]{0}', space=sflag, size = 0x8, scoped, tag = 'scoped memory for tpu_custom_call.1']
    #allocation7 [shape = 'u8[512]{0}', space=vmem, size = 0x400, scoped, tag = 'input window, operand 2, single buffered']
    #allocation8 [shape = 's32[1]{0}', space=sflag, size = 0x4, scoped, tag = 'scoped memory for tpu_custom_call.1']
    #allocation9 [shape = 'u8[1179648]{0}', space=vmem, size = 0x120000, scoped, tag = 'output window, operand 0']
    %8 = vsyncpa [#allocation5], 0
    %9 = vsyncpa [#allocation8], 0
    %10 = vsyncpa [#allocation6], 0
    %s11 = scalar_lea.sflag [#allocation6], 1
    %12 = vsyncpa %s11, 0
    loop: start=0, step=1, limit=4
    $region2: #{tpu_custom_call.1} parent=1 // loop_pre_header
      _
    $region3: #{tpu_custom_call.1} parent=1 // loop_header
      %s14 = sphi 0, %s18
      %p15 = scmp.ge.s32.totalorder %s14, 4
      %s21 = sphi 0, %s33
      %s22 = sphi 0, %s29
      %s23 = sphi 0, %s21
      %s24 = sphi 0, %s22
      %s25 = sphi 0, %s23
      %s26 = sphi 0, %s24
      %s34 = sphi 0, %s34
      %s36 = sphi 0, %s34
      %s37 = sphi 0, %s36
      %s51 = sphi 0, %s37
      %s55 = sphi 0, %s55
      %s57 = sphi 0, %s55
      %s58 = sphi 0, %s57
      %s72 = sphi 0, %s58
      %s80 = sphi 0, %s82
      %s83 = sphi 0, %s80
      %s84 = sphi 0, %s83
      %s100 = sphi 0, %s84
    $region4: #{tpu_custom_call.1} parent=1 // loop_header_branch
      %17 = sbr.rel (%p15) target = $region8
    $region5: #{tpu_custom_call.1} parent=1 // loop_body
      %s19 = ssub.s32 %s14, 1
      %s20 = ssub.s32 %s14, 2
      %s27 = sadd.s32 1, %s22
      %p28 = scmp.ge.s32.totalorder %s27, 1
      %s29 = scalar_select %p28, 0, %s27
      %s30 = sadd.s32 1, %s21
      %s31 = scalar_select %p28, %s30, %s21
      %p32 = scmp.ge.s32.totalorder %s31, 2
      %s33 = scalar_select %p32, 0, %s31
      %s35 = sadd.s32 %s34, 1
      %p38 = scmp.eq.s32.totalorder %s14, 1
      %p39 = scmp.ne.s32.totalorder %s34, %s36
      %p40 = scmp.eq.s32.totalorder %s14, 0
      %p41 = por %p39, %p40
      %p42 = scmp.ne.s32.totalorder %s34, %s36
      %p43 = scmp.eq.s32.totalorder %s19, 1
      %p44 = por %p42, %p43
      %p45 = scmp.ne.s32.totalorder %s36, %s37
      %p46 = scmp.eq.s32.totalorder %s19, 0
      %p47 = por %p45, %p46
      %p48 = scmp.ne.s32.totalorder %s36, %s37
      %p49 = scmp.eq.s32.totalorder %s20, 1
      %p50 = por %p48, %p49
      %p52 = scmp.ne.s32.totalorder %s37, %s51
      %p53 = scmp.eq.s32.totalorder %s20, 0
      %p54 = por %p52, %p53
      %s56 = sadd.s32 %s55, 1
      %p59 = scmp.eq.s32.totalorder %s14, 1
      %p60 = scmp.ne.s32.totalorder %s55, %s57
      %p61 = scmp.eq.s32.totalorder %s14, 0
      %p62 = por %p60, %p61
      %p63 = scmp.ne.s32.totalorder %s55, %s57
      %p64 = scmp.eq.s32.totalorder %s19, 1
      %p65 = por %p63, %p64
      %p66 = scmp.ne.s32.totalorder %s57, %s58
      %p67 = scmp.eq.s32.totalorder %s19, 0
      %p68 = por %p66, %p67
      %p69 = scmp.ne.s32.totalorder %s57, %s58
      %p70 = scmp.eq.s32.totalorder %s20, 1
      %p71 = por %p69, %p70
      %p73 = scmp.ne.s32.totalorder %s58, %s72
      %p74 = scmp.eq.s32.totalorder %s20, 0
      %p75 = por %p73, %p74
      %s76 = ssub.s32 %s21, %s33
      %s77 = ssub.s32 %s22, %s29
      %s78 = sor.u32 %s76, %s77
      %p79 = scmp.eq.s32.totalorder %s78, 0
      %s81 = sadd.s32 %s80, 1
      %s82 = scalar_select %p79, %s80, %s81
      %p85 = pneg %p79
      %p86 = scmp.eq.s32.totalorder %s14, 1
      %p87 = por %p85, %p86
      %p88 = scmp.ne.s32.totalorder %s80, %s83
      %p89 = scmp.eq.s32.totalorder %s14, 0
      %p90 = por %p88, %p89
      %p91 = scmp.ne.s32.totalorder %s80, %s83
      %p92 = scmp.eq.s32.totalorder %s19, 1
      %p93 = por %p91, %p92
      %p94 = scmp.ne.s32.totalorder %s83, %s84
      %p95 = scmp.eq.s32.totalorder %s19, 0
      %p96 = por %p94, %p95
      %p97 = scmp.ne.s32.totalorder %s83, %s84
      %p98 = scmp.eq.s32.totalorder %s20, 1
      %p99 = por %p97, %p98
      %p101 = scmp.ne.s32.totalorder %s84, %s100
      %p102 = scmp.eq.s32.totalorder %s20, 0
      %p103 = por %p101, %p102
      %p104 = scmp.le.s32.totalorder 1, %s14
      %p105 = scmp.lt.s32.totalorder %s14, 3
      %p106 = pnand %p104, %p105
      %p107 = pneg %p106
      // Predicated region
      $region9: #{tpu_custom_call.1} parent=5 // pred_check
        _
      $region10: #{tpu_custom_call.1} parent=5 // pred_check_branch
        %109 = sbr.rel (%p106) target = $region12
      $region11: #{tpu_custom_call.1} parent=5 // pred_region
        %s110 = ssub.s32 %s14, 1
        // Predicated region
        $region13: #{tpu_custom_call.1} parent=11 // pred_check
          %p111 = pneg %p47
        $region14: #{tpu_custom_call.1} parent=11 // pred_check_branch
          %113 = sbr.rel (%p111) target = $region16
        $region15: #{tpu_custom_call.1} parent=11 // pred_region
          %s115 = ssub.s32 32768, 32768
          %116 = vsyncadd [#allocation5], %s115
          %s117 = sshll.u32 [#allocation4], 4
          %s118 = int_to_ptr.vmem [resolvable:$true] %s117
          %123 = dma.hbm_to_vmem [thread:$0]  %s1, 32768, %s118, [#allocation5], 128, 128, 8
        $region16: #{tpu_custom_call.1} parent=11 // pred_fallthru
          _
        // Predicated region
        $region17: #{tpu_custom_call.1} parent=11 // pred_check
          %p124 = pneg %p68
        $region18: #{tpu_custom_call.1} parent=11 // pred_check_branch
          %126 = sbr.rel (%p124) target = $region20
        $region19: #{tpu_custom_call.1} parent=11 // pred_region
          %s128 = ssub.s32 16, 16
          %129 = vsyncadd [#allocation8], %s128
          %s131 = sshll.u32 [#allocation7], 4
          %s132 = int_to_ptr.vmem [resolvable:$true] %s131
          %134 = dma.hbm_to_vmem [thread:$0]  %s2, 16, %s132, [#allocation8]
        $region20: #{tpu_custom_call.1} parent=11 // pred_fallthru
          _
      $region12: #{tpu_custom_call.1} parent=5 // pred_fallthru
        _
      %p135 = scmp.lt.s32.totalorder %s14, 2
      // Predicated region
      $region21: #{tpu_custom_call.1} parent=5 // pred_check
        %p136 = pneg %p135
      $region22: #{tpu_custom_call.1} parent=5 // pred_check_branch
        %138 = sbr.rel (%p136) target = $region24
      $region23: #{tpu_custom_call.1} parent=5 // pred_region
        _
      $region24: #{tpu_custom_call.1} parent=5 // pred_fallthru
        _
      %p139 = scmp.le.s32.totalorder 1, %s14
      %p140 = scmp.lt.s32.totalorder %s14, 3
      %p141 = pnand %p139, %p140
      %p142 = pneg %p141
      // Predicated region
      $region25: #{tpu_custom_call.1} parent=5 // pred_check
        _
      $region26: #{tpu_custom_call.1} parent=5 // pred_check_branch
        %144 = sbr.rel (%p141) target = $region28
      $region27: #{tpu_custom_call.1} parent=5 // pred_region
        %s145 = ssub.s32 %s14, 1
        // Predicated region
        $region29: #{tpu_custom_call.1} parent=27 // pred_check
          %p146 = pneg %p47
        $region30: #{tpu_custom_call.1} parent=27 // pred_check_branch
          %148 = sbr.rel (%p146) target = $region32
        $region31: #{tpu_custom_call.1} parent=27 // pred_region
          %149 = dma.done [#allocation5], 32768
        $region32: #{tpu_custom_call.1} parent=27 // pred_fallthru
          _
        // Predicated region
        $region33: #{tpu_custom_call.1} parent=27 // pred_check
          %p150 = pneg %p68
        $region34: #{tpu_custom_call.1} parent=27 // pred_check_branch
          %152 = sbr.rel (%p150) target = $region36
        $region35: #{tpu_custom_call.1} parent=27 // pred_region
          %153 = dma.done [#allocation8], 16
        $region36: #{tpu_custom_call.1} parent=27 // pred_fallthru
          _
        %p154 = pneg %p47
        %p155 = pneg %p44
        %p156 = pneg %p68
        %p157 = pneg %p65
        %p158 = pneg %p96
        %p159 = pneg %p93
        %s160 = sand.u32 %s83, 1
        %s161 = scalar_lea.sflag [#allocation6], %s160
        %s162 = sand.u32 %s83, 1
        %s163 = smul.addr %s162, 1152
        %s164 = scalar_lea.vmem [#allocation9], %s163
        %s165 = smul.u32 %s24, 288
        %s166 = smul.u32 %s23, 344
        %s167 = sadd.s32 %s165, %s166
        %s168 = scalar_lea.vmem %s0, %s167
        %p170 = scmp.lt.u32.totalorder 326, 8
        %p171 = pneg %p170
        // Predicated region
        $region37: #{tpu_custom_call.1} parent=27 // pred_check
          _
        $region38: #{tpu_custom_call.1} parent=27 // pred_check_branch
          %173 = sbr.rel (%p170) target = $region40
        $region39: #{tpu_custom_call.1} parent=27 // pred_region
          %s189 = sand.u32 326, 7
          %p190 = scmp.eq.s32.totalorder %s189, 0
          %p191 = pneg %p190
          // Predicated region
          $region52: #{tpu_custom_call.1} parent=39 // pred_check
            _
          $region53: #{tpu_custom_call.1} parent=39 // pred_check_branch
            %193 = sbr.rel (%p190) target = $region55
          $region54: #{tpu_custom_call.1} parent=39 // pred_region
            %s194 = sand.u32 326, 7
            %s195 = ssub.s32 326, %s194
            %s196 = scalar_lea.vmem %s168, %s195
            %s197 = ssub.s32 326, %s194
            %s198 = scalar_lea.vmem [#allocation2], %s197
            loop: start=0, step=1, limit=1
            $region56: #{tpu_custom_call.1} parent=54 // loop_pre_header
              _
            $region57: #{tpu_custom_call.1} parent=54 // loop_header
              %s200 = sphi 0, %s204
              %p201 = scmp.ge.s32.totalorder %s200, 1
              %s205 = sphi %s168, %s168
              %s206 = sphi [#allocation2], [#allocation2]
            $region58: #{tpu_custom_call.1} parent=54 // loop_header_branch
              %203 = sbr.rel (%p201) target = $region62
            $region59: #{tpu_custom_call.1} parent=54 // loop_body
              %v207 = vld [vmem:[%s205] sm:$0xff]
              %208 = vst [vmem:[%s206] sm:$0xff] %v207
              %v209 = vld [vmem:[%s205 + $0x8] sm:$0xff]
              %210 = vst [vmem:[%s206 + $0x8] sm:$0xff] %v209
              %v211 = vld [vmem:[%s205 + $0x10] sm:$0xff]
              %212 = vst [vmem:[%s206 + $0x10] sm:$0xff] %v211
              %v213 = vld [vmem:[%s205 + $0x18] sm:$0xff]
              %214 = vst [vmem:[%s206 + $0x18] sm:$0xff] %v213
              %v215 = vld [vmem:[%s205 + $0x20] sm:$0xff]
              %216 = vst [vmem:[%s206 + $0x20] sm:$0xff] %v215
              %v217 = vld [vmem:[%s205 + $0x28] sm:$0xff]
              %218 = vst [vmem:[%s206 + $0x28] sm:$0xff] %v217
              %v219 = vld [vmem:[%s205 + $0x30] sm:$0xff]
              %220 = vst [vmem:[%s206 + $0x30] sm:$0xff] %v219
              %v221 = vld [vmem:[%s205 + $0x38] sm:$0xff]
              %222 = vst [vmem:[%s206 + $0x38] sm:$0xff] %v221
              %v223 = vld [vmem:[%s205 + $0x40] sm:$0xff]
              %224 = vst [vmem:[%s206 + $0x40] sm:$0xff] %v223
              %v225 = vld [vmem:[%s205 + $0x48] sm:$0xff]
              %226 = vst [vmem:[%s206 + $0x48] sm:$0xff] %v225
              %v227 = vld [vmem:[%s205 + $0x50] sm:$0xff]
              %228 = vst [vmem:[%s206 + $0x50] sm:$0xff] %v227
              %v229 = vld [vmem:[%s205 + $0x58] sm:$0xff]
              %230 = vst [vmem:[%s206 + $0x58] sm:$0xff] %v229
              %v231 = vld [vmem:[%s205 + $0x60] sm:$0xff]
              %232 = vst [vmem:[%s206 + $0x60] sm:$0xff] %v231
              %v233 = vld [vmem:[%s205 + $0x68] sm:$0xff]
              %234 = vst [vmem:[%s206 + $0x68] sm:$0xff] %v233
              %v235 = vld [vmem:[%s205 + $0x70] sm:$0xff]
              %236 = vst [vmem:[%s206 + $0x70] sm:$0xff] %v235
              %v237 = vld [vmem:[%s205 + $0x78] sm:$0xff]
              %238 = vst [vmem:[%s206 + $0x78] sm:$0xff] %v237
              %v239 = vld [vmem:[%s205 + $0x80] sm:$0xff]
              %240 = vst [vmem:[%s206 + $0x80] sm:$0xff] %v239
              %v241 = vld [vmem:[%s205 + $0x88] sm:$0xff]
              %242 = vst [vmem:[%s206 + $0x88] sm:$0xff] %v241
              %v243 = vld [vmem:[%s205 + $0x90] sm:$0xff]
              %244 = vst [vmem:[%s206 + $0x90] sm:$0xff] %v243
              %v245 = vld [vmem:[%s205 + $0x98] sm:$0xff]
              %246 = vst [vmem:[%s206 + $0x98] sm:$0xff] %v245
              %v247 = vld [vmem:[%s205 + $0xa0] sm:$0xff]
              %248 = vst [vmem:[%s206 + $0xa0] sm:$0xff] %v247
              %v249 = vld [vmem:[%s205 + $0xa8] sm:$0xff]
              %250 = vst [vmem:[%s206 + $0xa8] sm:$0xff] %v249
              %v251 = vld [vmem:[%s205 + $0xb0] sm:$0xff]
              %252 = vst [vmem:[%s206 + $0xb0] sm:$0xff] %v251
              %v253 = vld [vmem:[%s205 + $0xb8] sm:$0xff]
              %254 = vst [vmem:[%s206 + $0xb8] sm:$0xff] %v253
              %v255 = vld [vmem:[%s205 + $0xc0] sm:$0xff]
              %256 = vst [vmem:[%s206 + $0xc0] sm:$0xff] %v255
              %v257 = vld [vmem:[%s205 + $0xc8] sm:$0xff]
              %258 = vst [vmem:[%s206 + $0xc8] sm:$0xff] %v257
              %v259 = vld [vmem:[%s205 + $0xd0] sm:$0xff]
              %260 = vst [vmem:[%s206 + $0xd0] sm:$0xff] %v259
              %v261 = vld [vmem:[%s205 + $0xd8] sm:$0xff]
              %262 = vst [vmem:[%s206 + $0xd8] sm:$0xff] %v261
              %v263 = vld [vmem:[%s205 + $0xe0] sm:$0xff]
              %264 = vst [vmem:[%s206 + $0xe0] sm:$0xff] %v263
              %v265 = vld [vmem:[%s205 + $0xe8] sm:$0xff]
              %266 = vst [vmem:[%s206 + $0xe8] sm:$0xff] %v265
              %v267 = vld [vmem:[%s205 + $0xf0] sm:$0xff]
              %268 = vst [vmem:[%s206 + $0xf0] sm:$0xff] %v267
              %v269 = vld [vmem:[%s205 + $0xf8] sm:$0xff]
              %270 = vst [vmem:[%s206 + $0xf8] sm:$0xff] %v269
              %v271 = vld [vmem:[%s205 + $0x100] sm:$0xff]
              %272 = vst [vmem:[%s206 + $0x100] sm:$0xff] %v271
              %v273 = vld [vmem:[%s205 + $0x108] sm:$0xff]
              %274 = vst [vmem:[%s206 + $0x108] sm:$0xff] %v273
              %v275 = vld [vmem:[%s205 + $0x110] sm:$0xff]
              %276 = vst [vmem:[%s206 + $0x110] sm:$0xff] %v275
              %v277 = vld [vmem:[%s205 + $0x118] sm:$0xff]
              %278 = vst [vmem:[%s206 + $0x118] sm:$0xff] %v277
              %v279 = vld [vmem:[%s205 + $0x120] sm:$0xff]
              %280 = vst [vmem:[%s206 + $0x120] sm:$0xff] %v279
              %v281 = vld [vmem:[%s205 + $0x128] sm:$0xff]
              %282 = vst [vmem:[%s206 + $0x128] sm:$0xff] %v281
              %v283 = vld [vmem:[%s205 + $0x130] sm:$0xff]
              %284 = vst [vmem:[%s206 + $0x130] sm:$0xff] %v283
              %v285 = vld [vmem:[%s205 + $0x138] sm:$0xff]
              %286 = vst [vmem:[%s206 + $0x138] sm:$0xff] %v285
            $region60: #{tpu_custom_call.1} parent=54 // loop_footer
              %s204 = sadd.s32 1, %s200
            $region61: #{tpu_custom_call.1} parent=54 // loop_footer_branch
              %199 = sbr.rel target = $region57
            $region62: #{tpu_custom_call.1} parent=54 // loop_exit
              _
            %s287 = sshll.u32 1, %s194
            %s288 = ssub.s32 %s287, 1
            loop: start=0, step=1, limit=1
            $region63: #{tpu_custom_call.1} parent=54 // loop_pre_header
              _
            $region64: #{tpu_custom_call.1} parent=54 // loop_header
              %s290 = sphi 0, %s294
              %p291 = scmp.ge.s32.totalorder %s290, 1
              %s295 = sphi %s196, %s196
              %s296 = sphi %s198, %s198
            $region65: #{tpu_custom_call.1} parent=54 // loop_header_branch
              %293 = sbr.rel (%p291) target = $region69
            $region66: #{tpu_custom_call.1} parent=54 // loop_body
              %v297 = vld [vmem:[%s295] sm:%s288]
              %298 = vst [vmem:[%s296] sm:%s288] %v297
            $region67: #{tpu_custom_call.1} parent=54 // loop_footer
              %s294 = sadd.s32 1, %s290
            $region68: #{tpu_custom_call.1} parent=54 // loop_footer_branch
              %289 = sbr.rel target = $region64
            $region69: #{tpu_custom_call.1} parent=54 // loop_exit
              _
          $region55: #{tpu_custom_call.1} parent=39 // pred_fallthru
            _
        $region40: #{tpu_custom_call.1} parent=27 // pred_fallthru
          _
        // Predicated region
        $region41: #{tpu_custom_call.1} parent=27 // pred_check
          %p174 = pneg %p170
        $region42: #{tpu_custom_call.1} parent=27 // pred_check_branch
          %176 = sbr.rel (%p174) target = $region44
        $region43: #{tpu_custom_call.1} parent=27 // pred_region
          %s177 = sshll.u32 1, 326
          %s178 = ssub.s32 %s177, 1
          loop: start=0, step=1, limit=1
          $region45: #{tpu_custom_call.1} parent=43 // loop_pre_header
            _
          $region46: #{tpu_custom_call.1} parent=43 // loop_header
            %s180 = sphi 0, %s184
            %p181 = scmp.ge.s32.totalorder %s180, 1
            %s185 = sphi %s168, %s168
            %s186 = sphi [#allocation2], [#allocation2]
          $region47: #{tpu_custom_call.1} parent=43 // loop_header_branch
            %183 = sbr.rel (%p181) target = $region51
          $region48: #{tpu_custom_call.1} parent=43 // loop_body
            %v187 = vld [vmem:[%s185] sm:%s178]
            %188 = vst [vmem:[%s186] sm:%s178] %v187
          $region49: #{tpu_custom_call.1} parent=43 // loop_footer
            %s184 = sadd.s32 1, %s180
          $region50: #{tpu_custom_call.1} parent=43 // loop_footer_branch
            %179 = sbr.rel target = $region46
          $region51: #{tpu_custom_call.1} parent=43 // loop_exit
            _
        $region44: #{tpu_custom_call.1} parent=27 // pred_fallthru
          _
        // Predicated region
        $region70: #{tpu_custom_call.1} parent=27 // pred_check
          _
        $region71: #{tpu_custom_call.1} parent=27 // pred_check_branch
          %301 = sbr.rel (0) target = $region73
        $region72: #{tpu_custom_call.1} parent=27 // pred_region
          %302 = vsyncadd [#allocation3], 5216
        $region73: #{tpu_custom_call.1} parent=27 // pred_fallthru
          _
        %s303 = smul.u32 326, 1
        %s304 = sshll.u32 %s303, 4
        %305 = dma.done [#allocation3], %s304
        %v306 = vld [vmem:[#allocation7] sm:$0x1]
        %v307 = vld [vmem:[#allocation2] sm:$0xff]
        %v308 = vld [vmem:[#allocation2 + $0x8] sm:$0xff]
        %v309 = vld [vmem:[#allocation2 + $0x10] sm:$0xff]
        %v310 = vld [vmem:[#allocation2 + $0x18] sm:$0xff]
        %v311 = vld [vmem:[#allocation2 + $0x20] sm:$0xff]
        %v312 = vld [vmem:[#allocation2 + $0x28] sm:$0xff]
        %v313 = vld [vmem:[#allocation2 + $0x30] sm:$0xff]
        %v314 = vld [vmem:[#allocation2 + $0x38] sm:$0xff]
        %v315 = vld [vmem:[#allocation2 + $0x40] sm:$0xff]
        %v316 = vld [vmem:[#allocation2 + $0x48] sm:$0xff]
        %v317 = vld [vmem:[#allocation2 + $0x50] sm:$0xff]
        %v318 = vld [vmem:[#allocation2 + $0x58] sm:$0xff]
        %v319 = vld [vmem:[#allocation2 + $0x60] sm:$0xff]
        %v320 = vld [vmem:[#allocation2 + $0x68] sm:$0xff]
        %v321 = vld [vmem:[#allocation2 + $0x70] sm:$0xff]
        %v322 = vld [vmem:[#allocation2 + $0x78] sm:$0xff]
        %v323 = vld [vmem:[#allocation2 + $0x80] sm:$0xff]
        %v324 = vld [vmem:[#allocation2 + $0x88] sm:$0xff]
        %v325 = vld [vmem:[#allocation2 + $0x90] sm:$0xff]
        %v326 = vld [vmem:[#allocation2 + $0x98] sm:$0xff]
        %v327 = vld [vmem:[#allocation2 + $0xa0] sm:$0xff]
        %v328 = vld [vmem:[#allocation2 + $0xa8] sm:$0xff]
        %v329 = vld [vmem:[#allocation2 + $0xb0] sm:$0xff]
        %v330 = vld [vmem:[#allocation2 + $0xb8] sm:$0xff]
        %v331 = vld [vmem:[#allocation2 + $0xc0] sm:$0xff]
        %v332 = vld [vmem:[#allocation2 + $0xc8] sm:$0xff]
        %v333 = vld [vmem:[#allocation2 + $0xd0] sm:$0xff]
        %v334 = vld [vmem:[#allocation2 + $0xd8] sm:$0xff]
        %v335 = vld [vmem:[#allocation2 + $0xe0] sm:$0xff]
        %v336 = vld [vmem:[#allocation2 + $0xe8] sm:$0xff]
        %v337 = vld [vmem:[#allocation2 + $0xf0] sm:$0xff]
        %v338 = vld [vmem:[#allocation2 + $0xf8] sm:$0xff]
        %v339 = vld [vmem:[#allocation2 + $0x100] sm:$0xff]
        %v340 = vld [vmem:[#allocation2 + $0x108] sm:$0xff]
        %v341 = vld [vmem:[#allocation2 + $0x110] sm:$0xff]
        %v342 = vld [vmem:[#allocation2 + $0x118] sm:$0xff]
        %v343 = vld [vmem:[#allocation2 + $0x1] sm:$0xff]
        %v344 = vld [vmem:[#allocation2 + $0x9] sm:$0xff]
        %v345 = vld [vmem:[#allocation2 + $0x11] sm:$0xff]
        %v346 = vld [vmem:[#allocation2 + $0x19] sm:$0xff]
        %v347 = vld [vmem:[#allocation2 + $0x21] sm:$0xff]
        %v348 = vld [vmem:[#allocation2 + $0x29] sm:$0xff]
        %v349 = vld [vmem:[#allocation2 + $0x31] sm:$0xff]
        %v350 = vld [vmem:[#allocation2 + $0x39] sm:$0xff]
        %v351 = vld [vmem:[#allocation2 + $0x41] sm:$0xff]
        %v352 = vld [vmem:[#allocation2 + $0x49] sm:$0xff]
        %v353 = vld [vmem:[#allocation2 + $0x51] sm:$0xff]
        %v354 = vld [vmem:[#allocation2 + $0x59] sm:$0xff]
        %v355 = vld [vmem:[#allocation2 + $0x61] sm:$0xff]
        %v356 = vld [vmem:[#allocation2 + $0x69] sm:$0xff]
        %v357 = vld [vmem:[#allocation2 + $0x71] sm:$0xff]
        %v358 = vld [vmem:[#allocation2 + $0x79] sm:$0xff]
        %v359 = vld [vmem:[#allocation2 + $0x81] sm:$0xff]
        %v360 = vld [vmem:[#allocation2 + $0x89] sm:$0xff]
        %v361 = vld [vmem:[#allocation2 + $0x91] sm:$0xff]
        %v362 = vld [vmem:[#allocation2 + $0x99] sm:$0xff]
        %v363 = vld [vmem:[#allocation2 + $0xa1] sm:$0xff]
        %v364 = vld [vmem:[#allocation2 + $0xa9] sm:$0xff]
        %v365 = vld [vmem:[#allocation2 + $0xb1] sm:$0xff]
        %v366 = vld [vmem:[#allocation2 + $0xb9] sm:$0xff]
        %v367 = vld [vmem:[#allocation2 + $0xc1] sm:$0xff]
        %v368 = vld [vmem:[#allocation2 + $0xc9] sm:$0xff]
        %v369 = vld [vmem:[#allocation2 + $0xd1] sm:$0xff]
        %v370 = vld [vmem:[#allocation2 + $0xd9] sm:$0xff]
        %v371 = vld [vmem:[#allocation2 + $0xe1] sm:$0xff]
        %v372 = vld [vmem:[#allocation2 + $0xe9] sm:$0xff]
        %v373 = vld [vmem:[#allocation2 + $0xf1] sm:$0xff]
        %v374 = vld [vmem:[#allocation2 + $0xf9] sm:$0xff]
        %v375 = vld [vmem:[#allocation2 + $0x101] sm:$0xff]
        %v376 = vld [vmem:[#allocation2 + $0x109] sm:$0xff]
        %v377 = vld [vmem:[#allocation2 + $0x111] sm:$0xff]
        %v378 = vld [vmem:[#allocation2 + $0x119] sm:$0xff]
        %v379 = vld [vmem:[#allocation2 + $0x12] sm:$0xff]
        %v380 = vld [vmem:[#allocation2 + $0x1a] sm:$0xff]
        %v381 = vld [vmem:[#allocation2 + $0x22] sm:$0xff]
        %v382 = vld [vmem:[#allocation2 + $0x2a] sm:$0xff]
        %v383 = vld [vmem:[#allocation2 + $0x32] sm:$0xff]
        %v384 = vld [vmem:[#allocation2 + $0x3a] sm:$0xff]
        %v385 = vld [vmem:[#allocation2 + $0x42] sm:$0xff]
        %v386 = vld [vmem:[#allocation2 + $0x4a] sm:$0xff]
        %v387 = vld [vmem:[#allocation2 + $0x52] sm:$0xff]
        %v388 = vld [vmem:[#allocation2 + $0x5a] sm:$0xff]
        %v389 = vld [vmem:[#allocation2 + $0x62] sm:$0xff]
        %v390 = vld [vmem:[#allocation2 + $0x6a] sm:$0xff]
        %v391 = vld [vmem:[#allocation2 + $0x72] sm:$0xff]
        %v392 = vld [vmem:[#allocation2 + $0x7a] sm:$0xff]
        %v393 = vld [vmem:[#allocation2 + $0x82] sm:$0xff]
        %v394 = vld [vmem:[#allocation2 + $0x8a] sm:$0xff]
        %v395 = vld [vmem:[#allocation2 + $0x92] sm:$0xff]
        %v396 = vld [vmem:[#allocation2 + $0x9a] sm:$0xff]
        %v397 = vld [vmem:[#allocation2 + $0xa2] sm:$0xff]
        %v398 = vld [vmem:[#allocation2 + $0xaa] sm:$0xff]
        %v399 = vld [vmem:[#allocation2 + $0xb2] sm:$0xff]
        %v400 = vld [vmem:[#allocation2 + $0xba] sm:$0xff]
        %v401 = vld [vmem:[#allocation2 + $0xc2] sm:$0xff]
        %v402 = vld [vmem:[#allocation2 + $0xca] sm:$0xff]
        %v403 = vld [vmem:[#allocation2 + $0xd2] sm:$0xff]
        %v404 = vld [vmem:[#allocation2 + $0xda] sm:$0xff]
        %v405 = vld [vmem:[#allocation2 + $0xe2] sm:$0xff]
        %v406 = vld [vmem:[#allocation2 + $0xea] sm:$0xff]
        %v407 = vld [vmem:[#allocation2 + $0xf2] sm:$0xff]
        %v408 = vld [vmem:[#allocation2 + $0xfa] sm:$0xff]
        %v409 = vld [vmem:[#allocation2 + $0x102] sm:$0xff]
        %v410 = vld [vmem:[#allocation2 + $0x10a] sm:$0xff]
        %v411 = vld [vmem:[#allocation2 + $0x112] sm:$0xff]
        %v412 = vld [vmem:[#allocation2 + $0x11a] sm:$0xff]
        %v413 = vld [vmem:[#allocation2 + $0x122] sm:$0xff]
        %v414 = vld [vmem:[#allocation2 + $0x12a] sm:$0xff]
        %v415 = vld [vmem:[#allocation2 + $0x13] sm:$0xff]
        %v416 = vld [vmem:[#allocation2 + $0x1b] sm:$0xff]
        %v417 = vld [vmem:[#allocation2 + $0x23] sm:$0xff]
        %v418 = vld [vmem:[#allocation2 + $0x2b] sm:$0xff]
        %v419 = vld [vmem:[#allocation2 + $0x33] sm:$0xff]
        %v420 = vld [vmem:[#allocation2 + $0x3b] sm:$0xff]
        %v421 = vld [vmem:[#allocation2 + $0x43] sm:$0xff]
        %v422 = vld [vmem:[#allocation2 + $0x4b] sm:$0xff]
        %v423 = vld [vmem:[#allocation2 + $0x53] sm:$0xff]
        %v424 = vld [vmem:[#allocation2 + $0x5b] sm:$0xff]
        %v425 = vld [vmem:[#allocation2 + $0x63] sm:$0xff]
        %v426 = vld [vmem:[#allocation2 + $0x6b] sm:$0xff]
        %v427 = vld [vmem:[#allocation2 + $0x73] sm:$0xff]
        %v428 = vld [vmem:[#allocation2 + $0x7b] sm:$0xff]
        %v429 = vld [vmem:[#allocation2 + $0x83] sm:$0xff]
        %v430 = vld [vmem:[#allocation2 + $0x8b] sm:$0xff]
        %v431 = vld [vmem:[#allocation2 + $0x93] sm:$0xff]
        %v432 = vld [vmem:[#allocation2 + $0x9b] sm:$0xff]
        %v433 = vld [vmem:[#allocation2 + $0xa3] sm:$0xff]
        %v434 = vld [vmem:[#allocation2 + $0xab] sm:$0xff]
        %v435 = vld [vmem:[#allocation2 + $0xb3] sm:$0xff]
        %v436 = vld [vmem:[#allocation2 + $0xbb] sm:$0xff]
        %v437 = vld [vmem:[#allocation2 + $0xc3] sm:$0xff]
        %v438 = vld [vmem:[#allocation2 + $0xcb] sm:$0xff]
        %v439 = vld [vmem:[#allocation2 + $0xd3] sm:$0xff]
        %v440 = vld [vmem:[#allocation2 + $0xdb] sm:$0xff]
        %v441 = vld [vmem:[#allocation2 + $0xe3] sm:$0xff]
        %v442 = vld [vmem:[#allocation2 + $0xeb] sm:$0xff]
        %v443 = vld [vmem:[#allocation2 + $0xf3] sm:$0xff]
        %v444 = vld [vmem:[#allocation2 + $0xfb] sm:$0xff]
        %v445 = vld [vmem:[#allocation2 + $0x103] sm:$0xff]
        %v446 = vld [vmem:[#allocation2 + $0x10b] sm:$0xff]
        %v447 = vld [vmem:[#allocation2 + $0x113] sm:$0xff]
        %v448 = vld [vmem:[#allocation2 + $0x11b] sm:$0xff]
        %v449 = vld [vmem:[#allocation2 + $0x123] sm:$0xff]
        %v450 = vld [vmem:[#allocation2 + $0x12b] sm:$0xff]
        %v451 = vld [vmem:[#allocation4] sm:$0xff]
        %v452 = vld [vmem:[#allocation4 + $0x8] sm:$0xff]
        %v453 = vld [vmem:[#allocation4 + $0x10] sm:$0xff]
        %v454 = vld [vmem:[#allocation4 + $0x18] sm:$0xff]
        %v455 = vld [vmem:[#allocation4 + $0x20] sm:$0xff]
        %v456 = vld [vmem:[#allocation4 + $0x28] sm:$0xff]
        %v457 = vld [vmem:[#allocation4 + $0x30] sm:$0xff]
        %v458 = vld [vmem:[#allocation4 + $0x38] sm:$0xff]
        %v459 = vld [vmem:[#allocation4 + $0x40] sm:$0xff]
        %v460 = vld [vmem:[#allocation4 + $0x48] sm:$0xff]
        %v461 = vld [vmem:[#allocation4 + $0x50] sm:$0xff]
        %v462 = vld [vmem:[#allocation4 + $0x58] sm:$0xff]
        %v463 = vld [vmem:[#allocation4 + $0x60] sm:$0xff]
        %v464 = vld [vmem:[#allocation4 + $0x68] sm:$0xff]
        %v465 = vld [vmem:[#allocation4 + $0x70] sm:$0xff]
        %v466 = vld [vmem:[#allocation4 + $0x78] sm:$0xff]
        %v467 = vld [vmem:[#allocation4 + $0x80] sm:$0xff]
        %v468 = vld [vmem:[#allocation4 + $0x88] sm:$0xff]
        %v469 = vld [vmem:[#allocation4 + $0x90] sm:$0xff]
        %v470 = vld [vmem:[#allocation4 + $0x98] sm:$0xff]
        %v471 = vld [vmem:[#allocation4 + $0xa0] sm:$0xff]
        %v472 = vld [vmem:[#allocation4 + $0xa8] sm:$0xff]
        %v473 = vld [vmem:[#allocation4 + $0xb0] sm:$0xff]
        %v474 = vld [vmem:[#allocation4 + $0xb8] sm:$0xff]
        %v475 = vld [vmem:[#allocation4 + $0xc0] sm:$0xff]
        %v476 = vld [vmem:[#allocation4 + $0xc8] sm:$0xff]
        %v477 = vld [vmem:[#allocation4 + $0xd0] sm:$0xff]
        %v478 = vld [vmem:[#allocation4 + $0xd8] sm:$0xff]
        %v479 = vld [vmem:[#allocation4 + $0xe0] sm:$0xff]
        %v480 = vld [vmem:[#allocation4 + $0xe8] sm:$0xff]
        %v481 = vld [vmem:[#allocation4 + $0xf0] sm:$0xff]
        %v482 = vld [vmem:[#allocation4 + $0xf8] sm:$0xff]
        %v483 = vld [vmem:[#allocation4 + $0x100] sm:$0xff]
        %v484 = vld [vmem:[#allocation4 + $0x108] sm:$0xff]
        %v485 = vld [vmem:[#allocation4 + $0x110] sm:$0xff]
        %v486 = vld [vmem:[#allocation4 + $0x118] sm:$0xff]
        %v487 = vld [vmem:[#allocation4 + $0x120] sm:$0xff]
        %v488 = vld [vmem:[#allocation4 + $0x128] sm:$0xff]
        %v489 = vld [vmem:[#allocation4 + $0x130] sm:$0xff]
        %v490 = vld [vmem:[#allocation4 + $0x138] sm:$0xff]
        %v491 = vld [vmem:[#allocation4 + $0x140] sm:$0xff]
        %v492 = vld [vmem:[#allocation4 + $0x148] sm:$0xff]
        %v493 = vld [vmem:[#allocation4 + $0x150] sm:$0xff]
        %v494 = vld [vmem:[#allocation4 + $0x158] sm:$0xff]
        %v495 = vld [vmem:[#allocation4 + $0x160] sm:$0xff]
        %v496 = vld [vmem:[#allocation4 + $0x168] sm:$0xff]
        %v497 = vld [vmem:[#allocation4 + $0x170] sm:$0xff]
        %v498 = vld [vmem:[#allocation4 + $0x178] sm:$0xff]
        %v499 = vld [vmem:[#allocation4 + $0x180] sm:$0xff]
        %v500 = vld [vmem:[#allocation4 + $0x188] sm:$0xff]
        %v501 = vld [vmem:[#allocation4 + $0x190] sm:$0xff]
        %v502 = vld [vmem:[#allocation4 + $0x198] sm:$0xff]
        %v503 = vld [vmem:[#allocation4 + $0x1a0] sm:$0xff]
        %v504 = vld [vmem:[#allocation4 + $0x1a8] sm:$0xff]
        %v505 = vld [vmem:[#allocation4 + $0x1b0] sm:$0xff]
        %v506 = vld [vmem:[#allocation4 + $0x1b8] sm:$0xff]
        %v507 = vld [vmem:[#allocation4 + $0x1c0] sm:$0xff]
        %v508 = vld [vmem:[#allocation4 + $0x1c8] sm:$0xff]
        %v509 = vld [vmem:[#allocation4 + $0x1d0] sm:$0xff]
        %v510 = vld [vmem:[#allocation4 + $0x1d8] sm:$0xff]
        %v511 = vld [vmem:[#allocation4 + $0x1e0] sm:$0xff]
        %v512 = vld [vmem:[#allocation4 + $0x1e8] sm:$0xff]
        %v513 = vld [vmem:[#allocation4 + $0x1f0] sm:$0xff]
        %v514 = vld [vmem:[#allocation4 + $0x1f8] sm:$0xff]
        %v516 = vlaneseq
        %v517 = vshrl.u32 %v516, 7
        %v518 = vsub.s32 0, %v517
        %v519 = vrot.slane %v306, %v518
        %521 = vmatprep.subr.mxu0 0.0
        %522 = vmatpush1.msra.mxu0 %v466
        %523 = vmatprep.subr.mxu0 0.0
        %524 = vmatpush1.msra.mxu0 %v465
        %525 = vmatprep.subr.mxu0 0.0
        %526 = vmatpush1.msra.mxu0 %v464
        %527 = vmatprep.subr.mxu0 0.0
        %528 = vmatpush1.msra.mxu0 %v463
        %529 = vmatprep.subr.mxu0 0.0
        %530 = vmatpush1.msra.mxu0 %v462
        %531 = vmatprep.subr.mxu0 0.0
        %532 = vmatpush1.msra.mxu0 %v461
        %533 = vmatprep.subr.mxu0 0.0
        %534 = vmatpush1.msra.mxu0 %v460
        %535 = vmatprep.subr.mxu0 0.0
        %536 = vmatpush1.msra.mxu0 %v459
        %537 = vmatprep.subr.mxu0 0.0
        %538 = vmatpush1.msra.mxu0 %v458
        %539 = vmatprep.subr.mxu0 0.0
        %540 = vmatpush1.msra.mxu0 %v457
        %541 = vmatprep.subr.mxu0 0.0
        %542 = vmatpush1.msra.mxu0 %v456
        %543 = vmatprep.subr.mxu0 0.0
        %544 = vmatpush1.msra.mxu0 %v455
        %545 = vmatprep.subr.mxu0 0.0
        %546 = vmatpush1.msra.mxu0 %v454
        %547 = vmatprep.subr.mxu0 0.0
        %548 = vmatpush1.msra.mxu0 %v453
        %549 = vmatprep.subr.mxu0 0.0
        %550 = vmatpush1.msra.mxu0 %v452
        %551 = vmatprep.subr.mxu0 0.0
        %552 = vmatpush1.msra.mxu0 %v451
        %553 = vmatprep.subr.mxu0 0.0
        %554 = vmatpush2.msra.mxu0 %v482
        %555 = vmatprep.subr.mxu0 0.0
        %556 = vmatpush2.msra.mxu0 %v481
        %557 = vmatprep.subr.mxu0 0.0
        %558 = vmatpush2.msra.mxu0 %v480
        %559 = vmatprep.subr.mxu0 0.0
        %560 = vmatpush2.msra.mxu0 %v479
        %561 = vmatprep.subr.mxu0 0.0
        %562 = vmatpush2.msra.mxu0 %v478
        %563 = vmatprep.subr.mxu0 0.0
        %564 = vmatpush2.msra.mxu0 %v477
        %565 = vmatprep.subr.mxu0 0.0
        %566 = vmatpush2.msra.mxu0 %v476
        %567 = vmatprep.subr.mxu0 0.0
        %568 = vmatpush2.msra.mxu0 %v475
        %569 = vmatprep.subr.mxu0 0.0
        %570 = vmatpush2.msra.mxu0 %v474
        %571 = vmatprep.subr.mxu0 0.0
        %572 = vmatpush2.msra.mxu0 %v473
        %573 = vmatprep.subr.mxu0 0.0
        %574 = vmatpush2.msra.mxu0 %v472
        %575 = vmatprep.subr.mxu0 0.0
        %576 = vmatpush2.msra.mxu0 %v471
        %577 = vmatprep.subr.mxu0 0.0
        %578 = vmatpush2.msra.mxu0 %v470
        %579 = vmatprep.subr.mxu0 0.0
        %580 = vmatpush2.msra.mxu0 %v469
        %581 = vmatprep.subr.mxu0 0.0
        %582 = vmatpush2.msra.mxu0 %v468
        %583 = vmatprep.subr.mxu0 0.0
        %584 = vmatpush2.msra.mxu0 %v467
        %585 = vmatprep.mubr.f32.mxu0 %v343
        %586 = vmatmul.mubr.f32.gmra.mxu0 %v307
        %v587 = vpop.f32.mrf.mxu0
        %v588 = vadd.f32 %v519, %v587
        %v589 = vpop.f32.mrf.mxu0
        %590 = vmatprep.mubr.f32.mxu0 %v344
        %591 = vmatmul.mubr.f32.gmra.mxu0 %v308
        %v592 = vpop.f32.mrf.mxu0
        %v593 = vadd.f32 %v519, %v592
        %v594 = vpop.f32.mrf.mxu0
        %595 = vmatprep.mubr.f32.mxu0 %v345
        %596 = vmatmul.mubr.f32.gmra.mxu0 %v309
        %v597 = vpop.f32.mrf.mxu0
        %v598 = vadd.f32 %v519, %v597
        %v599 = vpop.f32.mrf.mxu0
        %600 = vmatprep.mubr.f32.mxu0 %v346
        %601 = vmatmul.mubr.f32.gmra.mxu0 %v310
        %v602 = vpop.f32.mrf.mxu0
        %v603 = vadd.f32 %v519, %v602
        %v604 = vpop.f32.mrf.mxu0
        %605 = vmatprep.mubr.f32.mxu0 %v347
        %606 = vmatmul.mubr.f32.gmra.mxu0 %v311
        %v607 = vpop.f32.mrf.mxu0
        %v608 = vadd.f32 %v519, %v607
        %v609 = vpop.f32.mrf.mxu0
        %610 = vmatprep.mubr.f32.mxu0 %v348
        %611 = vmatmul.mubr.f32.gmra.mxu0 %v312
        %v612 = vpop.f32.mrf.mxu0
        %v613 = vadd.f32 %v519, %v612
        %v614 = vpop.f32.mrf.mxu0
        %615 = vmatprep.mubr.f32.mxu0 %v349
        %616 = vmatmul.mubr.f32.gmra.mxu0 %v313
        %v617 = vpop.f32.mrf.mxu0
        %v618 = vadd.f32 %v519, %v617
        %v619 = vpop.f32.mrf.mxu0
        %620 = vmatprep.mubr.f32.mxu0 %v350
        %621 = vmatmul.mubr.f32.gmra.mxu0 %v314
        %v622 = vpop.f32.mrf.mxu0
        %v623 = vadd.f32 %v519, %v622
        %v624 = vpop.f32.mrf.mxu0
        %625 = vmatprep.mubr.f32.mxu0 %v351
        %626 = vmatmul.mubr.f32.gmra.mxu0 %v315
        %v627 = vpop.f32.mrf.mxu0
        %v628 = vadd.f32 %v519, %v627
        %v629 = vpop.f32.mrf.mxu0
        %630 = vmatprep.mubr.f32.mxu0 %v352
        %631 = vmatmul.mubr.f32.gmra.mxu0 %v316
        %v632 = vpop.f32.mrf.mxu0
        %v633 = vadd.f32 %v519, %v632
        %v634 = vpop.f32.mrf.mxu0
        %635 = vmatprep.mubr.f32.mxu0 %v353
        %636 = vmatmul.mubr.f32.gmra.mxu0 %v317
        %v637 = vpop.f32.mrf.mxu0
        %v638 = vadd.f32 %v519, %v637
        %v639 = vpop.f32.mrf.mxu0
        %640 = vmatprep.mubr.f32.mxu0 %v354
        %641 = vmatmul.mubr.f32.gmra.mxu0 %v318
        %v642 = vpop.f32.mrf.mxu0
        %v643 = vadd.f32 %v519, %v642
        %v644 = vpop.f32.mrf.mxu0
        %645 = vmatprep.mubr.f32.mxu0 %v355
        %646 = vmatmul.mubr.f32.gmra.mxu0 %v319
        %v647 = vpop.f32.mrf.mxu0
        %v648 = vadd.f32 %v519, %v647
        %v649 = vpop.f32.mrf.mxu0
        %650 = vmatprep.mubr.f32.mxu0 %v356
        %651 = vmatmul.mubr.f32.gmra.mxu0 %v320
        %v652 = vpop.f32.mrf.mxu0
        %v653 = vadd.f32 %v519, %v652
        %v654 = vpop.f32.mrf.mxu0
        %655 = vmatprep.mubr.f32.mxu0 %v357
        %656 = vmatmul.mubr.f32.gmra.mxu0 %v321
        %v657 = vpop.f32.mrf.mxu0
        %v658 = vadd.f32 %v519, %v657
        %v659 = vpop.f32.mrf.mxu0
        %660 = vmatprep.mubr.f32.mxu0 %v358
        %661 = vmatmul.mubr.f32.gmra.mxu0 %v322
        %v662 = vpop.f32.mrf.mxu0
        %v663 = vadd.f32 %v519, %v662
        %v664 = vpop.f32.mrf.mxu0
        %665 = vmatprep.mubr.f32.mxu0 %v359
        %666 = vmatmul.mubr.f32.gmra.mxu0 %v323
        %v667 = vpop.f32.mrf.mxu0
        %v668 = vadd.f32 %v519, %v667
        %v669 = vpop.f32.mrf.mxu0
        %670 = vmatprep.mubr.f32.mxu0 %v360
        %671 = vmatmul.mubr.f32.gmra.mxu0 %v324
        %v672 = vpop.f32.mrf.mxu0
        %v673 = vadd.f32 %v519, %v672
        %v674 = vpop.f32.mrf.mxu0
        %675 = vmatprep.mubr.f32.mxu0 %v361
        %676 = vmatmul.mubr.f32.gmra.mxu0 %v325
        %v677 = vpop.f32.mrf.mxu0
        %v678 = vadd.f32 %v519, %v677
        %v679 = vpop.f32.mrf.mxu0
        %680 = vmatprep.mubr.f32.mxu0 %v362
        %681 = vmatmul.mubr.f32.gmra.mxu0 %v326
        %v682 = vpop.f32.mrf.mxu0
        %v683 = vadd.f32 %v519, %v682
        %v684 = vpop.f32.mrf.mxu0
        %685 = vmatprep.mubr.f32.mxu0 %v363
        %686 = vmatmul.mubr.f32.gmra.mxu0 %v327
        %v687 = vpop.f32.mrf.mxu0
        %v688 = vadd.f32 %v519, %v687
        %v689 = vpop.f32.mrf.mxu0
        %690 = vmatprep.mubr.f32.mxu0 %v364
        %691 = vmatmul.mubr.f32.gmra.mxu0 %v328
        %v692 = vpop.f32.mrf.mxu0
        %v693 = vadd.f32 %v519, %v692
        %v694 = vpop.f32.mrf.mxu0
        %695 = vmatprep.mubr.f32.mxu0 %v365
        %696 = vmatmul.mubr.f32.gmra.mxu0 %v329
        %v697 = vpop.f32.mrf.mxu0
        %v698 = vadd.f32 %v519, %v697
        %v699 = vpop.f32.mrf.mxu0
        %700 = vmatprep.mubr.f32.mxu0 %v366
        %701 = vmatmul.mubr.f32.gmra.mxu0 %v330
        %v702 = vpop.f32.mrf.mxu0
        %v703 = vadd.f32 %v519, %v702
        %v704 = vpop.f32.mrf.mxu0
        %705 = vmatprep.mubr.f32.mxu0 %v367
        %706 = vmatmul.mubr.f32.gmra.mxu0 %v331
        %v707 = vpop.f32.mrf.mxu0
        %v708 = vadd.f32 %v519, %v707
        %v709 = vpop.f32.mrf.mxu0
        %710 = vmatprep.mubr.f32.mxu0 %v368
        %711 = vmatmul.mubr.f32.gmra.mxu0 %v332
        %v712 = vpop.f32.mrf.mxu0
        %v713 = vadd.f32 %v519, %v712
        %v714 = vpop.f32.mrf.mxu0
        %715 = vmatprep.mubr.f32.mxu0 %v369
        %716 = vmatmul.mubr.f32.gmra.mxu0 %v333
        %v717 = vpop.f32.mrf.mxu0
        %v718 = vadd.f32 %v519, %v717
        %v719 = vpop.f32.mrf.mxu0
        %720 = vmatprep.mubr.f32.mxu0 %v370
        %721 = vmatmul.mubr.f32.gmra.mxu0 %v334
        %v722 = vpop.f32.mrf.mxu0
        %v723 = vadd.f32 %v519, %v722
        %v724 = vpop.f32.mrf.mxu0
        %725 = vmatprep.mubr.f32.mxu0 %v371
        %726 = vmatmul.mubr.f32.gmra.mxu0 %v335
        %v727 = vpop.f32.mrf.mxu0
        %v728 = vadd.f32 %v519, %v727
        %v729 = vpop.f32.mrf.mxu0
        %730 = vmatprep.mubr.f32.mxu0 %v372
        %731 = vmatmul.mubr.f32.gmra.mxu0 %v336
        %v732 = vpop.f32.mrf.mxu0
        %v733 = vadd.f32 %v519, %v732
        %v734 = vpop.f32.mrf.mxu0
        %735 = vmatprep.mubr.f32.mxu0 %v373
        %736 = vmatmul.mubr.f32.gmra.mxu0 %v337
        %v737 = vpop.f32.mrf.mxu0
        %v738 = vadd.f32 %v519, %v737
        %v739 = vpop.f32.mrf.mxu0
        %740 = vmatprep.mubr.f32.mxu0 %v374
        %741 = vmatmul.mubr.f32.gmra.mxu0 %v338
        %v742 = vpop.f32.mrf.mxu0
        %v743 = vadd.f32 %v519, %v742
        %v744 = vpop.f32.mrf.mxu0
        %745 = vmatprep.mubr.f32.mxu0 %v375
        %746 = vmatmul.mubr.f32.gmra.mxu0 %v339
        %v747 = vpop.f32.mrf.mxu0
        %v748 = vadd.f32 %v519, %v747
        %v749 = vpop.f32.mrf.mxu0
        %750 = vmatprep.mubr.f32.mxu0 %v376
        %751 = vmatmul.mubr.f32.gmra.mxu0 %v340
        %v752 = vpop.f32.mrf.mxu0
        %v753 = vadd.f32 %v519, %v752
        %v754 = vpop.f32.mrf.mxu0
        %755 = vmatprep.mubr.f32.mxu0 %v377
        %756 = vmatmul.mubr.f32.gmra.mxu0 %v341
        %v757 = vpop.f32.mrf.mxu0
        %v758 = vadd.f32 %v519, %v757
        %v759 = vpop.f32.mrf.mxu0
        %760 = vmatprep.mubr.f32.mxu0 %v378
        %761 = vmatmul.mubr.f32.gmra.mxu0 %v342
        %v762 = vpop.f32.mrf.mxu0
        %v763 = vadd.f32 %v519, %v762
        %v764 = vpop.f32.mrf.mxu0
        %765 = vdwg.mxu0
        %766 = vmatprep.subr.mxu0 0.0
        %767 = vmatpush1.msra.mxu0 %v498
        %768 = vmatprep.subr.mxu0 0.0
        %769 = vmatpush1.msra.mxu0 %v497
        %770 = vmatprep.subr.mxu0 0.0
        %771 = vmatpush1.msra.mxu0 %v496
        %772 = vmatprep.subr.mxu0 0.0
        %773 = vmatpush1.msra.mxu0 %v495
        %774 = vmatprep.subr.mxu0 0.0
        %775 = vmatpush1.msra.mxu0 %v494
        %776 = vmatprep.subr.mxu0 0.0
        %777 = vmatpush1.msra.mxu0 %v493
        %778 = vmatprep.subr.mxu0 0.0
        %779 = vmatpush1.msra.mxu0 %v492
        %780 = vmatprep.subr.mxu0 0.0
        %781 = vmatpush1.msra.mxu0 %v491
        %782 = vmatprep.subr.mxu0 0.0
        %783 = vmatpush1.msra.mxu0 %v490
        %784 = vmatprep.subr.mxu0 0.0
        %785 = vmatpush1.msra.mxu0 %v489
        %786 = vmatprep.subr.mxu0 0.0
        %787 = vmatpush1.msra.mxu0 %v488
        %788 = vmatprep.subr.mxu0 0.0
        %789 = vmatpush1.msra.mxu0 %v487
        %790 = vmatprep.subr.mxu0 0.0
        %791 = vmatpush1.msra.mxu0 %v486
        %792 = vmatprep.subr.mxu0 0.0
        %793 = vmatpush1.msra.mxu0 %v485
        %794 = vmatprep.subr.mxu0 0.0
        %795 = vmatpush1.msra.mxu0 %v484
        %796 = vmatprep.subr.mxu0 0.0
        %797 = vmatpush1.msra.mxu0 %v483
        %798 = vmatprep.subr.mxu0 0.0
        %799 = vmatpush2.msra.mxu0 %v514
        %800 = vmatprep.subr.mxu0 0.0
        %801 = vmatpush2.msra.mxu0 %v513
        %802 = vmatprep.subr.mxu0 0.0
        %803 = vmatpush2.msra.mxu0 %v512
        %804 = vmatprep.subr.mxu0 0.0
        %805 = vmatpush2.msra.mxu0 %v511
        %806 = vmatprep.subr.mxu0 0.0
        %807 = vmatpush2.msra.mxu0 %v510
        %808 = vmatprep.subr.mxu0 0.0
        %809 = vmatpush2.msra.mxu0 %v509
        %810 = vmatprep.subr.mxu0 0.0
        %811 = vmatpush2.msra.mxu0 %v508
        %812 = vmatprep.subr.mxu0 0.0
        %813 = vmatpush2.msra.mxu0 %v507
        %814 = vmatprep.subr.mxu0 0.0
        %815 = vmatpush2.msra.mxu0 %v506
        %816 = vmatprep.subr.mxu0 0.0
        %817 = vmatpush2.msra.mxu0 %v505
        %818 = vmatprep.subr.mxu0 0.0
        %819 = vmatpush2.msra.mxu0 %v504
        %820 = vmatprep.subr.mxu0 0.0
        %821 = vmatpush2.msra.mxu0 %v503
        %822 = vmatprep.subr.mxu0 0.0
        %823 = vmatpush2.msra.mxu0 %v502
        %824 = vmatprep.subr.mxu0 0.0
        %825 = vmatpush2.msra.mxu0 %v501
        %826 = vmatprep.subr.mxu0 0.0
        %827 = vmatpush2.msra.mxu0 %v500
        %828 = vmatprep.subr.mxu0 0.0
        %829 = vmatpush2.msra.mxu0 %v499
        %830 = vmatprep.mubr.f32.mxu0 %v415
        %831 = vmatmul.mubr.f32.gmra.mxu0 %v379
        %v832 = vpop.f32.mrf.mxu0
        %v833 = vadd.f32 %v588, %v832
        %v834 = vpop.f32.mrf.mxu0
        %835 = vmatprep.mubr.f32.mxu0 %v416
        %836 = vmatmul.mubr.f32.gmra.mxu0 %v380
        %v837 = vpop.f32.mrf.mxu0
        %v838 = vadd.f32 %v593, %v837
        %v839 = vpop.f32.mrf.mxu0
        %840 = vmatprep.mubr.f32.mxu0 %v417
        %841 = vmatmul.mubr.f32.gmra.mxu0 %v381
        %v842 = vpop.f32.mrf.mxu0
        %v843 = vadd.f32 %v598, %v842
        %v844 = vpop.f32.mrf.mxu0
        %845 = vmatprep.mubr.f32.mxu0 %v418
        %846 = vmatmul.mubr.f32.gmra.mxu0 %v382
        %v847 = vpop.f32.mrf.mxu0
        %v848 = vadd.f32 %v603, %v847
        %v849 = vpop.f32.mrf.mxu0
        %850 = vmatprep.mubr.f32.mxu0 %v419
        %851 = vmatmul.mubr.f32.gmra.mxu0 %v383
        %v852 = vpop.f32.mrf.mxu0
        %v853 = vadd.f32 %v608, %v852
        %v854 = vpop.f32.mrf.mxu0
        %855 = vmatprep.mubr.f32.mxu0 %v420
        %856 = vmatmul.mubr.f32.gmra.mxu0 %v384
        %v857 = vpop.f32.mrf.mxu0
        %v858 = vadd.f32 %v613, %v857
        %v859 = vpop.f32.mrf.mxu0
        %860 = vmatprep.mubr.f32.mxu0 %v421
        %861 = vmatmul.mubr.f32.gmra.mxu0 %v385
        %v862 = vpop.f32.mrf.mxu0
        %v863 = vadd.f32 %v618, %v862
        %v864 = vpop.f32.mrf.mxu0
        %865 = vmatprep.mubr.f32.mxu0 %v422
        %866 = vmatmul.mubr.f32.gmra.mxu0 %v386
        %v867 = vpop.f32.mrf.mxu0
        %v868 = vadd.f32 %v623, %v867
        %v869 = vpop.f32.mrf.mxu0
        %870 = vmatprep.mubr.f32.mxu0 %v423
        %871 = vmatmul.mubr.f32.gmra.mxu0 %v387
        %v872 = vpop.f32.mrf.mxu0
        %v873 = vadd.f32 %v628, %v872
        %v874 = vpop.f32.mrf.mxu0
        %875 = vmatprep.mubr.f32.mxu0 %v424
        %876 = vmatmul.mubr.f32.gmra.mxu0 %v388
        %v877 = vpop.f32.mrf.mxu0
        %v878 = vadd.f32 %v633, %v877
        %v879 = vpop.f32.mrf.mxu0
        %880 = vmatprep.mubr.f32.mxu0 %v425
        %881 = vmatmul.mubr.f32.gmra.mxu0 %v389
        %v882 = vpop.f32.mrf.mxu0
        %v883 = vadd.f32 %v638, %v882
        %v884 = vpop.f32.mrf.mxu0
        %885 = vmatprep.mubr.f32.mxu0 %v426
        %886 = vmatmul.mubr.f32.gmra.mxu0 %v390
        %v887 = vpop.f32.mrf.mxu0
        %v888 = vadd.f32 %v643, %v887
        %v889 = vpop.f32.mrf.mxu0
        %890 = vmatprep.mubr.f32.mxu0 %v427
        %891 = vmatmul.mubr.f32.gmra.mxu0 %v391
        %v892 = vpop.f32.mrf.mxu0
        %v893 = vadd.f32 %v648, %v892
        %v894 = vpop.f32.mrf.mxu0
        %895 = vmatprep.mubr.f32.mxu0 %v428
        %896 = vmatmul.mubr.f32.gmra.mxu0 %v392
        %v897 = vpop.f32.mrf.mxu0
        %v898 = vadd.f32 %v653, %v897
        %v899 = vpop.f32.mrf.mxu0
        %900 = vmatprep.mubr.f32.mxu0 %v429
        %901 = vmatmul.mubr.f32.gmra.mxu0 %v393
        %v902 = vpop.f32.mrf.mxu0
        %v903 = vadd.f32 %v658, %v902
        %v904 = vpop.f32.mrf.mxu0
        %905 = vmatprep.mubr.f32.mxu0 %v430
        %906 = vmatmul.mubr.f32.gmra.mxu0 %v394
        %v907 = vpop.f32.mrf.mxu0
        %v908 = vadd.f32 %v663, %v907
        %v909 = vpop.f32.mrf.mxu0
        %910 = vmatprep.mubr.f32.mxu0 %v431
        %911 = vmatmul.mubr.f32.gmra.mxu0 %v395
        %v912 = vpop.f32.mrf.mxu0
        %v913 = vadd.f32 %v668, %v912
        %v914 = vpop.f32.mrf.mxu0
        %915 = vmatprep.mubr.f32.mxu0 %v432
        %916 = vmatmul.mubr.f32.gmra.mxu0 %v396
        %v917 = vpop.f32.mrf.mxu0
        %v918 = vadd.f32 %v673, %v917
        %v919 = vpop.f32.mrf.mxu0
        %920 = vmatprep.mubr.f32.mxu0 %v433
        %921 = vmatmul.mubr.f32.gmra.mxu0 %v397
        %v922 = vpop.f32.mrf.mxu0
        %v923 = vadd.f32 %v678, %v922
        %v924 = vpop.f32.mrf.mxu0
        %925 = vmatprep.mubr.f32.mxu0 %v434
        %926 = vmatmul.mubr.f32.gmra.mxu0 %v398
        %v927 = vpop.f32.mrf.mxu0
        %v928 = vadd.f32 %v683, %v927
        %v929 = vpop.f32.mrf.mxu0
        %930 = vmatprep.mubr.f32.mxu0 %v435
        %931 = vmatmul.mubr.f32.gmra.mxu0 %v399
        %v932 = vpop.f32.mrf.mxu0
        %v933 = vadd.f32 %v688, %v932
        %v934 = vpop.f32.mrf.mxu0
        %935 = vmatprep.mubr.f32.mxu0 %v436
        %936 = vmatmul.mubr.f32.gmra.mxu0 %v400
        %v937 = vpop.f32.mrf.mxu0
        %v938 = vadd.f32 %v693, %v937
        %v939 = vpop.f32.mrf.mxu0
        %940 = vmatprep.mubr.f32.mxu0 %v437
        %941 = vmatmul.mubr.f32.gmra.mxu0 %v401
        %v942 = vpop.f32.mrf.mxu0
        %v943 = vadd.f32 %v698, %v942
        %v944 = vpop.f32.mrf.mxu0
        %945 = vmatprep.mubr.f32.mxu0 %v438
        %946 = vmatmul.mubr.f32.gmra.mxu0 %v402
        %v947 = vpop.f32.mrf.mxu0
        %v948 = vadd.f32 %v703, %v947
        %v949 = vpop.f32.mrf.mxu0
        %950 = vmatprep.mubr.f32.mxu0 %v439
        %951 = vmatmul.mubr.f32.gmra.mxu0 %v403
        %v952 = vpop.f32.mrf.mxu0
        %v953 = vadd.f32 %v708, %v952
        %v954 = vpop.f32.mrf.mxu0
        %955 = vmatprep.mubr.f32.mxu0 %v440
        %956 = vmatmul.mubr.f32.gmra.mxu0 %v404
        %v957 = vpop.f32.mrf.mxu0
        %v958 = vadd.f32 %v713, %v957
        %v959 = vpop.f32.mrf.mxu0
        %960 = vmatprep.mubr.f32.mxu0 %v441
        %961 = vmatmul.mubr.f32.gmra.mxu0 %v405
        %v962 = vpop.f32.mrf.mxu0
        %v963 = vadd.f32 %v718, %v962
        %v964 = vpop.f32.mrf.mxu0
        %965 = vmatprep.mubr.f32.mxu0 %v442
        %966 = vmatmul.mubr.f32.gmra.mxu0 %v406
        %v967 = vpop.f32.mrf.mxu0
        %v968 = vadd.f32 %v723, %v967
        %v969 = vpop.f32.mrf.mxu0
        %970 = vmatprep.mubr.f32.mxu0 %v443
        %971 = vmatmul.mubr.f32.gmra.mxu0 %v407
        %v972 = vpop.f32.mrf.mxu0
        %v973 = vadd.f32 %v728, %v972
        %v974 = vpop.f32.mrf.mxu0
        %975 = vmatprep.mubr.f32.mxu0 %v444
        %976 = vmatmul.mubr.f32.gmra.mxu0 %v408
        %v977 = vpop.f32.mrf.mxu0
        %v978 = vadd.f32 %v733, %v977
        %v979 = vpop.f32.mrf.mxu0
        %980 = vmatprep.mubr.f32.mxu0 %v445
        %981 = vmatmul.mubr.f32.gmra.mxu0 %v409
        %v982 = vpop.f32.mrf.mxu0
        %v983 = vadd.f32 %v738, %v982
        %v984 = vpop.f32.mrf.mxu0
        %985 = vmatprep.mubr.f32.mxu0 %v446
        %986 = vmatmul.mubr.f32.gmra.mxu0 %v410
        %v987 = vpop.f32.mrf.mxu0
        %v988 = vadd.f32 %v743, %v987
        %v989 = vpop.f32.mrf.mxu0
        %990 = vmatprep.mubr.f32.mxu0 %v447
        %991 = vmatmul.mubr.f32.gmra.mxu0 %v411
        %v992 = vpop.f32.mrf.mxu0
        %v993 = vadd.f32 %v748, %v992
        %v994 = vpop.f32.mrf.mxu0
        %995 = vmatprep.mubr.f32.mxu0 %v448
        %996 = vmatmul.mubr.f32.gmra.mxu0 %v412
        %v997 = vpop.f32.mrf.mxu0
        %v998 = vadd.f32 %v753, %v997
        %v999 = vpop.f32.mrf.mxu0
        %1000 = vmatprep.mubr.f32.mxu0 %v449
        %1001 = vmatmul.mubr.f32.gmra.mxu0 %v413
        %v1002 = vpop.f32.mrf.mxu0
        %v1003 = vadd.f32 %v758, %v1002
        %v1004 = vpop.f32.mrf.mxu0
        %1005 = vmatprep.mubr.f32.mxu0 %v450
        %1006 = vmatmul.mubr.f32.gmra.mxu0 %v414
        %v1007 = vpop.f32.mrf.mxu0
        %v1008 = vadd.f32 %v763, %v1007
        %v1009 = vpop.f32.mrf.mxu0
        %1010 = vdwg.mxu0
        %1011 = vst [vmem:[%s164] sm:$0xff] %v833
        %1012 = vst [vmem:[%s164 + $0x8] sm:$0xff] %v838
        %1013 = vst [vmem:[%s164 + $0x10] sm:$0xff] %v843
        %1014 = vst [vmem:[%s164 + $0x18] sm:$0xff] %v848
        %1015 = vst [vmem:[%s164 + $0x20] sm:$0xff] %v853
        %1016 = vst [vmem:[%s164 + $0x28] sm:$0xff] %v858
        %1017 = vst [vmem:[%s164 + $0x30] sm:$0xff] %v863
        %1018 = vst [vmem:[%s164 + $0x38] sm:$0xff] %v868
        %1019 = vst [vmem:[%s164 + $0x40] sm:$0xff] %v873
        %1020 = vst [vmem:[%s164 + $0x48] sm:$0xff] %v878
        %1021 = vst [vmem:[%s164 + $0x50] sm:$0xff] %v883
        %1022 = vst [vmem:[%s164 + $0x58] sm:$0xff] %v888
        %1023 = vst [vmem:[%s164 + $0x60] sm:$0xff] %v893
        %1024 = vst [vmem:[%s164 + $0x68] sm:$0xff] %v898
        %1025 = vst [vmem:[%s164 + $0x70] sm:$0xff] %v903
        %1026 = vst [vmem:[%s164 + $0x78] sm:$0xff] %v908
        %1027 = vst [vmem:[%s164 + $0x80] sm:$0xff] %v913
        %1028 = vst [vmem:[%s164 + $0x88] sm:$0xff] %v918
        %1029 = vst [vmem:[%s164 + $0x90] sm:$0xff] %v923
        %1030 = vst [vmem:[%s164 + $0x98] sm:$0xff] %v928
        %1031 = vst [vmem:[%s164 + $0xa0] sm:$0xff] %v933
        %1032 = vst [vmem:[%s164 + $0xa8] sm:$0xff] %v938
        %1033 = vst [vmem:[%s164 + $0xb0] sm:$0xff] %v943
        %1034 = vst [vmem:[%s164 + $0xb8] sm:$0xff] %v948
        %1035 = vst [vmem:[%s164 + $0xc0] sm:$0xff] %v953
        %1036 = vst [vmem:[%s164 + $0xc8] sm:$0xff] %v958
        %1037 = vst [vmem:[%s164 + $0xd0] sm:$0xff] %v963
        %1038 = vst [vmem:[%s164 + $0xd8] sm:$0xff] %v968
        %1039 = vst [vmem:[%s164 + $0xe0] sm:$0xff] %v973
        %1040 = vst [vmem:[%s164 + $0xe8] sm:$0xff] %v978
        %1041 = vst [vmem:[%s164 + $0xf0] sm:$0xff] %v983
        %1042 = vst [vmem:[%s164 + $0xf8] sm:$0xff] %v988
        %1043 = vst [vmem:[%s164 + $0x100] sm:$0xff] %v993
        %1044 = vst [vmem:[%s164 + $0x108] sm:$0xff] %v998
        %1045 = vst [vmem:[%s164 + $0x110] sm:$0xff] %v1003
        %1046 = vst [vmem:[%s164 + $0x118] sm:$0xff] %v1008
        %v1047 = vld [vmem:[#allocation2 + $0x1] sm:$0xff]
        %v1048 = vld [vmem:[#allocation2 + $0x9] sm:$0xff]
        %v1049 = vld [vmem:[#allocation2 + $0x11] sm:$0xff]
        %v1050 = vld [vmem:[#allocation2 + $0x19] sm:$0xff]
        %v1051 = vld [vmem:[#allocation2 + $0x21] sm:$0xff]
        %v1052 = vld [vmem:[#allocation2 + $0x29] sm:$0xff]
        %v1053 = vld [vmem:[#allocation2 + $0x31] sm:$0xff]
        %v1054 = vld [vmem:[#allocation2 + $0x39] sm:$0xff]
        %v1055 = vld [vmem:[#allocation2 + $0x41] sm:$0xff]
        %v1056 = vld [vmem:[#allocation2 + $0x49] sm:$0xff]
        %v1057 = vld [vmem:[#allocation2 + $0x51] sm:$0xff]
        %v1058 = vld [vmem:[#allocation2 + $0x59] sm:$0xff]
        %v1059 = vld [vmem:[#allocation2 + $0x61] sm:$0xff]
        %v1060 = vld [vmem:[#allocation2 + $0x69] sm:$0xff]
        %v1061 = vld [vmem:[#allocation2 + $0x71] sm:$0xff]
        %v1062 = vld [vmem:[#allocation2 + $0x79] sm:$0xff]
        %v1063 = vld [vmem:[#allocation2 + $0x81] sm:$0xff]
        %v1064 = vld [vmem:[#allocation2 + $0x89] sm:$0xff]
        %v1065 = vld [vmem:[#allocation2 + $0x91] sm:$0xff]
        %v1066 = vld [vmem:[#allocation2 + $0x99] sm:$0xff]
        %v1067 = vld [vmem:[#allocation2 + $0xa1] sm:$0xff]
        %v1068 = vld [vmem:[#allocation2 + $0xa9] sm:$0xff]
        %v1069 = vld [vmem:[#allocation2 + $0xb1] sm:$0xff]
        %v1070 = vld [vmem:[#allocation2 + $0xb9] sm:$0xff]
        %v1071 = vld [vmem:[#allocation2 + $0xc1] sm:$0xff]
        %v1072 = vld [vmem:[#allocation2 + $0xc9] sm:$0xff]
        %v1073 = vld [vmem:[#allocation2 + $0xd1] sm:$0xff]
        %v1074 = vld [vmem:[#allocation2 + $0xd9] sm:$0xff]
        %v1075 = vld [vmem:[#allocation2 + $0xe1] sm:$0xff]
        %v1076 = vld [vmem:[#allocation2 + $0xe9] sm:$0xff]
        %v1077 = vld [vmem:[#allocation2 + $0xf1] sm:$0xff]
        %v1078 = vld [vmem:[#allocation2 + $0xf9] sm:$0xff]
        %v1079 = vld [vmem:[#allocation2 + $0x101] sm:$0xff]
        %v1080 = vld [vmem:[#allocation2 + $0x109] sm:$0xff]
        %v1081 = vld [vmem:[#allocation2 + $0x111] sm:$0xff]
        %v1082 = vld [vmem:[#allocation2 + $0x119] sm:$0xff]
        %v1083 = vld [vmem:[#allocation2 + $0x2] sm:$0xff]
        %v1084 = vld [vmem:[#allocation2 + $0xa] sm:$0xff]
        %v1085 = vld [vmem:[#allocation2 + $0x12] sm:$0xff]
        %v1086 = vld [vmem:[#allocation2 + $0x1a] sm:$0xff]
        %v1087 = vld [vmem:[#allocation2 + $0x22] sm:$0xff]
        %v1088 = vld [vmem:[#allocation2 + $0x2a] sm:$0xff]
        %v1089 = vld [vmem:[#allocation2 + $0x32] sm:$0xff]
        %v1090 = vld [vmem:[#allocation2 + $0x3a] sm:$0xff]
        %v1091 = vld [vmem:[#allocation2 + $0x42] sm:$0xff]
        %v1092 = vld [vmem:[#allocation2 + $0x4a] sm:$0xff]
        %v1093 = vld [vmem:[#allocation2 + $0x52] sm:$0xff]
        %v1094 = vld [vmem:[#allocation2 + $0x5a] sm:$0xff]
        %v1095 = vld [vmem:[#allocation2 + $0x62] sm:$0xff]
        %v1096 = vld [vmem:[#allocation2 + $0x6a] sm:$0xff]
        %v1097 = vld [vmem:[#allocation2 + $0x72] sm:$0xff]
        %v1098 = vld [vmem:[#allocation2 + $0x7a] sm:$0xff]
        %v1099 = vld [vmem:[#allocation2 + $0x82] sm:$0xff]
        %v1100 = vld [vmem:[#allocation2 + $0x8a] sm:$0xff]
        %v1101 = vld [vmem:[#allocation2 + $0x92] sm:$0xff]
        %v1102 = vld [vmem:[#allocation2 + $0x9a] sm:$0xff]
        %v1103 = vld [vmem:[#allocation2 + $0xa2] sm:$0xff]
        %v1104 = vld [vmem:[#allocation2 + $0xaa] sm:$0xff]
        %v1105 = vld [vmem:[#allocation2 + $0xb2] sm:$0xff]
        %v1106 = vld [vmem:[#allocation2 + $0xba] sm:$0xff]
        %v1107 = vld [vmem:[#allocation2 + $0xc2] sm:$0xff]
        %v1108 = vld [vmem:[#allocation2 + $0xca] sm:$0xff]
        %v1109 = vld [vmem:[#allocation2 + $0xd2] sm:$0xff]
        %v1110 = vld [vmem:[#allocation2 + $0xda] sm:$0xff]
        %v1111 = vld [vmem:[#allocation2 + $0xe2] sm:$0xff]
        %v1112 = vld [vmem:[#allocation2 + $0xea] sm:$0xff]
        %v1113 = vld [vmem:[#allocation2 + $0xf2] sm:$0xff]
        %v1114 = vld [vmem:[#allocation2 + $0xfa] sm:$0xff]
        %v1115 = vld [vmem:[#allocation2 + $0x102] sm:$0xff]
        %v1116 = vld [vmem:[#allocation2 + $0x10a] sm:$0xff]
        %v1117 = vld [vmem:[#allocation2 + $0x112] sm:$0xff]
        %v1118 = vld [vmem:[#allocation2 + $0x11a] sm:$0xff]
        %v1119 = vld [vmem:[#allocation2 + $0x13] sm:$0xff]
        %v1120 = vld [vmem:[#allocation2 + $0x1b] sm:$0xff]
        %v1121 = vld [vmem:[#allocation2 + $0x23] sm:$0xff]
        %v1122 = vld [vmem:[#allocation2 + $0x2b] sm:$0xff]
        %v1123 = vld [vmem:[#allocation2 + $0x33] sm:$0xff]
        %v1124 = vld [vmem:[#allocation2 + $0x3b] sm:$0xff]
        %v1125 = vld [vmem:[#allocation2 + $0x43] sm:$0xff]
        %v1126 = vld [vmem:[#allocation2 + $0x4b] sm:$0xff]
        %v1127 = vld [vmem:[#allocation2 + $0x53] sm:$0xff]
        %v1128 = vld [vmem:[#allocation2 + $0x5b] sm:$0xff]
        %v1129 = vld [vmem:[#allocation2 + $0x63] sm:$0xff]
        %v1130 = vld [vmem:[#allocation2 + $0x6b] sm:$0xff]
        %v1131 = vld [vmem:[#allocation2 + $0x73] sm:$0xff]
        %v1132 = vld [vmem:[#allocation2 + $0x7b] sm:$0xff]
        %v1133 = vld [vmem:[#allocation2 + $0x83] sm:$0xff]
        %v1134 = vld [vmem:[#allocation2 + $0x8b] sm:$0xff]
        %v1135 = vld [vmem:[#allocation2 + $0x93] sm:$0xff]
        %v1136 = vld [vmem:[#allocation2 + $0x9b] sm:$0xff]
        %v1137 = vld [vmem:[#allocation2 + $0xa3] sm:$0xff]
        %v1138 = vld [vmem:[#allocation2 + $0xab] sm:$0xff]
        %v1139 = vld [vmem:[#allocation2 + $0xb3] sm:$0xff]
        %v1140 = vld [vmem:[#allocation2 + $0xbb] sm:$0xff]
        %v1141 = vld [vmem:[#allocation2 + $0xc3] sm:$0xff]
        %v1142 = vld [vmem:[#allocation2 + $0xcb] sm:$0xff]
        %v1143 = vld [vmem:[#allocation2 + $0xd3] sm:$0xff]
        %v1144 = vld [vmem:[#allocation2 + $0xdb] sm:$0xff]
        %v1145 = vld [vmem:[#allocation2 + $0xe3] sm:$0xff]
        %v1146 = vld [vmem:[#allocation2 + $0xeb] sm:$0xff]
        %v1147 = vld [vmem:[#allocation2 + $0xf3] sm:$0xff]
        %v1148 = vld [vmem:[#allocation2 + $0xfb] sm:$0xff]
        %v1149 = vld [vmem:[#allocation2 + $0x103] sm:$0xff]
        %v1150 = vld [vmem:[#allocation2 + $0x10b] sm:$0xff]
        %v1151 = vld [vmem:[#allocation2 + $0x113] sm:$0xff]
        %v1152 = vld [vmem:[#allocation2 + $0x11b] sm:$0xff]
        %v1153 = vld [vmem:[#allocation2 + $0x123] sm:$0xff]
        %v1154 = vld [vmem:[#allocation2 + $0x12b] sm:$0xff]
        %v1155 = vld [vmem:[#allocation2 + $0x14] sm:$0xff]
        %v1156 = vld [vmem:[#allocation2 + $0x1c] sm:$0xff]
        %v1157 = vld [vmem:[#allocation2 + $0x24] sm:$0xff]
        %v1158 = vld [vmem:[#allocation2 + $0x2c] sm:$0xff]
        %v1159 = vld [vmem:[#allocation2 + $0x34] sm:$0xff]
        %v1160 = vld [vmem:[#allocation2 + $0x3c] sm:$0xff]
        %v1161 = vld [vmem:[#allocation2 + $0x44] sm:$0xff]
        %v1162 = vld [vmem:[#allocation2 + $0x4c] sm:$0xff]
        %v1163 = vld [vmem:[#allocation2 + $0x54] sm:$0xff]
        %v1164 = vld [vmem:[#allocation2 + $0x5c] sm:$0xff]
        %v1165 = vld [vmem:[#allocation2 + $0x64] sm:$0xff]
        %v1166 = vld [vmem:[#allocation2 + $0x6c] sm:$0xff]
        %v1167 = vld [vmem:[#allocation2 + $0x74] sm:$0xff]
        %v1168 = vld [vmem:[#allocation2 + $0x7c] sm:$0xff]
        %v1169 = vld [vmem:[#allocation2 + $0x84] sm:$0xff]
        %v1170 = vld [vmem:[#allocation2 + $0x8c] sm:$0xff]
        %v1171 = vld [vmem:[#allocation2 + $0x94] sm:$0xff]
        %v1172 = vld [vmem:[#allocation2 + $0x9c] sm:$0xff]
        %v1173 = vld [vmem:[#allocation2 + $0xa4] sm:$0xff]
        %v1174 = vld [vmem:[#allocation2 + $0xac] sm:$0xff]
        %v1175 = vld [vmem:[#allocation2 + $0xb4] sm:$0xff]
        %v1176 = vld [vmem:[#allocation2 + $0xbc] sm:$0xff]
        %v1177 = vld [vmem:[#allocation2 + $0xc4] sm:$0xff]
        %v1178 = vld [vmem:[#allocation2 + $0xcc] sm:$0xff]
        %v1179 = vld [vmem:[#allocation2 + $0xd4] sm:$0xff]
        %v1180 = vld [vmem:[#allocation2 + $0xdc] sm:$0xff]
        %v1181 = vld [vmem:[#allocation2 + $0xe4] sm:$0xff]
        %v1182 = vld [vmem:[#allocation2 + $0xec] sm:$0xff]
        %v1183 = vld [vmem:[#allocation2 + $0xf4] sm:$0xff]
        %v1184 = vld [vmem:[#allocation2 + $0xfc] sm:$0xff]
        %v1185 = vld [vmem:[#allocation2 + $0x104] sm:$0xff]
        %v1186 = vld [vmem:[#allocation2 + $0x10c] sm:$0xff]
        %v1187 = vld [vmem:[#allocation2 + $0x114] sm:$0xff]
        %v1188 = vld [vmem:[#allocation2 + $0x11c] sm:$0xff]
        %v1189 = vld [vmem:[#allocation2 + $0x124] sm:$0xff]
        %v1190 = vld [vmem:[#allocation2 + $0x12c] sm:$0xff]
        %s1191 = scalar_lea.vmem [#allocation4], 512
        %v1192 = vld [vmem:[%s1191] sm:$0xff]
        %v1193 = vld [vmem:[%s1191 + $0x8] sm:$0xff]
        %v1194 = vld [vmem:[%s1191 + $0x10] sm:$0xff]
        %v1195 = vld [vmem:[%s1191 + $0x18] sm:$0xff]
        %v1196 = vld [vmem:[%s1191 + $0x20] sm:$0xff]
        %v1197 = vld [vmem:[%s1191 + $0x28] sm:$0xff]
        %v1198 = vld [vmem:[%s1191 + $0x30] sm:$0xff]
        %v1199 = vld [vmem:[%s1191 + $0x38] sm:$0xff]
        %v1200 = vld [vmem:[%s1191 + $0x40] sm:$0xff]
        %v1201 = vld [vmem:[%s1191 + $0x48] sm:$0xff]
        %v1202 = vld [vmem:[%s1191 + $0x50] sm:$0xff]
        %v1203 = vld [vmem:[%s1191 + $0x58] sm:$0xff]
        %v1204 = vld [vmem:[%s1191 + $0x60] sm:$0xff]
        %v1205 = vld [vmem:[%s1191 + $0x68] sm:$0xff]
        %v1206 = vld [vmem:[%s1191 + $0x70] sm:$0xff]
        %v1207 = vld [vmem:[%s1191 + $0x78] sm:$0xff]
        %v1208 = vld [vmem:[%s1191 + $0x80] sm:$0xff]
        %v1209 = vld [vmem:[%s1191 + $0x88] sm:$0xff]
        %v1210 = vld [vmem:[%s1191 + $0x90] sm:$0xff]
        %v1211 = vld [vmem:[%s1191 + $0x98] sm:$0xff]
        %v1212 = vld [vmem:[%s1191 + $0xa0] sm:$0xff]
        %v1213 = vld [vmem:[%s1191 + $0xa8] sm:$0xff]
        %v1214 = vld [vmem:[%s1191 + $0xb0] sm:$0xff]
        %v1215 = vld [vmem:[%s1191 + $0xb8] sm:$0xff]
        %v1216 = vld [vmem:[%s1191 + $0xc0] sm:$0xff]
        %v1217 = vld [vmem:[%s1191 + $0xc8] sm:$0xff]
        %v1218 = vld [vmem:[%s1191 + $0xd0] sm:$0xff]
        %v1219 = vld [vmem:[%s1191 + $0xd8] sm:$0xff]
        %v1220 = vld [vmem:[%s1191 + $0xe0] sm:$0xff]
        %v1221 = vld [vmem:[%s1191 + $0xe8] sm:$0xff]
        %v1222 = vld [vmem:[%s1191 + $0xf0] sm:$0xff]
        %v1223 = vld [vmem:[%s1191 + $0xf8] sm:$0xff]
        %v1224 = vld [vmem:[%s1191 + $0x100] sm:$0xff]
        %v1225 = vld [vmem:[%s1191 + $0x108] sm:$0xff]
        %v1226 = vld [vmem:[%s1191 + $0x110] sm:$0xff]
        %v1227 = vld [vmem:[%s1191 + $0x118] sm:$0xff]
        %v1228 = vld [vmem:[%s1191 + $0x120] sm:$0xff]
        %v1229 = vld [vmem:[%s1191 + $0x128] sm:$0xff]
        %v1230 = vld [vmem:[%s1191 + $0x130] sm:$0xff]
        %v1231 = vld [vmem:[%s1191 + $0x138] sm:$0xff]
        %v1232 = vld [vmem:[%s1191 + $0x140] sm:$0xff]
        %v1233 = vld [vmem:[%s1191 + $0x148] sm:$0xff]
        %v1234 = vld [vmem:[%s1191 + $0x150] sm:$0xff]
        %v1235 = vld [vmem:[%s1191 + $0x158] sm:$0xff]
        %v1236 = vld [vmem:[%s1191 + $0x160] sm:$0xff]
        %v1237 = vld [vmem:[%s1191 + $0x168] sm:$0xff]
        %v1238 = vld [vmem:[%s1191 + $0x170] sm:$0xff]
        %v1239 = vld [vmem:[%s1191 + $0x178] sm:$0xff]
        %v1240 = vld [vmem:[%s1191 + $0x180] sm:$0xff]
        %v1241 = vld [vmem:[%s1191 + $0x188] sm:$0xff]
        %v1242 = vld [vmem:[%s1191 + $0x190] sm:$0xff]
        %v1243 = vld [vmem:[%s1191 + $0x198] sm:$0xff]
        %v1244 = vld [vmem:[%s1191 + $0x1a0] sm:$0xff]
        %v1245 = vld [vmem:[%s1191 + $0x1a8] sm:$0xff]
        %v1246 = vld [vmem:[%s1191 + $0x1b0] sm:$0xff]
        %v1247 = vld [vmem:[%s1191 + $0x1b8] sm:$0xff]
        %v1248 = vld [vmem:[%s1191 + $0x1c0] sm:$0xff]
        %v1249 = vld [vmem:[%s1191 + $0x1c8] sm:$0xff]
        %v1250 = vld [vmem:[%s1191 + $0x1d0] sm:$0xff]
        %v1251 = vld [vmem:[%s1191 + $0x1d8] sm:$0xff]
        %v1252 = vld [vmem:[%s1191 + $0x1e0] sm:$0xff]
        %v1253 = vld [vmem:[%s1191 + $0x1e8] sm:$0xff]
        %v1254 = vld [vmem:[%s1191 + $0x1f0] sm:$0xff]
        %v1255 = vld [vmem:[%s1191 + $0x1f8] sm:$0xff]
        %1256 = vmatprep.subr.mxu0 0.0
        %1257 = vmatpush1.msra.mxu0 %v1207
        %1258 = vmatprep.subr.mxu0 0.0
        %1259 = vmatpush1.msra.mxu0 %v1206
        %1260 = vmatprep.subr.mxu0 0.0
        %1261 = vmatpush1.msra.mxu0 %v1205
        %1262 = vmatprep.subr.mxu0 0.0
        %1263 = vmatpush1.msra.mxu0 %v1204
        %1264 = vmatprep.subr.mxu0 0.0
        %1265 = vmatpush1.msra.mxu0 %v1203
        %1266 = vmatprep.subr.mxu0 0.0
        %1267 = vmatpush1.msra.mxu0 %v1202
        %1268 = vmatprep.subr.mxu0 0.0
        %1269 = vmatpush1.msra.mxu0 %v1201
        %1270 = vmatprep.subr.mxu0 0.0
        %1271 = vmatpush1.msra.mxu0 %v1200
        %1272 = vmatprep.subr.mxu0 0.0
        %1273 = vmatpush1.msra.mxu0 %v1199
        %1274 = vmatprep.subr.mxu0 0.0
        %1275 = vmatpush1.msra.mxu0 %v1198
        %1276 = vmatprep.subr.mxu0 0.0
        %1277 = vmatpush1.msra.mxu0 %v1197
        %1278 = vmatprep.subr.mxu0 0.0
        %1279 = vmatpush1.msra.mxu0 %v1196
        %1280 = vmatprep.subr.mxu0 0.0
        %1281 = vmatpush1.msra.mxu0 %v1195
        %1282 = vmatprep.subr.mxu0 0.0
        %1283 = vmatpush1.msra.mxu0 %v1194
        %1284 = vmatprep.subr.mxu0 0.0
        %1285 = vmatpush1.msra.mxu0 %v1193
        %1286 = vmatprep.subr.mxu0 0.0
        %1287 = vmatpush1.msra.mxu0 %v1192
        %1288 = vmatprep.subr.mxu0 0.0
        %1289 = vmatpush2.msra.mxu0 %v1223
        %1290 = vmatprep.subr.mxu0 0.0
        %1291 = vmatpush2.msra.mxu0 %v1222
        %1292 = vmatprep.subr.mxu0 0.0
        %1293 = vmatpush2.msra.mxu0 %v1221
        %1294 = vmatprep.subr.mxu0 0.0
        %1295 = vmatpush2.msra.mxu0 %v1220
        %1296 = vmatprep.subr.mxu0 0.0
        %1297 = vmatpush2.msra.mxu0 %v1219
        %1298 = vmatprep.subr.mxu0 0.0
        %1299 = vmatpush2.msra.mxu0 %v1218
        %1300 = vmatprep.subr.mxu0 0.0
        %1301 = vmatpush2.msra.mxu0 %v1217
        %1302 = vmatprep.subr.mxu0 0.0
        %1303 = vmatpush2.msra.mxu0 %v1216
        %1304 = vmatprep.subr.mxu0 0.0
        %1305 = vmatpush2.msra.mxu0 %v1215
        %1306 = vmatprep.subr.mxu0 0.0
        %1307 = vmatpush2.msra.mxu0 %v1214
        %1308 = vmatprep.subr.mxu0 0.0
        %1309 = vmatpush2.msra.mxu0 %v1213
        %1310 = vmatprep.subr.mxu0 0.0
        %1311 = vmatpush2.msra.mxu0 %v1212
        %1312 = vmatprep.subr.mxu0 0.0
        %1313 = vmatpush2.msra.mxu0 %v1211
        %1314 = vmatprep.subr.mxu0 0.0
        %1315 = vmatpush2.msra.mxu0 %v1210
        %1316 = vmatprep.subr.mxu0 0.0
        %1317 = vmatpush2.msra.mxu0 %v1209
        %1318 = vmatprep.subr.mxu0 0.0
        %1319 = vmatpush2.msra.mxu0 %v1208
        %1320 = vmatprep.mubr.f32.mxu0 %v1083
        %1321 = vmatmul.mubr.f32.gmra.mxu0 %v1047
        %v1322 = vpop.f32.mrf.mxu0
        %v1323 = vadd.f32 %v519, %v1322
        %v1324 = vpop.f32.mrf.mxu0
        %1325 = vmatprep.mubr.f32.mxu0 %v1084
        %1326 = vmatmul.mubr.f32.gmra.mxu0 %v1048
        %v1327 = vpop.f32.mrf.mxu0
        %v1328 = vadd.f32 %v519, %v1327
        %v1329 = vpop.f32.mrf.mxu0
        %1330 = vmatprep.mubr.f32.mxu0 %v1085
        %1331 = vmatmul.mubr.f32.gmra.mxu0 %v1049
        %v1332 = vpop.f32.mrf.mxu0
        %v1333 = vadd.f32 %v519, %v1332
        %v1334 = vpop.f32.mrf.mxu0
        %1335 = vmatprep.mubr.f32.mxu0 %v1086
        %1336 = vmatmul.mubr.f32.gmra.mxu0 %v1050
        %v1337 = vpop.f32.mrf.mxu0
        %v1338 = vadd.f32 %v519, %v1337
        %v1339 = vpop.f32.mrf.mxu0
        %1340 = vmatprep.mubr.f32.mxu0 %v1087
        %1341 = vmatmul.mubr.f32.gmra.mxu0 %v1051
        %v1342 = vpop.f32.mrf.mxu0
        %v1343 = vadd.f32 %v519, %v1342
        %v1344 = vpop.f32.mrf.mxu0
        %1345 = vmatprep.mubr.f32.mxu0 %v1088
        %1346 = vmatmul.mubr.f32.gmra.mxu0 %v1052
        %v1347 = vpop.f32.mrf.mxu0
        %v1348 = vadd.f32 %v519, %v1347
        %v1349 = vpop.f32.mrf.mxu0
        %1350 = vmatprep.mubr.f32.mxu0 %v1089
        %1351 = vmatmul.mubr.f32.gmra.mxu0 %v1053
        %v1352 = vpop.f32.mrf.mxu0
        %v1353 = vadd.f32 %v519, %v1352
        %v1354 = vpop.f32.mrf.mxu0
        %1355 = vmatprep.mubr.f32.mxu0 %v1090
        %1356 = vmatmul.mubr.f32.gmra.mxu0 %v1054
        %v1357 = vpop.f32.mrf.mxu0
        %v1358 = vadd.f32 %v519, %v1357
        %v1359 = vpop.f32.mrf.mxu0
        %1360 = vmatprep.mubr.f32.mxu0 %v1091
        %1361 = vmatmul.mubr.f32.gmra.mxu0 %v1055
        %v1362 = vpop.f32.mrf.mxu0
        %v1363 = vadd.f32 %v519, %v1362
        %v1364 = vpop.f32.mrf.mxu0
        %1365 = vmatprep.mubr.f32.mxu0 %v1092
        %1366 = vmatmul.mubr.f32.gmra.mxu0 %v1056
        %v1367 = vpop.f32.mrf.mxu0
        %v1368 = vadd.f32 %v519, %v1367
        %v1369 = vpop.f32.mrf.mxu0
        %1370 = vmatprep.mubr.f32.mxu0 %v1093
        %1371 = vmatmul.mubr.f32.gmra.mxu0 %v1057
        %v1372 = vpop.f32.mrf.mxu0
        %v1373 = vadd.f32 %v519, %v1372
        %v1374 = vpop.f32.mrf.mxu0
        %1375 = vmatprep.mubr.f32.mxu0 %v1094
        %1376 = vmatmul.mubr.f32.gmra.mxu0 %v1058
        %v1377 = vpop.f32.mrf.mxu0
        %v1378 = vadd.f32 %v519, %v1377
        %v1379 = vpop.f32.mrf.mxu0
        %1380 = vmatprep.mubr.f32.mxu0 %v1095
        %1381 = vmatmul.mubr.f32.gmra.mxu0 %v1059
        %v1382 = vpop.f32.mrf.mxu0
        %v1383 = vadd.f32 %v519, %v1382
        %v1384 = vpop.f32.mrf.mxu0
        %1385 = vmatprep.mubr.f32.mxu0 %v1096
        %1386 = vmatmul.mubr.f32.gmra.mxu0 %v1060
        %v1387 = vpop.f32.mrf.mxu0
        %v1388 = vadd.f32 %v519, %v1387
        %v1389 = vpop.f32.mrf.mxu0
        %1390 = vmatprep.mubr.f32.mxu0 %v1097
        %1391 = vmatmul.mubr.f32.gmra.mxu0 %v1061
        %v1392 = vpop.f32.mrf.mxu0
        %v1393 = vadd.f32 %v519, %v1392
        %v1394 = vpop.f32.mrf.mxu0
        %1395 = vmatprep.mubr.f32.mxu0 %v1098
        %1396 = vmatmul.mubr.f32.gmra.mxu0 %v1062
        %v1397 = vpop.f32.mrf.mxu0
        %v1398 = vadd.f32 %v519, %v1397
        %v1399 = vpop.f32.mrf.mxu0
        %1400 = vmatprep.mubr.f32.mxu0 %v1099
        %1401 = vmatmul.mubr.f32.gmra.mxu0 %v1063
        %v1402 = vpop.f32.mrf.mxu0
        %v1403 = vadd.f32 %v519, %v1402
        %v1404 = vpop.f32.mrf.mxu0
        %1405 = vmatprep.mubr.f32.mxu0 %v1100
        %1406 = vmatmul.mubr.f32.gmra.mxu0 %v1064
        %v1407 = vpop.f32.mrf.mxu0
        %v1408 = vadd.f32 %v519, %v1407
        %v1409 = vpop.f32.mrf.mxu0
        %1410 = vmatprep.mubr.f32.mxu0 %v1101
        %1411 = vmatmul.mubr.f32.gmra.mxu0 %v1065
        %v1412 = vpop.f32.mrf.mxu0
        %v1413 = vadd.f32 %v519, %v1412
        %v1414 = vpop.f32.mrf.mxu0
        %1415 = vmatprep.mubr.f32.mxu0 %v1102
        %1416 = vmatmul.mubr.f32.gmra.mxu0 %v1066
        %v1417 = vpop.f32.mrf.mxu0
        %v1418 = vadd.f32 %v519, %v1417
        %v1419 = vpop.f32.mrf.mxu0
        %1420 = vmatprep.mubr.f32.mxu0 %v1103
        %1421 = vmatmul.mubr.f32.gmra.mxu0 %v1067
        %v1422 = vpop.f32.mrf.mxu0
        %v1423 = vadd.f32 %v519, %v1422
        %v1424 = vpop.f32.mrf.mxu0
        %1425 = vmatprep.mubr.f32.mxu0 %v1104
        %1426 = vmatmul.mubr.f32.gmra.mxu0 %v1068
        %v1427 = vpop.f32.mrf.mxu0
        %v1428 = vadd.f32 %v519, %v1427
        %v1429 = vpop.f32.mrf.mxu0
        %1430 = vmatprep.mubr.f32.mxu0 %v1105
        %1431 = vmatmul.mubr.f32.gmra.mxu0 %v1069
        %v1432 = vpop.f32.mrf.mxu0
        %v1433 = vadd.f32 %v519, %v1432
        %v1434 = vpop.f32.mrf.mxu0
        %1435 = vmatprep.mubr.f32.mxu0 %v1106
        %1436 = vmatmul.mubr.f32.gmra.mxu0 %v1070
        %v1437 = vpop.f32.mrf.mxu0
        %v1438 = vadd.f32 %v519, %v1437
        %v1439 = vpop.f32.mrf.mxu0
        %1440 = vmatprep.mubr.f32.mxu0 %v1107
        %1441 = vmatmul.mubr.f32.gmra.mxu0 %v1071
        %v1442 = vpop.f32.mrf.mxu0
        %v1443 = vadd.f32 %v519, %v1442
        %v1444 = vpop.f32.mrf.mxu0
        %1445 = vmatprep.mubr.f32.mxu0 %v1108
        %1446 = vmatmul.mubr.f32.gmra.mxu0 %v1072
        %v1447 = vpop.f32.mrf.mxu0
        %v1448 = vadd.f32 %v519, %v1447
        %v1449 = vpop.f32.mrf.mxu0
        %1450 = vmatprep.mubr.f32.mxu0 %v1109
        %1451 = vmatmul.mubr.f32.gmra.mxu0 %v1073
        %v1452 = vpop.f32.mrf.mxu0
        %v1453 = vadd.f32 %v519, %v1452
        %v1454 = vpop.f32.mrf.mxu0
        %1455 = vmatprep.mubr.f32.mxu0 %v1110
        %1456 = vmatmul.mubr.f32.gmra.mxu0 %v1074
        %v1457 = vpop.f32.mrf.mxu0
        %v1458 = vadd.f32 %v519, %v1457
        %v1459 = vpop.f32.mrf.mxu0
        %1460 = vmatprep.mubr.f32.mxu0 %v1111
        %1461 = vmatmul.mubr.f32.gmra.mxu0 %v1075
        %v1462 = vpop.f32.mrf.mxu0
        %v1463 = vadd.f32 %v519, %v1462
        %v1464 = vpop.f32.mrf.mxu0
        %1465 = vmatprep.mubr.f32.mxu0 %v1112
        %1466 = vmatmul.mubr.f32.gmra.mxu0 %v1076
        %v1467 = vpop.f32.mrf.mxu0
        %v1468 = vadd.f32 %v519, %v1467
        %v1469 = vpop.f32.mrf.mxu0
        %1470 = vmatprep.mubr.f32.mxu0 %v1113
        %1471 = vmatmul.mubr.f32.gmra.mxu0 %v1077
        %v1472 = vpop.f32.mrf.mxu0
        %v1473 = vadd.f32 %v519, %v1472
        %v1474 = vpop.f32.mrf.mxu0
        %1475 = vmatprep.mubr.f32.mxu0 %v1114
        %1476 = vmatmul.mubr.f32.gmra.mxu0 %v1078
        %v1477 = vpop.f32.mrf.mxu0
        %v1478 = vadd.f32 %v519, %v1477
        %v1479 = vpop.f32.mrf.mxu0
        %1480 = vmatprep.mubr.f32.mxu0 %v1115
        %1481 = vmatmul.mubr.f32.gmra.mxu0 %v1079
        %v1482 = vpop.f32.mrf.mxu0
        %v1483 = vadd.f32 %v519, %v1482
        %v1484 = vpop.f32.mrf.mxu0
        %1485 = vmatprep.mubr.f32.mxu0 %v1116
        %1486 = vmatmul.mubr.f32.gmra.mxu0 %v1080
        %v1487 = vpop.f32.mrf.mxu0
        %v1488 = vadd.f32 %v519, %v1487
        %v1489 = vpop.f32.mrf.mxu0
        %1490 = vmatprep.mubr.f32.mxu0 %v1117
        %1491 = vmatmul.mubr.f32.gmra.mxu0 %v1081
        %v1492 = vpop.f32.mrf.mxu0
        %v1493 = vadd.f32 %v519, %v1492
        %v1494 = vpop.f32.mrf.mxu0
        %1495 = vmatprep.mubr.f32.mxu0 %v1118
        %1496 = vmatmul.mubr.f32.gmra.mxu0 %v1082
        %v1497 = vpop.f32.mrf.mxu0
        %v1498 = vadd.f32 %v519, %v1497
        %v1499 = vpop.f32.mrf.mxu0
        %1500 = vdwg.mxu0
        %1501 = vmatprep.subr.mxu0 0.0
        %1502 = vmatpush1.msra.mxu0 %v1239
        %1503 = vmatprep.subr.mxu0 0.0
        %1504 = vmatpush1.msra.mxu0 %v1238
        %1505 = vmatprep.subr.mxu0 0.0
        %1506 = vmatpush1.msra.mxu0 %v1237
        %1507 = vmatprep.subr.mxu0 0.0
        %1508 = vmatpush1.msra.mxu0 %v1236
        %1509 = vmatprep.subr.mxu0 0.0
        %1510 = vmatpush1.msra.mxu0 %v1235
        %1511 = vmatprep.subr.mxu0 0.0
        %1512 = vmatpush1.msra.mxu0 %v1234
        %1513 = vmatprep.subr.mxu0 0.0
        %1514 = vmatpush1.msra.mxu0 %v1233
        %1515 = vmatprep.subr.mxu0 0.0
        %1516 = vmatpush1.msra.mxu0 %v1232
        %1517 = vmatprep.subr.mxu0 0.0
        %1518 = vmatpush1.msra.mxu0 %v1231
        %1519 = vmatprep.subr.mxu0 0.0
        %1520 = vmatpush1.msra.mxu0 %v1230
        %1521 = vmatprep.subr.mxu0 0.0
        %1522 = vmatpush1.msra.mxu0 %v1229
        %1523 = vmatprep.subr.mxu0 0.0
        %1524 = vmatpush1.msra.mxu0 %v1228
        %1525 = vmatprep.subr.mxu0 0.0
        %1526 = vmatpush1.msra.mxu0 %v1227
        %1527 = vmatprep.subr.mxu0 0.0
        %1528 = vmatpush1.msra.mxu0 %v1226
        %1529 = vmatprep.subr.mxu0 0.0
        %1530 = vmatpush1.msra.mxu0 %v1225
        %1531 = vmatprep.subr.mxu0 0.0
        %1532 = vmatpush1.msra.mxu0 %v1224
        %1533 = vmatprep.subr.mxu0 0.0
        %1534 = vmatpush2.msra.mxu0 %v1255
        %1535 = vmatprep.subr.mxu0 0.0
        %1536 = vmatpush2.msra.mxu0 %v1254
        %1537 = vmatprep.subr.mxu0 0.0
        %1538 = vmatpush2.msra.mxu0 %v1253
        %1539 = vmatprep.subr.mxu0 0.0
        %1540 = vmatpush2.msra.mxu0 %v1252
        %1541 = vmatprep.subr.mxu0 0.0
        %1542 = vmatpush2.msra.mxu0 %v1251
        %1543 = vmatprep.subr.mxu0 0.0
        %1544 = vmatpush2.msra.mxu0 %v1250
        %1545 = vmatprep.subr.mxu0 0.0
        %1546 = vmatpush2.msra.mxu0 %v1249
        %1547 = vmatprep.subr.mxu0 0.0
        %1548 = vmatpush2.msra.mxu0 %v1248
        %1549 = vmatprep.subr.mxu0 0.0
        %1550 = vmatpush2.msra.mxu0 %v1247
        %1551 = vmatprep.subr.mxu0 0.0
        %1552 = vmatpush2.msra.mxu0 %v1246
        %1553 = vmatprep.subr.mxu0 0.0
        %1554 = vmatpush2.msra.mxu0 %v1245
        %1555 = vmatprep.subr.mxu0 0.0
        %1556 = vmatpush2.msra.mxu0 %v1244
        %1557 = vmatprep.subr.mxu0 0.0
        %1558 = vmatpush2.msra.mxu0 %v1243
        %1559 = vmatprep.subr.mxu0 0.0
        %1560 = vmatpush2.msra.mxu0 %v1242
        %1561 = vmatprep.subr.mxu0 0.0
        %1562 = vmatpush2.msra.mxu0 %v1241
        %1563 = vmatprep.subr.mxu0 0.0
        %1564 = vmatpush2.msra.mxu0 %v1240
        %1565 = vmatprep.mubr.f32.mxu0 %v1155
        %1566 = vmatmul.mubr.f32.gmra.mxu0 %v1119
        %v1567 = vpop.f32.mrf.mxu0
        %v1568 = vadd.f32 %v1323, %v1567
        %v1569 = vpop.f32.mrf.mxu0
        %1570 = vmatprep.mubr.f32.mxu0 %v1156
        %1571 = vmatmul.mubr.f32.gmra.mxu0 %v1120
        %v1572 = vpop.f32.mrf.mxu0
        %v1573 = vadd.f32 %v1328, %v1572
        %v1574 = vpop.f32.mrf.mxu0
        %1575 = vmatprep.mubr.f32.mxu0 %v1157
        %1576 = vmatmul.mubr.f32.gmra.mxu0 %v1121
        %v1577 = vpop.f32.mrf.mxu0
        %v1578 = vadd.f32 %v1333, %v1577
        %v1579 = vpop.f32.mrf.mxu0
        %1580 = vmatprep.mubr.f32.mxu0 %v1158
        %1581 = vmatmul.mubr.f32.gmra.mxu0 %v1122
        %v1582 = vpop.f32.mrf.mxu0
        %v1583 = vadd.f32 %v1338, %v1582
        %v1584 = vpop.f32.mrf.mxu0
        %1585 = vmatprep.mubr.f32.mxu0 %v1159
        %1586 = vmatmul.mubr.f32.gmra.mxu0 %v1123
        %v1587 = vpop.f32.mrf.mxu0
        %v1588 = vadd.f32 %v1343, %v1587
        %v1589 = vpop.f32.mrf.mxu0
        %1590 = vmatprep.mubr.f32.mxu0 %v1160
        %1591 = vmatmul.mubr.f32.gmra.mxu0 %v1124
        %v1592 = vpop.f32.mrf.mxu0
        %v1593 = vadd.f32 %v1348, %v1592
        %v1594 = vpop.f32.mrf.mxu0
        %1595 = vmatprep.mubr.f32.mxu0 %v1161
        %1596 = vmatmul.mubr.f32.gmra.mxu0 %v1125
        %v1597 = vpop.f32.mrf.mxu0
        %v1598 = vadd.f32 %v1353, %v1597
        %v1599 = vpop.f32.mrf.mxu0
        %1600 = vmatprep.mubr.f32.mxu0 %v1162
        %1601 = vmatmul.mubr.f32.gmra.mxu0 %v1126
        %v1602 = vpop.f32.mrf.mxu0
        %v1603 = vadd.f32 %v1358, %v1602
        %v1604 = vpop.f32.mrf.mxu0
        %1605 = vmatprep.mubr.f32.mxu0 %v1163
        %1606 = vmatmul.mubr.f32.gmra.mxu0 %v1127
        %v1607 = vpop.f32.mrf.mxu0
        %v1608 = vadd.f32 %v1363, %v1607
        %v1609 = vpop.f32.mrf.mxu0
        %1610 = vmatprep.mubr.f32.mxu0 %v1164
        %1611 = vmatmul.mubr.f32.gmra.mxu0 %v1128
        %v1612 = vpop.f32.mrf.mxu0
        %v1613 = vadd.f32 %v1368, %v1612
        %v1614 = vpop.f32.mrf.mxu0
        %1615 = vmatprep.mubr.f32.mxu0 %v1165
        %1616 = vmatmul.mubr.f32.gmra.mxu0 %v1129
        %v1617 = vpop.f32.mrf.mxu0
        %v1618 = vadd.f32 %v1373, %v1617
        %v1619 = vpop.f32.mrf.mxu0
        %1620 = vmatprep.mubr.f32.mxu0 %v1166
        %1621 = vmatmul.mubr.f32.gmra.mxu0 %v1130
        %v1622 = vpop.f32.mrf.mxu0
        %v1623 = vadd.f32 %v1378, %v1622
        %v1624 = vpop.f32.mrf.mxu0
        %1625 = vmatprep.mubr.f32.mxu0 %v1167
        %1626 = vmatmul.mubr.f32.gmra.mxu0 %v1131
        %v1627 = vpop.f32.mrf.mxu0
        %v1628 = vadd.f32 %v1383, %v1627
        %v1629 = vpop.f32.mrf.mxu0
        %1630 = vmatprep.mubr.f32.mxu0 %v1168
        %1631 = vmatmul.mubr.f32.gmra.mxu0 %v1132
        %v1632 = vpop.f32.mrf.mxu0
        %v1633 = vadd.f32 %v1388, %v1632
        %v1634 = vpop.f32.mrf.mxu0
        %1635 = vmatprep.mubr.f32.mxu0 %v1169
        %1636 = vmatmul.mubr.f32.gmra.mxu0 %v1133
        %v1637 = vpop.f32.mrf.mxu0
        %v1638 = vadd.f32 %v1393, %v1637
        %v1639 = vpop.f32.mrf.mxu0
        %1640 = vmatprep.mubr.f32.mxu0 %v1170
        %1641 = vmatmul.mubr.f32.gmra.mxu0 %v1134
        %v1642 = vpop.f32.mrf.mxu0
        %v1643 = vadd.f32 %v1398, %v1642
        %v1644 = vpop.f32.mrf.mxu0
        %1645 = vmatprep.mubr.f32.mxu0 %v1171
        %1646 = vmatmul.mubr.f32.gmra.mxu0 %v1135
        %v1647 = vpop.f32.mrf.mxu0
        %v1648 = vadd.f32 %v1403, %v1647
        %v1649 = vpop.f32.mrf.mxu0
        %1650 = vmatprep.mubr.f32.mxu0 %v1172
        %1651 = vmatmul.mubr.f32.gmra.mxu0 %v1136
        %v1652 = vpop.f32.mrf.mxu0
        %v1653 = vadd.f32 %v1408, %v1652
        %v1654 = vpop.f32.mrf.mxu0
        %1655 = vmatprep.mubr.f32.mxu0 %v1173
        %1656 = vmatmul.mubr.f32.gmra.mxu0 %v1137
        %v1657 = vpop.f32.mrf.mxu0
        %v1658 = vadd.f32 %v1413, %v1657
        %v1659 = vpop.f32.mrf.mxu0
        %1660 = vmatprep.mubr.f32.mxu0 %v1174
        %1661 = vmatmul.mubr.f32.gmra.mxu0 %v1138
        %v1662 = vpop.f32.mrf.mxu0
        %v1663 = vadd.f32 %v1418, %v1662
        %v1664 = vpop.f32.mrf.mxu0
        %1665 = vmatprep.mubr.f32.mxu0 %v1175
        %1666 = vmatmul.mubr.f32.gmra.mxu0 %v1139
        %v1667 = vpop.f32.mrf.mxu0
        %v1668 = vadd.f32 %v1423, %v1667
        %v1669 = vpop.f32.mrf.mxu0
        %1670 = vmatprep.mubr.f32.mxu0 %v1176
        %1671 = vmatmul.mubr.f32.gmra.mxu0 %v1140
        %v1672 = vpop.f32.mrf.mxu0
        %v1673 = vadd.f32 %v1428, %v1672
        %v1674 = vpop.f32.mrf.mxu0
        %1675 = vmatprep.mubr.f32.mxu0 %v1177
        %1676 = vmatmul.mubr.f32.gmra.mxu0 %v1141
        %v1677 = vpop.f32.mrf.mxu0
        %v1678 = vadd.f32 %v1433, %v1677
        %v1679 = vpop.f32.mrf.mxu0
        %1680 = vmatprep.mubr.f32.mxu0 %v1178
        %1681 = vmatmul.mubr.f32.gmra.mxu0 %v1142
        %v1682 = vpop.f32.mrf.mxu0
        %v1683 = vadd.f32 %v1438, %v1682
        %v1684 = vpop.f32.mrf.mxu0
        %1685 = vmatprep.mubr.f32.mxu0 %v1179
        %1686 = vmatmul.mubr.f32.gmra.mxu0 %v1143
        %v1687 = vpop.f32.mrf.mxu0
        %v1688 = vadd.f32 %v1443, %v1687
        %v1689 = vpop.f32.mrf.mxu0
        %1690 = vmatprep.mubr.f32.mxu0 %v1180
        %1691 = vmatmul.mubr.f32.gmra.mxu0 %v1144
        %v1692 = vpop.f32.mrf.mxu0
        %v1693 = vadd.f32 %v1448, %v1692
        %v1694 = vpop.f32.mrf.mxu0
        %1695 = vmatprep.mubr.f32.mxu0 %v1181
        %1696 = vmatmul.mubr.f32.gmra.mxu0 %v1145
        %v1697 = vpop.f32.mrf.mxu0
        %v1698 = vadd.f32 %v1453, %v1697
        %v1699 = vpop.f32.mrf.mxu0
        %1700 = vmatprep.mubr.f32.mxu0 %v1182
        %1701 = vmatmul.mubr.f32.gmra.mxu0 %v1146
        %v1702 = vpop.f32.mrf.mxu0
        %v1703 = vadd.f32 %v1458, %v1702
        %v1704 = vpop.f32.mrf.mxu0
        %1705 = vmatprep.mubr.f32.mxu0 %v1183
        %1706 = vmatmul.mubr.f32.gmra.mxu0 %v1147
        %v1707 = vpop.f32.mrf.mxu0
        %v1708 = vadd.f32 %v1463, %v1707
        %v1709 = vpop.f32.mrf.mxu0
        %1710 = vmatprep.mubr.f32.mxu0 %v1184
        %1711 = vmatmul.mubr.f32.gmra.mxu0 %v1148
        %v1712 = vpop.f32.mrf.mxu0
        %v1713 = vadd.f32 %v1468, %v1712
        %v1714 = vpop.f32.mrf.mxu0
        %1715 = vmatprep.mubr.f32.mxu0 %v1185
        %1716 = vmatmul.mubr.f32.gmra.mxu0 %v1149
        %v1717 = vpop.f32.mrf.mxu0
        %v1718 = vadd.f32 %v1473, %v1717
        %v1719 = vpop.f32.mrf.mxu0
        %1720 = vmatprep.mubr.f32.mxu0 %v1186
        %1721 = vmatmul.mubr.f32.gmra.mxu0 %v1150
        %v1722 = vpop.f32.mrf.mxu0
        %v1723 = vadd.f32 %v1478, %v1722
        %v1724 = vpop.f32.mrf.mxu0
        %1725 = vmatprep.mubr.f32.mxu0 %v1187
        %1726 = vmatmul.mubr.f32.gmra.mxu0 %v1151
        %v1727 = vpop.f32.mrf.mxu0
        %v1728 = vadd.f32 %v1483, %v1727
        %v1729 = vpop.f32.mrf.mxu0
        %1730 = vmatprep.mubr.f32.mxu0 %v1188
        %1731 = vmatmul.mubr.f32.gmra.mxu0 %v1152
        %v1732 = vpop.f32.mrf.mxu0
        %v1733 = vadd.f32 %v1488, %v1732
        %v1734 = vpop.f32.mrf.mxu0
        %1735 = vmatprep.mubr.f32.mxu0 %v1189
        %1736 = vmatmul.mubr.f32.gmra.mxu0 %v1153
        %v1737 = vpop.f32.mrf.mxu0
        %v1738 = vadd.f32 %v1493, %v1737
        %v1739 = vpop.f32.mrf.mxu0
        %1740 = vmatprep.mubr.f32.mxu0 %v1190
        %1741 = vmatmul.mubr.f32.gmra.mxu0 %v1154
        %v1742 = vpop.f32.mrf.mxu0
        %v1743 = vadd.f32 %v1498, %v1742
        %v1744 = vpop.f32.mrf.mxu0
        %1745 = vdwg.mxu0
        %s1746 = scalar_lea.vmem %s164, 288 [#allocation9]
        %1747 = vst [vmem:[%s1746] sm:$0xff] %v1568
        %1748 = vst [vmem:[%s1746 + $0x8] sm:$0xff] %v1573
        %1749 = vst [vmem:[%s1746 + $0x10] sm:$0xff] %v1578
        %1750 = vst [vmem:[%s1746 + $0x18] sm:$0xff] %v1583
        %1751 = vst [vmem:[%s1746 + $0x20] sm:$0xff] %v1588
        %1752 = vst [vmem:[%s1746 + $0x28] sm:$0xff] %v1593
        %1753 = vst [vmem:[%s1746 + $0x30] sm:$0xff] %v1598
        %1754 = vst [vmem:[%s1746 + $0x38] sm:$0xff] %v1603
        %1755 = vst [vmem:[%s1746 + $0x40] sm:$0xff] %v1608
        %1756 = vst [vmem:[%s1746 + $0x48] sm:$0xff] %v1613
        %1757 = vst [vmem:[%s1746 + $0x50] sm:$0xff] %v1618
        %1758 = vst [vmem:[%s1746 + $0x58] sm:$0xff] %v1623
        %1759 = vst [vmem:[%s1746 + $0x60] sm:$0xff] %v1628
        %1760 = vst [vmem:[%s1746 + $0x68] sm:$0xff] %v1633
        %1761 = vst [vmem:[%s1746 + $0x70] sm:$0xff] %v1638
        %1762 = vst [vmem:[%s1746 + $0x78] sm:$0xff] %v1643
        %1763 = vst [vmem:[%s1746 + $0x80] sm:$0xff] %v1648
        %1764 = vst [vmem:[%s1746 + $0x88] sm:$0xff] %v1653
        %1765 = vst [vmem:[%s1746 + $0x90] sm:$0xff] %v1658
        %1766 = vst [vmem:[%s1746 + $0x98] sm:$0xff] %v1663
        %1767 = vst [vmem:[%s1746 + $0xa0] sm:$0xff] %v1668
        %1768 = vst [vmem:[%s1746 + $0xa8] sm:$0xff] %v1673
        %1769 = vst [vmem:[%s1746 + $0xb0] sm:$0xff] %v1678
        %1770 = vst [vmem:[%s1746 + $0xb8] sm:$0xff] %v1683
        %1771 = vst [vmem:[%s1746 + $0xc0] sm:$0xff] %v1688
        %1772 = vst [vmem:[%s1746 + $0xc8] sm:$0xff] %v1693
        %1773 = vst [vmem:[%s1746 + $0xd0] sm:$0xff] %v1698
        %1774 = vst [vmem:[%s1746 + $0xd8] sm:$0xff] %v1703
        %1775 = vst [vmem:[%s1746 + $0xe0] sm:$0xff] %v1708
        %1776 = vst [vmem:[%s1746 + $0xe8] sm:$0xff] %v1713
        %1777 = vst [vmem:[%s1746 + $0xf0] sm:$0xff] %v1718
        %1778 = vst [vmem:[%s1746 + $0xf8] sm:$0xff] %v1723
        %1779 = vst [vmem:[%s1746 + $0x100] sm:$0xff] %v1728
        %1780 = vst [vmem:[%s1746 + $0x108] sm:$0xff] %v1733
        %1781 = vst [vmem:[%s1746 + $0x110] sm:$0xff] %v1738
        %1782 = vst [vmem:[%s1746 + $0x118] sm:$0xff] %v1743
        %v1783 = vld [vmem:[#allocation2 + $0x12] sm:$0xff]
        %v1784 = vld [vmem:[#allocation2 + $0x1a] sm:$0xff]
        %v1785 = vld [vmem:[#allocation2 + $0x22] sm:$0xff]
        %v1786 = vld [vmem:[#allocation2 + $0x2a] sm:$0xff]
        %v1787 = vld [vmem:[#allocation2 + $0x32] sm:$0xff]
        %v1788 = vld [vmem:[#allocation2 + $0x3a] sm:$0xff]
        %v1789 = vld [vmem:[#allocation2 + $0x42] sm:$0xff]
        %v1790 = vld [vmem:[#allocation2 + $0x4a] sm:$0xff]
        %v1791 = vld [vmem:[#allocation2 + $0x52] sm:$0xff]
        %v1792 = vld [vmem:[#allocation2 + $0x5a] sm:$0xff]
        %v1793 = vld [vmem:[#allocation2 + $0x62] sm:$0xff]
        %v1794 = vld [vmem:[#allocation2 + $0x6a] sm:$0xff]
        %v1795 = vld [vmem:[#allocation2 + $0x72] sm:$0xff]
        %v1796 = vld [vmem:[#allocation2 + $0x7a] sm:$0xff]
        %v1797 = vld [vmem:[#allocation2 + $0x82] sm:$0xff]
        %v1798 = vld [vmem:[#allocation2 + $0x8a] sm:$0xff]
        %v1799 = vld [vmem:[#allocation2 + $0x92] sm:$0xff]
        %v1800 = vld [vmem:[#allocation2 + $0x9a] sm:$0xff]
        %v1801 = vld [vmem:[#allocation2 + $0xa2] sm:$0xff]
        %v1802 = vld [vmem:[#allocation2 + $0xaa] sm:$0xff]
        %v1803 = vld [vmem:[#allocation2 + $0xb2] sm:$0xff]
        %v1804 = vld [vmem:[#allocation2 + $0xba] sm:$0xff]
        %v1805 = vld [vmem:[#allocation2 + $0xc2] sm:$0xff]
        %v1806 = vld [vmem:[#allocation2 + $0xca] sm:$0xff]
        %v1807 = vld [vmem:[#allocation2 + $0xd2] sm:$0xff]
        %v1808 = vld [vmem:[#allocation2 + $0xda] sm:$0xff]
        %v1809 = vld [vmem:[#allocation2 + $0xe2] sm:$0xff]
        %v1810 = vld [vmem:[#allocation2 + $0xea] sm:$0xff]
        %v1811 = vld [vmem:[#allocation2 + $0xf2] sm:$0xff]
        %v1812 = vld [vmem:[#allocation2 + $0xfa] sm:$0xff]
        %v1813 = vld [vmem:[#allocation2 + $0x102] sm:$0xff]
        %v1814 = vld [vmem:[#allocation2 + $0x10a] sm:$0xff]
        %v1815 = vld [vmem:[#allocation2 + $0x112] sm:$0xff]
        %v1816 = vld [vmem:[#allocation2 + $0x11a] sm:$0xff]
        %v1817 = vld [vmem:[#allocation2 + $0x122] sm:$0xff]
        %v1818 = vld [vmem:[#allocation2 + $0x12a] sm:$0xff]
        %v1819 = vld [vmem:[#allocation2 + $0x13] sm:$0xff]
        %v1820 = vld [vmem:[#allocation2 + $0x1b] sm:$0xff]
        %v1821 = vld [vmem:[#allocation2 + $0x23] sm:$0xff]
        %v1822 = vld [vmem:[#allocation2 + $0x2b] sm:$0xff]
        %v1823 = vld [vmem:[#allocation2 + $0x33] sm:$0xff]
        %v1824 = vld [vmem:[#allocation2 + $0x3b] sm:$0xff]
        %v1825 = vld [vmem:[#allocation2 + $0x43] sm:$0xff]
        %v1826 = vld [vmem:[#allocation2 + $0x4b] sm:$0xff]
        %v1827 = vld [vmem:[#allocation2 + $0x53] sm:$0xff]
        %v1828 = vld [vmem:[#allocation2 + $0x5b] sm:$0xff]
        %v1829 = vld [vmem:[#allocation2 + $0x63] sm:$0xff]
        %v1830 = vld [vmem:[#allocation2 + $0x6b] sm:$0xff]
        %v1831 = vld [vmem:[#allocation2 + $0x73] sm:$0xff]
        %v1832 = vld [vmem:[#allocation2 + $0x7b] sm:$0xff]
        %v1833 = vld [vmem:[#allocation2 + $0x83] sm:$0xff]
        %v1834 = vld [vmem:[#allocation2 + $0x8b] sm:$0xff]
        %v1835 = vld [vmem:[#allocation2 + $0x93] sm:$0xff]
        %v1836 = vld [vmem:[#allocation2 + $0x9b] sm:$0xff]
        %v1837 = vld [vmem:[#allocation2 + $0xa3] sm:$0xff]
        %v1838 = vld [vmem:[#allocation2 + $0xab] sm:$0xff]
        %v1839 = vld [vmem:[#allocation2 + $0xb3] sm:$0xff]
        %v1840 = vld [vmem:[#allocation2 + $0xbb] sm:$0xff]
        %v1841 = vld [vmem:[#allocation2 + $0xc3] sm:$0xff]
        %v1842 = vld [vmem:[#allocation2 + $0xcb] sm:$0xff]
        %v1843 = vld [vmem:[#allocation2 + $0xd3] sm:$0xff]
        %v1844 = vld [vmem:[#allocation2 + $0xdb] sm:$0xff]
        %v1845 = vld [vmem:[#allocation2 + $0xe3] sm:$0xff]
        %v1846 = vld [vmem:[#allocation2 + $0xeb] sm:$0xff]
        %v1847 = vld [vmem:[#allocation2 + $0xf3] sm:$0xff]
        %v1848 = vld [vmem:[#allocation2 + $0xfb] sm:$0xff]
        %v1849 = vld [vmem:[#allocation2 + $0x103] sm:$0xff]
        %v1850 = vld [vmem:[#allocation2 + $0x10b] sm:$0xff]
        %v1851 = vld [vmem:[#allocation2 + $0x113] sm:$0xff]
        %v1852 = vld [vmem:[#allocation2 + $0x11b] sm:$0xff]
        %v1853 = vld [vmem:[#allocation2 + $0x123] sm:$0xff]
        %v1854 = vld [vmem:[#allocation2 + $0x12b] sm:$0xff]
        %v1855 = vld [vmem:[#allocation2 + $0x24] sm:$0xff]
        %v1856 = vld [vmem:[#allocation2 + $0x2c] sm:$0xff]
        %v1857 = vld [vmem:[#allocation2 + $0x34] sm:$0xff]
        %v1858 = vld [vmem:[#allocation2 + $0x3c] sm:$0xff]
        %v1859 = vld [vmem:[#allocation2 + $0x44] sm:$0xff]
        %v1860 = vld [vmem:[#allocation2 + $0x4c] sm:$0xff]
        %v1861 = vld [vmem:[#allocation2 + $0x54] sm:$0xff]
        %v1862 = vld [vmem:[#allocation2 + $0x5c] sm:$0xff]
        %v1863 = vld [vmem:[#allocation2 + $0x64] sm:$0xff]
        %v1864 = vld [vmem:[#allocation2 + $0x6c] sm:$0xff]
        %v1865 = vld [vmem:[#allocation2 + $0x74] sm:$0xff]
        %v1866 = vld [vmem:[#allocation2 + $0x7c] sm:$0xff]
        %v1867 = vld [vmem:[#allocation2 + $0x84] sm:$0xff]
        %v1868 = vld [vmem:[#allocation2 + $0x8c] sm:$0xff]
        %v1869 = vld [vmem:[#allocation2 + $0x94] sm:$0xff]
        %v1870 = vld [vmem:[#allocation2 + $0x9c] sm:$0xff]
        %v1871 = vld [vmem:[#allocation2 + $0xa4] sm:$0xff]
        %v1872 = vld [vmem:[#allocation2 + $0xac] sm:$0xff]
        %v1873 = vld [vmem:[#allocation2 + $0xb4] sm:$0xff]
        %v1874 = vld [vmem:[#allocation2 + $0xbc] sm:$0xff]
        %v1875 = vld [vmem:[#allocation2 + $0xc4] sm:$0xff]
        %v1876 = vld [vmem:[#allocation2 + $0xcc] sm:$0xff]
        %v1877 = vld [vmem:[#allocation2 + $0xd4] sm:$0xff]
        %v1878 = vld [vmem:[#allocation2 + $0xdc] sm:$0xff]
        %v1879 = vld [vmem:[#allocation2 + $0xe4] sm:$0xff]
        %v1880 = vld [vmem:[#allocation2 + $0xec] sm:$0xff]
        %v1881 = vld [vmem:[#allocation2 + $0xf4] sm:$0xff]
        %v1882 = vld [vmem:[#allocation2 + $0xfc] sm:$0xff]
        %v1883 = vld [vmem:[#allocation2 + $0x104] sm:$0xff]
        %v1884 = vld [vmem:[#allocation2 + $0x10c] sm:$0xff]
        %v1885 = vld [vmem:[#allocation2 + $0x114] sm:$0xff]
        %v1886 = vld [vmem:[#allocation2 + $0x11c] sm:$0xff]
        %v1887 = vld [vmem:[#allocation2 + $0x124] sm:$0xff]
        %v1888 = vld [vmem:[#allocation2 + $0x12c] sm:$0xff]
        %v1889 = vld [vmem:[#allocation2 + $0x134] sm:$0xff]
        %v1890 = vld [vmem:[#allocation2 + $0x13c] sm:$0xff]
        %v1891 = vld [vmem:[#allocation2 + $0x25] sm:$0xff]
        %v1892 = vld [vmem:[#allocation2 + $0x2d] sm:$0xff]
        %v1893 = vld [vmem:[#allocation2 + $0x35] sm:$0xff]
        %v1894 = vld [vmem:[#allocation2 + $0x3d] sm:$0xff]
        %v1895 = vld [vmem:[#allocation2 + $0x45] sm:$0xff]
        %v1896 = vld [vmem:[#allocation2 + $0x4d] sm:$0xff]
        %v1897 = vld [vmem:[#allocation2 + $0x55] sm:$0xff]
        %v1898 = vld [vmem:[#allocation2 + $0x5d] sm:$0xff]
        %v1899 = vld [vmem:[#allocation2 + $0x65] sm:$0xff]
        %v1900 = vld [vmem:[#allocation2 + $0x6d] sm:$0xff]
        %v1901 = vld [vmem:[#allocation2 + $0x75] sm:$0xff]
        %v1902 = vld [vmem:[#allocation2 + $0x7d] sm:$0xff]
        %v1903 = vld [vmem:[#allocation2 + $0x85] sm:$0xff]
        %v1904 = vld [vmem:[#allocation2 + $0x8d] sm:$0xff]
        %v1905 = vld [vmem:[#allocation2 + $0x95] sm:$0xff]
        %v1906 = vld [vmem:[#allocation2 + $0x9d] sm:$0xff]
        %v1907 = vld [vmem:[#allocation2 + $0xa5] sm:$0xff]
        %v1908 = vld [vmem:[#allocation2 + $0xad] sm:$0xff]
        %v1909 = vld [vmem:[#allocation2 + $0xb5] sm:$0xff]
        %v1910 = vld [vmem:[#allocation2 + $0xbd] sm:$0xff]
        %v1911 = vld [vmem:[#allocation2 + $0xc5] sm:$0xff]
        %v1912 = vld [vmem:[#allocation2 + $0xcd] sm:$0xff]
        %v1913 = vld [vmem:[#allocation2 + $0xd5] sm:$0xff]
        %v1914 = vld [vmem:[#allocation2 + $0xdd] sm:$0xff]
        %v1915 = vld [vmem:[#allocation2 + $0xe5] sm:$0xff]
        %v1916 = vld [vmem:[#allocation2 + $0xed] sm:$0xff]
        %v1917 = vld [vmem:[#allocation2 + $0xf5] sm:$0xff]
        %v1918 = vld [vmem:[#allocation2 + $0xfd] sm:$0xff]
        %v1919 = vld [vmem:[#allocation2 + $0x105] sm:$0xff]
        %v1920 = vld [vmem:[#allocation2 + $0x10d] sm:$0xff]
        %v1921 = vld [vmem:[#allocation2 + $0x115] sm:$0xff]
        %v1922 = vld [vmem:[#allocation2 + $0x11d] sm:$0xff]
        %v1923 = vld [vmem:[#allocation2 + $0x125] sm:$0xff]
        %v1924 = vld [vmem:[#allocation2 + $0x12d] sm:$0xff]
        %v1925 = vld [vmem:[#allocation2 + $0x135] sm:$0xff]
        %v1926 = vld [vmem:[#allocation2 + $0x13d] sm:$0xff]
        %s1927 = scalar_lea.vmem [#allocation4], 1024
        %v1928 = vld [vmem:[%s1927] sm:$0xff]
        %v1929 = vld [vmem:[%s1927 + $0x8] sm:$0xff]
        %v1930 = vld [vmem:[%s1927 + $0x10] sm:$0xff]
        %v1931 = vld [vmem:[%s1927 + $0x18] sm:$0xff]
        %v1932 = vld [vmem:[%s1927 + $0x20] sm:$0xff]
        %v1933 = vld [vmem:[%s1927 + $0x28] sm:$0xff]
        %v1934 = vld [vmem:[%s1927 + $0x30] sm:$0xff]
        %v1935 = vld [vmem:[%s1927 + $0x38] sm:$0xff]
        %v1936 = vld [vmem:[%s1927 + $0x40] sm:$0xff]
        %v1937 = vld [vmem:[%s1927 + $0x48] sm:$0xff]
        %v1938 = vld [vmem:[%s1927 + $0x50] sm:$0xff]
        %v1939 = vld [vmem:[%s1927 + $0x58] sm:$0xff]
        %v1940 = vld [vmem:[%s1927 + $0x60] sm:$0xff]
        %v1941 = vld [vmem:[%s1927 + $0x68] sm:$0xff]
        %v1942 = vld [vmem:[%s1927 + $0x70] sm:$0xff]
        %v1943 = vld [vmem:[%s1927 + $0x78] sm:$0xff]
        %v1944 = vld [vmem:[%s1927 + $0x80] sm:$0xff]
        %v1945 = vld [vmem:[%s1927 + $0x88] sm:$0xff]
        %v1946 = vld [vmem:[%s1927 + $0x90] sm:$0xff]
        %v1947 = vld [vmem:[%s1927 + $0x98] sm:$0xff]
        %v1948 = vld [vmem:[%s1927 + $0xa0] sm:$0xff]
        %v1949 = vld [vmem:[%s1927 + $0xa8] sm:$0xff]
        %v1950 = vld [vmem:[%s1927 + $0xb0] sm:$0xff]
        %v1951 = vld [vmem:[%s1927 + $0xb8] sm:$0xff]
        %v1952 = vld [vmem:[%s1927 + $0xc0] sm:$0xff]
        %v1953 = vld [vmem:[%s1927 + $0xc8] sm:$0xff]
        %v1954 = vld [vmem:[%s1927 + $0xd0] sm:$0xff]
        %v1955 = vld [vmem:[%s1927 + $0xd8] sm:$0xff]
        %v1956 = vld [vmem:[%s1927 + $0xe0] sm:$0xff]
        %v1957 = vld [vmem:[%s1927 + $0xe8] sm:$0xff]
        %v1958 = vld [vmem:[%s1927 + $0xf0] sm:$0xff]
        %v1959 = vld [vmem:[%s1927 + $0xf8] sm:$0xff]
        %v1960 = vld [vmem:[%s1927 + $0x100] sm:$0xff]
        %v1961 = vld [vmem:[%s1927 + $0x108] sm:$0xff]
        %v1962 = vld [vmem:[%s1927 + $0x110] sm:$0xff]
        %v1963 = vld [vmem:[%s1927 + $0x118] sm:$0xff]
        %v1964 = vld [vmem:[%s1927 + $0x120] sm:$0xff]
        %v1965 = vld [vmem:[%s1927 + $0x128] sm:$0xff]
        %v1966 = vld [vmem:[%s1927 + $0x130] sm:$0xff]
        %v1967 = vld [vmem:[%s1927 + $0x138] sm:$0xff]
        %v1968 = vld [vmem:[%s1927 + $0x140] sm:$0xff]
        %v1969 = vld [vmem:[%s1927 + $0x148] sm:$0xff]
        %v1970 = vld [vmem:[%s1927 + $0x150] sm:$0xff]
        %v1971 = vld [vmem:[%s1927 + $0x158] sm:$0xff]
        %v1972 = vld [vmem:[%s1927 + $0x160] sm:$0xff]
        %v1973 = vld [vmem:[%s1927 + $0x168] sm:$0xff]
        %v1974 = vld [vmem:[%s1927 + $0x170] sm:$0xff]
        %v1975 = vld [vmem:[%s1927 + $0x178] sm:$0xff]
        %v1976 = vld [vmem:[%s1927 + $0x180] sm:$0xff]
        %v1977 = vld [vmem:[%s1927 + $0x188] sm:$0xff]
        %v1978 = vld [vmem:[%s1927 + $0x190] sm:$0xff]
        %v1979 = vld [vmem:[%s1927 + $0x198] sm:$0xff]
        %v1980 = vld [vmem:[%s1927 + $0x1a0] sm:$0xff]
        %v1981 = vld [vmem:[%s1927 + $0x1a8] sm:$0xff]
        %v1982 = vld [vmem:[%s1927 + $0x1b0] sm:$0xff]
        %v1983 = vld [vmem:[%s1927 + $0x1b8] sm:$0xff]
        %v1984 = vld [vmem:[%s1927 + $0x1c0] sm:$0xff]
        %v1985 = vld [vmem:[%s1927 + $0x1c8] sm:$0xff]
        %v1986 = vld [vmem:[%s1927 + $0x1d0] sm:$0xff]
        %v1987 = vld [vmem:[%s1927 + $0x1d8] sm:$0xff]
        %v1988 = vld [vmem:[%s1927 + $0x1e0] sm:$0xff]
        %v1989 = vld [vmem:[%s1927 + $0x1e8] sm:$0xff]
        %v1990 = vld [vmem:[%s1927 + $0x1f0] sm:$0xff]
        %v1991 = vld [vmem:[%s1927 + $0x1f8] sm:$0xff]
        %1992 = vmatprep.subr.mxu0 0.0
        %1993 = vmatpush1.msra.mxu0 %v1943
        %1994 = vmatprep.subr.mxu0 0.0
        %1995 = vmatpush1.msra.mxu0 %v1942
        %1996 = vmatprep.subr.mxu0 0.0
        %1997 = vmatpush1.msra.mxu0 %v1941
        %1998 = vmatprep.subr.mxu0 0.0
        %1999 = vmatpush1.msra.mxu0 %v1940
        %2000 = vmatprep.subr.mxu0 0.0
        %2001 = vmatpush1.msra.mxu0 %v1939
        %2002 = vmatprep.subr.mxu0 0.0
        %2003 = vmatpush1.msra.mxu0 %v1938
        %2004 = vmatprep.subr.mxu0 0.0
        %2005 = vmatpush1.msra.mxu0 %v1937
        %2006 = vmatprep.subr.mxu0 0.0
        %2007 = vmatpush1.msra.mxu0 %v1936
        %2008 = vmatprep.subr.mxu0 0.0
        %2009 = vmatpush1.msra.mxu0 %v1935
        %2010 = vmatprep.subr.mxu0 0.0
        %2011 = vmatpush1.msra.mxu0 %v1934
        %2012 = vmatprep.subr.mxu0 0.0
        %2013 = vmatpush1.msra.mxu0 %v1933
        %2014 = vmatprep.subr.mxu0 0.0
        %2015 = vmatpush1.msra.mxu0 %v1932
        %2016 = vmatprep.subr.mxu0 0.0
        %2017 = vmatpush1.msra.mxu0 %v1931
        %2018 = vmatprep.subr.mxu0 0.0
        %2019 = vmatpush1.msra.mxu0 %v1930
        %2020 = vmatprep.subr.mxu0 0.0
        %2021 = vmatpush1.msra.mxu0 %v1929
        %2022 = vmatprep.subr.mxu0 0.0
        %2023 = vmatpush1.msra.mxu0 %v1928
        %2024 = vmatprep.subr.mxu0 0.0
        %2025 = vmatpush2.msra.mxu0 %v1959
        %2026 = vmatprep.subr.mxu0 0.0
        %2027 = vmatpush2.msra.mxu0 %v1958
        %2028 = vmatprep.subr.mxu0 0.0
        %2029 = vmatpush2.msra.mxu0 %v1957
        %2030 = vmatprep.subr.mxu0 0.0
        %2031 = vmatpush2.msra.mxu0 %v1956
        %2032 = vmatprep.subr.mxu0 0.0
        %2033 = vmatpush2.msra.mxu0 %v1955
        %2034 = vmatprep.subr.mxu0 0.0
        %2035 = vmatpush2.msra.mxu0 %v1954
        %2036 = vmatprep.subr.mxu0 0.0
        %2037 = vmatpush2.msra.mxu0 %v1953
        %2038 = vmatprep.subr.mxu0 0.0
        %2039 = vmatpush2.msra.mxu0 %v1952
        %2040 = vmatprep.subr.mxu0 0.0
        %2041 = vmatpush2.msra.mxu0 %v1951
        %2042 = vmatprep.subr.mxu0 0.0
        %2043 = vmatpush2.msra.mxu0 %v1950
        %2044 = vmatprep.subr.mxu0 0.0
        %2045 = vmatpush2.msra.mxu0 %v1949
        %2046 = vmatprep.subr.mxu0 0.0
        %2047 = vmatpush2.msra.mxu0 %v1948
        %2048 = vmatprep.subr.mxu0 0.0
        %2049 = vmatpush2.msra.mxu0 %v1947
        %2050 = vmatprep.subr.mxu0 0.0
        %2051 = vmatpush2.msra.mxu0 %v1946
        %2052 = vmatprep.subr.mxu0 0.0
        %2053 = vmatpush2.msra.mxu0 %v1945
        %2054 = vmatprep.subr.mxu0 0.0
        %2055 = vmatpush2.msra.mxu0 %v1944
        %2056 = vmatprep.mubr.f32.mxu0 %v1819
        %2057 = vmatmul.mubr.f32.gmra.mxu0 %v1783
        %v2058 = vpop.f32.mrf.mxu0
        %v2059 = vadd.f32 %v519, %v2058
        %v2060 = vpop.f32.mrf.mxu0
        %2061 = vmatprep.mubr.f32.mxu0 %v1820
        %2062 = vmatmul.mubr.f32.gmra.mxu0 %v1784
        %v2063 = vpop.f32.mrf.mxu0
        %v2064 = vadd.f32 %v519, %v2063
        %v2065 = vpop.f32.mrf.mxu0
        %2066 = vmatprep.mubr.f32.mxu0 %v1821
        %2067 = vmatmul.mubr.f32.gmra.mxu0 %v1785
        %v2068 = vpop.f32.mrf.mxu0
        %v2069 = vadd.f32 %v519, %v2068
        %v2070 = vpop.f32.mrf.mxu0
        %2071 = vmatprep.mubr.f32.mxu0 %v1822
        %2072 = vmatmul.mubr.f32.gmra.mxu0 %v1786
        %v2073 = vpop.f32.mrf.mxu0
        %v2074 = vadd.f32 %v519, %v2073
        %v2075 = vpop.f32.mrf.mxu0
        %2076 = vmatprep.mubr.f32.mxu0 %v1823
        %2077 = vmatmul.mubr.f32.gmra.mxu0 %v1787
        %v2078 = vpop.f32.mrf.mxu0
        %v2079 = vadd.f32 %v519, %v2078
        %v2080 = vpop.f32.mrf.mxu0
        %2081 = vmatprep.mubr.f32.mxu0 %v1824
        %2082 = vmatmul.mubr.f32.gmra.mxu0 %v1788
        %v2083 = vpop.f32.mrf.mxu0
        %v2084 = vadd.f32 %v519, %v2083
        %v2085 = vpop.f32.mrf.mxu0
        %2086 = vmatprep.mubr.f32.mxu0 %v1825
        %2087 = vmatmul.mubr.f32.gmra.mxu0 %v1789
        %v2088 = vpop.f32.mrf.mxu0
        %v2089 = vadd.f32 %v519, %v2088
        %v2090 = vpop.f32.mrf.mxu0
        %2091 = vmatprep.mubr.f32.mxu0 %v1826
        %2092 = vmatmul.mubr.f32.gmra.mxu0 %v1790
        %v2093 = vpop.f32.mrf.mxu0
        %v2094 = vadd.f32 %v519, %v2093
        %v2095 = vpop.f32.mrf.mxu0
        %2096 = vmatprep.mubr.f32.mxu0 %v1827
        %2097 = vmatmul.mubr.f32.gmra.mxu0 %v1791
        %v2098 = vpop.f32.mrf.mxu0
        %v2099 = vadd.f32 %v519, %v2098
        %v2100 = vpop.f32.mrf.mxu0
        %2101 = vmatprep.mubr.f32.mxu0 %v1828
        %2102 = vmatmul.mubr.f32.gmra.mxu0 %v1792
        %v2103 = vpop.f32.mrf.mxu0
        %v2104 = vadd.f32 %v519, %v2103
        %v2105 = vpop.f32.mrf.mxu0
        %2106 = vmatprep.mubr.f32.mxu0 %v1829
        %2107 = vmatmul.mubr.f32.gmra.mxu0 %v1793
        %v2108 = vpop.f32.mrf.mxu0
        %v2109 = vadd.f32 %v519, %v2108
        %v2110 = vpop.f32.mrf.mxu0
        %2111 = vmatprep.mubr.f32.mxu0 %v1830
        %2112 = vmatmul.mubr.f32.gmra.mxu0 %v1794
        %v2113 = vpop.f32.mrf.mxu0
        %v2114 = vadd.f32 %v519, %v2113
        %v2115 = vpop.f32.mrf.mxu0
        %2116 = vmatprep.mubr.f32.mxu0 %v1831
        %2117 = vmatmul.mubr.f32.gmra.mxu0 %v1795
        %v2118 = vpop.f32.mrf.mxu0
        %v2119 = vadd.f32 %v519, %v2118
        %v2120 = vpop.f32.mrf.mxu0
        %2121 = vmatprep.mubr.f32.mxu0 %v1832
        %2122 = vmatmul.mubr.f32.gmra.mxu0 %v1796
        %v2123 = vpop.f32.mrf.mxu0
        %v2124 = vadd.f32 %v519, %v2123
        %v2125 = vpop.f32.mrf.mxu0
        %2126 = vmatprep.mubr.f32.mxu0 %v1833
        %2127 = vmatmul.mubr.f32.gmra.mxu0 %v1797
        %v2128 = vpop.f32.mrf.mxu0
        %v2129 = vadd.f32 %v519, %v2128
        %v2130 = vpop.f32.mrf.mxu0
        %2131 = vmatprep.mubr.f32.mxu0 %v1834
        %2132 = vmatmul.mubr.f32.gmra.mxu0 %v1798
        %v2133 = vpop.f32.mrf.mxu0
        %v2134 = vadd.f32 %v519, %v2133
        %v2135 = vpop.f32.mrf.mxu0
        %2136 = vmatprep.mubr.f32.mxu0 %v1835
        %2137 = vmatmul.mubr.f32.gmra.mxu0 %v1799
        %v2138 = vpop.f32.mrf.mxu0
        %v2139 = vadd.f32 %v519, %v2138
        %v2140 = vpop.f32.mrf.mxu0
        %2141 = vmatprep.mubr.f32.mxu0 %v1836
        %2142 = vmatmul.mubr.f32.gmra.mxu0 %v1800
        %v2143 = vpop.f32.mrf.mxu0
        %v2144 = vadd.f32 %v519, %v2143
        %v2145 = vpop.f32.mrf.mxu0
        %2146 = vmatprep.mubr.f32.mxu0 %v1837
        %2147 = vmatmul.mubr.f32.gmra.mxu0 %v1801
        %v2148 = vpop.f32.mrf.mxu0
        %v2149 = vadd.f32 %v519, %v2148
        %v2150 = vpop.f32.mrf.mxu0
        %2151 = vmatprep.mubr.f32.mxu0 %v1838
        %2152 = vmatmul.mubr.f32.gmra.mxu0 %v1802
        %v2153 = vpop.f32.mrf.mxu0
        %v2154 = vadd.f32 %v519, %v2153
        %v2155 = vpop.f32.mrf.mxu0
        %2156 = vmatprep.mubr.f32.mxu0 %v1839
        %2157 = vmatmul.mubr.f32.gmra.mxu0 %v1803
        %v2158 = vpop.f32.mrf.mxu0
        %v2159 = vadd.f32 %v519, %v2158
        %v2160 = vpop.f32.mrf.mxu0
        %2161 = vmatprep.mubr.f32.mxu0 %v1840
        %2162 = vmatmul.mubr.f32.gmra.mxu0 %v1804
        %v2163 = vpop.f32.mrf.mxu0
        %v2164 = vadd.f32 %v519, %v2163
        %v2165 = vpop.f32.mrf.mxu0
        %2166 = vmatprep.mubr.f32.mxu0 %v1841
        %2167 = vmatmul.mubr.f32.gmra.mxu0 %v1805
        %v2168 = vpop.f32.mrf.mxu0
        %v2169 = vadd.f32 %v519, %v2168
        %v2170 = vpop.f32.mrf.mxu0
        %2171 = vmatprep.mubr.f32.mxu0 %v1842
        %2172 = vmatmul.mubr.f32.gmra.mxu0 %v1806
        %v2173 = vpop.f32.mrf.mxu0
        %v2174 = vadd.f32 %v519, %v2173
        %v2175 = vpop.f32.mrf.mxu0
        %2176 = vmatprep.mubr.f32.mxu0 %v1843
        %2177 = vmatmul.mubr.f32.gmra.mxu0 %v1807
        %v2178 = vpop.f32.mrf.mxu0
        %v2179 = vadd.f32 %v519, %v2178
        %v2180 = vpop.f32.mrf.mxu0
        %2181 = vmatprep.mubr.f32.mxu0 %v1844
        %2182 = vmatmul.mubr.f32.gmra.mxu0 %v1808
        %v2183 = vpop.f32.mrf.mxu0
        %v2184 = vadd.f32 %v519, %v2183
        %v2185 = vpop.f32.mrf.mxu0
        %2186 = vmatprep.mubr.f32.mxu0 %v1845
        %2187 = vmatmul.mubr.f32.gmra.mxu0 %v1809
        %v2188 = vpop.f32.mrf.mxu0
        %v2189 = vadd.f32 %v519, %v2188
        %v2190 = vpop.f32.mrf.mxu0
        %2191 = vmatprep.mubr.f32.mxu0 %v1846
        %2192 = vmatmul.mubr.f32.gmra.mxu0 %v1810
        %v2193 = vpop.f32.mrf.mxu0
        %v2194 = vadd.f32 %v519, %v2193
        %v2195 = vpop.f32.mrf.mxu0
        %2196 = vmatprep.mubr.f32.mxu0 %v1847
        %2197 = vmatmul.mubr.f32.gmra.mxu0 %v1811
        %v2198 = vpop.f32.mrf.mxu0
        %v2199 = vadd.f32 %v519, %v2198
        %v2200 = vpop.f32.mrf.mxu0
        %2201 = vmatprep.mubr.f32.mxu0 %v1848
        %2202 = vmatmul.mubr.f32.gmra.mxu0 %v1812
        %v2203 = vpop.f32.mrf.mxu0
        %v2204 = vadd.f32 %v519, %v2203
        %v2205 = vpop.f32.mrf.mxu0
        %2206 = vmatprep.mubr.f32.mxu0 %v1849
        %2207 = vmatmul.mubr.f32.gmra.mxu0 %v1813
        %v2208 = vpop.f32.mrf.mxu0
        %v2209 = vadd.f32 %v519, %v2208
        %v2210 = vpop.f32.mrf.mxu0
        %2211 = vmatprep.mubr.f32.mxu0 %v1850
        %2212 = vmatmul.mubr.f32.gmra.mxu0 %v1814
        %v2213 = vpop.f32.mrf.mxu0
        %v2214 = vadd.f32 %v519, %v2213
        %v2215 = vpop.f32.mrf.mxu0
        %2216 = vmatprep.mubr.f32.mxu0 %v1851
        %2217 = vmatmul.mubr.f32.gmra.mxu0 %v1815
        %v2218 = vpop.f32.mrf.mxu0
        %v2219 = vadd.f32 %v519, %v2218
        %v2220 = vpop.f32.mrf.mxu0
        %2221 = vmatprep.mubr.f32.mxu0 %v1852
        %2222 = vmatmul.mubr.f32.gmra.mxu0 %v1816
        %v2223 = vpop.f32.mrf.mxu0
        %v2224 = vadd.f32 %v519, %v2223
        %v2225 = vpop.f32.mrf.mxu0
        %2226 = vmatprep.mubr.f32.mxu0 %v1853
        %2227 = vmatmul.mubr.f32.gmra.mxu0 %v1817
        %v2228 = vpop.f32.mrf.mxu0
        %v2229 = vadd.f32 %v519, %v2228
        %v2230 = vpop.f32.mrf.mxu0
        %2231 = vmatprep.mubr.f32.mxu0 %v1854
        %2232 = vmatmul.mubr.f32.gmra.mxu0 %v1818
        %v2233 = vpop.f32.mrf.mxu0
        %v2234 = vadd.f32 %v519, %v2233
        %v2235 = vpop.f32.mrf.mxu0
        %2236 = vdwg.mxu0
        %2237 = vmatprep.subr.mxu0 0.0
        %2238 = vmatpush1.msra.mxu0 %v1975
        %2239 = vmatprep.subr.mxu0 0.0
        %2240 = vmatpush1.msra.mxu0 %v1974
        %2241 = vmatprep.subr.mxu0 0.0
        %2242 = vmatpush1.msra.mxu0 %v1973
        %2243 = vmatprep.subr.mxu0 0.0
        %2244 = vmatpush1.msra.mxu0 %v1972
        %2245 = vmatprep.subr.mxu0 0.0
        %2246 = vmatpush1.msra.mxu0 %v1971
        %2247 = vmatprep.subr.mxu0 0.0
        %2248 = vmatpush1.msra.mxu0 %v1970
        %2249 = vmatprep.subr.mxu0 0.0
        %2250 = vmatpush1.msra.mxu0 %v1969
        %2251 = vmatprep.subr.mxu0 0.0
        %2252 = vmatpush1.msra.mxu0 %v1968
        %2253 = vmatprep.subr.mxu0 0.0
        %2254 = vmatpush1.msra.mxu0 %v1967
        %2255 = vmatprep.subr.mxu0 0.0
        %2256 = vmatpush1.msra.mxu0 %v1966
        %2257 = vmatprep.subr.mxu0 0.0
        %2258 = vmatpush1.msra.mxu0 %v1965
        %2259 = vmatprep.subr.mxu0 0.0
        %2260 = vmatpush1.msra.mxu0 %v1964
        %2261 = vmatprep.subr.mxu0 0.0
        %2262 = vmatpush1.msra.mxu0 %v1963
        %2263 = vmatprep.subr.mxu0 0.0
        %2264 = vmatpush1.msra.mxu0 %v1962
        %2265 = vmatprep.subr.mxu0 0.0
        %2266 = vmatpush1.msra.mxu0 %v1961
        %2267 = vmatprep.subr.mxu0 0.0
        %2268 = vmatpush1.msra.mxu0 %v1960
        %2269 = vmatprep.subr.mxu0 0.0
        %2270 = vmatpush2.msra.mxu0 %v1991
        %2271 = vmatprep.subr.mxu0 0.0
        %2272 = vmatpush2.msra.mxu0 %v1990
        %2273 = vmatprep.subr.mxu0 0.0
        %2274 = vmatpush2.msra.mxu0 %v1989
        %2275 = vmatprep.subr.mxu0 0.0
        %2276 = vmatpush2.msra.mxu0 %v1988
        %2277 = vmatprep.subr.mxu0 0.0
        %2278 = vmatpush2.msra.mxu0 %v1987
        %2279 = vmatprep.subr.mxu0 0.0
        %2280 = vmatpush2.msra.mxu0 %v1986
        %2281 = vmatprep.subr.mxu0 0.0
        %2282 = vmatpush2.msra.mxu0 %v1985
        %2283 = vmatprep.subr.mxu0 0.0
        %2284 = vmatpush2.msra.mxu0 %v1984
        %2285 = vmatprep.subr.mxu0 0.0
        %2286 = vmatpush2.msra.mxu0 %v1983
        %2287 = vmatprep.subr.mxu0 0.0
        %2288 = vmatpush2.msra.mxu0 %v1982
        %2289 = vmatprep.subr.mxu0 0.0
        %2290 = vmatpush2.msra.mxu0 %v1981
        %2291 = vmatprep.subr.mxu0 0.0
        %2292 = vmatpush2.msra.mxu0 %v1980
        %2293 = vmatprep.subr.mxu0 0.0
        %2294 = vmatpush2.msra.mxu0 %v1979
        %2295 = vmatprep.subr.mxu0 0.0
        %2296 = vmatpush2.msra.mxu0 %v1978
        %2297 = vmatprep.subr.mxu0 0.0
        %2298 = vmatpush2.msra.mxu0 %v1977
        %2299 = vmatprep.subr.mxu0 0.0
        %2300 = vmatpush2.msra.mxu0 %v1976
        %2301 = vmatprep.mubr.f32.mxu0 %v1891
        %2302 = vmatmul.mubr.f32.gmra.mxu0 %v1855
        %v2303 = vpop.f32.mrf.mxu0
        %v2304 = vadd.f32 %v2059, %v2303
        %v2305 = vpop.f32.mrf.mxu0
        %2306 = vmatprep.mubr.f32.mxu0 %v1892
        %2307 = vmatmul.mubr.f32.gmra.mxu0 %v1856
        %v2308 = vpop.f32.mrf.mxu0
        %v2309 = vadd.f32 %v2064, %v2308
        %v2310 = vpop.f32.mrf.mxu0
        %2311 = vmatprep.mubr.f32.mxu0 %v1893
        %2312 = vmatmul.mubr.f32.gmra.mxu0 %v1857
        %v2313 = vpop.f32.mrf.mxu0
        %v2314 = vadd.f32 %v2069, %v2313
        %v2315 = vpop.f32.mrf.mxu0
        %2316 = vmatprep.mubr.f32.mxu0 %v1894
        %2317 = vmatmul.mubr.f32.gmra.mxu0 %v1858
        %v2318 = vpop.f32.mrf.mxu0
        %v2319 = vadd.f32 %v2074, %v2318
        %v2320 = vpop.f32.mrf.mxu0
        %2321 = vmatprep.mubr.f32.mxu0 %v1895
        %2322 = vmatmul.mubr.f32.gmra.mxu0 %v1859
        %v2323 = vpop.f32.mrf.mxu0
        %v2324 = vadd.f32 %v2079, %v2323
        %v2325 = vpop.f32.mrf.mxu0
        %2326 = vmatprep.mubr.f32.mxu0 %v1896
        %2327 = vmatmul.mubr.f32.gmra.mxu0 %v1860
        %v2328 = vpop.f32.mrf.mxu0
        %v2329 = vadd.f32 %v2084, %v2328
        %v2330 = vpop.f32.mrf.mxu0
        %2331 = vmatprep.mubr.f32.mxu0 %v1897
        %2332 = vmatmul.mubr.f32.gmra.mxu0 %v1861
        %v2333 = vpop.f32.mrf.mxu0
        %v2334 = vadd.f32 %v2089, %v2333
        %v2335 = vpop.f32.mrf.mxu0
        %2336 = vmatprep.mubr.f32.mxu0 %v1898
        %2337 = vmatmul.mubr.f32.gmra.mxu0 %v1862
        %v2338 = vpop.f32.mrf.mxu0
        %v2339 = vadd.f32 %v2094, %v2338
        %v2340 = vpop.f32.mrf.mxu0
        %2341 = vmatprep.mubr.f32.mxu0 %v1899
        %2342 = vmatmul.mubr.f32.gmra.mxu0 %v1863
        %v2343 = vpop.f32.mrf.mxu0
        %v2344 = vadd.f32 %v2099, %v2343
        %v2345 = vpop.f32.mrf.mxu0
        %2346 = vmatprep.mubr.f32.mxu0 %v1900
        %2347 = vmatmul.mubr.f32.gmra.mxu0 %v1864
        %v2348 = vpop.f32.mrf.mxu0
        %v2349 = vadd.f32 %v2104, %v2348
        %v2350 = vpop.f32.mrf.mxu0
        %2351 = vmatprep.mubr.f32.mxu0 %v1901
        %2352 = vmatmul.mubr.f32.gmra.mxu0 %v1865
        %v2353 = vpop.f32.mrf.mxu0
        %v2354 = vadd.f32 %v2109, %v2353
        %v2355 = vpop.f32.mrf.mxu0
        %2356 = vmatprep.mubr.f32.mxu0 %v1902
        %2357 = vmatmul.mubr.f32.gmra.mxu0 %v1866
        %v2358 = vpop.f32.mrf.mxu0
        %v2359 = vadd.f32 %v2114, %v2358
        %v2360 = vpop.f32.mrf.mxu0
        %2361 = vmatprep.mubr.f32.mxu0 %v1903
        %2362 = vmatmul.mubr.f32.gmra.mxu0 %v1867
        %v2363 = vpop.f32.mrf.mxu0
        %v2364 = vadd.f32 %v2119, %v2363
        %v2365 = vpop.f32.mrf.mxu0
        %2366 = vmatprep.mubr.f32.mxu0 %v1904
        %2367 = vmatmul.mubr.f32.gmra.mxu0 %v1868
        %v2368 = vpop.f32.mrf.mxu0
        %v2369 = vadd.f32 %v2124, %v2368
        %v2370 = vpop.f32.mrf.mxu0
        %2371 = vmatprep.mubr.f32.mxu0 %v1905
        %2372 = vmatmul.mubr.f32.gmra.mxu0 %v1869
        %v2373 = vpop.f32.mrf.mxu0
        %v2374 = vadd.f32 %v2129, %v2373
        %v2375 = vpop.f32.mrf.mxu0
        %2376 = vmatprep.mubr.f32.mxu0 %v1906
        %2377 = vmatmul.mubr.f32.gmra.mxu0 %v1870
        %v2378 = vpop.f32.mrf.mxu0
        %v2379 = vadd.f32 %v2134, %v2378
        %v2380 = vpop.f32.mrf.mxu0
        %2381 = vmatprep.mubr.f32.mxu0 %v1907
        %2382 = vmatmul.mubr.f32.gmra.mxu0 %v1871
        %v2383 = vpop.f32.mrf.mxu0
        %v2384 = vadd.f32 %v2139, %v2383
        %v2385 = vpop.f32.mrf.mxu0
        %2386 = vmatprep.mubr.f32.mxu0 %v1908
        %2387 = vmatmul.mubr.f32.gmra.mxu0 %v1872
        %v2388 = vpop.f32.mrf.mxu0
        %v2389 = vadd.f32 %v2144, %v2388
        %v2390 = vpop.f32.mrf.mxu0
        %2391 = vmatprep.mubr.f32.mxu0 %v1909
        %2392 = vmatmul.mubr.f32.gmra.mxu0 %v1873
        %v2393 = vpop.f32.mrf.mxu0
        %v2394 = vadd.f32 %v2149, %v2393
        %v2395 = vpop.f32.mrf.mxu0
        %2396 = vmatprep.mubr.f32.mxu0 %v1910
        %2397 = vmatmul.mubr.f32.gmra.mxu0 %v1874
        %v2398 = vpop.f32.mrf.mxu0
        %v2399 = vadd.f32 %v2154, %v2398
        %v2400 = vpop.f32.mrf.mxu0
        %2401 = vmatprep.mubr.f32.mxu0 %v1911
        %2402 = vmatmul.mubr.f32.gmra.mxu0 %v1875
        %v2403 = vpop.f32.mrf.mxu0
        %v2404 = vadd.f32 %v2159, %v2403
        %v2405 = vpop.f32.mrf.mxu0
        %2406 = vmatprep.mubr.f32.mxu0 %v1912
        %2407 = vmatmul.mubr.f32.gmra.mxu0 %v1876
        %v2408 = vpop.f32.mrf.mxu0
        %v2409 = vadd.f32 %v2164, %v2408
        %v2410 = vpop.f32.mrf.mxu0
        %2411 = vmatprep.mubr.f32.mxu0 %v1913
        %2412 = vmatmul.mubr.f32.gmra.mxu0 %v1877
        %v2413 = vpop.f32.mrf.mxu0
        %v2414 = vadd.f32 %v2169, %v2413
        %v2415 = vpop.f32.mrf.mxu0
        %2416 = vmatprep.mubr.f32.mxu0 %v1914
        %2417 = vmatmul.mubr.f32.gmra.mxu0 %v1878
        %v2418 = vpop.f32.mrf.mxu0
        %v2419 = vadd.f32 %v2174, %v2418
        %v2420 = vpop.f32.mrf.mxu0
        %2421 = vmatprep.mubr.f32.mxu0 %v1915
        %2422 = vmatmul.mubr.f32.gmra.mxu0 %v1879
        %v2423 = vpop.f32.mrf.mxu0
        %v2424 = vadd.f32 %v2179, %v2423
        %v2425 = vpop.f32.mrf.mxu0
        %2426 = vmatprep.mubr.f32.mxu0 %v1916
        %2427 = vmatmul.mubr.f32.gmra.mxu0 %v1880
        %v2428 = vpop.f32.mrf.mxu0
        %v2429 = vadd.f32 %v2184, %v2428
        %v2430 = vpop.f32.mrf.mxu0
        %2431 = vmatprep.mubr.f32.mxu0 %v1917
        %2432 = vmatmul.mubr.f32.gmra.mxu0 %v1881
        %v2433 = vpop.f32.mrf.mxu0
        %v2434 = vadd.f32 %v2189, %v2433
        %v2435 = vpop.f32.mrf.mxu0
        %2436 = vmatprep.mubr.f32.mxu0 %v1918
        %2437 = vmatmul.mubr.f32.gmra.mxu0 %v1882
        %v2438 = vpop.f32.mrf.mxu0
        %v2439 = vadd.f32 %v2194, %v2438
        %v2440 = vpop.f32.mrf.mxu0
        %2441 = vmatprep.mubr.f32.mxu0 %v1919
        %2442 = vmatmul.mubr.f32.gmra.mxu0 %v1883
        %v2443 = vpop.f32.mrf.mxu0
        %v2444 = vadd.f32 %v2199, %v2443
        %v2445 = vpop.f32.mrf.mxu0
        %2446 = vmatprep.mubr.f32.mxu0 %v1920
        %2447 = vmatmul.mubr.f32.gmra.mxu0 %v1884
        %v2448 = vpop.f32.mrf.mxu0
        %v2449 = vadd.f32 %v2204, %v2448
        %v2450 = vpop.f32.mrf.mxu0
        %2451 = vmatprep.mubr.f32.mxu0 %v1921
        %2452 = vmatmul.mubr.f32.gmra.mxu0 %v1885
        %v2453 = vpop.f32.mrf.mxu0
        %v2454 = vadd.f32 %v2209, %v2453
        %v2455 = vpop.f32.mrf.mxu0
        %2456 = vmatprep.mubr.f32.mxu0 %v1922
        %2457 = vmatmul.mubr.f32.gmra.mxu0 %v1886
        %v2458 = vpop.f32.mrf.mxu0
        %v2459 = vadd.f32 %v2214, %v2458
        %v2460 = vpop.f32.mrf.mxu0
        %2461 = vmatprep.mubr.f32.mxu0 %v1923
        %2462 = vmatmul.mubr.f32.gmra.mxu0 %v1887
        %v2463 = vpop.f32.mrf.mxu0
        %v2464 = vadd.f32 %v2219, %v2463
        %v2465 = vpop.f32.mrf.mxu0
        %2466 = vmatprep.mubr.f32.mxu0 %v1924
        %2467 = vmatmul.mubr.f32.gmra.mxu0 %v1888
        %v2468 = vpop.f32.mrf.mxu0
        %v2469 = vadd.f32 %v2224, %v2468
        %v2470 = vpop.f32.mrf.mxu0
        %2471 = vmatprep.mubr.f32.mxu0 %v1925
        %2472 = vmatmul.mubr.f32.gmra.mxu0 %v1889
        %v2473 = vpop.f32.mrf.mxu0
        %v2474 = vadd.f32 %v2229, %v2473
        %v2475 = vpop.f32.mrf.mxu0
        %2476 = vmatprep.mubr.f32.mxu0 %v1926
        %2477 = vmatmul.mubr.f32.gmra.mxu0 %v1890
        %v2478 = vpop.f32.mrf.mxu0
        %v2479 = vadd.f32 %v2234, %v2478
        %v2480 = vpop.f32.mrf.mxu0
        %2481 = vdwg.mxu0
        %s2482 = scalar_lea.vmem %s164, 576 [#allocation9]
        %2483 = vst [vmem:[%s2482] sm:$0xff] %v2304
        %2484 = vst [vmem:[%s2482 + $0x8] sm:$0xff] %v2309
        %2485 = vst [vmem:[%s2482 + $0x10] sm:$0xff] %v2314
        %2486 = vst [vmem:[%s2482 + $0x18] sm:$0xff] %v2319
        %2487 = vst [vmem:[%s2482 + $0x20] sm:$0xff] %v2324
        %2488 = vst [vmem:[%s2482 + $0x28] sm:$0xff] %v2329
        %2489 = vst [vmem:[%s2482 + $0x30] sm:$0xff] %v2334
        %2490 = vst [vmem:[%s2482 + $0x38] sm:$0xff] %v2339
        %2491 = vst [vmem:[%s2482 + $0x40] sm:$0xff] %v2344
        %2492 = vst [vmem:[%s2482 + $0x48] sm:$0xff] %v2349
        %2493 = vst [vmem:[%s2482 + $0x50] sm:$0xff] %v2354
        %2494 = vst [vmem:[%s2482 + $0x58] sm:$0xff] %v2359
        %2495 = vst [vmem:[%s2482 + $0x60] sm:$0xff] %v2364
        %2496 = vst [vmem:[%s2482 + $0x68] sm:$0xff] %v2369
        %2497 = vst [vmem:[%s2482 + $0x70] sm:$0xff] %v2374
        %2498 = vst [vmem:[%s2482 + $0x78] sm:$0xff] %v2379
        %2499 = vst [vmem:[%s2482 + $0x80] sm:$0xff] %v2384
        %2500 = vst [vmem:[%s2482 + $0x88] sm:$0xff] %v2389
        %2501 = vst [vmem:[%s2482 + $0x90] sm:$0xff] %v2394
        %2502 = vst [vmem:[%s2482 + $0x98] sm:$0xff] %v2399
        %2503 = vst [vmem:[%s2482 + $0xa0] sm:$0xff] %v2404
        %2504 = vst [vmem:[%s2482 + $0xa8] sm:$0xff] %v2409
        %2505 = vst [vmem:[%s2482 + $0xb0] sm:$0xff] %v2414
        %2506 = vst [vmem:[%s2482 + $0xb8] sm:$0xff] %v2419
        %2507 = vst [vmem:[%s2482 + $0xc0] sm:$0xff] %v2424
        %2508 = vst [vmem:[%s2482 + $0xc8] sm:$0xff] %v2429
        %2509 = vst [vmem:[%s2482 + $0xd0] sm:$0xff] %v2434
        %2510 = vst [vmem:[%s2482 + $0xd8] sm:$0xff] %v2439
        %2511 = vst [vmem:[%s2482 + $0xe0] sm:$0xff] %v2444
        %2512 = vst [vmem:[%s2482 + $0xe8] sm:$0xff] %v2449
        %2513 = vst [vmem:[%s2482 + $0xf0] sm:$0xff] %v2454
        %2514 = vst [vmem:[%s2482 + $0xf8] sm:$0xff] %v2459
        %2515 = vst [vmem:[%s2482 + $0x100] sm:$0xff] %v2464
        %2516 = vst [vmem:[%s2482 + $0x108] sm:$0xff] %v2469
        %2517 = vst [vmem:[%s2482 + $0x110] sm:$0xff] %v2474
        %2518 = vst [vmem:[%s2482 + $0x118] sm:$0xff] %v2479
        %v2519 = vld [vmem:[#allocation2 + $0x13] sm:$0xff]
        %v2520 = vld [vmem:[#allocation2 + $0x1b] sm:$0xff]
        %v2521 = vld [vmem:[#allocation2 + $0x23] sm:$0xff]
        %v2522 = vld [vmem:[#allocation2 + $0x2b] sm:$0xff]
        %v2523 = vld [vmem:[#allocation2 + $0x33] sm:$0xff]
        %v2524 = vld [vmem:[#allocation2 + $0x3b] sm:$0xff]
        %v2525 = vld [vmem:[#allocation2 + $0x43] sm:$0xff]
        %v2526 = vld [vmem:[#allocation2 + $0x4b] sm:$0xff]
        %v2527 = vld [vmem:[#allocation2 + $0x53] sm:$0xff]
        %v2528 = vld [vmem:[#allocation2 + $0x5b] sm:$0xff]
        %v2529 = vld [vmem:[#allocation2 + $0x63] sm:$0xff]
        %v2530 = vld [vmem:[#allocation2 + $0x6b] sm:$0xff]
        %v2531 = vld [vmem:[#allocation2 + $0x73] sm:$0xff]
        %v2532 = vld [vmem:[#allocation2 + $0x7b] sm:$0xff]
        %v2533 = vld [vmem:[#allocation2 + $0x83] sm:$0xff]
        %v2534 = vld [vmem:[#allocation2 + $0x8b] sm:$0xff]
        %v2535 = vld [vmem:[#allocation2 + $0x93] sm:$0xff]
        %v2536 = vld [vmem:[#allocation2 + $0x9b] sm:$0xff]
        %v2537 = vld [vmem:[#allocation2 + $0xa3] sm:$0xff]
        %v2538 = vld [vmem:[#allocation2 + $0xab] sm:$0xff]
        %v2539 = vld [vmem:[#allocation2 + $0xb3] sm:$0xff]
        %v2540 = vld [vmem:[#allocation2 + $0xbb] sm:$0xff]
        %v2541 = vld [vmem:[#allocation2 + $0xc3] sm:$0xff]
        %v2542 = vld [vmem:[#allocation2 + $0xcb] sm:$0xff]
        %v2543 = vld [vmem:[#allocation2 + $0xd3] sm:$0xff]
        %v2544 = vld [vmem:[#allocation2 + $0xdb] sm:$0xff]
        %v2545 = vld [vmem:[#allocation2 + $0xe3] sm:$0xff]
        %v2546 = vld [vmem:[#allocation2 + $0xeb] sm:$0xff]
        %v2547 = vld [vmem:[#allocation2 + $0xf3] sm:$0xff]
        %v2548 = vld [vmem:[#allocation2 + $0xfb] sm:$0xff]
        %v2549 = vld [vmem:[#allocation2 + $0x103] sm:$0xff]
        %v2550 = vld [vmem:[#allocation2 + $0x10b] sm:$0xff]
        %v2551 = vld [vmem:[#allocation2 + $0x113] sm:$0xff]
        %v2552 = vld [vmem:[#allocation2 + $0x11b] sm:$0xff]
        %v2553 = vld [vmem:[#allocation2 + $0x123] sm:$0xff]
        %v2554 = vld [vmem:[#allocation2 + $0x12b] sm:$0xff]
        %v2555 = vld [vmem:[#allocation2 + $0x14] sm:$0xff]
        %v2556 = vld [vmem:[#allocation2 + $0x1c] sm:$0xff]
        %v2557 = vld [vmem:[#allocation2 + $0x24] sm:$0xff]
        %v2558 = vld [vmem:[#allocation2 + $0x2c] sm:$0xff]
        %v2559 = vld [vmem:[#allocation2 + $0x34] sm:$0xff]
        %v2560 = vld [vmem:[#allocation2 + $0x3c] sm:$0xff]
        %v2561 = vld [vmem:[#allocation2 + $0x44] sm:$0xff]
        %v2562 = vld [vmem:[#allocation2 + $0x4c] sm:$0xff]
        %v2563 = vld [vmem:[#allocation2 + $0x54] sm:$0xff]
        %v2564 = vld [vmem:[#allocation2 + $0x5c] sm:$0xff]
        %v2565 = vld [vmem:[#allocation2 + $0x64] sm:$0xff]
        %v2566 = vld [vmem:[#allocation2 + $0x6c] sm:$0xff]
        %v2567 = vld [vmem:[#allocation2 + $0x74] sm:$0xff]
        %v2568 = vld [vmem:[#allocation2 + $0x7c] sm:$0xff]
        %v2569 = vld [vmem:[#allocation2 + $0x84] sm:$0xff]
        %v2570 = vld [vmem:[#allocation2 + $0x8c] sm:$0xff]
        %v2571 = vld [vmem:[#allocation2 + $0x94] sm:$0xff]
        %v2572 = vld [vmem:[#allocation2 + $0x9c] sm:$0xff]
        %v2573 = vld [vmem:[#allocation2 + $0xa4] sm:$0xff]
        %v2574 = vld [vmem:[#allocation2 + $0xac] sm:$0xff]
        %v2575 = vld [vmem:[#allocation2 + $0xb4] sm:$0xff]
        %v2576 = vld [vmem:[#allocation2 + $0xbc] sm:$0xff]
        %v2577 = vld [vmem:[#allocation2 + $0xc4] sm:$0xff]
        %v2578 = vld [vmem:[#allocation2 + $0xcc] sm:$0xff]
        %v2579 = vld [vmem:[#allocation2 + $0xd4] sm:$0xff]
        %v2580 = vld [vmem:[#allocation2 + $0xdc] sm:$0xff]
        %v2581 = vld [vmem:[#allocation2 + $0xe4] sm:$0xff]
        %v2582 = vld [vmem:[#allocation2 + $0xec] sm:$0xff]
        %v2583 = vld [vmem:[#allocation2 + $0xf4] sm:$0xff]
        %v2584 = vld [vmem:[#allocation2 + $0xfc] sm:$0xff]
        %v2585 = vld [vmem:[#allocation2 + $0x104] sm:$0xff]
        %v2586 = vld [vmem:[#allocation2 + $0x10c] sm:$0xff]
        %v2587 = vld [vmem:[#allocation2 + $0x114] sm:$0xff]
        %v2588 = vld [vmem:[#allocation2 + $0x11c] sm:$0xff]
        %v2589 = vld [vmem:[#allocation2 + $0x124] sm:$0xff]
        %v2590 = vld [vmem:[#allocation2 + $0x12c] sm:$0xff]
        %v2591 = vld [vmem:[#allocation2 + $0x25] sm:$0xff]
        %v2592 = vld [vmem:[#allocation2 + $0x2d] sm:$0xff]
        %v2593 = vld [vmem:[#allocation2 + $0x35] sm:$0xff]
        %v2594 = vld [vmem:[#allocation2 + $0x3d] sm:$0xff]
        %v2595 = vld [vmem:[#allocation2 + $0x45] sm:$0xff]
        %v2596 = vld [vmem:[#allocation2 + $0x4d] sm:$0xff]
        %v2597 = vld [vmem:[#allocation2 + $0x55] sm:$0xff]
        %v2598 = vld [vmem:[#allocation2 + $0x5d] sm:$0xff]
        %v2599 = vld [vmem:[#allocation2 + $0x65] sm:$0xff]
        %v2600 = vld [vmem:[#allocation2 + $0x6d] sm:$0xff]
        %v2601 = vld [vmem:[#allocation2 + $0x75] sm:$0xff]
        %v2602 = vld [vmem:[#allocation2 + $0x7d] sm:$0xff]
        %v2603 = vld [vmem:[#allocation2 + $0x85] sm:$0xff]
        %v2604 = vld [vmem:[#allocation2 + $0x8d] sm:$0xff]
        %v2605 = vld [vmem:[#allocation2 + $0x95] sm:$0xff]
        %v2606 = vld [vmem:[#allocation2 + $0x9d] sm:$0xff]
        %v2607 = vld [vmem:[#allocation2 + $0xa5] sm:$0xff]
        %v2608 = vld [vmem:[#allocation2 + $0xad] sm:$0xff]
        %v2609 = vld [vmem:[#allocation2 + $0xb5] sm:$0xff]
        %v2610 = vld [vmem:[#allocation2 + $0xbd] sm:$0xff]
        %v2611 = vld [vmem:[#allocation2 + $0xc5] sm:$0xff]
        %v2612 = vld [vmem:[#allocation2 + $0xcd] sm:$0xff]
        %v2613 = vld [vmem:[#allocation2 + $0xd5] sm:$0xff]
        %v2614 = vld [vmem:[#allocation2 + $0xdd] sm:$0xff]
        %v2615 = vld [vmem:[#allocation2 + $0xe5] sm:$0xff]
        %v2616 = vld [vmem:[#allocation2 + $0xed] sm:$0xff]
        %v2617 = vld [vmem:[#allocation2 + $0xf5] sm:$0xff]
        %v2618 = vld [vmem:[#allocation2 + $0xfd] sm:$0xff]
        %v2619 = vld [vmem:[#allocation2 + $0x105] sm:$0xff]
        %v2620 = vld [vmem:[#allocation2 + $0x10d] sm:$0xff]
        %v2621 = vld [vmem:[#allocation2 + $0x115] sm:$0xff]
        %v2622 = vld [vmem:[#allocation2 + $0x11d] sm:$0xff]
        %v2623 = vld [vmem:[#allocation2 + $0x125] sm:$0xff]
        %v2624 = vld [vmem:[#allocation2 + $0x12d] sm:$0xff]
        %v2625 = vld [vmem:[#allocation2 + $0x135] sm:$0xff]
        %v2626 = vld [vmem:[#allocation2 + $0x13d] sm:$0xff]
        %v2627 = vld [vmem:[#allocation2 + $0x26] sm:$0xff]
        %v2628 = vld [vmem:[#allocation2 + $0x2e] sm:$0xff]
        %v2629 = vld [vmem:[#allocation2 + $0x36] sm:$0xff]
        %v2630 = vld [vmem:[#allocation2 + $0x3e] sm:$0xff]
        %v2631 = vld [vmem:[#allocation2 + $0x46] sm:$0xff]
        %v2632 = vld [vmem:[#allocation2 + $0x4e] sm:$0xff]
        %v2633 = vld [vmem:[#allocation2 + $0x56] sm:$0xff]
        %v2634 = vld [vmem:[#allocation2 + $0x5e] sm:$0xff]
        %v2635 = vld [vmem:[#allocation2 + $0x66] sm:$0xff]
        %v2636 = vld [vmem:[#allocation2 + $0x6e] sm:$0xff]
        %v2637 = vld [vmem:[#allocation2 + $0x76] sm:$0xff]
        %v2638 = vld [vmem:[#allocation2 + $0x7e] sm:$0xff]
        %v2639 = vld [vmem:[#allocation2 + $0x86] sm:$0xff]
        %v2640 = vld [vmem:[#allocation2 + $0x8e] sm:$0xff]
        %v2641 = vld [vmem:[#allocation2 + $0x96] sm:$0xff]
        %v2642 = vld [vmem:[#allocation2 + $0x9e] sm:$0xff]
        %v2643 = vld [vmem:[#allocation2 + $0xa6] sm:$0xff]
        %v2644 = vld [vmem:[#allocation2 + $0xae] sm:$0xff]
        %v2645 = vld [vmem:[#allocation2 + $0xb6] sm:$0xff]
        %v2646 = vld [vmem:[#allocation2 + $0xbe] sm:$0xff]
        %v2647 = vld [vmem:[#allocation2 + $0xc6] sm:$0xff]
        %v2648 = vld [vmem:[#allocation2 + $0xce] sm:$0xff]
        %v2649 = vld [vmem:[#allocation2 + $0xd6] sm:$0xff]
        %v2650 = vld [vmem:[#allocation2 + $0xde] sm:$0xff]
        %v2651 = vld [vmem:[#allocation2 + $0xe6] sm:$0xff]
        %v2652 = vld [vmem:[#allocation2 + $0xee] sm:$0xff]
        %v2653 = vld [vmem:[#allocation2 + $0xf6] sm:$0xff]
        %v2654 = vld [vmem:[#allocation2 + $0xfe] sm:$0xff]
        %v2655 = vld [vmem:[#allocation2 + $0x106] sm:$0xff]
        %v2656 = vld [vmem:[#allocation2 + $0x10e] sm:$0xff]
        %v2657 = vld [vmem:[#allocation2 + $0x116] sm:$0xff]
        %v2658 = vld [vmem:[#allocation2 + $0x11e] sm:$0xff]
        %v2659 = vld [vmem:[#allocation2 + $0x126] sm:$0xff]
        %v2660 = vld [vmem:[#allocation2 + $0x12e] sm:$0xff]
        %v2661 = vld [vmem:[#allocation2 + $0x136] sm:$0xff]
        %v2662 = vld [vmem:[#allocation2 + $0x13e] sm:$0xff]
        %s2663 = scalar_lea.vmem [#allocation4], 1536
        %v2664 = vld [vmem:[%s2663] sm:$0xff]
        %v2665 = vld [vmem:[%s2663 + $0x8] sm:$0xff]
        %v2666 = vld [vmem:[%s2663 + $0x10] sm:$0xff]
        %v2667 = vld [vmem:[%s2663 + $0x18] sm:$0xff]
        %v2668 = vld [vmem:[%s2663 + $0x20] sm:$0xff]
        %v2669 = vld [vmem:[%s2663 + $0x28] sm:$0xff]
        %v2670 = vld [vmem:[%s2663 + $0x30] sm:$0xff]
        %v2671 = vld [vmem:[%s2663 + $0x38] sm:$0xff]
        %v2672 = vld [vmem:[%s2663 + $0x40] sm:$0xff]
        %v2673 = vld [vmem:[%s2663 + $0x48] sm:$0xff]
        %v2674 = vld [vmem:[%s2663 + $0x50] sm:$0xff]
        %v2675 = vld [vmem:[%s2663 + $0x58] sm:$0xff]
        %v2676 = vld [vmem:[%s2663 + $0x60] sm:$0xff]
        %v2677 = vld [vmem:[%s2663 + $0x68] sm:$0xff]
        %v2678 = vld [vmem:[%s2663 + $0x70] sm:$0xff]
        %v2679 = vld [vmem:[%s2663 + $0x78] sm:$0xff]
        %v2680 = vld [vmem:[%s2663 + $0x80] sm:$0xff]
        %v2681 = vld [vmem:[%s2663 + $0x88] sm:$0xff]
        %v2682 = vld [vmem:[%s2663 + $0x90] sm:$0xff]
        %v2683 = vld [vmem:[%s2663 + $0x98] sm:$0xff]
        %v2684 = vld [vmem:[%s2663 + $0xa0] sm:$0xff]
        %v2685 = vld [vmem:[%s2663 + $0xa8] sm:$0xff]
        %v2686 = vld [vmem:[%s2663 + $0xb0] sm:$0xff]
        %v2687 = vld [vmem:[%s2663 + $0xb8] sm:$0xff]
        %v2688 = vld [vmem:[%s2663 + $0xc0] sm:$0xff]
        %v2689 = vld [vmem:[%s2663 + $0xc8] sm:$0xff]
        %v2690 = vld [vmem:[%s2663 + $0xd0] sm:$0xff]
        %v2691 = vld [vmem:[%s2663 + $0xd8] sm:$0xff]
        %v2692 = vld [vmem:[%s2663 + $0xe0] sm:$0xff]
        %v2693 = vld [vmem:[%s2663 + $0xe8] sm:$0xff]
        %v2694 = vld [vmem:[%s2663 + $0xf0] sm:$0xff]
        %v2695 = vld [vmem:[%s2663 + $0xf8] sm:$0xff]
        %v2696 = vld [vmem:[%s2663 + $0x100] sm:$0xff]
        %v2697 = vld [vmem:[%s2663 + $0x108] sm:$0xff]
        %v2698 = vld [vmem:[%s2663 + $0x110] sm:$0xff]
        %v2699 = vld [vmem:[%s2663 + $0x118] sm:$0xff]
        %v2700 = vld [vmem:[%s2663 + $0x120] sm:$0xff]
        %v2701 = vld [vmem:[%s2663 + $0x128] sm:$0xff]
        %v2702 = vld [vmem:[%s2663 + $0x130] sm:$0xff]
        %v2703 = vld [vmem:[%s2663 + $0x138] sm:$0xff]
        %v2704 = vld [vmem:[%s2663 + $0x140] sm:$0xff]
        %v2705 = vld [vmem:[%s2663 + $0x148] sm:$0xff]
        %v2706 = vld [vmem:[%s2663 + $0x150] sm:$0xff]
        %v2707 = vld [vmem:[%s2663 + $0x158] sm:$0xff]
        %v2708 = vld [vmem:[%s2663 + $0x160] sm:$0xff]
        %v2709 = vld [vmem:[%s2663 + $0x168] sm:$0xff]
        %v2710 = vld [vmem:[%s2663 + $0x170] sm:$0xff]
        %v2711 = vld [vmem:[%s2663 + $0x178] sm:$0xff]
        %v2712 = vld [vmem:[%s2663 + $0x180] sm:$0xff]
        %v2713 = vld [vmem:[%s2663 + $0x188] sm:$0xff]
        %v2714 = vld [vmem:[%s2663 + $0x190] sm:$0xff]
        %v2715 = vld [vmem:[%s2663 + $0x198] sm:$0xff]
        %v2716 = vld [vmem:[%s2663 + $0x1a0] sm:$0xff]
        %v2717 = vld [vmem:[%s2663 + $0x1a8] sm:$0xff]
        %v2718 = vld [vmem:[%s2663 + $0x1b0] sm:$0xff]
        %v2719 = vld [vmem:[%s2663 + $0x1b8] sm:$0xff]
        %v2720 = vld [vmem:[%s2663 + $0x1c0] sm:$0xff]
        %v2721 = vld [vmem:[%s2663 + $0x1c8] sm:$0xff]
        %v2722 = vld [vmem:[%s2663 + $0x1d0] sm:$0xff]
        %v2723 = vld [vmem:[%s2663 + $0x1d8] sm:$0xff]
        %v2724 = vld [vmem:[%s2663 + $0x1e0] sm:$0xff]
        %v2725 = vld [vmem:[%s2663 + $0x1e8] sm:$0xff]
        %v2726 = vld [vmem:[%s2663 + $0x1f0] sm:$0xff]
        %v2727 = vld [vmem:[%s2663 + $0x1f8] sm:$0xff]
        %2728 = vmatprep.subr.mxu0 0.0
        %2729 = vmatpush1.msra.mxu0 %v2679
        %2730 = vmatprep.subr.mxu0 0.0
        %2731 = vmatpush1.msra.mxu0 %v2678
        %2732 = vmatprep.subr.mxu0 0.0
        %2733 = vmatpush1.msra.mxu0 %v2677
        %2734 = vmatprep.subr.mxu0 0.0
        %2735 = vmatpush1.msra.mxu0 %v2676
        %2736 = vmatprep.subr.mxu0 0.0
        %2737 = vmatpush1.msra.mxu0 %v2675
        %2738 = vmatprep.subr.mxu0 0.0
        %2739 = vmatpush1.msra.mxu0 %v2674
        %2740 = vmatprep.subr.mxu0 0.0
        %2741 = vmatpush1.msra.mxu0 %v2673
        %2742 = vmatprep.subr.mxu0 0.0
        %2743 = vmatpush1.msra.mxu0 %v2672
        %2744 = vmatprep.subr.mxu0 0.0
        %2745 = vmatpush1.msra.mxu0 %v2671
        %2746 = vmatprep.subr.mxu0 0.0
        %2747 = vmatpush1.msra.mxu0 %v2670
        %2748 = vmatprep.subr.mxu0 0.0
        %2749 = vmatpush1.msra.mxu0 %v2669
        %2750 = vmatprep.subr.mxu0 0.0
        %2751 = vmatpush1.msra.mxu0 %v2668
        %2752 = vmatprep.subr.mxu0 0.0
        %2753 = vmatpush1.msra.mxu0 %v2667
        %2754 = vmatprep.subr.mxu0 0.0
        %2755 = vmatpush1.msra.mxu0 %v2666
        %2756 = vmatprep.subr.mxu0 0.0
        %2757 = vmatpush1.msra.mxu0 %v2665
        %2758 = vmatprep.subr.mxu0 0.0
        %2759 = vmatpush1.msra.mxu0 %v2664
        %2760 = vmatprep.subr.mxu0 0.0
        %2761 = vmatpush2.msra.mxu0 %v2695
        %2762 = vmatprep.subr.mxu0 0.0
        %2763 = vmatpush2.msra.mxu0 %v2694
        %2764 = vmatprep.subr.mxu0 0.0
        %2765 = vmatpush2.msra.mxu0 %v2693
        %2766 = vmatprep.subr.mxu0 0.0
        %2767 = vmatpush2.msra.mxu0 %v2692
        %2768 = vmatprep.subr.mxu0 0.0
        %2769 = vmatpush2.msra.mxu0 %v2691
        %2770 = vmatprep.subr.mxu0 0.0
        %2771 = vmatpush2.msra.mxu0 %v2690
        %2772 = vmatprep.subr.mxu0 0.0
        %2773 = vmatpush2.msra.mxu0 %v2689
        %2774 = vmatprep.subr.mxu0 0.0
        %2775 = vmatpush2.msra.mxu0 %v2688
        %2776 = vmatprep.subr.mxu0 0.0
        %2777 = vmatpush2.msra.mxu0 %v2687
        %2778 = vmatprep.subr.mxu0 0.0
        %2779 = vmatpush2.msra.mxu0 %v2686
        %2780 = vmatprep.subr.mxu0 0.0
        %2781 = vmatpush2.msra.mxu0 %v2685
        %2782 = vmatprep.subr.mxu0 0.0
        %2783 = vmatpush2.msra.mxu0 %v2684
        %2784 = vmatprep.subr.mxu0 0.0
        %2785 = vmatpush2.msra.mxu0 %v2683
        %2786 = vmatprep.subr.mxu0 0.0
        %2787 = vmatpush2.msra.mxu0 %v2682
        %2788 = vmatprep.subr.mxu0 0.0
        %2789 = vmatpush2.msra.mxu0 %v2681
        %2790 = vmatprep.subr.mxu0 0.0
        %2791 = vmatpush2.msra.mxu0 %v2680
        %2792 = vmatprep.mubr.f32.mxu0 %v2555
        %2793 = vmatmul.mubr.f32.gmra.mxu0 %v2519
        %v2794 = vpop.f32.mrf.mxu0
        %v2795 = vadd.f32 %v519, %v2794
        %v2796 = vpop.f32.mrf.mxu0
        %2797 = vmatprep.mubr.f32.mxu0 %v2556
        %2798 = vmatmul.mubr.f32.gmra.mxu0 %v2520
        %v2799 = vpop.f32.mrf.mxu0
        %v2800 = vadd.f32 %v519, %v2799
        %v2801 = vpop.f32.mrf.mxu0
        %2802 = vmatprep.mubr.f32.mxu0 %v2557
        %2803 = vmatmul.mubr.f32.gmra.mxu0 %v2521
        %v2804 = vpop.f32.mrf.mxu0
        %v2805 = vadd.f32 %v519, %v2804
        %v2806 = vpop.f32.mrf.mxu0
        %2807 = vmatprep.mubr.f32.mxu0 %v2558
        %2808 = vmatmul.mubr.f32.gmra.mxu0 %v2522
        %v2809 = vpop.f32.mrf.mxu0
        %v2810 = vadd.f32 %v519, %v2809
        %v2811 = vpop.f32.mrf.mxu0
        %2812 = vmatprep.mubr.f32.mxu0 %v2559
        %2813 = vmatmul.mubr.f32.gmra.mxu0 %v2523
        %v2814 = vpop.f32.mrf.mxu0
        %v2815 = vadd.f32 %v519, %v2814
        %v2816 = vpop.f32.mrf.mxu0
        %2817 = vmatprep.mubr.f32.mxu0 %v2560
        %2818 = vmatmul.mubr.f32.gmra.mxu0 %v2524
        %v2819 = vpop.f32.mrf.mxu0
        %v2820 = vadd.f32 %v519, %v2819
        %v2821 = vpop.f32.mrf.mxu0
        %2822 = vmatprep.mubr.f32.mxu0 %v2561
        %2823 = vmatmul.mubr.f32.gmra.mxu0 %v2525
        %v2824 = vpop.f32.mrf.mxu0
        %v2825 = vadd.f32 %v519, %v2824
        %v2826 = vpop.f32.mrf.mxu0
        %2827 = vmatprep.mubr.f32.mxu0 %v2562
        %2828 = vmatmul.mubr.f32.gmra.mxu0 %v2526
        %v2829 = vpop.f32.mrf.mxu0
        %v2830 = vadd.f32 %v519, %v2829
        %v2831 = vpop.f32.mrf.mxu0
        %2832 = vmatprep.mubr.f32.mxu0 %v2563
        %2833 = vmatmul.mubr.f32.gmra.mxu0 %v2527
        %v2834 = vpop.f32.mrf.mxu0
        %v2835 = vadd.f32 %v519, %v2834
        %v2836 = vpop.f32.mrf.mxu0
        %2837 = vmatprep.mubr.f32.mxu0 %v2564
        %2838 = vmatmul.mubr.f32.gmra.mxu0 %v2528
        %v2839 = vpop.f32.mrf.mxu0
        %v2840 = vadd.f32 %v519, %v2839
        %v2841 = vpop.f32.mrf.mxu0
        %2842 = vmatprep.mubr.f32.mxu0 %v2565
        %2843 = vmatmul.mubr.f32.gmra.mxu0 %v2529
        %v2844 = vpop.f32.mrf.mxu0
        %v2845 = vadd.f32 %v519, %v2844
        %v2846 = vpop.f32.mrf.mxu0
        %2847 = vmatprep.mubr.f32.mxu0 %v2566
        %2848 = vmatmul.mubr.f32.gmra.mxu0 %v2530
        %v2849 = vpop.f32.mrf.mxu0
        %v2850 = vadd.f32 %v519, %v2849
        %v2851 = vpop.f32.mrf.mxu0
        %2852 = vmatprep.mubr.f32.mxu0 %v2567
        %2853 = vmatmul.mubr.f32.gmra.mxu0 %v2531
        %v2854 = vpop.f32.mrf.mxu0
        %v2855 = vadd.f32 %v519, %v2854
        %v2856 = vpop.f32.mrf.mxu0
        %2857 = vmatprep.mubr.f32.mxu0 %v2568
        %2858 = vmatmul.mubr.f32.gmra.mxu0 %v2532
        %v2859 = vpop.f32.mrf.mxu0
        %v2860 = vadd.f32 %v519, %v2859
        %v2861 = vpop.f32.mrf.mxu0
        %2862 = vmatprep.mubr.f32.mxu0 %v2569
        %2863 = vmatmul.mubr.f32.gmra.mxu0 %v2533
        %v2864 = vpop.f32.mrf.mxu0
        %v2865 = vadd.f32 %v519, %v2864
        %v2866 = vpop.f32.mrf.mxu0
        %2867 = vmatprep.mubr.f32.mxu0 %v2570
        %2868 = vmatmul.mubr.f32.gmra.mxu0 %v2534
        %v2869 = vpop.f32.mrf.mxu0
        %v2870 = vadd.f32 %v519, %v2869
        %v2871 = vpop.f32.mrf.mxu0
        %2872 = vmatprep.mubr.f32.mxu0 %v2571
        %2873 = vmatmul.mubr.f32.gmra.mxu0 %v2535
        %v2874 = vpop.f32.mrf.mxu0
        %v2875 = vadd.f32 %v519, %v2874
        %v2876 = vpop.f32.mrf.mxu0
        %2877 = vmatprep.mubr.f32.mxu0 %v2572
        %2878 = vmatmul.mubr.f32.gmra.mxu0 %v2536
        %v2879 = vpop.f32.mrf.mxu0
        %v2880 = vadd.f32 %v519, %v2879
        %v2881 = vpop.f32.mrf.mxu0
        %2882 = vmatprep.mubr.f32.mxu0 %v2573
        %2883 = vmatmul.mubr.f32.gmra.mxu0 %v2537
        %v2884 = vpop.f32.mrf.mxu0
        %v2885 = vadd.f32 %v519, %v2884
        %v2886 = vpop.f32.mrf.mxu0
        %2887 = vmatprep.mubr.f32.mxu0 %v2574
        %2888 = vmatmul.mubr.f32.gmra.mxu0 %v2538
        %v2889 = vpop.f32.mrf.mxu0
        %v2890 = vadd.f32 %v519, %v2889
        %v2891 = vpop.f32.mrf.mxu0
        %2892 = vmatprep.mubr.f32.mxu0 %v2575
        %2893 = vmatmul.mubr.f32.gmra.mxu0 %v2539
        %v2894 = vpop.f32.mrf.mxu0
        %v2895 = vadd.f32 %v519, %v2894
        %v2896 = vpop.f32.mrf.mxu0
        %2897 = vmatprep.mubr.f32.mxu0 %v2576
        %2898 = vmatmul.mubr.f32.gmra.mxu0 %v2540
        %v2899 = vpop.f32.mrf.mxu0
        %v2900 = vadd.f32 %v519, %v2899
        %v2901 = vpop.f32.mrf.mxu0
        %2902 = vmatprep.mubr.f32.mxu0 %v2577
        %2903 = vmatmul.mubr.f32.gmra.mxu0 %v2541
        %v2904 = vpop.f32.mrf.mxu0
        %v2905 = vadd.f32 %v519, %v2904
        %v2906 = vpop.f32.mrf.mxu0
        %2907 = vmatprep.mubr.f32.mxu0 %v2578
        %2908 = vmatmul.mubr.f32.gmra.mxu0 %v2542
        %v2909 = vpop.f32.mrf.mxu0
        %v2910 = vadd.f32 %v519, %v2909
        %v2911 = vpop.f32.mrf.mxu0
        %2912 = vmatprep.mubr.f32.mxu0 %v2579
        %2913 = vmatmul.mubr.f32.gmra.mxu0 %v2543
        %v2914 = vpop.f32.mrf.mxu0
        %v2915 = vadd.f32 %v519, %v2914
        %v2916 = vpop.f32.mrf.mxu0
        %2917 = vmatprep.mubr.f32.mxu0 %v2580
        %2918 = vmatmul.mubr.f32.gmra.mxu0 %v2544
        %v2919 = vpop.f32.mrf.mxu0
        %v2920 = vadd.f32 %v519, %v2919
        %v2921 = vpop.f32.mrf.mxu0
        %2922 = vmatprep.mubr.f32.mxu0 %v2581
        %2923 = vmatmul.mubr.f32.gmra.mxu0 %v2545
        %v2924 = vpop.f32.mrf.mxu0
        %v2925 = vadd.f32 %v519, %v2924
        %v2926 = vpop.f32.mrf.mxu0
        %2927 = vmatprep.mubr.f32.mxu0 %v2582
        %2928 = vmatmul.mubr.f32.gmra.mxu0 %v2546
        %v2929 = vpop.f32.mrf.mxu0
        %v2930 = vadd.f32 %v519, %v2929
        %v2931 = vpop.f32.mrf.mxu0
        %2932 = vmatprep.mubr.f32.mxu0 %v2583
        %2933 = vmatmul.mubr.f32.gmra.mxu0 %v2547
        %v2934 = vpop.f32.mrf.mxu0
        %v2935 = vadd.f32 %v519, %v2934
        %v2936 = vpop.f32.mrf.mxu0
        %2937 = vmatprep.mubr.f32.mxu0 %v2584
        %2938 = vmatmul.mubr.f32.gmra.mxu0 %v2548
        %v2939 = vpop.f32.mrf.mxu0
        %v2940 = vadd.f32 %v519, %v2939
        %v2941 = vpop.f32.mrf.mxu0
        %2942 = vmatprep.mubr.f32.mxu0 %v2585
        %2943 = vmatmul.mubr.f32.gmra.mxu0 %v2549
        %v2944 = vpop.f32.mrf.mxu0
        %v2945 = vadd.f32 %v519, %v2944
        %v2946 = vpop.f32.mrf.mxu0
        %2947 = vmatprep.mubr.f32.mxu0 %v2586
        %2948 = vmatmul.mubr.f32.gmra.mxu0 %v2550
        %v2949 = vpop.f32.mrf.mxu0
        %v2950 = vadd.f32 %v519, %v2949
        %v2951 = vpop.f32.mrf.mxu0
        %2952 = vmatprep.mubr.f32.mxu0 %v2587
        %2953 = vmatmul.mubr.f32.gmra.mxu0 %v2551
        %v2954 = vpop.f32.mrf.mxu0
        %v2955 = vadd.f32 %v519, %v2954
        %v2956 = vpop.f32.mrf.mxu0
        %2957 = vmatprep.mubr.f32.mxu0 %v2588
        %2958 = vmatmul.mubr.f32.gmra.mxu0 %v2552
        %v2959 = vpop.f32.mrf.mxu0
        %v2960 = vadd.f32 %v519, %v2959
        %v2961 = vpop.f32.mrf.mxu0
        %2962 = vmatprep.mubr.f32.mxu0 %v2589
        %2963 = vmatmul.mubr.f32.gmra.mxu0 %v2553
        %v2964 = vpop.f32.mrf.mxu0
        %v2965 = vadd.f32 %v519, %v2964
        %v2966 = vpop.f32.mrf.mxu0
        %2967 = vmatprep.mubr.f32.mxu0 %v2590
        %2968 = vmatmul.mubr.f32.gmra.mxu0 %v2554
        %v2969 = vpop.f32.mrf.mxu0
        %v2970 = vadd.f32 %v519, %v2969
        %v2971 = vpop.f32.mrf.mxu0
        %2972 = vdwg.mxu0
        %2973 = vmatprep.subr.mxu0 0.0
        %2974 = vmatpush1.msra.mxu0 %v2711
        %2975 = vmatprep.subr.mxu0 0.0
        %2976 = vmatpush1.msra.mxu0 %v2710
        %2977 = vmatprep.subr.mxu0 0.0
        %2978 = vmatpush1.msra.mxu0 %v2709
        %2979 = vmatprep.subr.mxu0 0.0
        %2980 = vmatpush1.msra.mxu0 %v2708
        %2981 = vmatprep.subr.mxu0 0.0
        %2982 = vmatpush1.msra.mxu0 %v2707
        %2983 = vmatprep.subr.mxu0 0.0
        %2984 = vmatpush1.msra.mxu0 %v2706
        %2985 = vmatprep.subr.mxu0 0.0
        %2986 = vmatpush1.msra.mxu0 %v2705
        %2987 = vmatprep.subr.mxu0 0.0
        %2988 = vmatpush1.msra.mxu0 %v2704
        %2989 = vmatprep.subr.mxu0 0.0
        %2990 = vmatpush1.msra.mxu0 %v2703
        %2991 = vmatprep.subr.mxu0 0.0
        %2992 = vmatpush1.msra.mxu0 %v2702
        %2993 = vmatprep.subr.mxu0 0.0
        %2994 = vmatpush1.msra.mxu0 %v2701
        %2995 = vmatprep.subr.mxu0 0.0
        %2996 = vmatpush1.msra.mxu0 %v2700
        %2997 = vmatprep.subr.mxu0 0.0
        %2998 = vmatpush1.msra.mxu0 %v2699
        %2999 = vmatprep.subr.mxu0 0.0
        %3000 = vmatpush1.msra.mxu0 %v2698
        %3001 = vmatprep.subr.mxu0 0.0
        %3002 = vmatpush1.msra.mxu0 %v2697
        %3003 = vmatprep.subr.mxu0 0.0
        %3004 = vmatpush1.msra.mxu0 %v2696
        %3005 = vmatprep.subr.mxu0 0.0
        %3006 = vmatpush2.msra.mxu0 %v2727
        %3007 = vmatprep.subr.mxu0 0.0
        %3008 = vmatpush2.msra.mxu0 %v2726
        %3009 = vmatprep.subr.mxu0 0.0
        %3010 = vmatpush2.msra.mxu0 %v2725
        %3011 = vmatprep.subr.mxu0 0.0
        %3012 = vmatpush2.msra.mxu0 %v2724
        %3013 = vmatprep.subr.mxu0 0.0
        %3014 = vmatpush2.msra.mxu0 %v2723
        %3015 = vmatprep.subr.mxu0 0.0
        %3016 = vmatpush2.msra.mxu0 %v2722
        %3017 = vmatprep.subr.mxu0 0.0
        %3018 = vmatpush2.msra.mxu0 %v2721
        %3019 = vmatprep.subr.mxu0 0.0
        %3020 = vmatpush2.msra.mxu0 %v2720
        %3021 = vmatprep.subr.mxu0 0.0
        %3022 = vmatpush2.msra.mxu0 %v2719
        %3023 = vmatprep.subr.mxu0 0.0
        %3024 = vmatpush2.msra.mxu0 %v2718
        %3025 = vmatprep.subr.mxu0 0.0
        %3026 = vmatpush2.msra.mxu0 %v2717
        %3027 = vmatprep.subr.mxu0 0.0
        %3028 = vmatpush2.msra.mxu0 %v2716
        %3029 = vmatprep.subr.mxu0 0.0
        %3030 = vmatpush2.msra.mxu0 %v2715
        %3031 = vmatprep.subr.mxu0 0.0
        %3032 = vmatpush2.msra.mxu0 %v2714
        %3033 = vmatprep.subr.mxu0 0.0
        %3034 = vmatpush2.msra.mxu0 %v2713
        %3035 = vmatprep.subr.mxu0 0.0
        %3036 = vmatpush2.msra.mxu0 %v2712
        %3037 = vmatprep.mubr.f32.mxu0 %v2627
        %3038 = vmatmul.mubr.f32.gmra.mxu0 %v2591
        %v3039 = vpop.f32.mrf.mxu0
        %v3040 = vadd.f32 %v2795, %v3039
        %v3041 = vpop.f32.mrf.mxu0
        %3042 = vmatprep.mubr.f32.mxu0 %v2628
        %3043 = vmatmul.mubr.f32.gmra.mxu0 %v2592
        %v3044 = vpop.f32.mrf.mxu0
        %v3045 = vadd.f32 %v2800, %v3044
        %v3046 = vpop.f32.mrf.mxu0
        %3047 = vmatprep.mubr.f32.mxu0 %v2629
        %3048 = vmatmul.mubr.f32.gmra.mxu0 %v2593
        %v3049 = vpop.f32.mrf.mxu0
        %v3050 = vadd.f32 %v2805, %v3049
        %v3051 = vpop.f32.mrf.mxu0
        %3052 = vmatprep.mubr.f32.mxu0 %v2630
        %3053 = vmatmul.mubr.f32.gmra.mxu0 %v2594
        %v3054 = vpop.f32.mrf.mxu0
        %v3055 = vadd.f32 %v2810, %v3054
        %v3056 = vpop.f32.mrf.mxu0
        %3057 = vmatprep.mubr.f32.mxu0 %v2631
        %3058 = vmatmul.mubr.f32.gmra.mxu0 %v2595
        %v3059 = vpop.f32.mrf.mxu0
        %v3060 = vadd.f32 %v2815, %v3059
        %v3061 = vpop.f32.mrf.mxu0
        %3062 = vmatprep.mubr.f32.mxu0 %v2632
        %3063 = vmatmul.mubr.f32.gmra.mxu0 %v2596
        %v3064 = vpop.f32.mrf.mxu0
        %v3065 = vadd.f32 %v2820, %v3064
        %v3066 = vpop.f32.mrf.mxu0
        %3067 = vmatprep.mubr.f32.mxu0 %v2633
        %3068 = vmatmul.mubr.f32.gmra.mxu0 %v2597
        %v3069 = vpop.f32.mrf.mxu0
        %v3070 = vadd.f32 %v2825, %v3069
        %v3071 = vpop.f32.mrf.mxu0
        %3072 = vmatprep.mubr.f32.mxu0 %v2634
        %3073 = vmatmul.mubr.f32.gmra.mxu0 %v2598
        %v3074 = vpop.f32.mrf.mxu0
        %v3075 = vadd.f32 %v2830, %v3074
        %v3076 = vpop.f32.mrf.mxu0
        %3077 = vmatprep.mubr.f32.mxu0 %v2635
        %3078 = vmatmul.mubr.f32.gmra.mxu0 %v2599
        %v3079 = vpop.f32.mrf.mxu0
        %v3080 = vadd.f32 %v2835, %v3079
        %v3081 = vpop.f32.mrf.mxu0
        %3082 = vmatprep.mubr.f32.mxu0 %v2636
        %3083 = vmatmul.mubr.f32.gmra.mxu0 %v2600
        %v3084 = vpop.f32.mrf.mxu0
        %v3085 = vadd.f32 %v2840, %v3084
        %v3086 = vpop.f32.mrf.mxu0
        %3087 = vmatprep.mubr.f32.mxu0 %v2637
        %3088 = vmatmul.mubr.f32.gmra.mxu0 %v2601
        %v3089 = vpop.f32.mrf.mxu0
        %v3090 = vadd.f32 %v2845, %v3089
        %v3091 = vpop.f32.mrf.mxu0
        %3092 = vmatprep.mubr.f32.mxu0 %v2638
        %3093 = vmatmul.mubr.f32.gmra.mxu0 %v2602
        %v3094 = vpop.f32.mrf.mxu0
        %v3095 = vadd.f32 %v2850, %v3094
        %v3096 = vpop.f32.mrf.mxu0
        %3097 = vmatprep.mubr.f32.mxu0 %v2639
        %3098 = vmatmul.mubr.f32.gmra.mxu0 %v2603
        %v3099 = vpop.f32.mrf.mxu0
        %v3100 = vadd.f32 %v2855, %v3099
        %v3101 = vpop.f32.mrf.mxu0
        %3102 = vmatprep.mubr.f32.mxu0 %v2640
        %3103 = vmatmul.mubr.f32.gmra.mxu0 %v2604
        %v3104 = vpop.f32.mrf.mxu0
        %v3105 = vadd.f32 %v2860, %v3104
        %v3106 = vpop.f32.mrf.mxu0
        %3107 = vmatprep.mubr.f32.mxu0 %v2641
        %3108 = vmatmul.mubr.f32.gmra.mxu0 %v2605
        %v3109 = vpop.f32.mrf.mxu0
        %v3110 = vadd.f32 %v2865, %v3109
        %v3111 = vpop.f32.mrf.mxu0
        %3112 = vmatprep.mubr.f32.mxu0 %v2642
        %3113 = vmatmul.mubr.f32.gmra.mxu0 %v2606
        %v3114 = vpop.f32.mrf.mxu0
        %v3115 = vadd.f32 %v2870, %v3114
        %v3116 = vpop.f32.mrf.mxu0
        %3117 = vmatprep.mubr.f32.mxu0 %v2643
        %3118 = vmatmul.mubr.f32.gmra.mxu0 %v2607
        %v3119 = vpop.f32.mrf.mxu0
        %v3120 = vadd.f32 %v2875, %v3119
        %v3121 = vpop.f32.mrf.mxu0
        %3122 = vmatprep.mubr.f32.mxu0 %v2644
        %3123 = vmatmul.mubr.f32.gmra.mxu0 %v2608
        %v3124 = vpop.f32.mrf.mxu0
        %v3125 = vadd.f32 %v2880, %v3124
        %v3126 = vpop.f32.mrf.mxu0
        %3127 = vmatprep.mubr.f32.mxu0 %v2645
        %3128 = vmatmul.mubr.f32.gmra.mxu0 %v2609
        %v3129 = vpop.f32.mrf.mxu0
        %v3130 = vadd.f32 %v2885, %v3129
        %v3131 = vpop.f32.mrf.mxu0
        %3132 = vmatprep.mubr.f32.mxu0 %v2646
        %3133 = vmatmul.mubr.f32.gmra.mxu0 %v2610
        %v3134 = vpop.f32.mrf.mxu0
        %v3135 = vadd.f32 %v2890, %v3134
        %v3136 = vpop.f32.mrf.mxu0
        %3137 = vmatprep.mubr.f32.mxu0 %v2647
        %3138 = vmatmul.mubr.f32.gmra.mxu0 %v2611
        %v3139 = vpop.f32.mrf.mxu0
        %v3140 = vadd.f32 %v2895, %v3139
        %v3141 = vpop.f32.mrf.mxu0
        %3142 = vmatprep.mubr.f32.mxu0 %v2648
        %3143 = vmatmul.mubr.f32.gmra.mxu0 %v2612
        %v3144 = vpop.f32.mrf.mxu0
        %v3145 = vadd.f32 %v2900, %v3144
        %v3146 = vpop.f32.mrf.mxu0
        %3147 = vmatprep.mubr.f32.mxu0 %v2649
        %3148 = vmatmul.mubr.f32.gmra.mxu0 %v2613
        %v3149 = vpop.f32.mrf.mxu0
        %v3150 = vadd.f32 %v2905, %v3149
        %v3151 = vpop.f32.mrf.mxu0
        %3152 = vmatprep.mubr.f32.mxu0 %v2650
        %3153 = vmatmul.mubr.f32.gmra.mxu0 %v2614
        %v3154 = vpop.f32.mrf.mxu0
        %v3155 = vadd.f32 %v2910, %v3154
        %v3156 = vpop.f32.mrf.mxu0
        %3157 = vmatprep.mubr.f32.mxu0 %v2651
        %3158 = vmatmul.mubr.f32.gmra.mxu0 %v2615
        %v3159 = vpop.f32.mrf.mxu0
        %v3160 = vadd.f32 %v2915, %v3159
        %v3161 = vpop.f32.mrf.mxu0
        %3162 = vmatprep.mubr.f32.mxu0 %v2652
        %3163 = vmatmul.mubr.f32.gmra.mxu0 %v2616
        %v3164 = vpop.f32.mrf.mxu0
        %v3165 = vadd.f32 %v2920, %v3164
        %v3166 = vpop.f32.mrf.mxu0
        %3167 = vmatprep.mubr.f32.mxu0 %v2653
        %3168 = vmatmul.mubr.f32.gmra.mxu0 %v2617
        %v3169 = vpop.f32.mrf.mxu0
        %v3170 = vadd.f32 %v2925, %v3169
        %v3171 = vpop.f32.mrf.mxu0
        %3172 = vmatprep.mubr.f32.mxu0 %v2654
        %3173 = vmatmul.mubr.f32.gmra.mxu0 %v2618
        %v3174 = vpop.f32.mrf.mxu0
        %v3175 = vadd.f32 %v2930, %v3174
        %v3176 = vpop.f32.mrf.mxu0
        %3177 = vmatprep.mubr.f32.mxu0 %v2655
        %3178 = vmatmul.mubr.f32.gmra.mxu0 %v2619
        %v3179 = vpop.f32.mrf.mxu0
        %v3180 = vadd.f32 %v2935, %v3179
        %v3181 = vpop.f32.mrf.mxu0
        %3182 = vmatprep.mubr.f32.mxu0 %v2656
        %3183 = vmatmul.mubr.f32.gmra.mxu0 %v2620
        %v3184 = vpop.f32.mrf.mxu0
        %v3185 = vadd.f32 %v2940, %v3184
        %v3186 = vpop.f32.mrf.mxu0
        %3187 = vmatprep.mubr.f32.mxu0 %v2657
        %3188 = vmatmul.mubr.f32.gmra.mxu0 %v2621
        %v3189 = vpop.f32.mrf.mxu0
        %v3190 = vadd.f32 %v2945, %v3189
        %v3191 = vpop.f32.mrf.mxu0
        %3192 = vmatprep.mubr.f32.mxu0 %v2658
        %3193 = vmatmul.mubr.f32.gmra.mxu0 %v2622
        %v3194 = vpop.f32.mrf.mxu0
        %v3195 = vadd.f32 %v2950, %v3194
        %v3196 = vpop.f32.mrf.mxu0
        %3197 = vmatprep.mubr.f32.mxu0 %v2659
        %3198 = vmatmul.mubr.f32.gmra.mxu0 %v2623
        %v3199 = vpop.f32.mrf.mxu0
        %v3200 = vadd.f32 %v2955, %v3199
        %v3201 = vpop.f32.mrf.mxu0
        %3202 = vmatprep.mubr.f32.mxu0 %v2660
        %3203 = vmatmul.mubr.f32.gmra.mxu0 %v2624
        %v3204 = vpop.f32.mrf.mxu0
        %v3205 = vadd.f32 %v2960, %v3204
        %v3206 = vpop.f32.mrf.mxu0
        %3207 = vmatprep.mubr.f32.mxu0 %v2661
        %3208 = vmatmul.mubr.f32.gmra.mxu0 %v2625
        %v3209 = vpop.f32.mrf.mxu0
        %v3210 = vadd.f32 %v2965, %v3209
        %v3211 = vpop.f32.mrf.mxu0
        %3212 = vmatprep.mubr.f32.mxu0 %v2662
        %3213 = vmatmul.mubr.f32.gmra.mxu0 %v2626
        %v3214 = vpop.f32.mrf.mxu0
        %v3215 = vadd.f32 %v2970, %v3214
        %v3216 = vpop.f32.mrf.mxu0
        %3217 = vdwg.mxu0
        %s3218 = scalar_lea.vmem %s164, 864 [#allocation9]
        %3219 = vst [vmem:[%s3218] sm:$0xff] %v3040
        %3220 = vst [vmem:[%s3218 + $0x8] sm:$0xff] %v3045
        %3221 = vst [vmem:[%s3218 + $0x10] sm:$0xff] %v3050
        %3222 = vst [vmem:[%s3218 + $0x18] sm:$0xff] %v3055
        %3223 = vst [vmem:[%s3218 + $0x20] sm:$0xff] %v3060
        %3224 = vst [vmem:[%s3218 + $0x28] sm:$0xff] %v3065
        %3225 = vst [vmem:[%s3218 + $0x30] sm:$0xff] %v3070
        %3226 = vst [vmem:[%s3218 + $0x38] sm:$0xff] %v3075
        %3227 = vst [vmem:[%s3218 + $0x40] sm:$0xff] %v3080
        %3228 = vst [vmem:[%s3218 + $0x48] sm:$0xff] %v3085
        %3229 = vst [vmem:[%s3218 + $0x50] sm:$0xff] %v3090
        %3230 = vst [vmem:[%s3218 + $0x58] sm:$0xff] %v3095
        %3231 = vst [vmem:[%s3218 + $0x60] sm:$0xff] %v3100
        %3232 = vst [vmem:[%s3218 + $0x68] sm:$0xff] %v3105
        %3233 = vst [vmem:[%s3218 + $0x70] sm:$0xff] %v3110
        %3234 = vst [vmem:[%s3218 + $0x78] sm:$0xff] %v3115
        %3235 = vst [vmem:[%s3218 + $0x80] sm:$0xff] %v3120
        %3236 = vst [vmem:[%s3218 + $0x88] sm:$0xff] %v3125
        %3237 = vst [vmem:[%s3218 + $0x90] sm:$0xff] %v3130
        %3238 = vst [vmem:[%s3218 + $0x98] sm:$0xff] %v3135
        %3239 = vst [vmem:[%s3218 + $0xa0] sm:$0xff] %v3140
        %3240 = vst [vmem:[%s3218 + $0xa8] sm:$0xff] %v3145
        %3241 = vst [vmem:[%s3218 + $0xb0] sm:$0xff] %v3150
        %3242 = vst [vmem:[%s3218 + $0xb8] sm:$0xff] %v3155
        %3243 = vst [vmem:[%s3218 + $0xc0] sm:$0xff] %v3160
        %3244 = vst [vmem:[%s3218 + $0xc8] sm:$0xff] %v3165
        %3245 = vst [vmem:[%s3218 + $0xd0] sm:$0xff] %v3170
        %3246 = vst [vmem:[%s3218 + $0xd8] sm:$0xff] %v3175
        %3247 = vst [vmem:[%s3218 + $0xe0] sm:$0xff] %v3180
        %3248 = vst [vmem:[%s3218 + $0xe8] sm:$0xff] %v3185
        %3249 = vst [vmem:[%s3218 + $0xf0] sm:$0xff] %v3190
        %3250 = vst [vmem:[%s3218 + $0xf8] sm:$0xff] %v3195
        %3251 = vst [vmem:[%s3218 + $0x100] sm:$0xff] %v3200
        %3252 = vst [vmem:[%s3218 + $0x108] sm:$0xff] %v3205
        %3253 = vst [vmem:[%s3218 + $0x110] sm:$0xff] %v3210
        %3254 = vst [vmem:[%s3218 + $0x118] sm:$0xff] %v3215
        %s3255 = sand.u32 %s83, 1
        %s3256 = scalar_lea.sflag [#allocation6], %s3255
        %s3257 = sand.u32 %s83, 1
        %s3258 = smul.addr %s3257, 1152
        %s3259 = scalar_lea.vmem [#allocation9], %s3258
        // Predicated region
        $region74: #{tpu_custom_call.1} parent=27 // pred_check
          %p3260 = pneg %p93
        $region75: #{tpu_custom_call.1} parent=27 // pred_check_branch
          %3262 = sbr.rel (%p3260) target = $region77
        $region76: #{tpu_custom_call.1} parent=27 // pred_region
          %s3264 = ssub.s32 18432, 18432
          %3265 = vsyncadd %s3256, %s3264
          %s3266 = smul.addr %s24, 36
          %s3267 = smul.addr %s23, 144
          %s3268 = sadd.s32 %s3266, %s3267
          %s3269 = smul.addr %s3268, 128
          %s3270 = scalar_lea.hbm %s3, %s3269
          %s3271 = sshll.u32 %s3259, 4
          %s3272 = int_to_ptr.vmem [resolvable:$true] %s3271
          %3277 = dma.vmem_to_hbm [thread:$0]  %s3272, 18432, %s3270, %s3256, 128, 128, 8
        $region77: #{tpu_custom_call.1} parent=27 // pred_fallthru
          _
      $region28: #{tpu_custom_call.1} parent=5 // pred_fallthru
        _
      %p3278 = scmp.le.s32.totalorder 2, %s14
      // Predicated region
      $region78: #{tpu_custom_call.1} parent=5 // pred_check
        %p3279 = pneg %p3278
      $region79: #{tpu_custom_call.1} parent=5 // pred_check_branch
        %3281 = sbr.rel (%p3279) target = $region81
      $region80: #{tpu_custom_call.1} parent=5 // pred_region
        %s3282 = ssub.s32 %s14, 2
        // Predicated region
        $region82: #{tpu_custom_call.1} parent=80 // pred_check
          %p3283 = pneg %p99
        $region83: #{tpu_custom_call.1} parent=80 // pred_check_branch
          %3285 = sbr.rel (%p3283) target = $region85
        $region84: #{tpu_custom_call.1} parent=80 // pred_region
          %s3286 = sand.u32 %s84, 1
          %s3287 = scalar_lea.sflag [#allocation6], %s3286
          %s3288 = sand.u32 %s84, 1
          %s3289 = smul.addr %s3288, 1152
          %s3290 = scalar_lea.vmem [#allocation9], %s3289
          %3291 = dma.done %s3287, 18432
        $region85: #{tpu_custom_call.1} parent=80 // pred_fallthru
          _
      $region81: #{tpu_custom_call.1} parent=5 // pred_fallthru
        _
    $region6: #{tpu_custom_call.1} parent=1 // loop_footer
      %s18 = sadd.s32 1, %s14
    $region7: #{tpu_custom_call.1} parent=1 // loop_footer_branch
      %13 = sbr.rel target = $region3
    $region8: #{tpu_custom_call.1} parent=1 // loop_exit
      _
    %3292 = vsyncpa [#allocation5], 1
    %s3293 = scalar_lea.sflag [#allocation5], 1
    %3294 = vsyncpa %s3293, 1
    %3295 = vsyncpa [#allocation8], 1
    %3296 = vsyncpa [#allocation6], 1
    %s3297 = scalar_lea.sflag [#allocation6], 1
    %3298 = vsyncpa %s3297, 1
  %3299 = vsyncmov [#allocation3]
  %s3300 = vpop.sfrf %3299
  %p3301 = scmp.eq.s32.totalorder %s3300, 0
  %p3302 = pneg %p3301
  %3304 = shalt.err (%p3302)

// kernel: tpu_custom_call.1
$region0: #{tpu_custom_call.1}
  #allocation0 [shape = 'u32[]', space=smem, size = 0x4, offset = 0x4, fixed_abs, tag = 'smem constant byte address 0x4 - core index']
  #allocation1 [shape = 'u32[144,128]{1,0:T(1,128)}', space=vmem, size = 0x12000, scoped, tag = 'internal scratch']
  #allocation2 [shape = 'f32[326,128]{1,0:T(8,128)}', space=vmem, size = 0x29000, scoped, tag = 'scratch operand']
  #allocation3 [shape = 's32[1]{0}', space=sflag, size = 0x4, scoped, tag = 'scratch operand']
  #allocation10 [shape = 's32[]', space=sflag, size = 0x4, offset = 0, fixed_abs, tag = 'sflag constant byte address 0x0 - dummy sync flag']
  %s0 = inlined_call_operand.vmem [shape: f32[2,342,128], index: 0, kind: input, shape index: {}]
  %s1 = inlined_call_operand.hbm [shape: f32[4,512,128], index: 1, kind: input, shape index: {}]
  %s2 = inlined_call_operand.hbm [shape: f32[1,128], index: 2, kind: input, shape index: {}]
  %s3 = inlined_call_operand.hbm [shape: f32[2,2,2,1,288,128], index: 3, kind: output, shape index: {}]
  %s4 = sld [smem:[#allocation0]]
  $region86: #{tpu_custom_call.1} parent=0
    _
  %s6 = ssub.s32 1, %s4
  %s7 = scalar_select 0, %s6, %s4
  $region1: #{tpu_custom_call.1} parent=0
    #allocation4 [shape = 'u8[1048576]{0}', space=vmem, size = 0x100000, scoped, tag = 'input window, operand 1, single buffered']
    #allocation5 [shape = 's32[2]{0}', space=sflag, size = 0x8, scoped, tag = 'scoped memory for tpu_custom_call.1']
    #allocation6 [shape = 's32[2]{0}', space=sflag, size = 0x8, scoped, tag = 'scoped memory for tpu_custom_call.1']
    #allocation7 [shape = 'u8[512]{0}', space=vmem, size = 0x400, scoped, tag = 'input window, operand 2, single buffered']
    #allocation8 [shape = 's32[1]{0}', space=sflag, size = 0x4, scoped, tag = 'scoped memory for tpu_custom_call.1']
    #allocation9 [shape = 'u8[1179648]{0}', space=vmem, size = 0x120000, scoped, tag = 'output window, operand 0']
    %8 = vsyncpa [#allocation5], 0
    %9 = vsyncpa [#allocation8], 0
    %10 = vsyncpa [#allocation6], 0
    %s11 = scalar_lea.sflag [#allocation6], 1
    %12 = vsyncpa %s11, 0
    loop: start=0, step=1, limit=4
    $region2: #{tpu_custom_call.1} parent=1 // loop_pre_header
      _
    $region3: #{tpu_custom_call.1} parent=1 // loop_header
      %s14 = sphi 0, %s18
      %p15 = scmp.ge.s32.totalorder %s14, 4
      %s21 = sphi 0, %s33
      %s22 = sphi 0, %s29
      %s23 = sphi 0, %s21
      %s24 = sphi 0, %s22
      %s25 = sphi 0, %s23
      %s26 = sphi 0, %s24
      %s34 = sphi 0, %s34
      %s36 = sphi 0, %s34
      %s37 = sphi 0, %s36
      %s51 = sphi 0, %s37
      %s55 = sphi 0, %s55
      %s57 = sphi 0, %s55
      %s58 = sphi 0, %s57
      %s72 = sphi 0, %s58
      %s80 = sphi 0, %s82
      %s83 = sphi 0, %s80
      %s84 = sphi 0, %s83
      %s100 = sphi 0, %s84
    $region4: #{tpu_custom_call.1} parent=1 // loop_header_branch
      %17 = sbr.rel (%p15) target = $region8
    $region5: #{tpu_custom_call.1} parent=1 // loop_body
      %s19 = ssub.s32 %s14, 1
      %s20 = ssub.s32 %s14, 2
      %s27 = sadd.s32 1, %s22
      %p28 = scmp.ge.s32.totalorder %s27, 1
      %s29 = scalar_select %p28, 0, %s27
      %s30 = sadd.s32 1, %s21
      %s31 = scalar_select %p28, %s30, %s21
      %p32 = scmp.ge.s32.totalorder %s31, 2
      %s33 = scalar_select %p32, 0, %s31
      %s35 = sadd.s32 %s34, 1
      %p38 = scmp.eq.s32.totalorder %s14, 1
      %p39 = scmp.ne.s32.totalorder %s34, %s36
      %p40 = scmp.eq.s32.totalorder %s14, 0
      %p41 = por %p39, %p40
      %p42 = scmp.ne.s32.totalorder %s34, %s36
      %p43 = scmp.eq.s32.totalorder %s19, 1
      %p44 = por %p42, %p43
      %p45 = scmp.ne.s32.totalorder %s36, %s37
      %p46 = scmp.eq.s32.totalorder %s19, 0
      %p47 = por %p45, %p46
      %p48 = scmp.ne.s32.totalorder %s36, %s37
      %p49 = scmp.eq.s32.totalorder %s20, 1
      %p50 = por %p48, %p49
      %p52 = scmp.ne.s32.totalorder %s37, %s51
      %p53 = scmp.eq.s32.totalorder %s20, 0
      %p54 = por %p52, %p53
      %s56 = sadd.s32 %s55, 1
      %p59 = scmp.eq.s32.totalorder %s14, 1
      %p60 = scmp.ne.s32.totalorder %s55, %s57
      %p61 = scmp.eq.s32.totalorder %s14, 0
      %p62 = por %p60, %p61
      %p63 = scmp.ne.s32.totalorder %s55, %s57
      %p64 = scmp.eq.s32.totalorder %s19, 1
      %p65 = por %p63, %p64
      %p66 = scmp.ne.s32.totalorder %s57, %s58
      %p67 = scmp.eq.s32.totalorder %s19, 0
      %p68 = por %p66, %p67
      %p69 = scmp.ne.s32.totalorder %s57, %s58
      %p70 = scmp.eq.s32.totalorder %s20, 1
      %p71 = por %p69, %p70
      %p73 = scmp.ne.s32.totalorder %s58, %s72
      %p74 = scmp.eq.s32.totalorder %s20, 0
      %p75 = por %p73, %p74
      %s76 = ssub.s32 %s21, %s33
      %s77 = ssub.s32 %s22, %s29
      %s78 = sor.u32 %s76, %s77
      %p79 = scmp.eq.s32.totalorder %s78, 0
      %s81 = sadd.s32 %s80, 1
      %s82 = scalar_select %p79, %s80, %s81
      %p85 = pneg %p79
      %p86 = scmp.eq.s32.totalorder %s14, 1
      %p87 = por %p85, %p86
      %p88 = scmp.ne.s32.totalorder %s80, %s83
      %p89 = scmp.eq.s32.totalorder %s14, 0
      %p90 = por %p88, %p89
      %p91 = scmp.ne.s32.totalorder %s80, %s83
      %p92 = scmp.eq.s32.totalorder %s19, 1
      %p93 = por %p91, %p92
      %p94 = scmp.ne.s32.totalorder %s83, %s84
      %p95 = scmp.eq.s32.totalorder %s19, 0
      %p96 = por %p94, %p95
      %p97 = scmp.ne.s32.totalorder %s83, %s84
      %p98 = scmp.eq.s32.totalorder %s20, 1
      %p99 = por %p97, %p98
      %p101 = scmp.ne.s32.totalorder %s84, %s100
      %p102 = scmp.eq.s32.totalorder %s20, 0
      %p103 = por %p101, %p102
      %p104 = scmp.le.s32.totalorder 1, %s14
      %p105 = scmp.lt.s32.totalorder %s14, 3
      %p106 = pnand %p104, %p105
      %p107 = pneg %p106
      // Predicated region
      $region9: #{tpu_custom_call.1} parent=5 // pred_check
        _
      $region10: #{tpu_custom_call.1} parent=5 // pred_check_branch
        %109 = sbr.rel (%p106) target = $region12
      $region11: #{tpu_custom_call.1} parent=5 // pred_region
        %s110 = ssub.s32 %s14, 1
        // Predicated region
        $region13: #{tpu_custom_call.1} parent=11 // pred_check
          %p111 = pneg %p47
        $region14: #{tpu_custom_call.1} parent=11 // pred_check_branch
          %113 = sbr.rel (%p111) target = $region16
        $region15: #{tpu_custom_call.1} parent=11 // pred_region
          %s115 = ssub.s32 32768, 32768
          %116 = vsyncadd [#allocation5], %s115
          %s117 = sshll.u32 [#allocation4], 4
          %s118 = int_to_ptr.vmem [resolvable:$true] %s117
          %123 = dma.hbm_to_vmem [thread:$0]  %s1, 32768, %s118, [#allocation5], 128, 128, 8
        $region16: #{tpu_custom_call.1} parent=11 // pred_fallthru
          _
        // Predicated region
        $region17: #{tpu_custom_call.1} parent=11 // pred_check
          %p124 = pneg %p68
        $region18: #{tpu_custom_call.1} parent=11 // pred_check_branch
          %126 = sbr.rel (%p124) target = $region20
        $region19: #{tpu_custom_call.1} parent=11 // pred_region
          %s128 = ssub.s32 16, 16
          %129 = vsyncadd [#allocation8], %s128
          %s131 = sshll.u32 [#allocation7], 4
          %s132 = int_to_ptr.vmem [resolvable:$true] %s131
          %134 = dma.hbm_to_vmem [thread:$0]  %s2, 16, %s132, [#allocation8]
        $region20: #{tpu_custom_call.1} parent=11 // pred_fallthru
          _
      $region12: #{tpu_custom_call.1} parent=5 // pred_fallthru
        _
      %p135 = scmp.lt.s32.totalorder %s14, 2
      // Predicated region
      $region21: #{tpu_custom_call.1} parent=5 // pred_check
        %p136 = pneg %p135
      $region22: #{tpu_custom_call.1} parent=5 // pred_check_branch
        %138 = sbr.rel (%p136) target = $region24
      $region23: #{tpu_custom_call.1} parent=5 // pred_region
        _
      $region24: #{tpu_custom_call.1} parent=5 // pred_fallthru
        _
      %p139 = scmp.le.s32.totalorder 1, %s14
      %p140 = scmp.lt.s32.totalorder %s14, 3
      %p141 = pnand %p139, %p140
      %p142 = pneg %p141
      // Predicated region
      $region25: #{tpu_custom_call.1} parent=5 // pred_check
        _
      $region26: #{tpu_custom_call.1} parent=5 // pred_check_branch
        %144 = sbr.rel (%p141) target = $region28
      $region27: #{tpu_custom_call.1} parent=5 // pred_region
        %s145 = ssub.s32 %s14, 1
        // Predicated region
        $region29: #{tpu_custom_call.1} parent=27 // pred_check
          %p146 = pneg %p47
        $region30: #{tpu_custom_call.1} parent=27 // pred_check_branch
          %148 = sbr.rel (%p146) target = $region32
        $region31: #{tpu_custom_call.1} parent=27 // pred_region
          %149 = dma.done [#allocation5], 32768
        $region32: #{tpu_custom_call.1} parent=27 // pred_fallthru
          _
        // Predicated region
        $region33: #{tpu_custom_call.1} parent=27 // pred_check
          %p150 = pneg %p68
        $region34: #{tpu_custom_call.1} parent=27 // pred_check_branch
          %152 = sbr.rel (%p150) target = $region36
        $region35: #{tpu_custom_call.1} parent=27 // pred_region
          %153 = dma.done [#allocation8], 16
        $region36: #{tpu_custom_call.1} parent=27 // pred_fallthru
          _
        %p154 = pneg %p47
        %p155 = pneg %p44
        %p156 = pneg %p68
        %p157 = pneg %p65
        %p158 = pneg %p96
        %p159 = pneg %p93
        %s160 = sand.u32 %s83, 1
        %s161 = scalar_lea.sflag [#allocation6], %s160
        %s162 = sand.u32 %s83, 1
        %s163 = smul.addr %s162, 1152
        %s164 = scalar_lea.vmem [#allocation9], %s163
        %s165 = smul.u32 %s24, 288
        %s166 = smul.u32 %s23, 344
        %s167 = sadd.s32 %s165, %s166
        %s168 = scalar_lea.vmem %s0, %s167
        %p170 = scmp.lt.u32.totalorder 326, 8
        %p171 = pneg %p170
        // Predicated region
        $region37: #{tpu_custom_call.1} parent=27 // pred_check
          _
        $region38: #{tpu_custom_call.1} parent=27 // pred_check_branch
          %173 = sbr.rel (%p170) target = $region40
        $region39: #{tpu_custom_call.1} parent=27 // pred_region
          %s189 = sand.u32 326, 7
          %p190 = scmp.eq.s32.totalorder %s189, 0
          %p191 = pneg %p190
          // Predicated region
          $region52: #{tpu_custom_call.1} parent=39 // pred_check
            _
          $region53: #{tpu_custom_call.1} parent=39 // pred_check_branch
            %193 = sbr.rel (%p190) target = $region55
          $region54: #{tpu_custom_call.1} parent=39 // pred_region
            %s194 = sand.u32 326, 7
            %s195 = ssub.s32 326, %s194
            %s196 = scalar_lea.vmem %s168, %s195
            %s197 = ssub.s32 326, %s194
            %s198 = scalar_lea.vmem [#allocation2], %s197
            loop: start=0, step=1, limit=1
            $region56: #{tpu_custom_call.1} parent=54 // loop_pre_header
              _
            $region57: #{tpu_custom_call.1} parent=54 // loop_header
              %s200 = sphi 0, %s204
              %p201 = scmp.ge.s32.totalorder %s200, 1
              %s205 = sphi %s168, %s168
              %s206 = sphi [#allocation2], [#allocation2]
            $region58: #{tpu_custom_call.1} parent=54 // loop_header_branch
              %203 = sbr.rel (%p201) target = $region62
            $region59: #{tpu_custom_call.1} parent=54 // loop_body
              %v207 = vld [vmem:[%s205] sm:$0xff]
              %208 = vst [vmem:[%s206] sm:$0xff] %v207
              %v209 = vld [vmem:[%s205 + $0x8] sm:$0xff]
              %210 = vst [vmem:[%s206 + $0x8] sm:$0xff] %v209
              %v211 = vld [vmem:[%s205 + $0x10] sm:$0xff]
              %212 = vst [vmem:[%s206 + $0x10] sm:$0xff] %v211
              %v213 = vld [vmem:[%s205 + $0x18] sm:$0xff]
              %214 = vst [vmem:[%s206 + $0x18] sm:$0xff] %v213
              %v215 = vld [vmem:[%s205 + $0x20] sm:$0xff]
              %216 = vst [vmem:[%s206 + $0x20] sm:$0xff] %v215
              %v217 = vld [vmem:[%s205 + $0x28] sm:$0xff]
              %218 = vst [vmem:[%s206 + $0x28] sm:$0xff] %v217
              %v219 = vld [vmem:[%s205 + $0x30] sm:$0xff]
              %220 = vst [vmem:[%s206 + $0x30] sm:$0xff] %v219
              %v221 = vld [vmem:[%s205 + $0x38] sm:$0xff]
              %222 = vst [vmem:[%s206 + $0x38] sm:$0xff] %v221
              %v223 = vld [vmem:[%s205 + $0x40] sm:$0xff]
              %224 = vst [vmem:[%s206 + $0x40] sm:$0xff] %v223
              %v225 = vld [vmem:[%s205 + $0x48] sm:$0xff]
              %226 = vst [vmem:[%s206 + $0x48] sm:$0xff] %v225
              %v227 = vld [vmem:[%s205 + $0x50] sm:$0xff]
              %228 = vst [vmem:[%s206 + $0x50] sm:$0xff] %v227
              %v229 = vld [vmem:[%s205 + $0x58] sm:$0xff]
              %230 = vst [vmem:[%s206 + $0x58] sm:$0xff] %v229
              %v231 = vld [vmem:[%s205 + $0x60] sm:$0xff]
              %232 = vst [vmem:[%s206 + $0x60] sm:$0xff] %v231
              %v233 = vld [vmem:[%s205 + $0x68] sm:$0xff]
              %234 = vst [vmem:[%s206 + $0x68] sm:$0xff] %v233
              %v235 = vld [vmem:[%s205 + $0x70] sm:$0xff]
              %236 = vst [vmem:[%s206 + $0x70] sm:$0xff] %v235
              %v237 = vld [vmem:[%s205 + $0x78] sm:$0xff]
              %238 = vst [vmem:[%s206 + $0x78] sm:$0xff] %v237
              %v239 = vld [vmem:[%s205 + $0x80] sm:$0xff]
              %240 = vst [vmem:[%s206 + $0x80] sm:$0xff] %v239
              %v241 = vld [vmem:[%s205 + $0x88] sm:$0xff]
              %242 = vst [vmem:[%s206 + $0x88] sm:$0xff] %v241
              %v243 = vld [vmem:[%s205 + $0x90] sm:$0xff]
              %244 = vst [vmem:[%s206 + $0x90] sm:$0xff] %v243
              %v245 = vld [vmem:[%s205 + $0x98] sm:$0xff]
              %246 = vst [vmem:[%s206 + $0x98] sm:$0xff] %v245
              %v247 = vld [vmem:[%s205 + $0xa0] sm:$0xff]
              %248 = vst [vmem:[%s206 + $0xa0] sm:$0xff] %v247
              %v249 = vld [vmem:[%s205 + $0xa8] sm:$0xff]
              %250 = vst [vmem:[%s206 + $0xa8] sm:$0xff] %v249
              %v251 = vld [vmem:[%s205 + $0xb0] sm:$0xff]
              %252 = vst [vmem:[%s206 + $0xb0] sm:$0xff] %v251
              %v253 = vld [vmem:[%s205 + $0xb8] sm:$0xff]
              %254 = vst [vmem:[%s206 + $0xb8] sm:$0xff] %v253
              %v255 = vld [vmem:[%s205 + $0xc0] sm:$0xff]
              %256 = vst [vmem:[%s206 + $0xc0] sm:$0xff] %v255
              %v257 = vld [vmem:[%s205 + $0xc8] sm:$0xff]
              %258 = vst [vmem:[%s206 + $0xc8] sm:$0xff] %v257
              %v259 = vld [vmem:[%s205 + $0xd0] sm:$0xff]
              %260 = vst [vmem:[%s206 + $0xd0] sm:$0xff] %v259
              %v261 = vld [vmem:[%s205 + $0xd8] sm:$0xff]
              %262 = vst [vmem:[%s206 + $0xd8] sm:$0xff] %v261
              %v263 = vld [vmem:[%s205 + $0xe0] sm:$0xff]
              %264 = vst [vmem:[%s206 + $0xe0] sm:$0xff] %v263
              %v265 = vld [vmem:[%s205 + $0xe8] sm:$0xff]
              %266 = vst [vmem:[%s206 + $0xe8] sm:$0xff] %v265
              %v267 = vld [vmem:[%s205 + $0xf0] sm:$0xff]
              %268 = vst [vmem:[%s206 + $0xf0] sm:$0xff] %v267
              %v269 = vld [vmem:[%s205 + $0xf8] sm:$0xff]
              %270 = vst [vmem:[%s206 + $0xf8] sm:$0xff] %v269
              %v271 = vld [vmem:[%s205 + $0x100] sm:$0xff]
              %272 = vst [vmem:[%s206 + $0x100] sm:$0xff] %v271
              %v273 = vld [vmem:[%s205 + $0x108] sm:$0xff]
              %274 = vst [vmem:[%s206 + $0x108] sm:$0xff] %v273
              %v275 = vld [vmem:[%s205 + $0x110] sm:$0xff]
              %276 = vst [vmem:[%s206 + $0x110] sm:$0xff] %v275
              %v277 = vld [vmem:[%s205 + $0x118] sm:$0xff]
              %278 = vst [vmem:[%s206 + $0x118] sm:$0xff] %v277
              %v279 = vld [vmem:[%s205 + $0x120] sm:$0xff]
              %280 = vst [vmem:[%s206 + $0x120] sm:$0xff] %v279
              %v281 = vld [vmem:[%s205 + $0x128] sm:$0xff]
              %282 = vst [vmem:[%s206 + $0x128] sm:$0xff] %v281
              %v283 = vld [vmem:[%s205 + $0x130] sm:$0xff]
              %284 = vst [vmem:[%s206 + $0x130] sm:$0xff] %v283
              %v285 = vld [vmem:[%s205 + $0x138] sm:$0xff]
              %286 = vst [vmem:[%s206 + $0x138] sm:$0xff] %v285
            $region60: #{tpu_custom_call.1} parent=54 // loop_footer
              %s204 = sadd.s32 1, %s200
            $region61: #{tpu_custom_call.1} parent=54 // loop_footer_branch
              %199 = sbr.rel target = $region57
            $region62: #{tpu_custom_call.1} parent=54 // loop_exit
              _
            %s287 = sshll.u32 1, %s194
            %s288 = ssub.s32 %s287, 1
            loop: start=0, step=1, limit=1
            $region63: #{tpu_custom_call.1} parent=54 // loop_pre_header
              _
            $region64: #{tpu_custom_call.1} parent=54 // loop_header
              %s290 = sphi 0, %s294
              %p291 = scmp.ge.s32.totalorder %s290, 1
              %s295 = sphi %s196, %s196
              %s296 = sphi %s198, %s198
            $region65: #{tpu_custom_call.1} parent=54 // loop_header_branch
              %293 = sbr.rel (%p291) target = $region69
            $region66: #{tpu_custom_call.1} parent=54 // loop_body
              %v297 = vld [vmem:[%s295] sm:%s288]
              %298 = vst [vmem:[%s296] sm:%s288] %v297
            $region67: #{tpu_custom_call.1} parent=54 // loop_footer
              %s294 = sadd.s32 1, %s290
            $region68: #{tpu_custom_call.1} parent=54 // loop_footer_branch
              %289 = sbr.rel target = $region64
            $region69: #{tpu_custom_call.1} parent=54 // loop_exit
              _
          $region55: #{tpu_custom_call.1} parent=39 // pred_fallthru
            _
        $region40: #{tpu_custom_call.1} parent=27 // pred_fallthru
          _
        // Predicated region
        $region41: #{tpu_custom_call.1} parent=27 // pred_check
          %p174 = pneg %p170
        $region42: #{tpu_custom_call.1} parent=27 // pred_check_branch
          %176 = sbr.rel (%p174) target = $region44
        $region43: #{tpu_custom_call.1} parent=27 // pred_region
          %s177 = sshll.u32 1, 326
          %s178 = ssub.s32 %s177, 1
          loop: start=0, step=1, limit=1
          $region45: #{tpu_custom_call.1} parent=43 // loop_pre_header
            _
          $region46: #{tpu_custom_call.1} parent=43 // loop_header
            %s180 = sphi 0, %s184
            %p181 = scmp.ge.s32.totalorder %s180, 1
            %s185 = sphi %s168, %s168
            %s186 = sphi [#allocation2], [#allocation2]
          $region47: #{tpu_custom_call.1} parent=43 // loop_header_branch
            %183 = sbr.rel (%p181) target = $region51
          $region48: #{tpu_custom_call.1} parent=43 // loop_body
            %v187 = vld [vmem:[%s185] sm:%s178]
            %188 = vst [vmem:[%s186] sm:%s178] %v187
          $region49: #{tpu_custom_call.1} parent=43 // loop_footer
            %s184 = sadd.s32 1, %s180
          $region50: #{tpu_custom_call.1} parent=43 // loop_footer_branch
            %179 = sbr.rel target = $region46
          $region51: #{tpu_custom_call.1} parent=43 // loop_exit
            _
        $region44: #{tpu_custom_call.1} parent=27 // pred_fallthru
          _
        // Predicated region
        $region70: #{tpu_custom_call.1} parent=27 // pred_check
          _
        $region71: #{tpu_custom_call.1} parent=27 // pred_check_branch
          %301 = sbr.rel (0) target = $region73
        $region72: #{tpu_custom_call.1} parent=27 // pred_region
          %302 = vsyncadd [#allocation3], 5216
        $region73: #{tpu_custom_call.1} parent=27 // pred_fallthru
          _
        %s303 = smul.u32 326, 1
        %s304 = sshll.u32 %s303, 4
        %305 = dma.done [#allocation3], %s304
        %v306 = vld [vmem:[#allocation7] sm:$0x1]
        %v307 = vld [vmem:[#allocation2] sm:$0xff]
        %v308 = vld [vmem:[#allocation2 + $0x8] sm:$0xff]
        %v309 = vld [vmem:[#allocation2 + $0x10] sm:$0xff]
        %v310 = vld [vmem:[#allocation2 + $0x18] sm:$0xff]
        %v311 = vld [vmem:[#allocation2 + $0x20] sm:$0xff]
        %v312 = vld [vmem:[#allocation2 + $0x28] sm:$0xff]
        %v313 = vld [vmem:[#allocation2 + $0x30] sm:$0xff]
        %v314 = vld [vmem:[#allocation2 + $0x38] sm:$0xff]
        %v315 = vld [vmem:[#allocation2 + $0x40] sm:$0xff]
        %v316 = vld [vmem:[#allocation2 + $0x48] sm:$0xff]
        %v317 = vld [vmem:[#allocation2 + $0x50] sm:$0xff]
        %v318 = vld [vmem:[#allocation2 + $0x58] sm:$0xff]
        %v319 = vld [vmem:[#allocation2 + $0x60] sm:$0xff]
        %v320 = vld [vmem:[#allocation2 + $0x68] sm:$0xff]
        %v321 = vld [vmem:[#allocation2 + $0x70] sm:$0xff]
        %v322 = vld [vmem:[#allocation2 + $0x78] sm:$0xff]
        %v323 = vld [vmem:[#allocation2 + $0x80] sm:$0xff]
        %v324 = vld [vmem:[#allocation2 + $0x88] sm:$0xff]
        %v325 = vld [vmem:[#allocation2 + $0x90] sm:$0xff]
        %v326 = vld [vmem:[#allocation2 + $0x98] sm:$0xff]
        %v327 = vld [vmem:[#allocation2 + $0xa0] sm:$0xff]
        %v328 = vld [vmem:[#allocation2 + $0xa8] sm:$0xff]
        %v329 = vld [vmem:[#allocation2 + $0xb0] sm:$0xff]
        %v330 = vld [vmem:[#allocation2 + $0xb8] sm:$0xff]
        %v331 = vld [vmem:[#allocation2 + $0xc0] sm:$0xff]
        %v332 = vld [vmem:[#allocation2 + $0xc8] sm:$0xff]
        %v333 = vld [vmem:[#allocation2 + $0xd0] sm:$0xff]
        %v334 = vld [vmem:[#allocation2 + $0xd8] sm:$0xff]
        %v335 = vld [vmem:[#allocation2 + $0xe0] sm:$0xff]
        %v336 = vld [vmem:[#allocation2 + $0xe8] sm:$0xff]
        %v337 = vld [vmem:[#allocation2 + $0xf0] sm:$0xff]
        %v338 = vld [vmem:[#allocation2 + $0xf8] sm:$0xff]
        %v339 = vld [vmem:[#allocation2 + $0x100] sm:$0xff]
        %v340 = vld [vmem:[#allocation2 + $0x108] sm:$0xff]
        %v341 = vld [vmem:[#allocation2 + $0x110] sm:$0xff]
        %v342 = vld [vmem:[#allocation2 + $0x118] sm:$0xff]
        %v343 = vld [vmem:[#allocation2 + $0x1] sm:$0xff]
        %v344 = vld [vmem:[#allocation2 + $0x9] sm:$0xff]
        %v345 = vld [vmem:[#allocation2 + $0x11] sm:$0xff]
        %v346 = vld [vmem:[#allocation2 + $0x19] sm:$0xff]
        %v347 = vld [vmem:[#allocation2 + $0x21] sm:$0xff]
        %v348 = vld [vmem:[#allocation2 + $0x29] sm:$0xff]
        %v349 = vld [vmem:[#allocation2 + $0x31] sm:$0xff]
        %v350 = vld [vmem:[#allocation2 + $0x39] sm:$0xff]
        %v351 = vld [vmem:[#allocation2 + $0x41] sm:$0xff]
        %v352 = vld [vmem:[#allocation2 + $0x49] sm:$0xff]
        %v353 = vld [vmem:[#allocation2 + $0x51] sm:$0xff]
        %v354 = vld [vmem:[#allocation2 + $0x59] sm:$0xff]
        %v355 = vld [vmem:[#allocation2 + $0x61] sm:$0xff]
        %v356 = vld [vmem:[#allocation2 + $0x69] sm:$0xff]
        %v357 = vld [vmem:[#allocation2 + $0x71] sm:$0xff]
        %v358 = vld [vmem:[#allocation2 + $0x79] sm:$0xff]
        %v359 = vld [vmem:[#allocation2 + $0x81] sm:$0xff]
        %v360 = vld [vmem:[#allocation2 + $0x89] sm:$0xff]
        %v361 = vld [vmem:[#allocation2 + $0x91] sm:$0xff]
        %v362 = vld [vmem:[#allocation2 + $0x99] sm:$0xff]
        %v363 = vld [vmem:[#allocation2 + $0xa1] sm:$0xff]
        %v364 = vld [vmem:[#allocation2 + $0xa9] sm:$0xff]
        %v365 = vld [vmem:[#allocation2 + $0xb1] sm:$0xff]
        %v366 = vld [vmem:[#allocation2 + $0xb9] sm:$0xff]
        %v367 = vld [vmem:[#allocation2 + $0xc1] sm:$0xff]
        %v368 = vld [vmem:[#allocation2 + $0xc9] sm:$0xff]
        %v369 = vld [vmem:[#allocation2 + $0xd1] sm:$0xff]
        %v370 = vld [vmem:[#allocation2 + $0xd9] sm:$0xff]
        %v371 = vld [vmem:[#allocation2 + $0xe1] sm:$0xff]
        %v372 = vld [vmem:[#allocation2 + $0xe9] sm:$0xff]
        %v373 = vld [vmem:[#allocation2 + $0xf1] sm:$0xff]
        %v374 = vld [vmem:[#allocation2 + $0xf9] sm:$0xff]
        %v375 = vld [vmem:[#allocation2 + $0x101] sm:$0xff]
        %v376 = vld [vmem:[#allocation2 + $0x109] sm:$0xff]
        %v377 = vld [vmem:[#allocation2 + $0x111] sm:$0xff]
        %v378 = vld [vmem:[#allocation2 + $0x119] sm:$0xff]
        %v379 = vld [vmem:[#allocation2 + $0x12] sm:$0xff]
        %v380 = vld [vmem:[#allocation2 + $0x1a] sm:$0xff]
        %v381 = vld [vmem:[#allocation2 + $0x22] sm:$0xff]
        %v382 = vld [vmem:[#allocation2 + $0x2a] sm:$0xff]
        %v383 = vld [vmem:[#allocation2 + $0x32] sm:$0xff]
        %v384 = vld [vmem:[#allocation2 + $0x3a] sm:$0xff]
        %v385 = vld [vmem:[#allocation2 + $0x42] sm:$0xff]
        %v386 = vld [vmem:[#allocation2 + $0x4a] sm:$0xff]
        %v387 = vld [vmem:[#allocation2 + $0x52] sm:$0xff]
        %v388 = vld [vmem:[#allocation2 + $0x5a] sm:$0xff]
        %v389 = vld [vmem:[#allocation2 + $0x62] sm:$0xff]
        %v390 = vld [vmem:[#allocation2 + $0x6a] sm:$0xff]
        %v391 = vld [vmem:[#allocation2 + $0x72] sm:$0xff]
        %v392 = vld [vmem:[#allocation2 + $0x7a] sm:$0xff]
        %v393 = vld [vmem:[#allocation2 + $0x82] sm:$0xff]
        %v394 = vld [vmem:[#allocation2 + $0x8a] sm:$0xff]
        %v395 = vld [vmem:[#allocation2 + $0x92] sm:$0xff]
        %v396 = vld [vmem:[#allocation2 + $0x9a] sm:$0xff]
        %v397 = vld [vmem:[#allocation2 + $0xa2] sm:$0xff]
        %v398 = vld [vmem:[#allocation2 + $0xaa] sm:$0xff]
        %v399 = vld [vmem:[#allocation2 + $0xb2] sm:$0xff]
        %v400 = vld [vmem:[#allocation2 + $0xba] sm:$0xff]
        %v401 = vld [vmem:[#allocation2 + $0xc2] sm:$0xff]
        %v402 = vld [vmem:[#allocation2 + $0xca] sm:$0xff]
        %v403 = vld [vmem:[#allocation2 + $0xd2] sm:$0xff]
        %v404 = vld [vmem:[#allocation2 + $0xda] sm:$0xff]
        %v405 = vld [vmem:[#allocation2 + $0xe2] sm:$0xff]
        %v406 = vld [vmem:[#allocation2 + $0xea] sm:$0xff]
        %v407 = vld [vmem:[#allocation2 + $0xf2] sm:$0xff]
        %v408 = vld [vmem:[#allocation2 + $0xfa] sm:$0xff]
        %v409 = vld [vmem:[#allocation2 + $0x102] sm:$0xff]
        %v410 = vld [vmem:[#allocation2 + $0x10a] sm:$0xff]
        %v411 = vld [vmem:[#allocation2 + $0x112] sm:$0xff]
        %v412 = vld [vmem:[#allocation2 + $0x11a] sm:$0xff]
        %v413 = vld [vmem:[#allocation2 + $0x122] sm:$0xff]
        %v414 = vld [vmem:[#allocation2 + $0x12a] sm:$0xff]
        %v415 = vld [vmem:[#allocation2 + $0x13] sm:$0xff]
        %v416 = vld [vmem:[#allocation2 + $0x1b] sm:$0xff]
        %v417 = vld [vmem:[#allocation2 + $0x23] sm:$0xff]
        %v418 = vld [vmem:[#allocation2 + $0x2b] sm:$0xff]
        %v419 = vld [vmem:[#allocation2 + $0x33] sm:$0xff]
        %v420 = vld [vmem:[#allocation2 + $0x3b] sm:$0xff]
        %v421 = vld [vmem:[#allocation2 + $0x43] sm:$0xff]
        %v422 = vld [vmem:[#allocation2 + $0x4b] sm:$0xff]
        %v423 = vld [vmem:[#allocation2 + $0x53] sm:$0xff]
        %v424 = vld [vmem:[#allocation2 + $0x5b] sm:$0xff]
        %v425 = vld [vmem:[#allocation2 + $0x63] sm:$0xff]
        %v426 = vld [vmem:[#allocation2 + $0x6b] sm:$0xff]
        %v427 = vld [vmem:[#allocation2 + $0x73] sm:$0xff]
        %v428 = vld [vmem:[#allocation2 + $0x7b] sm:$0xff]
        %v429 = vld [vmem:[#allocation2 + $0x83] sm:$0xff]
        %v430 = vld [vmem:[#allocation2 + $0x8b] sm:$0xff]
        %v431 = vld [vmem:[#allocation2 + $0x93] sm:$0xff]
        %v432 = vld [vmem:[#allocation2 + $0x9b] sm:$0xff]
        %v433 = vld [vmem:[#allocation2 + $0xa3] sm:$0xff]
        %v434 = vld [vmem:[#allocation2 + $0xab] sm:$0xff]
        %v435 = vld [vmem:[#allocation2 + $0xb3] sm:$0xff]
        %v436 = vld [vmem:[#allocation2 + $0xbb] sm:$0xff]
        %v437 = vld [vmem:[#allocation2 + $0xc3] sm:$0xff]
        %v438 = vld [vmem:[#allocation2 + $0xcb] sm:$0xff]
        %v439 = vld [vmem:[#allocation2 + $0xd3] sm:$0xff]
        %v440 = vld [vmem:[#allocation2 + $0xdb] sm:$0xff]
        %v441 = vld [vmem:[#allocation2 + $0xe3] sm:$0xff]
        %v442 = vld [vmem:[#allocation2 + $0xeb] sm:$0xff]
        %v443 = vld [vmem:[#allocation2 + $0xf3] sm:$0xff]
        %v444 = vld [vmem:[#allocation2 + $0xfb] sm:$0xff]
        %v445 = vld [vmem:[#allocation2 + $0x103] sm:$0xff]
        %v446 = vld [vmem:[#allocation2 + $0x10b] sm:$0xff]
        %v447 = vld [vmem:[#allocation2 + $0x113] sm:$0xff]
        %v448 = vld [vmem:[#allocation2 + $0x11b] sm:$0xff]
        %v449 = vld [vmem:[#allocation2 + $0x123] sm:$0xff]
        %v450 = vld [vmem:[#allocation2 + $0x12b] sm:$0xff]
        %v451 = vld [vmem:[#allocation4] sm:$0xff]
        %v452 = vld [vmem:[#allocation4 + $0x8] sm:$0xff]
        %v453 = vld [vmem:[#allocation4 + $0x10] sm:$0xff]
        %v454 = vld [vmem:[#allocation4 + $0x18] sm:$0xff]
        %v455 = vld [vmem:[#allocation4 + $0x20] sm:$0xff]
        %v456 = vld [vmem:[#allocation4 + $0x28] sm:$0xff]
        %v457 = vld [vmem:[#allocation4 + $0x30] sm:$0xff]
        %v458 = vld [vmem:[#allocation4 + $0x38] sm:$0xff]
        %v459 = vld [vmem:[#allocation4 + $0x40] sm:$0xff]
        %v460 = vld [vmem:[#allocation4 + $0x48] sm:$0xff]
        %v461 = vld [vmem:[#allocation4 + $0x50] sm:$0xff]
        %v462 = vld [vmem:[#allocation4 + $0x58] sm:$0xff]
        %v463 = vld [vmem:[#allocation4 + $0x60] sm:$0xff]
        %v464 = vld [vmem:[#allocation4 + $0x68] sm:$0xff]
        %v465 = vld [vmem:[#allocation4 + $0x70] sm:$0xff]
        %v466 = vld [vmem:[#allocation4 + $0x78] sm:$0xff]
        %v467 = vld [vmem:[#allocation4 + $0x80] sm:$0xff]
        %v468 = vld [vmem:[#allocation4 + $0x88] sm:$0xff]
        %v469 = vld [vmem:[#allocation4 + $0x90] sm:$0xff]
        %v470 = vld [vmem:[#allocation4 + $0x98] sm:$0xff]
        %v471 = vld [vmem:[#allocation4 + $0xa0] sm:$0xff]
        %v472 = vld [vmem:[#allocation4 + $0xa8] sm:$0xff]
        %v473 = vld [vmem:[#allocation4 + $0xb0] sm:$0xff]
        %v474 = vld [vmem:[#allocation4 + $0xb8] sm:$0xff]
        %v475 = vld [vmem:[#allocation4 + $0xc0] sm:$0xff]
        %v476 = vld [vmem:[#allocation4 + $0xc8] sm:$0xff]
        %v477 = vld [vmem:[#allocation4 + $0xd0] sm:$0xff]
        %v478 = vld [vmem:[#allocation4 + $0xd8] sm:$0xff]
        %v479 = vld [vmem:[#allocation4 + $0xe0] sm:$0xff]
        %v480 = vld [vmem:[#allocation4 + $0xe8] sm:$0xff]
        %v481 = vld [vmem:[#allocation4 + $0xf0] sm:$0xff]
        %v482 = vld [vmem:[#allocation4 + $0xf8] sm:$0xff]
        %v483 = vld [vmem:[#allocation4 + $0x100] sm:$0xff]
        %v484 = vld [vmem:[#allocation4 + $0x108] sm:$0xff]
        %v485 = vld [vmem:[#allocation4 + $0x110] sm:$0xff]
        %v486 = vld [vmem:[#allocation4 + $0x118] sm:$0xff]
        %v487 = vld [vmem:[#allocation4 + $0x120] sm:$0xff]
        %v488 = vld [vmem:[#allocation4 + $0x128] sm:$0xff]
        %v489 = vld [vmem:[#allocation4 + $0x130] sm:$0xff]
        %v490 = vld [vmem:[#allocation4 + $0x138] sm:$0xff]
        %v491 = vld [vmem:[#allocation4 + $0x140] sm:$0xff]
        %v492 = vld [vmem:[#allocation4 + $0x148] sm:$0xff]
        %v493 = vld [vmem:[#allocation4 + $0x150] sm:$0xff]
        %v494 = vld [vmem:[#allocation4 + $0x158] sm:$0xff]
        %v495 = vld [vmem:[#allocation4 + $0x160] sm:$0xff]
        %v496 = vld [vmem:[#allocation4 + $0x168] sm:$0xff]
        %v497 = vld [vmem:[#allocation4 + $0x170] sm:$0xff]
        %v498 = vld [vmem:[#allocation4 + $0x178] sm:$0xff]
        %v499 = vld [vmem:[#allocation4 + $0x180] sm:$0xff]
        %v500 = vld [vmem:[#allocation4 + $0x188] sm:$0xff]
        %v501 = vld [vmem:[#allocation4 + $0x190] sm:$0xff]
        %v502 = vld [vmem:[#allocation4 + $0x198] sm:$0xff]
        %v503 = vld [vmem:[#allocation4 + $0x1a0] sm:$0xff]
        %v504 = vld [vmem:[#allocation4 + $0x1a8] sm:$0xff]
        %v505 = vld [vmem:[#allocation4 + $0x1b0] sm:$0xff]
        %v506 = vld [vmem:[#allocation4 + $0x1b8] sm:$0xff]
        %v507 = vld [vmem:[#allocation4 + $0x1c0] sm:$0xff]
        %v508 = vld [vmem:[#allocation4 + $0x1c8] sm:$0xff]
        %v509 = vld [vmem:[#allocation4 + $0x1d0] sm:$0xff]
        %v510 = vld [vmem:[#allocation4 + $0x1d8] sm:$0xff]
        %v511 = vld [vmem:[#allocation4 + $0x1e0] sm:$0xff]
        %v512 = vld [vmem:[#allocation4 + $0x1e8] sm:$0xff]
        %v513 = vld [vmem:[#allocation4 + $0x1f0] sm:$0xff]
        %v514 = vld [vmem:[#allocation4 + $0x1f8] sm:$0xff]
        %v516 = vlaneseq
        %v517 = vshrl.u32 %v516, 7
        %v518 = vsub.s32 0, %v517
        %v519 = vrot.slane %v306, %v518
        %521 = vmatprep.subr.mxu0 0.0
        %522 = vmatpush1.msra.mxu0 %v466
        %523 = vmatprep.subr.mxu0 0.0
        %524 = vmatpush1.msra.mxu0 %v465
        %525 = vmatprep.subr.mxu0 0.0
        %526 = vmatpush1.msra.mxu0 %v464
        %527 = vmatprep.subr.mxu0 0.0
        %528 = vmatpush1.msra.mxu0 %v463
        %529 = vmatprep.subr.mxu0 0.0
        %530 = vmatpush1.msra.mxu0 %v462
        %531 = vmatprep.subr.mxu0 0.0
        %532 = vmatpush1.msra.mxu0 %v461
        %533 = vmatprep.subr.mxu0 0.0
        %534 = vmatpush1.msra.mxu0 %v460
        %535 = vmatprep.subr.mxu0 0.0
        %536 = vmatpush1.msra.mxu0 %v459
        %537 = vmatprep.subr.mxu0 0.0
        %538 = vmatpush1.msra.mxu0 %v458
        %539 = vmatprep.subr.mxu0 0.0
        %540 = vmatpush1.msra.mxu0 %v457
        %541 = vmatprep.subr.mxu0 0.0
        %542 = vmatpush1.msra.mxu0 %v456
        %543 = vmatprep.subr.mxu0 0.0
        %544 = vmatpush1.msra.mxu0 %v455
        %545 = vmatprep.subr.mxu0 0.0
        %546 = vmatpush1.msra.mxu0 %v454
        %547 = vmatprep.subr.mxu0 0.0
        %548 = vmatpush1.msra.mxu0 %v453
        %549 = vmatprep.subr.mxu0 0.0
        %550 = vmatpush1.msra.mxu0 %v452
        %551 = vmatprep.subr.mxu0 0.0
        %552 = vmatpush1.msra.mxu0 %v451
        %553 = vmatprep.subr.mxu0 0.0
        %554 = vmatpush2.msra.mxu0 %v482
        %555 = vmatprep.subr.mxu0 0.0
        %556 = vmatpush2.msra.mxu0 %v481
        %557 = vmatprep.subr.mxu0 0.0
        %558 = vmatpush2.msra.mxu0 %v480
        %559 = vmatprep.subr.mxu0 0.0
        %560 = vmatpush2.msra.mxu0 %v479
        %561 = vmatprep.subr.mxu0 0.0
        %562 = vmatpush2.msra.mxu0 %v478
        %563 = vmatprep.subr.mxu0 0.0
        %564 = vmatpush2.msra.mxu0 %v477
        %565 = vmatprep.subr.mxu0 0.0
        %566 = vmatpush2.msra.mxu0 %v476
        %567 = vmatprep.subr.mxu0 0.0
        %568 = vmatpush2.msra.mxu0 %v475
        %569 = vmatprep.subr.mxu0 0.0
        %570 = vmatpush2.msra.mxu0 %v474
        %571 = vmatprep.subr.mxu0 0.0
        %572 = vmatpush2.msra.mxu0 %v473
        %573 = vmatprep.subr.mxu0 0.0
        %574 = vmatpush2.msra.mxu0 %v472
        %575 = vmatprep.subr.mxu0 0.0
        %576 = vmatpush2.msra.mxu0 %v471
        %577 = vmatprep.subr.mxu0 0.0
        %578 = vmatpush2.msra.mxu0 %v470
        %579 = vmatprep.subr.mxu0 0.0
        %580 = vmatpush2.msra.mxu0 %v469
        %581 = vmatprep.subr.mxu0 0.0
        %582 = vmatpush2.msra.mxu0 %v468
        %583 = vmatprep.subr.mxu0 0.0
        %584 = vmatpush2.msra.mxu0 %v467
        %585 = vmatprep.mubr.f32.mxu0 %v343
        %586 = vmatmul.mubr.f32.gmra.mxu0 %v307
        %v587 = vpop.f32.mrf.mxu0
        %v588 = vadd.f32 %v519, %v587
        %v589 = vpop.f32.mrf.mxu0
        %590 = vmatprep.mubr.f32.mxu0 %v344
        %591 = vmatmul.mubr.f32.gmra.mxu0 %v308
        %v592 = vpop.f32.mrf.mxu0
        %v593 = vadd.f32 %v519, %v592
        %v594 = vpop.f32.mrf.mxu0
        %595 = vmatprep.mubr.f32.mxu0 %v345
        %596 = vmatmul.mubr.f32.gmra.mxu0 %v309
        %v597 = vpop.f32.mrf.mxu0
        %v598 = vadd.f32 %v519, %v597
        %v599 = vpop.f32.mrf.mxu0
        %600 = vmatprep.mubr.f32.mxu0 %v346
        %601 = vmatmul.mubr.f32.gmra.mxu0 %v310
        %v602 = vpop.f32.mrf.mxu0
        %v603 = vadd.f32 %v519, %v602
        %v604 = vpop.f32.mrf.mxu0
        %605 = vmatprep.mubr.f32.mxu0 %v347
        %606 = vmatmul.mubr.f32.gmra.mxu0 %v311
        %v607 = vpop.f32.mrf.mxu0
        %v608 = vadd.f32 %v519, %v607
        %v609 = vpop.f32.mrf.mxu0
        %610 = vmatprep.mubr.f32.mxu0 %v348
        %611 = vmatmul.mubr.f32.gmra.mxu0 %v312
        %v612 = vpop.f32.mrf.mxu0
        %v613 = vadd.f32 %v519, %v612
        %v614 = vpop.f32.mrf.mxu0
        %615 = vmatprep.mubr.f32.mxu0 %v349
        %616 = vmatmul.mubr.f32.gmra.mxu0 %v313
        %v617 = vpop.f32.mrf.mxu0
        %v618 = vadd.f32 %v519, %v617
        %v619 = vpop.f32.mrf.mxu0
        %620 = vmatprep.mubr.f32.mxu0 %v350
        %621 = vmatmul.mubr.f32.gmra.mxu0 %v314
        %v622 = vpop.f32.mrf.mxu0
        %v623 = vadd.f32 %v519, %v622
        %v624 = vpop.f32.mrf.mxu0
        %625 = vmatprep.mubr.f32.mxu0 %v351
        %626 = vmatmul.mubr.f32.gmra.mxu0 %v315
        %v627 = vpop.f32.mrf.mxu0
        %v628 = vadd.f32 %v519, %v627
        %v629 = vpop.f32.mrf.mxu0
        %630 = vmatprep.mubr.f32.mxu0 %v352
        %631 = vmatmul.mubr.f32.gmra.mxu0 %v316
        %v632 = vpop.f32.mrf.mxu0
        %v633 = vadd.f32 %v519, %v632
        %v634 = vpop.f32.mrf.mxu0
        %635 = vmatprep.mubr.f32.mxu0 %v353
        %636 = vmatmul.mubr.f32.gmra.mxu0 %v317
        %v637 = vpop.f32.mrf.mxu0
        %v638 = vadd.f32 %v519, %v637
        %v639 = vpop.f32.mrf.mxu0
        %640 = vmatprep.mubr.f32.mxu0 %v354
        %641 = vmatmul.mubr.f32.gmra.mxu0 %v318
        %v642 = vpop.f32.mrf.mxu0
        %v643 = vadd.f32 %v519, %v642
        %v644 = vpop.f32.mrf.mxu0
        %645 = vmatprep.mubr.f32.mxu0 %v355
        %646 = vmatmul.mubr.f32.gmra.mxu0 %v319
        %v647 = vpop.f32.mrf.mxu0
        %v648 = vadd.f32 %v519, %v647
        %v649 = vpop.f32.mrf.mxu0
        %650 = vmatprep.mubr.f32.mxu0 %v356
        %651 = vmatmul.mubr.f32.gmra.mxu0 %v320
        %v652 = vpop.f32.mrf.mxu0
        %v653 = vadd.f32 %v519, %v652
        %v654 = vpop.f32.mrf.mxu0
        %655 = vmatprep.mubr.f32.mxu0 %v357
        %656 = vmatmul.mubr.f32.gmra.mxu0 %v321
        %v657 = vpop.f32.mrf.mxu0
        %v658 = vadd.f32 %v519, %v657
        %v659 = vpop.f32.mrf.mxu0
        %660 = vmatprep.mubr.f32.mxu0 %v358
        %661 = vmatmul.mubr.f32.gmra.mxu0 %v322
        %v662 = vpop.f32.mrf.mxu0
        %v663 = vadd.f32 %v519, %v662
        %v664 = vpop.f32.mrf.mxu0
        %665 = vmatprep.mubr.f32.mxu0 %v359
        %666 = vmatmul.mubr.f32.gmra.mxu0 %v323
        %v667 = vpop.f32.mrf.mxu0
        %v668 = vadd.f32 %v519, %v667
        %v669 = vpop.f32.mrf.mxu0
        %670 = vmatprep.mubr.f32.mxu0 %v360
        %671 = vmatmul.mubr.f32.gmra.mxu0 %v324
        %v672 = vpop.f32.mrf.mxu0
        %v673 = vadd.f32 %v519, %v672
        %v674 = vpop.f32.mrf.mxu0
        %675 = vmatprep.mubr.f32.mxu0 %v361
        %676 = vmatmul.mubr.f32.gmra.mxu0 %v325
        %v677 = vpop.f32.mrf.mxu0
        %v678 = vadd.f32 %v519, %v677
        %v679 = vpop.f32.mrf.mxu0
        %680 = vmatprep.mubr.f32.mxu0 %v362
        %681 = vmatmul.mubr.f32.gmra.mxu0 %v326
        %v682 = vpop.f32.mrf.mxu0
        %v683 = vadd.f32 %v519, %v682
        %v684 = vpop.f32.mrf.mxu0
        %685 = vmatprep.mubr.f32.mxu0 %v363
        %686 = vmatmul.mubr.f32.gmra.mxu0 %v327
        %v687 = vpop.f32.mrf.mxu0
        %v688 = vadd.f32 %v519, %v687
        %v689 = vpop.f32.mrf.mxu0
        %690 = vmatprep.mubr.f32.mxu0 %v364
        %691 = vmatmul.mubr.f32.gmra.mxu0 %v328
        %v692 = vpop.f32.mrf.mxu0
        %v693 = vadd.f32 %v519, %v692
        %v694 = vpop.f32.mrf.mxu0
        %695 = vmatprep.mubr.f32.mxu0 %v365
        %696 = vmatmul.mubr.f32.gmra.mxu0 %v329
        %v697 = vpop.f32.mrf.mxu0
        %v698 = vadd.f32 %v519, %v697
        %v699 = vpop.f32.mrf.mxu0
        %700 = vmatprep.mubr.f32.mxu0 %v366
        %701 = vmatmul.mubr.f32.gmra.mxu0 %v330
        %v702 = vpop.f32.mrf.mxu0
        %v703 = vadd.f32 %v519, %v702
        %v704 = vpop.f32.mrf.mxu0
        %705 = vmatprep.mubr.f32.mxu0 %v367
        %706 = vmatmul.mubr.f32.gmra.mxu0 %v331
        %v707 = vpop.f32.mrf.mxu0
        %v708 = vadd.f32 %v519, %v707
        %v709 = vpop.f32.mrf.mxu0
        %710 = vmatprep.mubr.f32.mxu0 %v368
        %711 = vmatmul.mubr.f32.gmra.mxu0 %v332
        %v712 = vpop.f32.mrf.mxu0
        %v713 = vadd.f32 %v519, %v712
        %v714 = vpop.f32.mrf.mxu0
        %715 = vmatprep.mubr.f32.mxu0 %v369
        %716 = vmatmul.mubr.f32.gmra.mxu0 %v333
        %v717 = vpop.f32.mrf.mxu0
        %v718 = vadd.f32 %v519, %v717
        %v719 = vpop.f32.mrf.mxu0
        %720 = vmatprep.mubr.f32.mxu0 %v370
        %721 = vmatmul.mubr.f32.gmra.mxu0 %v334
        %v722 = vpop.f32.mrf.mxu0
        %v723 = vadd.f32 %v519, %v722
        %v724 = vpop.f32.mrf.mxu0
        %725 = vmatprep.mubr.f32.mxu0 %v371
        %726 = vmatmul.mubr.f32.gmra.mxu0 %v335
        %v727 = vpop.f32.mrf.mxu0
        %v728 = vadd.f32 %v519, %v727
        %v729 = vpop.f32.mrf.mxu0
        %730 = vmatprep.mubr.f32.mxu0 %v372
        %731 = vmatmul.mubr.f32.gmra.mxu0 %v336
        %v732 = vpop.f32.mrf.mxu0
        %v733 = vadd.f32 %v519, %v732
        %v734 = vpop.f32.mrf.mxu0
        %735 = vmatprep.mubr.f32.mxu0 %v373
        %736 = vmatmul.mubr.f32.gmra.mxu0 %v337
        %v737 = vpop.f32.mrf.mxu0
        %v738 = vadd.f32 %v519, %v737
        %v739 = vpop.f32.mrf.mxu0
        %740 = vmatprep.mubr.f32.mxu0 %v374
        %741 = vmatmul.mubr.f32.gmra.mxu0 %v338
        %v742 = vpop.f32.mrf.mxu0
        %v743 = vadd.f32 %v519, %v742
        %v744 = vpop.f32.mrf.mxu0
        %745 = vmatprep.mubr.f32.mxu0 %v375
        %746 = vmatmul.mubr.f32.gmra.mxu0 %v339
        %v747 = vpop.f32.mrf.mxu0
        %v748 = vadd.f32 %v519, %v747
        %v749 = vpop.f32.mrf.mxu0
        %750 = vmatprep.mubr.f32.mxu0 %v376
        %751 = vmatmul.mubr.f32.gmra.mxu0 %v340
        %v752 = vpop.f32.mrf.mxu0
        %v753 = vadd.f32 %v519, %v752
        %v754 = vpop.f32.mrf.mxu0
        %755 = vmatprep.mubr.f32.mxu0 %v377
        %756 = vmatmul.mubr.f32.gmra.mxu0 %v341
        %v757 = vpop.f32.mrf.mxu0
        %v758 = vadd.f32 %v519, %v757
        %v759 = vpop.f32.mrf.mxu0
        %760 = vmatprep.mubr.f32.mxu0 %v378
        %761 = vmatmul.mubr.f32.gmra.mxu0 %v342
        %v762 = vpop.f32.mrf.mxu0
        %v763 = vadd.f32 %v519, %v762
        %v764 = vpop.f32.mrf.mxu0
        %765 = vdwg.mxu0
        %766 = vmatprep.subr.mxu0 0.0
        %767 = vmatpush1.msra.mxu0 %v498
        %768 = vmatprep.subr.mxu0 0.0
        %769 = vmatpush1.msra.mxu0 %v497
        %770 = vmatprep.subr.mxu0 0.0
        %771 = vmatpush1.msra.mxu0 %v496
        %772 = vmatprep.subr.mxu0 0.0
        %773 = vmatpush1.msra.mxu0 %v495
        %774 = vmatprep.subr.mxu0 0.0
        %775 = vmatpush1.msra.mxu0 %v494
        %776 = vmatprep.subr.mxu0 0.0
        %777 = vmatpush1.msra.mxu0 %v493
        %778 = vmatprep.subr.mxu0 0.0
        %779 = vmatpush1.msra.mxu0 %v492
        %780 = vmatprep.subr.mxu0 0.0
        %781 = vmatpush1.msra.mxu0 %v491
        %782 = vmatprep.subr.mxu0 0.0
        %783 = vmatpush1.msra.mxu0 %v490
        %784 = vmatprep.subr.mxu0 0.0
        %785 = vmatpush1.msra.mxu0 %v489
        %786 = vmatprep.subr.mxu0 0.0
        %787 = vmatpush1.msra.mxu0 %v488
        %788 = vmatprep.subr.mxu0 0.0
        %789 = vmatpush1.msra.mxu0 %v487
        %790 = vmatprep.subr.mxu0 0.0
        %791 = vmatpush1.msra.mxu0 %v486
        %792 = vmatprep.subr.mxu0 0.0
        %793 = vmatpush1.msra.mxu0 %v485
        %794 = vmatprep.subr.mxu0 0.0
        %795 = vmatpush1.msra.mxu0 %v484
        %796 = vmatprep.subr.mxu0 0.0
        %797 = vmatpush1.msra.mxu0 %v483
        %798 = vmatprep.subr.mxu0 0.0
        %799 = vmatpush2.msra.mxu0 %v514
        %800 = vmatprep.subr.mxu0 0.0
        %801 = vmatpush2.msra.mxu0 %v513
        %802 = vmatprep.subr.mxu0 0.0
        %803 = vmatpush2.msra.mxu0 %v512
        %804 = vmatprep.subr.mxu0 0.0
        %805 = vmatpush2.msra.mxu0 %v511
        %806 = vmatprep.subr.mxu0 0.0
        %807 = vmatpush2.msra.mxu0 %v510
        %808 = vmatprep.subr.mxu0 0.0
        %809 = vmatpush2.msra.mxu0 %v509
        %810 = vmatprep.subr.mxu0 0.0
        %811 = vmatpush2.msra.mxu0 %v508
        %812 = vmatprep.subr.mxu0 0.0
        %813 = vmatpush2.msra.mxu0 %v507
        %814 = vmatprep.subr.mxu0 0.0
        %815 = vmatpush2.msra.mxu0 %v506
        %816 = vmatprep.subr.mxu0 0.0
        %817 = vmatpush2.msra.mxu0 %v505
        %818 = vmatprep.subr.mxu0 0.0
        %819 = vmatpush2.msra.mxu0 %v504
        %820 = vmatprep.subr.mxu0 0.0
        %821 = vmatpush2.msra.mxu0 %v503
        %822 = vmatprep.subr.mxu0 0.0
        %823 = vmatpush2.msra.mxu0 %v502
        %824 = vmatprep.subr.mxu0 0.0
        %825 = vmatpush2.msra.mxu0 %v501
        %826 = vmatprep.subr.mxu0 0.0
        %827 = vmatpush2.msra.mxu0 %v500
        %828 = vmatprep.subr.mxu0 0.0
        %829 = vmatpush2.msra.mxu0 %v499
        %830 = vmatprep.mubr.f32.mxu0 %v415
        %831 = vmatmul.mubr.f32.gmra.mxu0 %v379
        %v832 = vpop.f32.mrf.mxu0
        %v833 = vadd.f32 %v588, %v832
        %v834 = vpop.f32.mrf.mxu0
        %835 = vmatprep.mubr.f32.mxu0 %v416
        %836 = vmatmul.mubr.f32.gmra.mxu0 %v380
        %v837 = vpop.f32.mrf.mxu0
        %v838 = vadd.f32 %v593, %v837
        %v839 = vpop.f32.mrf.mxu0
        %840 = vmatprep.mubr.f32.mxu0 %v417
        %841 = vmatmul.mubr.f32.gmra.mxu0 %v381
        %v842 = vpop.f32.mrf.mxu0
        %v843 = vadd.f32 %v598, %v842
        %v844 = vpop.f32.mrf.mxu0
        %845 = vmatprep.mubr.f32.mxu0 %v418
        %846 = vmatmul.mubr.f32.gmra.mxu0 %v382
        %v847 = vpop.f32.mrf.mxu0
        %v848 = vadd.f32 %v603, %v847
        %v849 = vpop.f32.mrf.mxu0
        %850 = vmatprep.mubr.f32.mxu0 %v419
        %851 = vmatmul.mubr.f32.gmra.mxu0 %v383
        %v852 = vpop.f32.mrf.mxu0
        %v853 = vadd.f32 %v608, %v852
        %v854 = vpop.f32.mrf.mxu0
        %855 = vmatprep.mubr.f32.mxu0 %v420
        %856 = vmatmul.mubr.f32.gmra.mxu0 %v384
        %v857 = vpop.f32.mrf.mxu0
        %v858 = vadd.f32 %v613, %v857
        %v859 = vpop.f32.mrf.mxu0
        %860 = vmatprep.mubr.f32.mxu0 %v421
        %861 = vmatmul.mubr.f32.gmra.mxu0 %v385
        %v862 = vpop.f32.mrf.mxu0
        %v863 = vadd.f32 %v618, %v862
        %v864 = vpop.f32.mrf.mxu0
        %865 = vmatprep.mubr.f32.mxu0 %v422
        %866 = vmatmul.mubr.f32.gmra.mxu0 %v386
        %v867 = vpop.f32.mrf.mxu0
        %v868 = vadd.f32 %v623, %v867
        %v869 = vpop.f32.mrf.mxu0
        %870 = vmatprep.mubr.f32.mxu0 %v423
        %871 = vmatmul.mubr.f32.gmra.mxu0 %v387
        %v872 = vpop.f32.mrf.mxu0
        %v873 = vadd.f32 %v628, %v872
        %v874 = vpop.f32.mrf.mxu0
        %875 = vmatprep.mubr.f32.mxu0 %v424
        %876 = vmatmul.mubr.f32.gmra.mxu0 %v388
        %v877 = vpop.f32.mrf.mxu0
        %v878 = vadd.f32 %v633, %v877
        %v879 = vpop.f32.mrf.mxu0
        %880 = vmatprep.mubr.f32.mxu0 %v425
        %881 = vmatmul.mubr.f32.gmra.mxu0 %v389
        %v882 = vpop.f32.mrf.mxu0
        %v883 = vadd.f32 %v638, %v882
        %v884 = vpop.f32.mrf.mxu0
        %885 = vmatprep.mubr.f32.mxu0 %v426
        %886 = vmatmul.mubr.f32.gmra.mxu0 %v390
        %v887 = vpop.f32.mrf.mxu0
        %v888 = vadd.f32 %v643, %v887
        %v889 = vpop.f32.mrf.mxu0
        %890 = vmatprep.mubr.f32.mxu0 %v427
        %891 = vmatmul.mubr.f32.gmra.mxu0 %v391
        %v892 = vpop.f32.mrf.mxu0
        %v893 = vadd.f32 %v648, %v892
        %v894 = vpop.f32.mrf.mxu0
        %895 = vmatprep.mubr.f32.mxu0 %v428
        %896 = vmatmul.mubr.f32.gmra.mxu0 %v392
        %v897 = vpop.f32.mrf.mxu0
        %v898 = vadd.f32 %v653, %v897
        %v899 = vpop.f32.mrf.mxu0
        %900 = vmatprep.mubr.f32.mxu0 %v429
        %901 = vmatmul.mubr.f32.gmra.mxu0 %v393
        %v902 = vpop.f32.mrf.mxu0
        %v903 = vadd.f32 %v658, %v902
        %v904 = vpop.f32.mrf.mxu0
        %905 = vmatprep.mubr.f32.mxu0 %v430
        %906 = vmatmul.mubr.f32.gmra.mxu0 %v394
        %v907 = vpop.f32.mrf.mxu0
        %v908 = vadd.f32 %v663, %v907
        %v909 = vpop.f32.mrf.mxu0
        %910 = vmatprep.mubr.f32.mxu0 %v431
        %911 = vmatmul.mubr.f32.gmra.mxu0 %v395
        %v912 = vpop.f32.mrf.mxu0
        %v913 = vadd.f32 %v668, %v912
        %v914 = vpop.f32.mrf.mxu0
        %915 = vmatprep.mubr.f32.mxu0 %v432
        %916 = vmatmul.mubr.f32.gmra.mxu0 %v396
        %v917 = vpop.f32.mrf.mxu0
        %v918 = vadd.f32 %v673, %v917
        %v919 = vpop.f32.mrf.mxu0
        %920 = vmatprep.mubr.f32.mxu0 %v433
        %921 = vmatmul.mubr.f32.gmra.mxu0 %v397
        %v922 = vpop.f32.mrf.mxu0
        %v923 = vadd.f32 %v678, %v922
        %v924 = vpop.f32.mrf.mxu0
        %925 = vmatprep.mubr.f32.mxu0 %v434
        %926 = vmatmul.mubr.f32.gmra.mxu0 %v398
        %v927 = vpop.f32.mrf.mxu0
        %v928 = vadd.f32 %v683, %v927
        %v929 = vpop.f32.mrf.mxu0
        %930 = vmatprep.mubr.f32.mxu0 %v435
        %931 = vmatmul.mubr.f32.gmra.mxu0 %v399
        %v932 = vpop.f32.mrf.mxu0
        %v933 = vadd.f32 %v688, %v932
        %v934 = vpop.f32.mrf.mxu0
        %935 = vmatprep.mubr.f32.mxu0 %v436
        %936 = vmatmul.mubr.f32.gmra.mxu0 %v400
        %v937 = vpop.f32.mrf.mxu0
        %v938 = vadd.f32 %v693, %v937
        %v939 = vpop.f32.mrf.mxu0
        %940 = vmatprep.mubr.f32.mxu0 %v437
        %941 = vmatmul.mubr.f32.gmra.mxu0 %v401
        %v942 = vpop.f32.mrf.mxu0
        %v943 = vadd.f32 %v698, %v942
        %v944 = vpop.f32.mrf.mxu0
        %945 = vmatprep.mubr.f32.mxu0 %v438
        %946 = vmatmul.mubr.f32.gmra.mxu0 %v402
        %v947 = vpop.f32.mrf.mxu0
        %v948 = vadd.f32 %v703, %v947
        %v949 = vpop.f32.mrf.mxu0
        %950 = vmatprep.mubr.f32.mxu0 %v439
        %951 = vmatmul.mubr.f32.gmra.mxu0 %v403
        %v952 = vpop.f32.mrf.mxu0
        %v953 = vadd.f32 %v708, %v952
        %v954 = vpop.f32.mrf.mxu0
        %955 = vmatprep.mubr.f32.mxu0 %v440
        %956 = vmatmul.mubr.f32.gmra.mxu0 %v404
        %v957 = vpop.f32.mrf.mxu0
        %v958 = vadd.f32 %v713, %v957
        %v959 = vpop.f32.mrf.mxu0
        %960 = vmatprep.mubr.f32.mxu0 %v441
        %961 = vmatmul.mubr.f32.gmra.mxu0 %v405
        %v962 = vpop.f32.mrf.mxu0
        %v963 = vadd.f32 %v718, %v962
        %v964 = vpop.f32.mrf.mxu0
        %965 = vmatprep.mubr.f32.mxu0 %v442
        %966 = vmatmul.mubr.f32.gmra.mxu0 %v406
        %v967 = vpop.f32.mrf.mxu0
        %v968 = vadd.f32 %v723, %v967
        %v969 = vpop.f32.mrf.mxu0
        %970 = vmatprep.mubr.f32.mxu0 %v443
        %971 = vmatmul.mubr.f32.gmra.mxu0 %v407
        %v972 = vpop.f32.mrf.mxu0
        %v973 = vadd.f32 %v728, %v972
        %v974 = vpop.f32.mrf.mxu0
        %975 = vmatprep.mubr.f32.mxu0 %v444
        %976 = vmatmul.mubr.f32.gmra.mxu0 %v408
        %v977 = vpop.f32.mrf.mxu0
        %v978 = vadd.f32 %v733, %v977
        %v979 = vpop.f32.mrf.mxu0
        %980 = vmatprep.mubr.f32.mxu0 %v445
        %981 = vmatmul.mubr.f32.gmra.mxu0 %v409
        %v982 = vpop.f32.mrf.mxu0
        %v983 = vadd.f32 %v738, %v982
        %v984 = vpop.f32.mrf.mxu0
        %985 = vmatprep.mubr.f32.mxu0 %v446
        %986 = vmatmul.mubr.f32.gmra.mxu0 %v410
        %v987 = vpop.f32.mrf.mxu0
        %v988 = vadd.f32 %v743, %v987
        %v989 = vpop.f32.mrf.mxu0
        %990 = vmatprep.mubr.f32.mxu0 %v447
        %991 = vmatmul.mubr.f32.gmra.mxu0 %v411
        %v992 = vpop.f32.mrf.mxu0
        %v993 = vadd.f32 %v748, %v992
        %v994 = vpop.f32.mrf.mxu0
        %995 = vmatprep.mubr.f32.mxu0 %v448
        %996 = vmatmul.mubr.f32.gmra.mxu0 %v412
        %v997 = vpop.f32.mrf.mxu0
        %v998 = vadd.f32 %v753, %v997
        %v999 = vpop.f32.mrf.mxu0
        %1000 = vmatprep.mubr.f32.mxu0 %v449
        %1001 = vmatmul.mubr.f32.gmra.mxu0 %v413
        %v1002 = vpop.f32.mrf.mxu0
        %v1003 = vadd.f32 %v758, %v1002
        %v1004 = vpop.f32.mrf.mxu0
        %1005 = vmatprep.mubr.f32.mxu0 %v450
        %1006 = vmatmul.mubr.f32.gmra.mxu0 %v414
        %v1007 = vpop.f32.mrf.mxu0
        %v1008 = vadd.f32 %v763, %v1007
        %v1009 = vpop.f32.mrf.mxu0
        %1010 = vdwg.mxu0
        %1011 = vst [vmem:[%s164] sm:$0xff] %v833
        %1012 = vst [vmem:[%s164 + $0x8] sm:$0xff] %v838
        %1013 = vst [vmem:[%s164 + $0x10] sm:$0xff] %v843
        %1014 = vst [vmem:[%s164 + $0x18] sm:$0xff] %v848
        %1015 = vst [vmem:[%s164 + $0x20] sm:$0xff] %v853
        %1016 = vst [vmem:[%s164 + $0x28] sm:$0xff] %v858
        %1017 = vst [vmem:[%s164 + $0x30] sm:$0xff] %v863
        %1018 = vst [vmem:[%s164 + $0x38] sm:$0xff] %v868
        %1019 = vst [vmem:[%s164 + $0x40] sm:$0xff] %v873
        %1020 = vst [vmem:[%s164 + $0x48] sm:$0xff] %v878
        %1021 = vst [vmem:[%s164 + $0x50] sm:$0xff] %v883
        %1022 = vst [vmem:[%s164 + $0x58] sm:$0xff] %v888
        %1023 = vst [vmem:[%s164 + $0x60] sm:$0xff] %v893
        %1024 = vst [vmem:[%s164 + $0x68] sm:$0xff] %v898
        %1025 = vst [vmem:[%s164 + $0x70] sm:$0xff] %v903
        %1026 = vst [vmem:[%s164 + $0x78] sm:$0xff] %v908
        %1027 = vst [vmem:[%s164 + $0x80] sm:$0xff] %v913
        %1028 = vst [vmem:[%s164 + $0x88] sm:$0xff] %v918
        %1029 = vst [vmem:[%s164 + $0x90] sm:$0xff] %v923
        %1030 = vst [vmem:[%s164 + $0x98] sm:$0xff] %v928
        %1031 = vst [vmem:[%s164 + $0xa0] sm:$0xff] %v933
        %1032 = vst [vmem:[%s164 + $0xa8] sm:$0xff] %v938
        %1033 = vst [vmem:[%s164 + $0xb0] sm:$0xff] %v943
        %1034 = vst [vmem:[%s164 + $0xb8] sm:$0xff] %v948
        %1035 = vst [vmem:[%s164 + $0xc0] sm:$0xff] %v953
        %1036 = vst [vmem:[%s164 + $0xc8] sm:$0xff] %v958
        %1037 = vst [vmem:[%s164 + $0xd0] sm:$0xff] %v963
        %1038 = vst [vmem:[%s164 + $0xd8] sm:$0xff] %v968
        %1039 = vst [vmem:[%s164 + $0xe0] sm:$0xff] %v973
        %1040 = vst [vmem:[%s164 + $0xe8] sm:$0xff] %v978
        %1041 = vst [vmem:[%s164 + $0xf0] sm:$0xff] %v983
        %1042 = vst [vmem:[%s164 + $0xf8] sm:$0xff] %v988
        %1043 = vst [vmem:[%s164 + $0x100] sm:$0xff] %v993
        %1044 = vst [vmem:[%s164 + $0x108] sm:$0xff] %v998
        %1045 = vst [vmem:[%s164 + $0x110] sm:$0xff] %v1003
        %1046 = vst [vmem:[%s164 + $0x118] sm:$0xff] %v1008
        %v1047 = vld [vmem:[#allocation2 + $0x1] sm:$0xff]
        %v1048 = vld [vmem:[#allocation2 + $0x9] sm:$0xff]
        %v1049 = vld [vmem:[#allocation2 + $0x11] sm:$0xff]
        %v1050 = vld [vmem:[#allocation2 + $0x19] sm:$0xff]
        %v1051 = vld [vmem:[#allocation2 + $0x21] sm:$0xff]
        %v1052 = vld [vmem:[#allocation2 + $0x29] sm:$0xff]
        %v1053 = vld [vmem:[#allocation2 + $0x31] sm:$0xff]
        %v1054 = vld [vmem:[#allocation2 + $0x39] sm:$0xff]
        %v1055 = vld [vmem:[#allocation2 + $0x41] sm:$0xff]
        %v1056 = vld [vmem:[#allocation2 + $0x49] sm:$0xff]
        %v1057 = vld [vmem:[#allocation2 + $0x51] sm:$0xff]
        %v1058 = vld [vmem:[#allocation2 + $0x59] sm:$0xff]
        %v1059 = vld [vmem:[#allocation2 + $0x61] sm:$0xff]
        %v1060 = vld [vmem:[#allocation2 + $0x69] sm:$0xff]
        %v1061 = vld [vmem:[#allocation2 + $0x71] sm:$0xff]
        %v1062 = vld [vmem:[#allocation2 + $0x79] sm:$0xff]
        %v1063 = vld [vmem:[#allocation2 + $0x81] sm:$0xff]
        %v1064 = vld [vmem:[#allocation2 + $0x89] sm:$0xff]
        %v1065 = vld [vmem:[#allocation2 + $0x91] sm:$0xff]
        %v1066 = vld [vmem:[#allocation2 + $0x99] sm:$0xff]
        %v1067 = vld [vmem:[#allocation2 + $0xa1] sm:$0xff]
        %v1068 = vld [vmem:[#allocation2 + $0xa9] sm:$0xff]
        %v1069 = vld [vmem:[#allocation2 + $0xb1] sm:$0xff]
        %v1070 = vld [vmem:[#allocation2 + $0xb9] sm:$0xff]
        %v1071 = vld [vmem:[#allocation2 + $0xc1] sm:$0xff]
        %v1072 = vld [vmem:[#allocation2 + $0xc9] sm:$0xff]
        %v1073 = vld [vmem:[#allocation2 + $0xd1] sm:$0xff]
        %v1074 = vld [vmem:[#allocation2 + $0xd9] sm:$0xff]
        %v1075 = vld [vmem:[#allocation2 + $0xe1] sm:$0xff]
        %v1076 = vld [vmem:[#allocation2 + $0xe9] sm:$0xff]
        %v1077 = vld [vmem:[#allocation2 + $0xf1] sm:$0xff]
        %v1078 = vld [vmem:[#allocation2 + $0xf9] sm:$0xff]
        %v1079 = vld [vmem:[#allocation2 + $0x101] sm:$0xff]
        %v1080 = vld [vmem:[#allocation2 + $0x109] sm:$0xff]
        %v1081 = vld [vmem:[#allocation2 + $0x111] sm:$0xff]
        %v1082 = vld [vmem:[#allocation2 + $0x119] sm:$0xff]
        %v1083 = vld [vmem:[#allocation2 + $0x2] sm:$0xff]
        %v1084 = vld [vmem:[#allocation2 + $0xa] sm:$0xff]
        %v1085 = vld [vmem:[#allocation2 + $0x12] sm:$0xff]
        %v1086 = vld [vmem:[#allocation2 + $0x1a] sm:$0xff]
        %v1087 = vld [vmem:[#allocation2 + $0x22] sm:$0xff]
        %v1088 = vld [vmem:[#allocation2 + $0x2a] sm:$0xff]
        %v1089 = vld [vmem:[#allocation2 + $0x32] sm:$0xff]
        %v1090 = vld [vmem:[#allocation2 + $0x3a] sm:$0xff]
        %v1091 = vld [vmem:[#allocation2 + $0x42] sm:$0xff]
        %v1092 = vld [vmem:[#allocation2 + $0x4a] sm:$0xff]
        %v1093 = vld [vmem:[#allocation2 + $0x52] sm:$0xff]
        %v1094 = vld [vmem:[#allocation2 + $0x5a] sm:$0xff]
        %v1095 = vld [vmem:[#allocation2 + $0x62] sm:$0xff]
        %v1096 = vld [vmem:[#allocation2 + $0x6a] sm:$0xff]
        %v1097 = vld [vmem:[#allocation2 + $0x72] sm:$0xff]
        %v1098 = vld [vmem:[#allocation2 + $0x7a] sm:$0xff]
        %v1099 = vld [vmem:[#allocation2 + $0x82] sm:$0xff]
        %v1100 = vld [vmem:[#allocation2 + $0x8a] sm:$0xff]
        %v1101 = vld [vmem:[#allocation2 + $0x92] sm:$0xff]
        %v1102 = vld [vmem:[#allocation2 + $0x9a] sm:$0xff]
        %v1103 = vld [vmem:[#allocation2 + $0xa2] sm:$0xff]
        %v1104 = vld [vmem:[#allocation2 + $0xaa] sm:$0xff]
        %v1105 = vld [vmem:[#allocation2 + $0xb2] sm:$0xff]
        %v1106 = vld [vmem:[#allocation2 + $0xba] sm:$0xff]
        %v1107 = vld [vmem:[#allocation2 + $0xc2] sm:$0xff]
        %v1108 = vld [vmem:[#allocation2 + $0xca] sm:$0xff]
        %v1109 = vld [vmem:[#allocation2 + $0xd2] sm:$0xff]
        %v1110 = vld [vmem:[#allocation2 + $0xda] sm:$0xff]
        %v1111 = vld [vmem:[#allocation2 + $0xe2] sm:$0xff]
        %v1112 = vld [vmem:[#allocation2 + $0xea] sm:$0xff]
        %v1113 = vld [vmem:[#allocation2 + $0xf2] sm:$0xff]
        %v1114 = vld [vmem:[#allocation2 + $0xfa] sm:$0xff]
        %v1115 = vld [vmem:[#allocation2 + $0x102] sm:$0xff]
        %v1116 = vld [vmem:[#allocation2 + $0x10a] sm:$0xff]
        %v1117 = vld [vmem:[#allocation2 + $0x112] sm:$0xff]
        %v1118 = vld [vmem:[#allocation2 + $0x11a] sm:$0xff]
        %v1119 = vld [vmem:[#allocation2 + $0x13] sm:$0xff]
        %v1120 = vld [vmem:[#allocation2 + $0x1b] sm:$0xff]
        %v1121 = vld [vmem:[#allocation2 + $0x23] sm:$0xff]
        %v1122 = vld [vmem:[#allocation2 + $0x2b] sm:$0xff]
        %v1123 = vld [vmem:[#allocation2 + $0x33] sm:$0xff]
        %v1124 = vld [vmem:[#allocation2 + $0x3b] sm:$0xff]
        %v1125 = vld [vmem:[#allocation2 + $0x43] sm:$0xff]
        %v1126 = vld [vmem:[#allocation2 + $0x4b] sm:$0xff]
        %v1127 = vld [vmem:[#allocation2 + $0x53] sm:$0xff]
        %v1128 = vld [vmem:[#allocation2 + $0x5b] sm:$0xff]
        %v1129 = vld [vmem:[#allocation2 + $0x63] sm:$0xff]
        %v1130 = vld [vmem:[#allocation2 + $0x6b] sm:$0xff]
        %v1131 = vld [vmem:[#allocation2 + $0x73] sm:$0xff]
        %v1132 = vld [vmem:[#allocation2 + $0x7b] sm:$0xff]
        %v1133 = vld [vmem:[#allocation2 + $0x83] sm:$0xff]
        %v1134 = vld [vmem:[#allocation2 + $0x8b] sm:$0xff]
        %v1135 = vld [vmem:[#allocation2 + $0x93] sm:$0xff]
        %v1136 = vld [vmem:[#allocation2 + $0x9b] sm:$0xff]
        %v1137 = vld [vmem:[#allocation2 + $0xa3] sm:$0xff]
        %v1138 = vld [vmem:[#allocation2 + $0xab] sm:$0xff]
        %v1139 = vld [vmem:[#allocation2 + $0xb3] sm:$0xff]
        %v1140 = vld [vmem:[#allocation2 + $0xbb] sm:$0xff]
        %v1141 = vld [vmem:[#allocation2 + $0xc3] sm:$0xff]
        %v1142 = vld [vmem:[#allocation2 + $0xcb] sm:$0xff]
        %v1143 = vld [vmem:[#allocation2 + $0xd3] sm:$0xff]
        %v1144 = vld [vmem:[#allocation2 + $0xdb] sm:$0xff]
        %v1145 = vld [vmem:[#allocation2 + $0xe3] sm:$0xff]
        %v1146 = vld [vmem:[#allocation2 + $0xeb] sm:$0xff]
        %v1147 = vld [vmem:[#allocation2 + $0xf3] sm:$0xff]
        %v1148 = vld [vmem:[#allocation2 + $0xfb] sm:$0xff]
        %v1149 = vld [vmem:[#allocation2 + $0x103] sm:$0xff]
        %v1150 = vld [vmem:[#allocation2 + $0x10b] sm:$0xff]
        %v1151 = vld [vmem:[#allocation2 + $0x113] sm:$0xff]
        %v1152 = vld [vmem:[#allocation2 + $0x11b] sm:$0xff]
        %v1153 = vld [vmem:[#allocation2 + $0x123] sm:$0xff]
        %v1154 = vld [vmem:[#allocation2 + $0x12b] sm:$0xff]
        %v1155 = vld [vmem:[#allocation2 + $0x14] sm:$0xff]
        %v1156 = vld [vmem:[#allocation2 + $0x1c] sm:$0xff]
        %v1157 = vld [vmem:[#allocation2 + $0x24] sm:$0xff]
        %v1158 = vld [vmem:[#allocation2 + $0x2c] sm:$0xff]
        %v1159 = vld [vmem:[#allocation2 + $0x34] sm:$0xff]
        %v1160 = vld [vmem:[#allocation2 + $0x3c] sm:$0xff]
        %v1161 = vld [vmem:[#allocation2 + $0x44] sm:$0xff]
        %v1162 = vld [vmem:[#allocation2 + $0x4c] sm:$0xff]
        %v1163 = vld [vmem:[#allocation2 + $0x54] sm:$0xff]
        %v1164 = vld [vmem:[#allocation2 + $0x5c] sm:$0xff]
        %v1165 = vld [vmem:[#allocation2 + $0x64] sm:$0xff]
        %v1166 = vld [vmem:[#allocation2 + $0x6c] sm:$0xff]
        %v1167 = vld [vmem:[#allocation2 + $0x74] sm:$0xff]
        %v1168 = vld [vmem:[#allocation2 + $0x7c] sm:$0xff]
        %v1169 = vld [vmem:[#allocation2 + $0x84] sm:$0xff]
        %v1170 = vld [vmem:[#allocation2 + $0x8c] sm:$0xff]
        %v1171 = vld [vmem:[#allocation2 + $0x94] sm:$0xff]
        %v1172 = vld [vmem:[#allocation2 + $0x9c] sm:$0xff]
        %v1173 = vld [vmem:[#allocation2 + $0xa4] sm:$0xff]
        %v1174 = vld [vmem:[#allocation2 + $0xac] sm:$0xff]
        %v1175 = vld [vmem:[#allocation2 + $0xb4] sm:$0xff]
        %v1176 = vld [vmem:[#allocation2 + $0xbc] sm:$0xff]
        %v1177 = vld [vmem:[#allocation2 + $0xc4] sm:$0xff]
        %v1178 = vld [vmem:[#allocation2 + $0xcc] sm:$0xff]
        %v1179 = vld [vmem:[#allocation2 + $0xd4] sm:$0xff]
        %v1180 = vld [vmem:[#allocation2 + $0xdc] sm:$0xff]
        %v1181 = vld [vmem:[#allocation2 + $0xe4] sm:$0xff]
        %v1182 = vld [vmem:[#allocation2 + $0xec] sm:$0xff]
        %v1183 = vld [vmem:[#allocation2 + $0xf4] sm:$0xff]
        %v1184 = vld [vmem:[#allocation2 + $0xfc] sm:$0xff]
        %v1185 = vld [vmem:[#allocation2 + $0x104] sm:$0xff]
        %v1186 = vld [vmem:[#allocation2 + $0x10c] sm:$0xff]
        %v1187 = vld [vmem:[#allocation2 + $0x114] sm:$0xff]
        %v1188 = vld [vmem:[#allocation2 + $0x11c] sm:$0xff]
        %v1189 = vld [vmem:[#allocation2 + $0x124] sm:$0xff]
        %v1190 = vld [vmem:[#allocation2 + $0x12c] sm:$0xff]
        %s1191 = scalar_lea.vmem [#allocation4], 512
        %v1192 = vld [vmem:[%s1191] sm:$0xff]
        %v1193 = vld [vmem:[%s1191 + $0x8] sm:$0xff]
        %v1194 = vld [vmem:[%s1191 + $0x10] sm:$0xff]
        %v1195 = vld [vmem:[%s1191 + $0x18] sm:$0xff]
        %v1196 = vld [vmem:[%s1191 + $0x20] sm:$0xff]
        %v1197 = vld [vmem:[%s1191 + $0x28] sm:$0xff]
        %v1198 = vld [vmem:[%s1191 + $0x30] sm:$0xff]
        %v1199 = vld [vmem:[%s1191 + $0x38] sm:$0xff]
        %v1200 = vld [vmem:[%s1191 + $0x40] sm:$0xff]
        %v1201 = vld [vmem:[%s1191 + $0x48] sm:$0xff]
        %v1202 = vld [vmem:[%s1191 + $0x50] sm:$0xff]
        %v1203 = vld [vmem:[%s1191 + $0x58] sm:$0xff]
        %v1204 = vld [vmem:[%s1191 + $0x60] sm:$0xff]
        %v1205 = vld [vmem:[%s1191 + $0x68] sm:$0xff]
        %v1206 = vld [vmem:[%s1191 + $0x70] sm:$0xff]
        %v1207 = vld [vmem:[%s1191 + $0x78] sm:$0xff]
        %v1208 = vld [vmem:[%s1191 + $0x80] sm:$0xff]
        %v1209 = vld [vmem:[%s1191 + $0x88] sm:$0xff]
        %v1210 = vld [vmem:[%s1191 + $0x90] sm:$0xff]
        %v1211 = vld [vmem:[%s1191 + $0x98] sm:$0xff]
        %v1212 = vld [vmem:[%s1191 + $0xa0] sm:$0xff]
        %v1213 = vld [vmem:[%s1191 + $0xa8] sm:$0xff]
        %v1214 = vld [vmem:[%s1191 + $0xb0] sm:$0xff]
        %v1215 = vld [vmem:[%s1191 + $0xb8] sm:$0xff]
        %v1216 = vld [vmem:[%s1191 + $0xc0] sm:$0xff]
        %v1217 = vld [vmem:[%s1191 + $0xc8] sm:$0xff]
        %v1218 = vld [vmem:[%s1191 + $0xd0] sm:$0xff]
        %v1219 = vld [vmem:[%s1191 + $0xd8] sm:$0xff]
        %v1220 = vld [vmem:[%s1191 + $0xe0] sm:$0xff]
        %v1221 = vld [vmem:[%s1191 + $0xe8] sm:$0xff]
        %v1222 = vld [vmem:[%s1191 + $0xf0] sm:$0xff]
        %v1223 = vld [vmem:[%s1191 + $0xf8] sm:$0xff]
        %v1224 = vld [vmem:[%s1191 + $0x100] sm:$0xff]
        %v1225 = vld [vmem:[%s1191 + $0x108] sm:$0xff]
        %v1226 = vld [vmem:[%s1191 + $0x110] sm:$0xff]
        %v1227 = vld [vmem:[%s1191 + $0x118] sm:$0xff]
        %v1228 = vld [vmem:[%s1191 + $0x120] sm:$0xff]
        %v1229 = vld [vmem:[%s1191 + $0x128] sm:$0xff]
        %v1230 = vld [vmem:[%s1191 + $0x130] sm:$0xff]
        %v1231 = vld [vmem:[%s1191 + $0x138] sm:$0xff]
        %v1232 = vld [vmem:[%s1191 + $0x140] sm:$0xff]
        %v1233 = vld [vmem:[%s1191 + $0x148] sm:$0xff]
        %v1234 = vld [vmem:[%s1191 + $0x150] sm:$0xff]
        %v1235 = vld [vmem:[%s1191 + $0x158] sm:$0xff]
        %v1236 = vld [vmem:[%s1191 + $0x160] sm:$0xff]
        %v1237 = vld [vmem:[%s1191 + $0x168] sm:$0xff]
        %v1238 = vld [vmem:[%s1191 + $0x170] sm:$0xff]
        %v1239 = vld [vmem:[%s1191 + $0x178] sm:$0xff]
        %v1240 = vld [vmem:[%s1191 + $0x180] sm:$0xff]
        %v1241 = vld [vmem:[%s1191 + $0x188] sm:$0xff]
        %v1242 = vld [vmem:[%s1191 + $0x190] sm:$0xff]
        %v1243 = vld [vmem:[%s1191 + $0x198] sm:$0xff]
        %v1244 = vld [vmem:[%s1191 + $0x1a0] sm:$0xff]
        %v1245 = vld [vmem:[%s1191 + $0x1a8] sm:$0xff]
        %v1246 = vld [vmem:[%s1191 + $0x1b0] sm:$0xff]
        %v1247 = vld [vmem:[%s1191 + $0x1b8] sm:$0xff]
        %v1248 = vld [vmem:[%s1191 + $0x1c0] sm:$0xff]
        %v1249 = vld [vmem:[%s1191 + $0x1c8] sm:$0xff]
        %v1250 = vld [vmem:[%s1191 + $0x1d0] sm:$0xff]
        %v1251 = vld [vmem:[%s1191 + $0x1d8] sm:$0xff]
        %v1252 = vld [vmem:[%s1191 + $0x1e0] sm:$0xff]
        %v1253 = vld [vmem:[%s1191 + $0x1e8] sm:$0xff]
        %v1254 = vld [vmem:[%s1191 + $0x1f0] sm:$0xff]
        %v1255 = vld [vmem:[%s1191 + $0x1f8] sm:$0xff]
        %1256 = vmatprep.subr.mxu0 0.0
        %1257 = vmatpush1.msra.mxu0 %v1207
        %1258 = vmatprep.subr.mxu0 0.0
        %1259 = vmatpush1.msra.mxu0 %v1206
        %1260 = vmatprep.subr.mxu0 0.0
        %1261 = vmatpush1.msra.mxu0 %v1205
        %1262 = vmatprep.subr.mxu0 0.0
        %1263 = vmatpush1.msra.mxu0 %v1204
        %1264 = vmatprep.subr.mxu0 0.0
        %1265 = vmatpush1.msra.mxu0 %v1203
        %1266 = vmatprep.subr.mxu0 0.0
        %1267 = vmatpush1.msra.mxu0 %v1202
        %1268 = vmatprep.subr.mxu0 0.0
        %1269 = vmatpush1.msra.mxu0 %v1201
        %1270 = vmatprep.subr.mxu0 0.0
        %1271 = vmatpush1.msra.mxu0 %v1200
        %1272 = vmatprep.subr.mxu0 0.0
        %1273 = vmatpush1.msra.mxu0 %v1199
        %1274 = vmatprep.subr.mxu0 0.0
        %1275 = vmatpush1.msra.mxu0 %v1198
        %1276 = vmatprep.subr.mxu0 0.0
        %1277 = vmatpush1.msra.mxu0 %v1197
        %1278 = vmatprep.subr.mxu0 0.0
        %1279 = vmatpush1.msra.mxu0 %v1196
        %1280 = vmatprep.subr.mxu0 0.0
        %1281 = vmatpush1.msra.mxu0 %v1195
        %1282 = vmatprep.subr.mxu0 0.0
        %1283 = vmatpush1.msra.mxu0 %v1194
        %1284 = vmatprep.subr.mxu0 0.0
        %1285 = vmatpush1.msra.mxu0 %v1193
        %1286 = vmatprep.subr.mxu0 0.0
        %1287 = vmatpush1.msra.mxu0 %v1192
        %1288 = vmatprep.subr.mxu0 0.0
        %1289 = vmatpush2.msra.mxu0 %v1223
        %1290 = vmatprep.subr.mxu0 0.0
        %1291 = vmatpush2.msra.mxu0 %v1222
        %1292 = vmatprep.subr.mxu0 0.0
        %1293 = vmatpush2.msra.mxu0 %v1221
        %1294 = vmatprep.subr.mxu0 0.0
        %1295 = vmatpush2.msra.mxu0 %v1220
        %1296 = vmatprep.subr.mxu0 0.0
        %1297 = vmatpush2.msra.mxu0 %v1219
        %1298 = vmatprep.subr.mxu0 0.0
        %1299 = vmatpush2.msra.mxu0 %v1218
        %1300 = vmatprep.subr.mxu0 0.0
        %1301 = vmatpush2.msra.mxu0 %v1217
        %1302 = vmatprep.subr.mxu0 0.0
        %1303 = vmatpush2.msra.mxu0 %v1216
        %1304 = vmatprep.subr.mxu0 0.0
        %1305 = vmatpush2.msra.mxu0 %v1215
        %1306 = vmatprep.subr.mxu0 0.0
        %1307 = vmatpush2.msra.mxu0 %v1214
        %1308 = vmatprep.subr.mxu0 0.0
        %1309 = vmatpush2.msra.mxu0 %v1213
        %1310 = vmatprep.subr.mxu0 0.0
        %1311 = vmatpush2.msra.mxu0 %v1212
        %1312 = vmatprep.subr.mxu0 0.0
        %1313 = vmatpush2.msra.mxu0 %v1211
        %1314 = vmatprep.subr.mxu0 0.0
        %1315 = vmatpush2.msra.mxu0 %v1210
        %1316 = vmatprep.subr.mxu0 0.0
        %1317 = vmatpush2.msra.mxu0 %v1209
        %1318 = vmatprep.subr.mxu0 0.0
        %1319 = vmatpush2.msra.mxu0 %v1208
        %1320 = vmatprep.mubr.f32.mxu0 %v1083
        %1321 = vmatmul.mubr.f32.gmra.mxu0 %v1047
        %v1322 = vpop.f32.mrf.mxu0
        %v1323 = vadd.f32 %v519, %v1322
        %v1324 = vpop.f32.mrf.mxu0
        %1325 = vmatprep.mubr.f32.mxu0 %v1084
        %1326 = vmatmul.mubr.f32.gmra.mxu0 %v1048
        %v1327 = vpop.f32.mrf.mxu0
        %v1328 = vadd.f32 %v519, %v1327
        %v1329 = vpop.f32.mrf.mxu0
        %1330 = vmatprep.mubr.f32.mxu0 %v1085
        %1331 = vmatmul.mubr.f32.gmra.mxu0 %v1049
        %v1332 = vpop.f32.mrf.mxu0
        %v1333 = vadd.f32 %v519, %v1332
        %v1334 = vpop.f32.mrf.mxu0
        %1335 = vmatprep.mubr.f32.mxu0 %v1086
        %1336 = vmatmul.mubr.f32.gmra.mxu0 %v1050
        %v1337 = vpop.f32.mrf.mxu0
        %v1338 = vadd.f32 %v519, %v1337
        %v1339 = vpop.f32.mrf.mxu0
        %1340 = vmatprep.mubr.f32.mxu0 %v1087
        %1341 = vmatmul.mubr.f32.gmra.mxu0 %v1051
        %v1342 = vpop.f32.mrf.mxu0
        %v1343 = vadd.f32 %v519, %v1342
        %v1344 = vpop.f32.mrf.mxu0
        %1345 = vmatprep.mubr.f32.mxu0 %v1088
        %1346 = vmatmul.mubr.f32.gmra.mxu0 %v1052
        %v1347 = vpop.f32.mrf.mxu0
        %v1348 = vadd.f32 %v519, %v1347
        %v1349 = vpop.f32.mrf.mxu0
        %1350 = vmatprep.mubr.f32.mxu0 %v1089
        %1351 = vmatmul.mubr.f32.gmra.mxu0 %v1053
        %v1352 = vpop.f32.mrf.mxu0
        %v1353 = vadd.f32 %v519, %v1352
        %v1354 = vpop.f32.mrf.mxu0
        %1355 = vmatprep.mubr.f32.mxu0 %v1090
        %1356 = vmatmul.mubr.f32.gmra.mxu0 %v1054
        %v1357 = vpop.f32.mrf.mxu0
        %v1358 = vadd.f32 %v519, %v1357
        %v1359 = vpop.f32.mrf.mxu0
        %1360 = vmatprep.mubr.f32.mxu0 %v1091
        %1361 = vmatmul.mubr.f32.gmra.mxu0 %v1055
        %v1362 = vpop.f32.mrf.mxu0
        %v1363 = vadd.f32 %v519, %v1362
        %v1364 = vpop.f32.mrf.mxu0
        %1365 = vmatprep.mubr.f32.mxu0 %v1092
        %1366 = vmatmul.mubr.f32.gmra.mxu0 %v1056
        %v1367 = vpop.f32.mrf.mxu0
        %v1368 = vadd.f32 %v519, %v1367
        %v1369 = vpop.f32.mrf.mxu0
        %1370 = vmatprep.mubr.f32.mxu0 %v1093
        %1371 = vmatmul.mubr.f32.gmra.mxu0 %v1057
        %v1372 = vpop.f32.mrf.mxu0
        %v1373 = vadd.f32 %v519, %v1372
        %v1374 = vpop.f32.mrf.mxu0
        %1375 = vmatprep.mubr.f32.mxu0 %v1094
        %1376 = vmatmul.mubr.f32.gmra.mxu0 %v1058
        %v1377 = vpop.f32.mrf.mxu0
        %v1378 = vadd.f32 %v519, %v1377
        %v1379 = vpop.f32.mrf.mxu0
        %1380 = vmatprep.mubr.f32.mxu0 %v1095
        %1381 = vmatmul.mubr.f32.gmra.mxu0 %v1059
        %v1382 = vpop.f32.mrf.mxu0
        %v1383 = vadd.f32 %v519, %v1382
        %v1384 = vpop.f32.mrf.mxu0
        %1385 = vmatprep.mubr.f32.mxu0 %v1096
        %1386 = vmatmul.mubr.f32.gmra.mxu0 %v1060
        %v1387 = vpop.f32.mrf.mxu0
        %v1388 = vadd.f32 %v519, %v1387
        %v1389 = vpop.f32.mrf.mxu0
        %1390 = vmatprep.mubr.f32.mxu0 %v1097
        %1391 = vmatmul.mubr.f32.gmra.mxu0 %v1061
        %v1392 = vpop.f32.mrf.mxu0
        %v1393 = vadd.f32 %v519, %v1392
        %v1394 = vpop.f32.mrf.mxu0
        %1395 = vmatprep.mubr.f32.mxu0 %v1098
        %1396 = vmatmul.mubr.f32.gmra.mxu0 %v1062
        %v1397 = vpop.f32.mrf.mxu0
        %v1398 = vadd.f32 %v519, %v1397
        %v1399 = vpop.f32.mrf.mxu0
        %1400 = vmatprep.mubr.f32.mxu0 %v1099
        %1401 = vmatmul.mubr.f32.gmra.mxu0 %v1063
        %v1402 = vpop.f32.mrf.mxu0
        %v1403 = vadd.f32 %v519, %v1402
        %v1404 = vpop.f32.mrf.mxu0
        %1405 = vmatprep.mubr.f32.mxu0 %v1100
        %1406 = vmatmul.mubr.f32.gmra.mxu0 %v1064
        %v1407 = vpop.f32.mrf.mxu0
        %v1408 = vadd.f32 %v519, %v1407
        %v1409 = vpop.f32.mrf.mxu0
        %1410 = vmatprep.mubr.f32.mxu0 %v1101
        %1411 = vmatmul.mubr.f32.gmra.mxu0 %v1065
        %v1412 = vpop.f32.mrf.mxu0
        %v1413 = vadd.f32 %v519, %v1412
        %v1414 = vpop.f32.mrf.mxu0
        %1415 = vmatprep.mubr.f32.mxu0 %v1102
        %1416 = vmatmul.mubr.f32.gmra.mxu0 %v1066
        %v1417 = vpop.f32.mrf.mxu0
        %v1418 = vadd.f32 %v519, %v1417
        %v1419 = vpop.f32.mrf.mxu0
        %1420 = vmatprep.mubr.f32.mxu0 %v1103
        %1421 = vmatmul.mubr.f32.gmra.mxu0 %v1067
        %v1422 = vpop.f32.mrf.mxu0
        %v1423 = vadd.f32 %v519, %v1422
        %v1424 = vpop.f32.mrf.mxu0
        %1425 = vmatprep.mubr.f32.mxu0 %v1104
        %1426 = vmatmul.mubr.f32.gmra.mxu0 %v1068
        %v1427 = vpop.f32.mrf.mxu0
        %v1428 = vadd.f32 %v519, %v1427
        %v1429 = vpop.f32.mrf.mxu0
        %1430 = vmatprep.mubr.f32.mxu0 %v1105
        %1431 = vmatmul.mubr.f32.gmra.mxu0 %v1069
        %v1432 = vpop.f32.mrf.mxu0
        %v1433 = vadd.f32 %v519, %v1432
        %v1434 = vpop.f32.mrf.mxu0
        %1435 = vmatprep.mubr.f32.mxu0 %v1106
        %1436 = vmatmul.mubr.f32.gmra.mxu0 %v1070
        %v1437 = vpop.f32.mrf.mxu0
        %v1438 = vadd.f32 %v519, %v1437
        %v1439 = vpop.f32.mrf.mxu0
        %1440 = vmatprep.mubr.f32.mxu0 %v1107
        %1441 = vmatmul.mubr.f32.gmra.mxu0 %v1071
        %v1442 = vpop.f32.mrf.mxu0
        %v1443 = vadd.f32 %v519, %v1442
        %v1444 = vpop.f32.mrf.mxu0
        %1445 = vmatprep.mubr.f32.mxu0 %v1108
        %1446 = vmatmul.mubr.f32.gmra.mxu0 %v1072
        %v1447 = vpop.f32.mrf.mxu0
        %v1448 = vadd.f32 %v519, %v1447
        %v1449 = vpop.f32.mrf.mxu0
        %1450 = vmatprep.mubr.f32.mxu0 %v1109
        %1451 = vmatmul.mubr.f32.gmra.mxu0 %v1073
        %v1452 = vpop.f32.mrf.mxu0
        %v1453 = vadd.f32 %v519, %v1452
        %v1454 = vpop.f32.mrf.mxu0
        %1455 = vmatprep.mubr.f32.mxu0 %v1110
        %1456 = vmatmul.mubr.f32.gmra.mxu0 %v1074
        %v1457 = vpop.f32.mrf.mxu0
        %v1458 = vadd.f32 %v519, %v1457
        %v1459 = vpop.f32.mrf.mxu0
        %1460 = vmatprep.mubr.f32.mxu0 %v1111
        %1461 = vmatmul.mubr.f32.gmra.mxu0 %v1075
        %v1462 = vpop.f32.mrf.mxu0
        %v1463 = vadd.f32 %v519, %v1462
        %v1464 = vpop.f32.mrf.mxu0
        %1465 = vmatprep.mubr.f32.mxu0 %v1112
        %1466 = vmatmul.mubr.f32.gmra.mxu0 %v1076
        %v1467 = vpop.f32.mrf.mxu0
        %v1468 = vadd.f32 %v519, %v1467
        %v1469 = vpop.f32.mrf.mxu0
        %1470 = vmatprep.mubr.f32.mxu0 %v1113
        %1471 = vmatmul.mubr.f32.gmra.mxu0 %v1077
        %v1472 = vpop.f32.mrf.mxu0
        %v1473 = vadd.f32 %v519, %v1472
        %v1474 = vpop.f32.mrf.mxu0
        %1475 = vmatprep.mubr.f32.mxu0 %v1114
        %1476 = vmatmul.mubr.f32.gmra.mxu0 %v1078
        %v1477 = vpop.f32.mrf.mxu0
        %v1478 = vadd.f32 %v519, %v1477
        %v1479 = vpop.f32.mrf.mxu0
        %1480 = vmatprep.mubr.f32.mxu0 %v1115
        %1481 = vmatmul.mubr.f32.gmra.mxu0 %v1079
        %v1482 = vpop.f32.mrf.mxu0
        %v1483 = vadd.f32 %v519, %v1482
        %v1484 = vpop.f32.mrf.mxu0
        %1485 = vmatprep.mubr.f32.mxu0 %v1116
        %1486 = vmatmul.mubr.f32.gmra.mxu0 %v1080
        %v1487 = vpop.f32.mrf.mxu0
        %v1488 = vadd.f32 %v519, %v1487
        %v1489 = vpop.f32.mrf.mxu0
        %1490 = vmatprep.mubr.f32.mxu0 %v1117
        %1491 = vmatmul.mubr.f32.gmra.mxu0 %v1081
        %v1492 = vpop.f32.mrf.mxu0
        %v1493 = vadd.f32 %v519, %v1492
        %v1494 = vpop.f32.mrf.mxu0
        %1495 = vmatprep.mubr.f32.mxu0 %v1118
        %1496 = vmatmul.mubr.f32.gmra.mxu0 %v1082
        %v1497 = vpop.f32.mrf.mxu0
        %v1498 = vadd.f32 %v519, %v1497
        %v1499 = vpop.f32.mrf.mxu0
        %1500 = vdwg.mxu0
        %1501 = vmatprep.subr.mxu0 0.0
        %1502 = vmatpush1.msra.mxu0 %v1239
        %1503 = vmatprep.subr.mxu0 0.0
        %1504 = vmatpush1.msra.mxu0 %v1238
        %1505 = vmatprep.subr.mxu0 0.0
        %1506 = vmatpush1.msra.mxu0 %v1237
        %1507 = vmatprep.subr.mxu0 0.0
        %1508 = vmatpush1.msra.mxu0 %v1236
        %1509 = vmatprep.subr.mxu0 0.0
        %1510 = vmatpush1.msra.mxu0 %v1235
        %1511 = vmatprep.subr.mxu0 0.0
        %1512 = vmatpush1.msra.mxu0 %v1234
        %1513 = vmatprep.subr.mxu0 0.0
        %1514 = vmatpush1.msra.mxu0 %v1233
        %1515 = vmatprep.subr.mxu0 0.0
        %1516 = vmatpush1.msra.mxu0 %v1232
        %1517 = vmatprep.subr.mxu0 0.0
        %1518 = vmatpush1.msra.mxu0 %v1231
        %1519 = vmatprep.subr.mxu0 0.0
        %1520 = vmatpush1.msra.mxu0 %v1230
        %1521 = vmatprep.subr.mxu0 0.0
        %1522 = vmatpush1.msra.mxu0 %v1229
        %1523 = vmatprep.subr.mxu0 0.0
        %1524 = vmatpush1.msra.mxu0 %v1228
        %1525 = vmatprep.subr.mxu0 0.0
        %1526 = vmatpush1.msra.mxu0 %v1227
        %1527 = vmatprep.subr.mxu0 0.0
        %1528 = vmatpush1.msra.mxu0 %v1226
        %1529 = vmatprep.subr.mxu0 0.0
        %1530 = vmatpush1.msra.mxu0 %v1225
        %1531 = vmatprep.subr.mxu0 0.0
        %1532 = vmatpush1.msra.mxu0 %v1224
        %1533 = vmatprep.subr.mxu0 0.0
        %1534 = vmatpush2.msra.mxu0 %v1255
        %1535 = vmatprep.subr.mxu0 0.0
        %1536 = vmatpush2.msra.mxu0 %v1254
        %1537 = vmatprep.subr.mxu0 0.0
        %1538 = vmatpush2.msra.mxu0 %v1253
        %1539 = vmatprep.subr.mxu0 0.0
        %1540 = vmatpush2.msra.mxu0 %v1252
        %1541 = vmatprep.subr.mxu0 0.0
        %1542 = vmatpush2.msra.mxu0 %v1251
        %1543 = vmatprep.subr.mxu0 0.0
        %1544 = vmatpush2.msra.mxu0 %v1250
        %1545 = vmatprep.subr.mxu0 0.0
        %1546 = vmatpush2.msra.mxu0 %v1249
        %1547 = vmatprep.subr.mxu0 0.0
        %1548 = vmatpush2.msra.mxu0 %v1248
        %1549 = vmatprep.subr.mxu0 0.0
        %1550 = vmatpush2.msra.mxu0 %v1247
        %1551 = vmatprep.subr.mxu0 0.0
        %1552 = vmatpush2.msra.mxu0 %v1246
        %1553 = vmatprep.subr.mxu0 0.0
        %1554 = vmatpush2.msra.mxu0 %v1245
        %1555 = vmatprep.subr.mxu0 0.0
        %1556 = vmatpush2.msra.mxu0 %v1244
        %1557 = vmatprep.subr.mxu0 0.0
        %1558 = vmatpush2.msra.mxu0 %v1243
        %1559 = vmatprep.subr.mxu0 0.0
        %1560 = vmatpush2.msra.mxu0 %v1242
        %1561 = vmatprep.subr.mxu0 0.0
        %1562 = vmatpush2.msra.mxu0 %v1241
        %1563 = vmatprep.subr.mxu0 0.0
        %1564 = vmatpush2.msra.mxu0 %v1240
        %1565 = vmatprep.mubr.f32.mxu0 %v1155
        %1566 = vmatmul.mubr.f32.gmra.mxu0 %v1119
        %v1567 = vpop.f32.mrf.mxu0
        %v1568 = vadd.f32 %v1323, %v1567
        %v1569 = vpop.f32.mrf.mxu0
        %1570 = vmatprep.mubr.f32.mxu0 %v1156
        %1571 = vmatmul.mubr.f32.gmra.mxu0 %v1120
        %v1572 = vpop.f32.mrf.mxu0
        %v1573 = vadd.f32 %v1328, %v1572
        %v1574 = vpop.f32.mrf.mxu0
        %1575 = vmatprep.mubr.f32.mxu0 %v1157
        %1576 = vmatmul.mubr.f32.gmra.mxu0 %v1121
        %v1577 = vpop.f32.mrf.mxu0
        %v1578 = vadd.f32 %v1333, %v1577
        %v1579 = vpop.f32.mrf.mxu0
        %1580 = vmatprep.mubr.f32.mxu0 %v1158
        %1581 = vmatmul.mubr.f32.gmra.mxu0 %v1122
        %v1582 = vpop.f32.mrf.mxu0
        %v1583 = vadd.f32 %v1338, %v1582
        %v1584 = vpop.f32.mrf.mxu0
        %1585 = vmatprep.mubr.f32.mxu0 %v1159
        %1586 = vmatmul.mubr.f32.gmra.mxu0 %v1123
        %v1587 = vpop.f32.mrf.mxu0
        %v1588 = vadd.f32 %v1343, %v1587
        %v1589 = vpop.f32.mrf.mxu0
        %1590 = vmatprep.mubr.f32.mxu0 %v1160
        %1591 = vmatmul.mubr.f32.gmra.mxu0 %v1124
        %v1592 = vpop.f32.mrf.mxu0
        %v1593 = vadd.f32 %v1348, %v1592
        %v1594 = vpop.f32.mrf.mxu0
        %1595 = vmatprep.mubr.f32.mxu0 %v1161
        %1596 = vmatmul.mubr.f32.gmra.mxu0 %v1125
        %v1597 = vpop.f32.mrf.mxu0
        %v1598 = vadd.f32 %v1353, %v1597
        %v1599 = vpop.f32.mrf.mxu0
        %1600 = vmatprep.mubr.f32.mxu0 %v1162
        %1601 = vmatmul.mubr.f32.gmra.mxu0 %v1126
        %v1602 = vpop.f32.mrf.mxu0
        %v1603 = vadd.f32 %v1358, %v1602
        %v1604 = vpop.f32.mrf.mxu0
        %1605 = vmatprep.mubr.f32.mxu0 %v1163
        %1606 = vmatmul.mubr.f32.gmra.mxu0 %v1127
        %v1607 = vpop.f32.mrf.mxu0
        %v1608 = vadd.f32 %v1363, %v1607
        %v1609 = vpop.f32.mrf.mxu0
        %1610 = vmatprep.mubr.f32.mxu0 %v1164
        %1611 = vmatmul.mubr.f32.gmra.mxu0 %v1128
        %v1612 = vpop.f32.mrf.mxu0
        %v1613 = vadd.f32 %v1368, %v1612
        %v1614 = vpop.f32.mrf.mxu0
        %1615 = vmatprep.mubr.f32.mxu0 %v1165
        %1616 = vmatmul.mubr.f32.gmra.mxu0 %v1129
        %v1617 = vpop.f32.mrf.mxu0
        %v1618 = vadd.f32 %v1373, %v1617
        %v1619 = vpop.f32.mrf.mxu0
        %1620 = vmatprep.mubr.f32.mxu0 %v1166
        %1621 = vmatmul.mubr.f32.gmra.mxu0 %v1130
        %v1622 = vpop.f32.mrf.mxu0
        %v1623 = vadd.f32 %v1378, %v1622
        %v1624 = vpop.f32.mrf.mxu0
        %1625 = vmatprep.mubr.f32.mxu0 %v1167
        %1626 = vmatmul.mubr.f32.gmra.mxu0 %v1131
        %v1627 = vpop.f32.mrf.mxu0
        %v1628 = vadd.f32 %v1383, %v1627
        %v1629 = vpop.f32.mrf.mxu0
        %1630 = vmatprep.mubr.f32.mxu0 %v1168
        %1631 = vmatmul.mubr.f32.gmra.mxu0 %v1132
        %v1632 = vpop.f32.mrf.mxu0
        %v1633 = vadd.f32 %v1388, %v1632
        %v1634 = vpop.f32.mrf.mxu0
        %1635 = vmatprep.mubr.f32.mxu0 %v1169
        %1636 = vmatmul.mubr.f32.gmra.mxu0 %v1133
        %v1637 = vpop.f32.mrf.mxu0
        %v1638 = vadd.f32 %v1393, %v1637
        %v1639 = vpop.f32.mrf.mxu0
        %1640 = vmatprep.mubr.f32.mxu0 %v1170
        %1641 = vmatmul.mubr.f32.gmra.mxu0 %v1134
        %v1642 = vpop.f32.mrf.mxu0
        %v1643 = vadd.f32 %v1398, %v1642
        %v1644 = vpop.f32.mrf.mxu0
        %1645 = vmatprep.mubr.f32.mxu0 %v1171
        %1646 = vmatmul.mubr.f32.gmra.mxu0 %v1135
        %v1647 = vpop.f32.mrf.mxu0
        %v1648 = vadd.f32 %v1403, %v1647
        %v1649 = vpop.f32.mrf.mxu0
        %1650 = vmatprep.mubr.f32.mxu0 %v1172
        %1651 = vmatmul.mubr.f32.gmra.mxu0 %v1136
        %v1652 = vpop.f32.mrf.mxu0
        %v1653 = vadd.f32 %v1408, %v1652
        %v1654 = vpop.f32.mrf.mxu0
        %1655 = vmatprep.mubr.f32.mxu0 %v1173
        %1656 = vmatmul.mubr.f32.gmra.mxu0 %v1137
        %v1657 = vpop.f32.mrf.mxu0
        %v1658 = vadd.f32 %v1413, %v1657
        %v1659 = vpop.f32.mrf.mxu0
        %1660 = vmatprep.mubr.f32.mxu0 %v1174
        %1661 = vmatmul.mubr.f32.gmra.mxu0 %v1138
        %v1662 = vpop.f32.mrf.mxu0
        %v1663 = vadd.f32 %v1418, %v1662
        %v1664 = vpop.f32.mrf.mxu0
        %1665 = vmatprep.mubr.f32.mxu0 %v1175
        %1666 = vmatmul.mubr.f32.gmra.mxu0 %v1139
        %v1667 = vpop.f32.mrf.mxu0
        %v1668 = vadd.f32 %v1423, %v1667
        %v1669 = vpop.f32.mrf.mxu0
        %1670 = vmatprep.mubr.f32.mxu0 %v1176
        %1671 = vmatmul.mubr.f32.gmra.mxu0 %v1140
        %v1672 = vpop.f32.mrf.mxu0
        %v1673 = vadd.f32 %v1428, %v1672
        %v1674 = vpop.f32.mrf.mxu0
        %1675 = vmatprep.mubr.f32.mxu0 %v1177
        %1676 = vmatmul.mubr.f32.gmra.mxu0 %v1141
        %v1677 = vpop.f32.mrf.mxu0
        %v1678 = vadd.f32 %v1433, %v1677
        %v1679 = vpop.f32.mrf.mxu0
        %1680 = vmatprep.mubr.f32.mxu0 %v1178
        %1681 = vmatmul.mubr.f32.gmra.mxu0 %v1142
        %v1682 = vpop.f32.mrf.mxu0
        %v1683 = vadd.f32 %v1438, %v1682
        %v1684 = vpop.f32.mrf.mxu0
        %1685 = vmatprep.mubr.f32.mxu0 %v1179
        %1686 = vmatmul.mubr.f32.gmra.mxu0 %v1143
        %v1687 = vpop.f32.mrf.mxu0
        %v1688 = vadd.f32 %v1443, %v1687
        %v1689 = vpop.f32.mrf.mxu0
        %1690 = vmatprep.mubr.f32.mxu0 %v1180
        %1691 = vmatmul.mubr.f32.gmra.mxu0 %v1144
        %v1692 = vpop.f32.mrf.mxu0
        %v1693 = vadd.f32 %v1448, %v1692
        %v1694 = vpop.f32.mrf.mxu0
        %1695 = vmatprep.mubr.f32.mxu0 %v1181
        %1696 = vmatmul.mubr.f32.gmra.mxu0 %v1145
        %v1697 = vpop.f32.mrf.mxu0
        %v1698 = vadd.f32 %v1453, %v1697
        %v1699 = vpop.f32.mrf.mxu0
        %1700 = vmatprep.mubr.f32.mxu0 %v1182
        %1701 = vmatmul.mubr.f32.gmra.mxu0 %v1146
        %v1702 = vpop.f32.mrf.mxu0
        %v1703 = vadd.f32 %v1458, %v1702
        %v1704 = vpop.f32.mrf.mxu0
        %1705 = vmatprep.mubr.f32.mxu0 %v1183
        %1706 = vmatmul.mubr.f32.gmra.mxu0 %v1147
        %v1707 = vpop.f32.mrf.mxu0
        %v1708 = vadd.f32 %v1463, %v1707
        %v1709 = vpop.f32.mrf.mxu0
        %1710 = vmatprep.mubr.f32.mxu0 %v1184
        %1711 = vmatmul.mubr.f32.gmra.mxu0 %v1148
        %v1712 = vpop.f32.mrf.mxu0
        %v1713 = vadd.f32 %v1468, %v1712
        %v1714 = vpop.f32.mrf.mxu0
        %1715 = vmatprep.mubr.f32.mxu0 %v1185
        %1716 = vmatmul.mubr.f32.gmra.mxu0 %v1149
        %v1717 = vpop.f32.mrf.mxu0
        %v1718 = vadd.f32 %v1473, %v1717
        %v1719 = vpop.f32.mrf.mxu0
        %1720 = vmatprep.mubr.f32.mxu0 %v1186
        %1721 = vmatmul.mubr.f32.gmra.mxu0 %v1150
        %v1722 = vpop.f32.mrf.mxu0
        %v1723 = vadd.f32 %v1478, %v1722
        %v1724 = vpop.f32.mrf.mxu0
        %1725 = vmatprep.mubr.f32.mxu0 %v1187
        %1726 = vmatmul.mubr.f32.gmra.mxu0 %v1151
        %v1727 = vpop.f32.mrf.mxu0
        %v1728 = vadd.f32 %v1483, %v1727
        %v1729 = vpop.f32.mrf.mxu0
        %1730 = vmatprep.mubr.f32.mxu0 %v1188
        %1731 = vmatmul.mubr.f32.gmra.mxu0 %v1152
        %v1732 = vpop.f32.mrf.mxu0
        %v1733 = vadd.f32 %v1488, %v1732
        %v1734 = vpop.f32.mrf.mxu0
        %1735 = vmatprep.mubr.f32.mxu0 %v1189
        %1736 = vmatmul.mubr.f32.gmra.mxu0 %v1153
        %v1737 = vpop.f32.mrf.mxu0
        %v1738 = vadd.f32 %v1493, %v1737
        %v1739 = vpop.f32.mrf.mxu0
        %1740 = vmatprep.mubr.f32.mxu0 %v1190
        %1741 = vmatmul.mubr.f32.gmra.mxu0 %v1154
        %v1742 = vpop.f32.mrf.mxu0
        %v1743 = vadd.f32 %v1498, %v1742
        %v1744 = vpop.f32.mrf.mxu0
        %1745 = vdwg.mxu0
        %s1746 = scalar_lea.vmem %s164, 288 [#allocation9]
        %1747 = vst [vmem:[%s1746] sm:$0xff] %v1568
        %1748 = vst [vmem:[%s1746 + $0x8] sm:$0xff] %v1573
        %1749 = vst [vmem:[%s1746 + $0x10] sm:$0xff] %v1578
        %1750 = vst [vmem:[%s1746 + $0x18] sm:$0xff] %v1583
        %1751 = vst [vmem:[%s1746 + $0x20] sm:$0xff] %v1588
        %1752 = vst [vmem:[%s1746 + $0x28] sm:$0xff] %v1593
        %1753 = vst [vmem:[%s1746 + $0x30] sm:$0xff] %v1598
        %1754 = vst [vmem:[%s1746 + $0x38] sm:$0xff] %v1603
        %1755 = vst [vmem:[%s1746 + $0x40] sm:$0xff] %v1608
        %1756 = vst [vmem:[%s1746 + $0x48] sm:$0xff] %v1613
        %1757 = vst [vmem:[%s1746 + $0x50] sm:$0xff] %v1618
        %1758 = vst [vmem:[%s1746 + $0x58] sm:$0xff] %v1623
        %1759 = vst [vmem:[%s1746 + $0x60] sm:$0xff] %v1628
        %1760 = vst [vmem:[%s1746 + $0x68] sm:$0xff] %v1633
        %1761 = vst [vmem:[%s1746 + $0x70] sm:$0xff] %v1638
        %1762 = vst [vmem:[%s1746 + $0x78] sm:$0xff] %v1643
        %1763 = vst [vmem:[%s1746 + $0x80] sm:$0xff] %v1648
        %1764 = vst [vmem:[%s1746 + $0x88] sm:$0xff] %v1653
        %1765 = vst [vmem:[%s1746 + $0x90] sm:$0xff] %v1658
        %1766 = vst [vmem:[%s1746 + $0x98] sm:$0xff] %v1663
        %1767 = vst [vmem:[%s1746 + $0xa0] sm:$0xff] %v1668
        %1768 = vst [vmem:[%s1746 + $0xa8] sm:$0xff] %v1673
        %1769 = vst [vmem:[%s1746 + $0xb0] sm:$0xff] %v1678
        %1770 = vst [vmem:[%s1746 + $0xb8] sm:$0xff] %v1683
        %1771 = vst [vmem:[%s1746 + $0xc0] sm:$0xff] %v1688
        %1772 = vst [vmem:[%s1746 + $0xc8] sm:$0xff] %v1693
        %1773 = vst [vmem:[%s1746 + $0xd0] sm:$0xff] %v1698
        %1774 = vst [vmem:[%s1746 + $0xd8] sm:$0xff] %v1703
        %1775 = vst [vmem:[%s1746 + $0xe0] sm:$0xff] %v1708
        %1776 = vst [vmem:[%s1746 + $0xe8] sm:$0xff] %v1713
        %1777 = vst [vmem:[%s1746 + $0xf0] sm:$0xff] %v1718
        %1778 = vst [vmem:[%s1746 + $0xf8] sm:$0xff] %v1723
        %1779 = vst [vmem:[%s1746 + $0x100] sm:$0xff] %v1728
        %1780 = vst [vmem:[%s1746 + $0x108] sm:$0xff] %v1733
        %1781 = vst [vmem:[%s1746 + $0x110] sm:$0xff] %v1738
        %1782 = vst [vmem:[%s1746 + $0x118] sm:$0xff] %v1743
        %v1783 = vld [vmem:[#allocation2 + $0x12] sm:$0xff]
        %v1784 = vld [vmem:[#allocation2 + $0x1a] sm:$0xff]
        %v1785 = vld [vmem:[#allocation2 + $0x22] sm:$0xff]
        %v1786 = vld [vmem:[#allocation2 + $0x2a] sm:$0xff]
        %v1787 = vld [vmem:[#allocation2 + $0x32] sm:$0xff]
        %v1788 = vld [vmem:[#allocation2 + $0x3a] sm:$0xff]
        %v1789 = vld [vmem:[#allocation2 + $0x42] sm:$0xff]
        %v1790 = vld [vmem:[#allocation2 + $0x4a] sm:$0xff]
        %v1791 = vld [vmem:[#allocation2 + $0x52] sm:$0xff]
        %v1792 = vld [vmem:[#allocation2 + $0x5a] sm:$0xff]
        %v1793 = vld [vmem:[#allocation2 + $0x62] sm:$0xff]
        %v1794 = vld [vmem:[#allocation2 + $0x6a] sm:$0xff]
        %v1795 = vld [vmem:[#allocation2 + $0x72] sm:$0xff]
        %v1796 = vld [vmem:[#allocation2 + $0x7a] sm:$0xff]
        %v1797 = vld [vmem:[#allocation2 + $0x82] sm:$0xff]
        %v1798 = vld [vmem:[#allocation2 + $0x8a] sm:$0xff]
        %v1799 = vld [vmem:[#allocation2 + $0x92] sm:$0xff]
        %v1800 = vld [vmem:[#allocation2 + $0x9a] sm:$0xff]
        %v1801 = vld [vmem:[#allocation2 + $0xa2] sm:$0xff]
        %v1802 = vld [vmem:[#allocation2 + $0xaa] sm:$0xff]
        %v1803 = vld [vmem:[#allocation2 + $0xb2] sm:$0xff]
        %v1804 = vld [vmem:[#allocation2 + $0xba] sm:$0xff]
        %v1805 = vld [vmem:[#allocation2 + $0xc2] sm:$0xff]
        %v1806 = vld [vmem:[#allocation2 + $0xca] sm:$0xff]
        %v1807 = vld [vmem:[#allocation2 + $0xd2] sm:$0xff]
        %v1808 = vld [vmem:[#allocation2 + $0xda] sm:$0xff]
        %v1809 = vld [vmem:[#allocation2 + $0xe2] sm:$0xff]
        %v1810 = vld [vmem:[#allocation2 + $0xea] sm:$0xff]
        %v1811 = vld [vmem:[#allocation2 + $0xf2] sm:$0xff]
        %v1812 = vld [vmem:[#allocation2 + $0xfa] sm:$0xff]
        %v1813 = vld [vmem:[#allocation2 + $0x102] sm:$0xff]
        %v1814 = vld [vmem:[#allocation2 + $0x10a] sm:$0xff]
        %v1815 = vld [vmem:[#allocation2 + $0x112] sm:$0xff]
        %v1816 = vld [vmem:[#allocation2 + $0x11a] sm:$0xff]
        %v1817 = vld [vmem:[#allocation2 + $0x122] sm:$0xff]
        %v1818 = vld [vmem:[#allocation2 + $0x12a] sm:$0xff]
        %v1819 = vld [vmem:[#allocation2 + $0x13] sm:$0xff]
        %v1820 = vld [vmem:[#allocation2 + $0x1b] sm:$0xff]
        %v1821 = vld [vmem:[#allocation2 + $0x23] sm:$0xff]
        %v1822 = vld [vmem:[#allocation2 + $0x2b] sm:$0xff]
        %v1823 = vld [vmem:[#allocation2 + $0x33] sm:$0xff]
        %v1824 = vld [vmem:[#allocation2 + $0x3b] sm:$0xff]
        %v1825 = vld [vmem:[#allocation2 + $0x43] sm:$0xff]
        %v1826 = vld [vmem:[#allocation2 + $0x4b] sm:$0xff]
        %v1827 = vld [vmem:[#allocation2 + $0x53] sm:$0xff]
        %v1828 = vld [vmem:[#allocation2 + $0x5b] sm:$0xff]
        %v1829 = vld [vmem:[#allocation2 + $0x63] sm:$0xff]
        %v1830 = vld [vmem:[#allocation2 + $0x6b] sm:$0xff]
        %v1831 = vld [vmem:[#allocation2 + $0x73] sm:$0xff]
        %v1832 = vld [vmem:[#allocation2 + $0x7b] sm:$0xff]
        %v1833 = vld [vmem:[#allocation2 + $0x83] sm:$0xff]
        %v1834 = vld [vmem:[#allocation2 + $0x8b] sm:$0xff]
        %v1835 = vld [vmem:[#allocation2 + $0x93] sm:$0xff]
        %v1836 = vld [vmem:[#allocation2 + $0x9b] sm:$0xff]
        %v1837 = vld [vmem:[#allocation2 + $0xa3] sm:$0xff]
        %v1838 = vld [vmem:[#allocation2 + $0xab] sm:$0xff]
        %v1839 = vld [vmem:[#allocation2 + $0xb3] sm:$0xff]
        %v1840 = vld [vmem:[#allocation2 + $0xbb] sm:$0xff]
        %v1841 = vld [vmem:[#allocation2 + $0xc3] sm:$0xff]
        %v1842 = vld [vmem:[#allocation2 + $0xcb] sm:$0xff]
        %v1843 = vld [vmem:[#allocation2 + $0xd3] sm:$0xff]
        %v1844 = vld [vmem:[#allocation2 + $0xdb] sm:$0xff]
        %v1845 = vld [vmem:[#allocation2 + $0xe3] sm:$0xff]
        %v1846 = vld [vmem:[#allocation2 + $0xeb] sm:$0xff]
        %v1847 = vld [vmem:[#allocation2 + $0xf3] sm:$0xff]
        %v1848 = vld [vmem:[#allocation2 + $0xfb] sm:$0xff]
        %v1849 = vld [vmem:[#allocation2 + $0x103] sm:$0xff]
        %v1850 = vld [vmem:[#allocation2 + $0x10b] sm:$0xff]
        %v1851 = vld [vmem:[#allocation2 + $0x113] sm:$0xff]
        %v1852 = vld [vmem:[#allocation2 + $0x11b] sm:$0xff]
        %v1853 = vld [vmem:[#allocation2 + $0x123] sm:$0xff]
        %v1854 = vld [vmem:[#allocation2 + $0x12b] sm:$0xff]
        %v1855 = vld [vmem:[#allocation2 + $0x24] sm:$0xff]
        %v1856 = vld [vmem:[#allocation2 + $0x2c] sm:$0xff]
        %v1857 = vld [vmem:[#allocation2 + $0x34] sm:$0xff]
        %v1858 = vld [vmem:[#allocation2 + $0x3c] sm:$0xff]
        %v1859 = vld [vmem:[#allocation2 + $0x44] sm:$0xff]
        %v1860 = vld [vmem:[#allocation2 + $0x4c] sm:$0xff]
        %v1861 = vld [vmem:[#allocation2 + $0x54] sm:$0xff]
        %v1862 = vld [vmem:[#allocation2 + $0x5c] sm:$0xff]
        %v1863 = vld [vmem:[#allocation2 + $0x64] sm:$0xff]
        %v1864 = vld [vmem:[#allocation2 + $0x6c] sm:$0xff]
        %v1865 = vld [vmem:[#allocation2 + $0x74] sm:$0xff]
        %v1866 = vld [vmem:[#allocation2 + $0x7c] sm:$0xff]
        %v1867 = vld [vmem:[#allocation2 + $0x84] sm:$0xff]
        %v1868 = vld [vmem:[#allocation2 + $0x8c] sm:$0xff]
        %v1869 = vld [vmem:[#allocation2 + $0x94] sm:$0xff]
        %v1870 = vld [vmem:[#allocation2 + $0x9c] sm:$0xff]
        %v1871 = vld [vmem:[#allocation2 + $0xa4] sm:$0xff]
        %v1872 = vld [vmem:[#allocation2 + $0xac] sm:$0xff]
        %v1873 = vld [vmem:[#allocation2 + $0xb4] sm:$0xff]
        %v1874 = vld [vmem:[#allocation2 + $0xbc] sm:$0xff]
        %v1875 = vld [vmem:[#allocation2 + $0xc4] sm:$0xff]
        %v1876 = vld [vmem:[#allocation2 + $0xcc] sm:$0xff]
        %v1877 = vld [vmem:[#allocation2 + $0xd4] sm:$0xff]
        %v1878 = vld [vmem:[#allocation2 + $0xdc] sm:$0xff]
        %v1879 = vld [vmem:[#allocation2 + $0xe4] sm:$0xff]
        %v1880 = vld [vmem:[#allocation2 + $0xec] sm:$0xff]
        %v1881 = vld [vmem:[#allocation2 + $0xf4] sm:$0xff]
        %v1882 = vld [vmem:[#allocation2 + $0xfc] sm:$0xff]
        %v1883 = vld [vmem:[#allocation2 + $0x104] sm:$0xff]
        %v1884 = vld [vmem:[#allocation2 + $0x10c] sm:$0xff]
        %v1885 = vld [vmem:[#allocation2 + $0x114] sm:$0xff]
        %v1886 = vld [vmem:[#allocation2 + $0x11c] sm:$0xff]
        %v1887 = vld [vmem:[#allocation2 + $0x124] sm:$0xff]
        %v1888 = vld [vmem:[#allocation2 + $0x12c] sm:$0xff]
        %v1889 = vld [vmem:[#allocation2 + $0x134] sm:$0xff]
        %v1890 = vld [vmem:[#allocation2 + $0x13c] sm:$0xff]
        %v1891 = vld [vmem:[#allocation2 + $0x25] sm:$0xff]
        %v1892 = vld [vmem:[#allocation2 + $0x2d] sm:$0xff]
        %v1893 = vld [vmem:[#allocation2 + $0x35] sm:$0xff]
        %v1894 = vld [vmem:[#allocation2 + $0x3d] sm:$0xff]
        %v1895 = vld [vmem:[#allocation2 + $0x45] sm:$0xff]
        %v1896 = vld [vmem:[#allocation2 + $0x4d] sm:$0xff]
        %v1897 = vld [vmem:[#allocation2 + $0x55] sm:$0xff]
        %v1898 = vld [vmem:[#allocation2 + $0x5d] sm:$0xff]
        %v1899 = vld [vmem:[#allocation2 + $0x65] sm:$0xff]
        %v1900 = vld [vmem:[#allocation2 + $0x6d] sm:$0xff]
        %v1901 = vld [vmem:[#allocation2 + $0x75] sm:$0xff]
        %v1902 = vld [vmem:[#allocation2 + $0x7d] sm:$0xff]
        %v1903 = vld [vmem:[#allocation2 + $0x85] sm:$0xff]
        %v1904 = vld [vmem:[#allocation2 + $0x8d] sm:$0xff]
        %v1905 = vld [vmem:[#allocation2 + $0x95] sm:$0xff]
        %v1906 = vld [vmem:[#allocation2 + $0x9d] sm:$0xff]
        %v1907 = vld [vmem:[#allocation2 + $0xa5] sm:$0xff]
        %v1908 = vld [vmem:[#allocation2 + $0xad] sm:$0xff]
        %v1909 = vld [vmem:[#allocation2 + $0xb5] sm:$0xff]
        %v1910 = vld [vmem:[#allocation2 + $0xbd] sm:$0xff]
        %v1911 = vld [vmem:[#allocation2 + $0xc5] sm:$0xff]
        %v1912 = vld [vmem:[#allocation2 + $0xcd] sm:$0xff]
        %v1913 = vld [vmem:[#allocation2 + $0xd5] sm:$0xff]
        %v1914 = vld [vmem:[#allocation2 + $0xdd] sm:$0xff]
        %v1915 = vld [vmem:[#allocation2 + $0xe5] sm:$0xff]
        %v1916 = vld [vmem:[#allocation2 + $0xed] sm:$0xff]
        %v1917 = vld [vmem:[#allocation2 + $0xf5] sm:$0xff]
        %v1918 = vld [vmem:[#allocation2 + $0xfd] sm:$0xff]
        %v1919 = vld [vmem:[#allocation2 + $0x105] sm:$0xff]
        %v1920 = vld [vmem:[#allocation2 + $0x10d] sm:$0xff]
        %v1921 = vld [vmem:[#allocation2 + $0x115] sm:$0xff]
        %v1922 = vld [vmem:[#allocation2 + $0x11d] sm:$0xff]
        %v1923 = vld [vmem:[#allocation2 + $0x125] sm:$0xff]
        %v1924 = vld [vmem:[#allocation2 + $0x12d] sm:$0xff]
        %v1925 = vld [vmem:[#allocation2 + $0x135] sm:$0xff]
        %v1926 = vld [vmem:[#allocation2 + $0x13d] sm:$0xff]
        %s1927 = scalar_lea.vmem [#allocation4], 1024
        %v1928 = vld [vmem:[%s1927] sm:$0xff]
        %v1929 = vld [vmem:[%s1927 + $0x8] sm:$0xff]
        %v1930 = vld [vmem:[%s1927 + $0x10] sm:$0xff]
        %v1931 = vld [vmem:[%s1927 + $0x18] sm:$0xff]
        %v1932 = vld [vmem:[%s1927 + $0x20] sm:$0xff]
        %v1933 = vld [vmem:[%s1927 + $0x28] sm:$0xff]
        %v1934 = vld [vmem:[%s1927 + $0x30] sm:$0xff]
        %v1935 = vld [vmem:[%s1927 + $0x38] sm:$0xff]
        %v1936 = vld [vmem:[%s1927 + $0x40] sm:$0xff]
        %v1937 = vld [vmem:[%s1927 + $0x48] sm:$0xff]
        %v1938 = vld [vmem:[%s1927 + $0x50] sm:$0xff]
        %v1939 = vld [vmem:[%s1927 + $0x58] sm:$0xff]
        %v1940 = vld [vmem:[%s1927 + $0x60] sm:$0xff]
        %v1941 = vld [vmem:[%s1927 + $0x68] sm:$0xff]
        %v1942 = vld [vmem:[%s1927 + $0x70] sm:$0xff]
        %v1943 = vld [vmem:[%s1927 + $0x78] sm:$0xff]
        %v1944 = vld [vmem:[%s1927 + $0x80] sm:$0xff]
        %v1945 = vld [vmem:[%s1927 + $0x88] sm:$0xff]
        %v1946 = vld [vmem:[%s1927 + $0x90] sm:$0xff]
        %v1947 = vld [vmem:[%s1927 + $0x98] sm:$0xff]
        %v1948 = vld [vmem:[%s1927 + $0xa0] sm:$0xff]
        %v1949 = vld [vmem:[%s1927 + $0xa8] sm:$0xff]
        %v1950 = vld [vmem:[%s1927 + $0xb0] sm:$0xff]
        %v1951 = vld [vmem:[%s1927 + $0xb8] sm:$0xff]
        %v1952 = vld [vmem:[%s1927 + $0xc0] sm:$0xff]
        %v1953 = vld [vmem:[%s1927 + $0xc8] sm:$0xff]
        %v1954 = vld [vmem:[%s1927 + $0xd0] sm:$0xff]
        %v1955 = vld [vmem:[%s1927 + $0xd8] sm:$0xff]
        %v1956 = vld [vmem:[%s1927 + $0xe0] sm:$0xff]
        %v1957 = vld [vmem:[%s1927 + $0xe8] sm:$0xff]
        %v1958 = vld [vmem:[%s1927 + $0xf0] sm:$0xff]
        %v1959 = vld [vmem:[%s1927 + $0xf8] sm:$0xff]
        %v1960 = vld [vmem:[%s1927 + $0x100] sm:$0xff]
        %v1961 = vld [vmem:[%s1927 + $0x108] sm:$0xff]
        %v1962 = vld [vmem:[%s1927 + $0x110] sm:$0xff]
        %v1963 = vld [vmem:[%s1927 + $0x118] sm:$0xff]
        %v1964 = vld [vmem:[%s1927 + $0x120] sm:$0xff]
        %v1965 = vld [vmem:[%s1927 + $0x128] sm:$0xff]
        %v1966 = vld [vmem:[%s1927 + $0x130] sm:$0xff]
        %v1967 = vld [vmem:[%s1927 + $0x138] sm:$0xff]
        %v1968 = vld [vmem:[%s1927 + $0x140] sm:$0xff]
        %v1969 = vld [vmem:[%s1927 + $0x148] sm:$0xff]
        %v1970 = vld [vmem:[%s1927 + $0x150] sm:$0xff]
        %v1971 = vld [vmem:[%s1927 + $0x158] sm:$0xff]
        %v1972 = vld [vmem:[%s1927 + $0x160] sm:$0xff]
        %v1973 = vld [vmem:[%s1927 + $0x168] sm:$0xff]
        %v1974 = vld [vmem:[%s1927 + $0x170] sm:$0xff]
        %v1975 = vld [vmem:[%s1927 + $0x178] sm:$0xff]
        %v1976 = vld [vmem:[%s1927 + $0x180] sm:$0xff]
        %v1977 = vld [vmem:[%s1927 + $0x188] sm:$0xff]
        %v1978 = vld [vmem:[%s1927 + $0x190] sm:$0xff]
        %v1979 = vld [vmem:[%s1927 + $0x198] sm:$0xff]
        %v1980 = vld [vmem:[%s1927 + $0x1a0] sm:$0xff]
        %v1981 = vld [vmem:[%s1927 + $0x1a8] sm:$0xff]
        %v1982 = vld [vmem:[%s1927 + $0x1b0] sm:$0xff]
        %v1983 = vld [vmem:[%s1927 + $0x1b8] sm:$0xff]
        %v1984 = vld [vmem:[%s1927 + $0x1c0] sm:$0xff]
        %v1985 = vld [vmem:[%s1927 + $0x1c8] sm:$0xff]
        %v1986 = vld [vmem:[%s1927 + $0x1d0] sm:$0xff]
        %v1987 = vld [vmem:[%s1927 + $0x1d8] sm:$0xff]
        %v1988 = vld [vmem:[%s1927 + $0x1e0] sm:$0xff]
        %v1989 = vld [vmem:[%s1927 + $0x1e8] sm:$0xff]
        %v1990 = vld [vmem:[%s1927 + $0x1f0] sm:$0xff]
        %v1991 = vld [vmem:[%s1927 + $0x1f8] sm:$0xff]
        %1992 = vmatprep.subr.mxu0 0.0
        %1993 = vmatpush1.msra.mxu0 %v1943
        %1994 = vmatprep.subr.mxu0 0.0
        %1995 = vmatpush1.msra.mxu0 %v1942
        %1996 = vmatprep.subr.mxu0 0.0
        %1997 = vmatpush1.msra.mxu0 %v1941
        %1998 = vmatprep.subr.mxu0 0.0
        %1999 = vmatpush1.msra.mxu0 %v1940
        %2000 = vmatprep.subr.mxu0 0.0
        %2001 = vmatpush1.msra.mxu0 %v1939
        %2002 = vmatprep.subr.mxu0 0.0
        %2003 = vmatpush1.msra.mxu0 %v1938
        %2004 = vmatprep.subr.mxu0 0.0
        %2005 = vmatpush1.msra.mxu0 %v1937
        %2006 = vmatprep.subr.mxu0 0.0
        %2007 = vmatpush1.msra.mxu0 %v1936
        %2008 = vmatprep.subr.mxu0 0.0
        %2009 = vmatpush1.msra.mxu0 %v1935
        %2010 = vmatprep.subr.mxu0 0.0
        %2011 = vmatpush1.msra.mxu0 %v1934
        %2012 = vmatprep.subr.mxu0 0.0
        %2013 = vmatpush1.msra.mxu0 %v1933
        %2014 = vmatprep.subr.mxu0 0.0
        %2015 = vmatpush1.msra.mxu0 %v1932
        %2016 = vmatprep.subr.mxu0 0.0
        %2017 = vmatpush1.msra.mxu0 %v1931
        %2018 = vmatprep.subr.mxu0 0.0
        %2019 = vmatpush1.msra.mxu0 %v1930
        %2020 = vmatprep.subr.mxu0 0.0
        %2021 = vmatpush1.msra.mxu0 %v1929
        %2022 = vmatprep.subr.mxu0 0.0
        %2023 = vmatpush1.msra.mxu0 %v1928
        %2024 = vmatprep.subr.mxu0 0.0
        %2025 = vmatpush2.msra.mxu0 %v1959
        %2026 = vmatprep.subr.mxu0 0.0
        %2027 = vmatpush2.msra.mxu0 %v1958
        %2028 = vmatprep.subr.mxu0 0.0
        %2029 = vmatpush2.msra.mxu0 %v1957
        %2030 = vmatprep.subr.mxu0 0.0
        %2031 = vmatpush2.msra.mxu0 %v1956
        %2032 = vmatprep.subr.mxu0 0.0
        %2033 = vmatpush2.msra.mxu0 %v1955
        %2034 = vmatprep.subr.mxu0 0.0
        %2035 = vmatpush2.msra.mxu0 %v1954
        %2036 = vmatprep.subr.mxu0 0.0
        %2037 = vmatpush2.msra.mxu0 %v1953
        %2038 = vmatprep.subr.mxu0 0.0
        %2039 = vmatpush2.msra.mxu0 %v1952
        %2040 = vmatprep.subr.mxu0 0.0
        %2041 = vmatpush2.msra.mxu0 %v1951
        %2042 = vmatprep.subr.mxu0 0.0
        %2043 = vmatpush2.msra.mxu0 %v1950
        %2044 = vmatprep.subr.mxu0 0.0
        %2045 = vmatpush2.msra.mxu0 %v1949
        %2046 = vmatprep.subr.mxu0 0.0
        %2047 = vmatpush2.msra.mxu0 %v1948
        %2048 = vmatprep.subr.mxu0 0.0
        %2049 = vmatpush2.msra.mxu0 %v1947
        %2050 = vmatprep.subr.mxu0 0.0
        %2051 = vmatpush2.msra.mxu0 %v1946
        %2052 = vmatprep.subr.mxu0 0.0
        %2053 = vmatpush2.msra.mxu0 %v1945
        %2054 = vmatprep.subr.mxu0 0.0
        %2055 = vmatpush2.msra.mxu0 %v1944
        %2056 = vmatprep.mubr.f32.mxu0 %v1819
        %2057 = vmatmul.mubr.f32.gmra.mxu0 %v1783
        %v2058 = vpop.f32.mrf.mxu0
        %v2059 = vadd.f32 %v519, %v2058
        %v2060 = vpop.f32.mrf.mxu0
        %2061 = vmatprep.mubr.f32.mxu0 %v1820
        %2062 = vmatmul.mubr.f32.gmra.mxu0 %v1784
        %v2063 = vpop.f32.mrf.mxu0
        %v2064 = vadd.f32 %v519, %v2063
        %v2065 = vpop.f32.mrf.mxu0
        %2066 = vmatprep.mubr.f32.mxu0 %v1821
        %2067 = vmatmul.mubr.f32.gmra.mxu0 %v1785
        %v2068 = vpop.f32.mrf.mxu0
        %v2069 = vadd.f32 %v519, %v2068
        %v2070 = vpop.f32.mrf.mxu0
        %2071 = vmatprep.mubr.f32.mxu0 %v1822
        %2072 = vmatmul.mubr.f32.gmra.mxu0 %v1786
        %v2073 = vpop.f32.mrf.mxu0
        %v2074 = vadd.f32 %v519, %v2073
        %v2075 = vpop.f32.mrf.mxu0
        %2076 = vmatprep.mubr.f32.mxu0 %v1823
        %2077 = vmatmul.mubr.f32.gmra.mxu0 %v1787
        %v2078 = vpop.f32.mrf.mxu0
        %v2079 = vadd.f32 %v519, %v2078
        %v2080 = vpop.f32.mrf.mxu0
        %2081 = vmatprep.mubr.f32.mxu0 %v1824
        %2082 = vmatmul.mubr.f32.gmra.mxu0 %v1788
        %v2083 = vpop.f32.mrf.mxu0
        %v2084 = vadd.f32 %v519, %v2083
        %v2085 = vpop.f32.mrf.mxu0
        %2086 = vmatprep.mubr.f32.mxu0 %v1825
        %2087 = vmatmul.mubr.f32.gmra.mxu0 %v1789
        %v2088 = vpop.f32.mrf.mxu0
        %v2089 = vadd.f32 %v519, %v2088
        %v2090 = vpop.f32.mrf.mxu0
        %2091 = vmatprep.mubr.f32.mxu0 %v1826
        %2092 = vmatmul.mubr.f32.gmra.mxu0 %v1790
        %v2093 = vpop.f32.mrf.mxu0
        %v2094 = vadd.f32 %v519, %v2093
        %v2095 = vpop.f32.mrf.mxu0
        %2096 = vmatprep.mubr.f32.mxu0 %v1827
        %2097 = vmatmul.mubr.f32.gmra.mxu0 %v1791
        %v2098 = vpop.f32.mrf.mxu0
        %v2099 = vadd.f32 %v519, %v2098
        %v2100 = vpop.f32.mrf.mxu0
        %2101 = vmatprep.mubr.f32.mxu0 %v1828
        %2102 = vmatmul.mubr.f32.gmra.mxu0 %v1792
        %v2103 = vpop.f32.mrf.mxu0
        %v2104 = vadd.f32 %v519, %v2103
        %v2105 = vpop.f32.mrf.mxu0
        %2106 = vmatprep.mubr.f32.mxu0 %v1829
        %2107 = vmatmul.mubr.f32.gmra.mxu0 %v1793
        %v2108 = vpop.f32.mrf.mxu0
        %v2109 = vadd.f32 %v519, %v2108
        %v2110 = vpop.f32.mrf.mxu0
        %2111 = vmatprep.mubr.f32.mxu0 %v1830
        %2112 = vmatmul.mubr.f32.gmra.mxu0 %v1794
        %v2113 = vpop.f32.mrf.mxu0
        %v2114 = vadd.f32 %v519, %v2113
        %v2115 = vpop.f32.mrf.mxu0
        %2116 = vmatprep.mubr.f32.mxu0 %v1831
        %2117 = vmatmul.mubr.f32.gmra.mxu0 %v1795
        %v2118 = vpop.f32.mrf.mxu0
        %v2119 = vadd.f32 %v519, %v2118
        %v2120 = vpop.f32.mrf.mxu0
        %2121 = vmatprep.mubr.f32.mxu0 %v1832
        %2122 = vmatmul.mubr.f32.gmra.mxu0 %v1796
        %v2123 = vpop.f32.mrf.mxu0
        %v2124 = vadd.f32 %v519, %v2123
        %v2125 = vpop.f32.mrf.mxu0
        %2126 = vmatprep.mubr.f32.mxu0 %v1833
        %2127 = vmatmul.mubr.f32.gmra.mxu0 %v1797
        %v2128 = vpop.f32.mrf.mxu0
        %v2129 = vadd.f32 %v519, %v2128
        %v2130 = vpop.f32.mrf.mxu0
        %2131 = vmatprep.mubr.f32.mxu0 %v1834
        %2132 = vmatmul.mubr.f32.gmra.mxu0 %v1798
        %v2133 = vpop.f32.mrf.mxu0
        %v2134 = vadd.f32 %v519, %v2133
        %v2135 = vpop.f32.mrf.mxu0
        %2136 = vmatprep.mubr.f32.mxu0 %v1835
        %2137 = vmatmul.mubr.f32.gmra.mxu0 %v1799
        %v2138 = vpop.f32.mrf.mxu0
        %v2139 = vadd.f32 %v519, %v2138
        %v2140 = vpop.f32.mrf.mxu0
        %2141 = vmatprep.mubr.f32.mxu0 %v1836
        %2142 = vmatmul.mubr.f32.gmra.mxu0 %v1800
        %v2143 = vpop.f32.mrf.mxu0
        %v2144 = vadd.f32 %v519, %v2143
        %v2145 = vpop.f32.mrf.mxu0
        %2146 = vmatprep.mubr.f32.mxu0 %v1837
        %2147 = vmatmul.mubr.f32.gmra.mxu0 %v1801
        %v2148 = vpop.f32.mrf.mxu0
        %v2149 = vadd.f32 %v519, %v2148
        %v2150 = vpop.f32.mrf.mxu0
        %2151 = vmatprep.mubr.f32.mxu0 %v1838
        %2152 = vmatmul.mubr.f32.gmra.mxu0 %v1802
        %v2153 = vpop.f32.mrf.mxu0
        %v2154 = vadd.f32 %v519, %v2153
        %v2155 = vpop.f32.mrf.mxu0
        %2156 = vmatprep.mubr.f32.mxu0 %v1839
        %2157 = vmatmul.mubr.f32.gmra.mxu0 %v1803
        %v2158 = vpop.f32.mrf.mxu0
        %v2159 = vadd.f32 %v519, %v2158
        %v2160 = vpop.f32.mrf.mxu0
        %2161 = vmatprep.mubr.f32.mxu0 %v1840
        %2162 = vmatmul.mubr.f32.gmra.mxu0 %v1804
        %v2163 = vpop.f32.mrf.mxu0
        %v2164 = vadd.f32 %v519, %v2163
        %v2165 = vpop.f32.mrf.mxu0
        %2166 = vmatprep.mubr.f32.mxu0 %v1841
        %2167 = vmatmul.mubr.f32.gmra.mxu0 %v1805
        %v2168 = vpop.f32.mrf.mxu0
        %v2169 = vadd.f32 %v519, %v2168
        %v2170 = vpop.f32.mrf.mxu0
        %2171 = vmatprep.mubr.f32.mxu0 %v1842
        %2172 = vmatmul.mubr.f32.gmra.mxu0 %v1806
        %v2173 = vpop.f32.mrf.mxu0
        %v2174 = vadd.f32 %v519, %v2173
        %v2175 = vpop.f32.mrf.mxu0
        %2176 = vmatprep.mubr.f32.mxu0 %v1843
        %2177 = vmatmul.mubr.f32.gmra.mxu0 %v1807
        %v2178 = vpop.f32.mrf.mxu0
        %v2179 = vadd.f32 %v519, %v2178
        %v2180 = vpop.f32.mrf.mxu0
        %2181 = vmatprep.mubr.f32.mxu0 %v1844
        %2182 = vmatmul.mubr.f32.gmra.mxu0 %v1808
        %v2183 = vpop.f32.mrf.mxu0
        %v2184 = vadd.f32 %v519, %v2183
        %v2185 = vpop.f32.mrf.mxu0
        %2186 = vmatprep.mubr.f32.mxu0 %v1845
        %2187 = vmatmul.mubr.f32.gmra.mxu0 %v1809
        %v2188 = vpop.f32.mrf.mxu0
        %v2189 = vadd.f32 %v519, %v2188
        %v2190 = vpop.f32.mrf.mxu0
        %2191 = vmatprep.mubr.f32.mxu0 %v1846
        %2192 = vmatmul.mubr.f32.gmra.mxu0 %v1810
        %v2193 = vpop.f32.mrf.mxu0
        %v2194 = vadd.f32 %v519, %v2193
        %v2195 = vpop.f32.mrf.mxu0
        %2196 = vmatprep.mubr.f32.mxu0 %v1847
        %2197 = vmatmul.mubr.f32.gmra.mxu0 %v1811
        %v2198 = vpop.f32.mrf.mxu0
        %v2199 = vadd.f32 %v519, %v2198
        %v2200 = vpop.f32.mrf.mxu0
        %2201 = vmatprep.mubr.f32.mxu0 %v1848
        %2202 = vmatmul.mubr.f32.gmra.mxu0 %v1812
        %v2203 = vpop.f32.mrf.mxu0
        %v2204 = vadd.f32 %v519, %v2203
        %v2205 = vpop.f32.mrf.mxu0
        %2206 = vmatprep.mubr.f32.mxu0 %v1849
        %2207 = vmatmul.mubr.f32.gmra.mxu0 %v1813
        %v2208 = vpop.f32.mrf.mxu0
        %v2209 = vadd.f32 %v519, %v2208
        %v2210 = vpop.f32.mrf.mxu0
        %2211 = vmatprep.mubr.f32.mxu0 %v1850
        %2212 = vmatmul.mubr.f32.gmra.mxu0 %v1814
        %v2213 = vpop.f32.mrf.mxu0
        %v2214 = vadd.f32 %v519, %v2213
        %v2215 = vpop.f32.mrf.mxu0
        %2216 = vmatprep.mubr.f32.mxu0 %v1851
        %2217 = vmatmul.mubr.f32.gmra.mxu0 %v1815
        %v2218 = vpop.f32.mrf.mxu0
        %v2219 = vadd.f32 %v519, %v2218
        %v2220 = vpop.f32.mrf.mxu0
        %2221 = vmatprep.mubr.f32.mxu0 %v1852
        %2222 = vmatmul.mubr.f32.gmra.mxu0 %v1816
        %v2223 = vpop.f32.mrf.mxu0
        %v2224 = vadd.f32 %v519, %v2223
        %v2225 = vpop.f32.mrf.mxu0
        %2226 = vmatprep.mubr.f32.mxu0 %v1853
        %2227 = vmatmul.mubr.f32.gmra.mxu0 %v1817
        %v2228 = vpop.f32.mrf.mxu0
        %v2229 = vadd.f32 %v519, %v2228
        %v2230 = vpop.f32.mrf.mxu0
        %2231 = vmatprep.mubr.f32.mxu0 %v1854
        %2232 = vmatmul.mubr.f32.gmra.mxu0 %v1818
        %v2233 = vpop.f32.mrf.mxu0
        %v2234 = vadd.f32 %v519, %v2233
        %v2235 = vpop.f32.mrf.mxu0
        %2236 = vdwg.mxu0
        %2237 = vmatprep.subr.mxu0 0.0
        %2238 = vmatpush1.msra.mxu0 %v1975
        %2239 = vmatprep.subr.mxu0 0.0
        %2240 = vmatpush1.msra.mxu0 %v1974
        %2241 = vmatprep.subr.mxu0 0.0
        %2242 = vmatpush1.msra.mxu0 %v1973
        %2243 = vmatprep.subr.mxu0 0.0
        %2244 = vmatpush1.msra.mxu0 %v1972
        %2245 = vmatprep.subr.mxu0 0.0
        %2246 = vmatpush1.msra.mxu0 %v1971
        %2247 = vmatprep.subr.mxu0 0.0
        %2248 = vmatpush1.msra.mxu0 %v1970
        %2249 = vmatprep.subr.mxu0 0.0
        %2250 = vmatpush1.msra.mxu0 %v1969
        %2251 = vmatprep.subr.mxu0 0.0
        %2252 = vmatpush1.msra.mxu0 %v1968
        %2253 = vmatprep.subr.mxu0 0.0
        %2254 = vmatpush1.msra.mxu0 %v1967
        %2255 = vmatprep.subr.mxu0 0.0
        %2256 = vmatpush1.msra.mxu0 %v1966
        %2257 = vmatprep.subr.mxu0 0.0
        %2258 = vmatpush1.msra.mxu0 %v1965
        %2259 = vmatprep.subr.mxu0 0.0
        %2260 = vmatpush1.msra.mxu0 %v1964
        %2261 = vmatprep.subr.mxu0 0.0
        %2262 = vmatpush1.msra.mxu0 %v1963
        %2263 = vmatprep.subr.mxu0 0.0
        %2264 = vmatpush1.msra.mxu0 %v1962
        %2265 = vmatprep.subr.mxu0 0.0
        %2266 = vmatpush1.msra.mxu0 %v1961
        %2267 = vmatprep.subr.mxu0 0.0
        %2268 = vmatpush1.msra.mxu0 %v1960
        %2269 = vmatprep.subr.mxu0 0.0
        %2270 = vmatpush2.msra.mxu0 %v1991
        %2271 = vmatprep.subr.mxu0 0.0
        %2272 = vmatpush2.msra.mxu0 %v1990
        %2273 = vmatprep.subr.mxu0 0.0
        %2274 = vmatpush2.msra.mxu0 %v1989
        %2275 = vmatprep.subr.mxu0 0.0
        %2276 = vmatpush2.msra.mxu0 %v1988
        %2277 = vmatprep.subr.mxu0 0.0
        %2278 = vmatpush2.msra.mxu0 %v1987
        %2279 = vmatprep.subr.mxu0 0.0
        %2280 = vmatpush2.msra.mxu0 %v1986
        %2281 = vmatprep.subr.mxu0 0.0
        %2282 = vmatpush2.msra.mxu0 %v1985
        %2283 = vmatprep.subr.mxu0 0.0
        %2284 = vmatpush2.msra.mxu0 %v1984
        %2285 = vmatprep.subr.mxu0 0.0
        %2286 = vmatpush2.msra.mxu0 %v1983
        %2287 = vmatprep.subr.mxu0 0.0
        %2288 = vmatpush2.msra.mxu0 %v1982
        %2289 = vmatprep.subr.mxu0 0.0
        %2290 = vmatpush2.msra.mxu0 %v1981
        %2291 = vmatprep.subr.mxu0 0.0
        %2292 = vmatpush2.msra.mxu0 %v1980
        %2293 = vmatprep.subr.mxu0 0.0
        %2294 = vmatpush2.msra.mxu0 %v1979
        %2295 = vmatprep.subr.mxu0 0.0
        %2296 = vmatpush2.msra.mxu0 %v1978
        %2297 = vmatprep.subr.mxu0 0.0
        %2298 = vmatpush2.msra.mxu0 %v1977
        %2299 = vmatprep.subr.mxu0 0.0
        %2300 = vmatpush2.msra.mxu0 %v1976
        %2301 = vmatprep.mubr.f32.mxu0 %v1891
        %2302 = vmatmul.mubr.f32.gmra.mxu0 %v1855
        %v2303 = vpop.f32.mrf.mxu0
        %v2304 = vadd.f32 %v2059, %v2303
        %v2305 = vpop.f32.mrf.mxu0
        %2306 = vmatprep.mubr.f32.mxu0 %v1892
        %2307 = vmatmul.mubr.f32.gmra.mxu0 %v1856
        %v2308 = vpop.f32.mrf.mxu0
        %v2309 = vadd.f32 %v2064, %v2308
        %v2310 = vpop.f32.mrf.mxu0
        %2311 = vmatprep.mubr.f32.mxu0 %v1893
        %2312 = vmatmul.mubr.f32.gmra.mxu0 %v1857
        %v2313 = vpop.f32.mrf.mxu0
        %v2314 = vadd.f32 %v2069, %v2313
        %v2315 = vpop.f32.mrf.mxu0
        %2316 = vmatprep.mubr.f32.mxu0 %v1894
        %2317 = vmatmul.mubr.f32.gmra.mxu0 %v1858
        %v2318 = vpop.f32.mrf.mxu0
        %v2319 = vadd.f32 %v2074, %v2318
        %v2320 = vpop.f32.mrf.mxu0
        %2321 = vmatprep.mubr.f32.mxu0 %v1895
        %2322 = vmatmul.mubr.f32.gmra.mxu0 %v1859
        %v2323 = vpop.f32.mrf.mxu0
        %v2324 = vadd.f32 %v2079, %v2323
        %v2325 = vpop.f32.mrf.mxu0
        %2326 = vmatprep.mubr.f32.mxu0 %v1896
        %2327 = vmatmul.mubr.f32.gmra.mxu0 %v1860
        %v2328 = vpop.f32.mrf.mxu0
        %v2329 = vadd.f32 %v2084, %v2328
        %v2330 = vpop.f32.mrf.mxu0
        %2331 = vmatprep.mubr.f32.mxu0 %v1897
        %2332 = vmatmul.mubr.f32.gmra.mxu0 %v1861
        %v2333 = vpop.f32.mrf.mxu0
        %v2334 = vadd.f32 %v2089, %v2333
        %v2335 = vpop.f32.mrf.mxu0
        %2336 = vmatprep.mubr.f32.mxu0 %v1898
        %2337 = vmatmul.mubr.f32.gmra.mxu0 %v1862
        %v2338 = vpop.f32.mrf.mxu0
        %v2339 = vadd.f32 %v2094, %v2338
        %v2340 = vpop.f32.mrf.mxu0
        %2341 = vmatprep.mubr.f32.mxu0 %v1899
        %2342 = vmatmul.mubr.f32.gmra.mxu0 %v1863
        %v2343 = vpop.f32.mrf.mxu0
        %v2344 = vadd.f32 %v2099, %v2343
        %v2345 = vpop.f32.mrf.mxu0
        %2346 = vmatprep.mubr.f32.mxu0 %v1900
        %2347 = vmatmul.mubr.f32.gmra.mxu0 %v1864
        %v2348 = vpop.f32.mrf.mxu0
        %v2349 = vadd.f32 %v2104, %v2348
        %v2350 = vpop.f32.mrf.mxu0
        %2351 = vmatprep.mubr.f32.mxu0 %v1901
        %2352 = vmatmul.mubr.f32.gmra.mxu0 %v1865
        %v2353 = vpop.f32.mrf.mxu0
        %v2354 = vadd.f32 %v2109, %v2353
        %v2355 = vpop.f32.mrf.mxu0
        %2356 = vmatprep.mubr.f32.mxu0 %v1902
        %2357 = vmatmul.mubr.f32.gmra.mxu0 %v1866
        %v2358 = vpop.f32.mrf.mxu0
        %v2359 = vadd.f32 %v2114, %v2358
        %v2360 = vpop.f32.mrf.mxu0
        %2361 = vmatprep.mubr.f32.mxu0 %v1903
        %2362 = vmatmul.mubr.f32.gmra.mxu0 %v1867
        %v2363 = vpop.f32.mrf.mxu0
        %v2364 = vadd.f32 %v2119, %v2363
        %v2365 = vpop.f32.mrf.mxu0
        %2366 = vmatprep.mubr.f32.mxu0 %v1904
        %2367 = vmatmul.mubr.f32.gmra.mxu0 %v1868
        %v2368 = vpop.f32.mrf.mxu0
        %v2369 = vadd.f32 %v2124, %v2368
        %v2370 = vpop.f32.mrf.mxu0
        %2371 = vmatprep.mubr.f32.mxu0 %v1905
        %2372 = vmatmul.mubr.f32.gmra.mxu0 %v1869
        %v2373 = vpop.f32.mrf.mxu0
        %v2374 = vadd.f32 %v2129, %v2373
        %v2375 = vpop.f32.mrf.mxu0
        %2376 = vmatprep.mubr.f32.mxu0 %v1906
        %2377 = vmatmul.mubr.f32.gmra.mxu0 %v1870
        %v2378 = vpop.f32.mrf.mxu0
        %v2379 = vadd.f32 %v2134, %v2378
        %v2380 = vpop.f32.mrf.mxu0
        %2381 = vmatprep.mubr.f32.mxu0 %v1907
        %2382 = vmatmul.mubr.f32.gmra.mxu0 %v1871
        %v2383 = vpop.f32.mrf.mxu0
        %v2384 = vadd.f32 %v2139, %v2383
        %v2385 = vpop.f32.mrf.mxu0
        %2386 = vmatprep.mubr.f32.mxu0 %v1908
        %2387 = vmatmul.mubr.f32.gmra.mxu0 %v1872
        %v2388 = vpop.f32.mrf.mxu0
        %v2389 = vadd.f32 %v2144, %v2388
        %v2390 = vpop.f32.mrf.mxu0
        %2391 = vmatprep.mubr.f32.mxu0 %v1909
        %2392 = vmatmul.mubr.f32.gmra.mxu0 %v1873
        %v2393 = vpop.f32.mrf.mxu0
        %v2394 = vadd.f32 %v2149, %v2393
        %v2395 = vpop.f32.mrf.mxu0
        %2396 = vmatprep.mubr.f32.mxu0 %v1910
        %2397 = vmatmul.mubr.f32.gmra.mxu0 %v1874
        %v2398 = vpop.f32.mrf.mxu0
        %v2399 = vadd.f32 %v2154, %v2398
        %v2400 = vpop.f32.mrf.mxu0
        %2401 = vmatprep.mubr.f32.mxu0 %v1911
        %2402 = vmatmul.mubr.f32.gmra.mxu0 %v1875
        %v2403 = vpop.f32.mrf.mxu0
        %v2404 = vadd.f32 %v2159, %v2403
        %v2405 = vpop.f32.mrf.mxu0
        %2406 = vmatprep.mubr.f32.mxu0 %v1912
        %2407 = vmatmul.mubr.f32.gmra.mxu0 %v1876
        %v2408 = vpop.f32.mrf.mxu0
        %v2409 = vadd.f32 %v2164, %v2408
        %v2410 = vpop.f32.mrf.mxu0
        %2411 = vmatprep.mubr.f32.mxu0 %v1913
        %2412 = vmatmul.mubr.f32.gmra.mxu0 %v1877
        %v2413 = vpop.f32.mrf.mxu0
        %v2414 = vadd.f32 %v2169, %v2413
        %v2415 = vpop.f32.mrf.mxu0
        %2416 = vmatprep.mubr.f32.mxu0 %v1914
        %2417 = vmatmul.mubr.f32.gmra.mxu0 %v1878
        %v2418 = vpop.f32.mrf.mxu0
        %v2419 = vadd.f32 %v2174, %v2418
        %v2420 = vpop.f32.mrf.mxu0
        %2421 = vmatprep.mubr.f32.mxu0 %v1915
        %2422 = vmatmul.mubr.f32.gmra.mxu0 %v1879
        %v2423 = vpop.f32.mrf.mxu0
        %v2424 = vadd.f32 %v2179, %v2423
        %v2425 = vpop.f32.mrf.mxu0
        %2426 = vmatprep.mubr.f32.mxu0 %v1916
        %2427 = vmatmul.mubr.f32.gmra.mxu0 %v1880
        %v2428 = vpop.f32.mrf.mxu0
        %v2429 = vadd.f32 %v2184, %v2428
        %v2430 = vpop.f32.mrf.mxu0
        %2431 = vmatprep.mubr.f32.mxu0 %v1917
        %2432 = vmatmul.mubr.f32.gmra.mxu0 %v1881
        %v2433 = vpop.f32.mrf.mxu0
        %v2434 = vadd.f32 %v2189, %v2433
        %v2435 = vpop.f32.mrf.mxu0
        %2436 = vmatprep.mubr.f32.mxu0 %v1918
        %2437 = vmatmul.mubr.f32.gmra.mxu0 %v1882
        %v2438 = vpop.f32.mrf.mxu0
        %v2439 = vadd.f32 %v2194, %v2438
        %v2440 = vpop.f32.mrf.mxu0
        %2441 = vmatprep.mubr.f32.mxu0 %v1919
        %2442 = vmatmul.mubr.f32.gmra.mxu0 %v1883
        %v2443 = vpop.f32.mrf.mxu0
        %v2444 = vadd.f32 %v2199, %v2443
        %v2445 = vpop.f32.mrf.mxu0
        %2446 = vmatprep.mubr.f32.mxu0 %v1920
        %2447 = vmatmul.mubr.f32.gmra.mxu0 %v1884
        %v2448 = vpop.f32.mrf.mxu0
        %v2449 = vadd.f32 %v2204, %v2448
        %v2450 = vpop.f32.mrf.mxu0
        %2451 = vmatprep.mubr.f32.mxu0 %v1921
        %2452 = vmatmul.mubr.f32.gmra.mxu0 %v1885
        %v2453 = vpop.f32.mrf.mxu0
        %v2454 = vadd.f32 %v2209, %v2453
        %v2455 = vpop.f32.mrf.mxu0
        %2456 = vmatprep.mubr.f32.mxu0 %v1922
        %2457 = vmatmul.mubr.f32.gmra.mxu0 %v1886
        %v2458 = vpop.f32.mrf.mxu0
        %v2459 = vadd.f32 %v2214, %v2458
        %v2460 = vpop.f32.mrf.mxu0
        %2461 = vmatprep.mubr.f32.mxu0 %v1923
        %2462 = vmatmul.mubr.f32.gmra.mxu0 %v1887
        %v2463 = vpop.f32.mrf.mxu0
        %v2464 = vadd.f32 %v2219, %v2463
        %v2465 = vpop.f32.mrf.mxu0
        %2466 = vmatprep.mubr.f32.mxu0 %v1924
        %2467 = vmatmul.mubr.f32.gmra.mxu0 %v1888
        %v2468 = vpop.f32.mrf.mxu0
        %v2469 = vadd.f32 %v2224, %v2468
        %v2470 = vpop.f32.mrf.mxu0
        %2471 = vmatprep.mubr.f32.mxu0 %v1925
        %2472 = vmatmul.mubr.f32.gmra.mxu0 %v1889
        %v2473 = vpop.f32.mrf.mxu0
        %v2474 = vadd.f32 %v2229, %v2473
        %v2475 = vpop.f32.mrf.mxu0
        %2476 = vmatprep.mubr.f32.mxu0 %v1926
        %2477 = vmatmul.mubr.f32.gmra.mxu0 %v1890
        %v2478 = vpop.f32.mrf.mxu0
        %v2479 = vadd.f32 %v2234, %v2478
        %v2480 = vpop.f32.mrf.mxu0
        %2481 = vdwg.mxu0
        %s2482 = scalar_lea.vmem %s164, 576 [#allocation9]
        %2483 = vst [vmem:[%s2482] sm:$0xff] %v2304
        %2484 = vst [vmem:[%s2482 + $0x8] sm:$0xff] %v2309
        %2485 = vst [vmem:[%s2482 + $0x10] sm:$0xff] %v2314
        %2486 = vst [vmem:[%s2482 + $0x18] sm:$0xff] %v2319
        %2487 = vst [vmem:[%s2482 + $0x20] sm:$0xff] %v2324
        %2488 = vst [vmem:[%s2482 + $0x28] sm:$0xff] %v2329
        %2489 = vst [vmem:[%s2482 + $0x30] sm:$0xff] %v2334
        %2490 = vst [vmem:[%s2482 + $0x38] sm:$0xff] %v2339
        %2491 = vst [vmem:[%s2482 + $0x40] sm:$0xff] %v2344
        %2492 = vst [vmem:[%s2482 + $0x48] sm:$0xff] %v2349
        %2493 = vst [vmem:[%s2482 + $0x50] sm:$0xff] %v2354
        %2494 = vst [vmem:[%s2482 + $0x58] sm:$0xff] %v2359
        %2495 = vst [vmem:[%s2482 + $0x60] sm:$0xff] %v2364
        %2496 = vst [vmem:[%s2482 + $0x68] sm:$0xff] %v2369
        %2497 = vst [vmem:[%s2482 + $0x70] sm:$0xff] %v2374
        %2498 = vst [vmem:[%s2482 + $0x78] sm:$0xff] %v2379
        %2499 = vst [vmem:[%s2482 + $0x80] sm:$0xff] %v2384
        %2500 = vst [vmem:[%s2482 + $0x88] sm:$0xff] %v2389
        %2501 = vst [vmem:[%s2482 + $0x90] sm:$0xff] %v2394
        %2502 = vst [vmem:[%s2482 + $0x98] sm:$0xff] %v2399
        %2503 = vst [vmem:[%s2482 + $0xa0] sm:$0xff] %v2404
        %2504 = vst [vmem:[%s2482 + $0xa8] sm:$0xff] %v2409
        %2505 = vst [vmem:[%s2482 + $0xb0] sm:$0xff] %v2414
        %2506 = vst [vmem:[%s2482 + $0xb8] sm:$0xff] %v2419
        %2507 = vst [vmem:[%s2482 + $0xc0] sm:$0xff] %v2424
        %2508 = vst [vmem:[%s2482 + $0xc8] sm:$0xff] %v2429
        %2509 = vst [vmem:[%s2482 + $0xd0] sm:$0xff] %v2434
        %2510 = vst [vmem:[%s2482 + $0xd8] sm:$0xff] %v2439
        %2511 = vst [vmem:[%s2482 + $0xe0] sm:$0xff] %v2444
        %2512 = vst [vmem:[%s2482 + $0xe8] sm:$0xff] %v2449
        %2513 = vst [vmem:[%s2482 + $0xf0] sm:$0xff] %v2454
        %2514 = vst [vmem:[%s2482 + $0xf8] sm:$0xff] %v2459
        %2515 = vst [vmem:[%s2482 + $0x100] sm:$0xff] %v2464
        %2516 = vst [vmem:[%s2482 + $0x108] sm:$0xff] %v2469
        %2517 = vst [vmem:[%s2482 + $0x110] sm:$0xff] %v2474
        %2518 = vst [vmem:[%s2482 + $0x118] sm:$0xff] %v2479
        %v2519 = vld [vmem:[#allocation2 + $0x13] sm:$0xff]
        %v2520 = vld [vmem:[#allocation2 + $0x1b] sm:$0xff]
        %v2521 = vld [vmem:[#allocation2 + $0x23] sm:$0xff]
        %v2522 = vld [vmem:[#allocation2 + $0x2b] sm:$0xff]
        %v2523 = vld [vmem:[#allocation2 + $0x33] sm:$0xff]
        %v2524 = vld [vmem:[#allocation2 + $0x3b] sm:$0xff]
        %v2525 = vld [vmem:[#allocation2 + $0x43] sm:$0xff]
        %v2526 = vld [vmem:[#allocation2 + $0x4b] sm:$0xff]
        %v2527 = vld [vmem:[#allocation2 + $0x53] sm:$0xff]
        %v2528 = vld [vmem:[#allocation2 + $0x5b] sm:$0xff]
        %v2529 = vld [vmem:[#allocation2 + $0x63] sm:$0xff]
        %v2530 = vld [vmem:[#allocation2 + $0x6b] sm:$0xff]
        %v2531 = vld [vmem:[#allocation2 + $0x73] sm:$0xff]
        %v2532 = vld [vmem:[#allocation2 + $0x7b] sm:$0xff]
        %v2533 = vld [vmem:[#allocation2 + $0x83] sm:$0xff]
        %v2534 = vld [vmem:[#allocation2 + $0x8b] sm:$0xff]
        %v2535 = vld [vmem:[#allocation2 + $0x93] sm:$0xff]
        %v2536 = vld [vmem:[#allocation2 + $0x9b] sm:$0xff]
        %v2537 = vld [vmem:[#allocation2 + $0xa3] sm:$0xff]
        %v2538 = vld [vmem:[#allocation2 + $0xab] sm:$0xff]
        %v2539 = vld [vmem:[#allocation2 + $0xb3] sm:$0xff]
        %v2540 = vld [vmem:[#allocation2 + $0xbb] sm:$0xff]
        %v2541 = vld [vmem:[#allocation2 + $0xc3] sm:$0xff]
        %v2542 = vld [vmem:[#allocation2 + $0xcb] sm:$0xff]
        %v2543 = vld [vmem:[#allocation2 + $0xd3] sm:$0xff]
        %v2544 = vld [vmem:[#allocation2 + $0xdb] sm:$0xff]
        %v2545 = vld [vmem:[#allocation2 + $0xe3] sm:$0xff]
        %v2546 = vld [vmem:[#allocation2 + $0xeb] sm:$0xff]
        %v2547 = vld [vmem:[#allocation2 + $0xf3] sm:$0xff]
        %v2548 = vld [vmem:[#allocation2 + $0xfb] sm:$0xff]
        %v2549 = vld [vmem:[#allocation2 + $0x103] sm:$0xff]
        %v2550 = vld [vmem:[#allocation2 + $0x10b] sm:$0xff]
        %v2551 = vld [vmem:[#allocation2 + $0x113] sm:$0xff]
        %v2552 = vld [vmem:[#allocation2 + $0x11b] sm:$0xff]
        %v2553 = vld [vmem:[#allocation2 + $0x123] sm:$0xff]
        %v2554 = vld [vmem:[#allocation2 + $0x12b] sm:$0xff]
        %v2555 = vld [vmem:[#allocation2 + $0x14] sm:$0xff]
        %v2556 = vld [vmem:[#allocation2 + $0x1c] sm:$0xff]
        %v2557 = vld [vmem:[#allocation2 + $0x24] sm:$0xff]
        %v2558 = vld [vmem:[#allocation2 + $0x2c] sm:$0xff]
        %v2559 = vld [vmem:[#allocation2 + $0x34] sm:$0xff]
        %v2560 = vld [vmem:[#allocation2 + $0x3c] sm:$0xff]
        %v2561 = vld [vmem:[#allocation2 + $0x44] sm:$0xff]
        %v2562 = vld [vmem:[#allocation2 + $0x4c] sm:$0xff]
        %v2563 = vld [vmem:[#allocation2 + $0x54] sm:$0xff]
        %v2564 = vld [vmem:[#allocation2 + $0x5c] sm:$0xff]
        %v2565 = vld [vmem:[#allocation2 + $0x64] sm:$0xff]
        %v2566 = vld [vmem:[#allocation2 + $0x6c] sm:$0xff]
        %v2567 = vld [vmem:[#allocation2 + $0x74] sm:$0xff]
        %v2568 = vld [vmem:[#allocation2 + $0x7c] sm:$0xff]
        %v2569 = vld [vmem:[#allocation2 + $0x84] sm:$0xff]
        %v2570 = vld [vmem:[#allocation2 + $0x8c] sm:$0xff]
        %v2571 = vld [vmem:[#allocation2 + $0x94] sm:$0xff]
        %v2572 = vld [vmem:[#allocation2 + $0x9c] sm:$0xff]
        %v2573 = vld [vmem:[#allocation2 + $0xa4] sm:$0xff]
        %v2574 = vld [vmem:[#allocation2 + $0xac] sm:$0xff]
        %v2575 = vld [vmem:[#allocation2 + $0xb4] sm:$0xff]
        %v2576 = vld [vmem:[#allocation2 + $0xbc] sm:$0xff]
        %v2577 = vld [vmem:[#allocation2 + $0xc4] sm:$0xff]
        %v2578 = vld [vmem:[#allocation2 + $0xcc] sm:$0xff]
        %v2579 = vld [vmem:[#allocation2 + $0xd4] sm:$0xff]
        %v2580 = vld [vmem:[#allocation2 + $0xdc] sm:$0xff]
        %v2581 = vld [vmem:[#allocation2 + $0xe4] sm:$0xff]
        %v2582 = vld [vmem:[#allocation2 + $0xec] sm:$0xff]
        %v2583 = vld [vmem:[#allocation2 + $0xf4] sm:$0xff]
        %v2584 = vld [vmem:[#allocation2 + $0xfc] sm:$0xff]
        %v2585 = vld [vmem:[#allocation2 + $0x104] sm:$0xff]
        %v2586 = vld [vmem:[#allocation2 + $0x10c] sm:$0xff]
        %v2587 = vld [vmem:[#allocation2 + $0x114] sm:$0xff]
        %v2588 = vld [vmem:[#allocation2 + $0x11c] sm:$0xff]
        %v2589 = vld [vmem:[#allocation2 + $0x124] sm:$0xff]
        %v2590 = vld [vmem:[#allocation2 + $0x12c] sm:$0xff]
        %v2591 = vld [vmem:[#allocation2 + $0x25] sm:$0xff]
        %v2592 = vld [vmem:[#allocation2 + $0x2d] sm:$0xff]
        %v2593 = vld [vmem:[#allocation2 + $0x35] sm:$0xff]
        %v2594 = vld [vmem:[#allocation2 + $0x3d] sm:$0xff]
        %v2595 = vld [vmem:[#allocation2 + $0x45] sm:$0xff]
        %v2596 = vld [vmem:[#allocation2 + $0x4d] sm:$0xff]
        %v2597 = vld [vmem:[#allocation2 + $0x55] sm:$0xff]
        %v2598 = vld [vmem:[#allocation2 + $0x5d] sm:$0xff]
        %v2599 = vld [vmem:[#allocation2 + $0x65] sm:$0xff]
        %v2600 = vld [vmem:[#allocation2 + $0x6d] sm:$0xff]
        %v2601 = vld [vmem:[#allocation2 + $0x75] sm:$0xff]
        %v2602 = vld [vmem:[#allocation2 + $0x7d] sm:$0xff]
        %v2603 = vld [vmem:[#allocation2 + $0x85] sm:$0xff]
        %v2604 = vld [vmem:[#allocation2 + $0x8d] sm:$0xff]
        %v2605 = vld [vmem:[#allocation2 + $0x95] sm:$0xff]
        %v2606 = vld [vmem:[#allocation2 + $0x9d] sm:$0xff]
        %v2607 = vld [vmem:[#allocation2 + $0xa5] sm:$0xff]
        %v2608 = vld [vmem:[#allocation2 + $0xad] sm:$0xff]
        %v2609 = vld [vmem:[#allocation2 + $0xb5] sm:$0xff]
        %v2610 = vld [vmem:[#allocation2 + $0xbd] sm:$0xff]
        %v2611 = vld [vmem:[#allocation2 + $0xc5] sm:$0xff]
        %v2612 = vld [vmem:[#allocation2 + $0xcd] sm:$0xff]
        %v2613 = vld [vmem:[#allocation2 + $0xd5] sm:$0xff]
        %v2614 = vld [vmem:[#allocation2 + $0xdd] sm:$0xff]
        %v2615 = vld [vmem:[#allocation2 + $0xe5] sm:$0xff]
        %v2616 = vld [vmem:[#allocation2 + $0xed] sm:$0xff]
        %v2617 = vld [vmem:[#allocation2 + $0xf5] sm:$0xff]
        %v2618 = vld [vmem:[#allocation2 + $0xfd] sm:$0xff]
        %v2619 = vld [vmem:[#allocation2 + $0x105] sm:$0xff]
        %v2620 = vld [vmem:[#allocation2 + $0x10d] sm:$0xff]
        %v2621 = vld [vmem:[#allocation2 + $0x115] sm:$0xff]
        %v2622 = vld [vmem:[#allocation2 + $0x11d] sm:$0xff]
        %v2623 = vld [vmem:[#allocation2 + $0x125] sm:$0xff]
        %v2624 = vld [vmem:[#allocation2 + $0x12d] sm:$0xff]
        %v2625 = vld [vmem:[#allocation2 + $0x135] sm:$0xff]
        %v2626 = vld [vmem:[#allocation2 + $0x13d] sm:$0xff]
        %v2627 = vld [vmem:[#allocation2 + $0x26] sm:$0xff]
        %v2628 = vld [vmem:[#allocation2 + $0x2e] sm:$0xff]
        %v2629 = vld [vmem:[#allocation2 + $0x36] sm:$0xff]
        %v2630 = vld [vmem:[#allocation2 + $0x3e] sm:$0xff]
        %v2631 = vld [vmem:[#allocation2 + $0x46] sm:$0xff]
        %v2632 = vld [vmem:[#allocation2 + $0x4e] sm:$0xff]
        %v2633 = vld [vmem:[#allocation2 + $0x56] sm:$0xff]
        %v2634 = vld [vmem:[#allocation2 + $0x5e] sm:$0xff]
        %v2635 = vld [vmem:[#allocation2 + $0x66] sm:$0xff]
        %v2636 = vld [vmem:[#allocation2 + $0x6e] sm:$0xff]
        %v2637 = vld [vmem:[#allocation2 + $0x76] sm:$0xff]
        %v2638 = vld [vmem:[#allocation2 + $0x7e] sm:$0xff]
        %v2639 = vld [vmem:[#allocation2 + $0x86] sm:$0xff]
        %v2640 = vld [vmem:[#allocation2 + $0x8e] sm:$0xff]
        %v2641 = vld [vmem:[#allocation2 + $0x96] sm:$0xff]
        %v2642 = vld [vmem:[#allocation2 + $0x9e] sm:$0xff]
        %v2643 = vld [vmem:[#allocation2 + $0xa6] sm:$0xff]
        %v2644 = vld [vmem:[#allocation2 + $0xae] sm:$0xff]
        %v2645 = vld [vmem:[#allocation2 + $0xb6] sm:$0xff]
        %v2646 = vld [vmem:[#allocation2 + $0xbe] sm:$0xff]
        %v2647 = vld [vmem:[#allocation2 + $0xc6] sm:$0xff]
        %v2648 = vld [vmem:[#allocation2 + $0xce] sm:$0xff]
        %v2649 = vld [vmem:[#allocation2 + $0xd6] sm:$0xff]
        %v2650 = vld [vmem:[#allocation2 + $0xde] sm:$0xff]
        %v2651 = vld [vmem:[#allocation2 + $0xe6] sm:$0xff]
        %v2652 = vld [vmem:[#allocation2 + $0xee] sm:$0xff]
        %v2653 = vld [vmem:[#allocation2 + $0xf6] sm:$0xff]
        %v2654 = vld [vmem:[#allocation2 + $0xfe] sm:$0xff]
        %v2655 = vld [vmem:[#allocation2 + $0x106] sm:$0xff]
        %v2656 = vld [vmem:[#allocation2 + $0x10e] sm:$0xff]
        %v2657 = vld [vmem:[#allocation2 + $0x116] sm:$0xff]
        %v2658 = vld [vmem:[#allocation2 + $0x11e] sm:$0xff]
        %v2659 = vld [vmem:[#allocation2 + $0x126] sm:$0xff]
        %v2660 = vld [vmem:[#allocation2 + $0x12e] sm:$0xff]
        %v2661 = vld [vmem:[#allocation2 + $0x136] sm:$0xff]
        %v2662 = vld [vmem:[#allocation2 + $0x13e] sm:$0xff]
        %s2663 = scalar_lea.vmem [#allocation4], 1536
        %v2664 = vld [vmem:[%s2663] sm:$0xff]
        %v2665 = vld [vmem:[%s2663 + $0x8] sm:$0xff]
        %v2666 = vld [vmem:[%s2663 + $0x10] sm:$0xff]
        %v2667 = vld [vmem:[%s2663 + $0x18] sm:$0xff]
        %v2668 = vld [vmem:[%s2663 + $0x20] sm:$0xff]
        %v2669 = vld [vmem:[%s2663 + $0x28] sm:$0xff]
        %v2670 = vld [vmem:[%s2663 + $0x30] sm:$0xff]
        %v2671 = vld [vmem:[%s2663 + $0x38] sm:$0xff]
        %v2672 = vld [vmem:[%s2663 + $0x40] sm:$0xff]
        %v2673 = vld [vmem:[%s2663 + $0x48] sm:$0xff]
        %v2674 = vld [vmem:[%s2663 + $0x50] sm:$0xff]
        %v2675 = vld [vmem:[%s2663 + $0x58] sm:$0xff]
        %v2676 = vld [vmem:[%s2663 + $0x60] sm:$0xff]
        %v2677 = vld [vmem:[%s2663 + $0x68] sm:$0xff]
        %v2678 = vld [vmem:[%s2663 + $0x70] sm:$0xff]
        %v2679 = vld [vmem:[%s2663 + $0x78] sm:$0xff]
        %v2680 = vld [vmem:[%s2663 + $0x80] sm:$0xff]
        %v2681 = vld [vmem:[%s2663 + $0x88] sm:$0xff]
        %v2682 = vld [vmem:[%s2663 + $0x90] sm:$0xff]
        %v2683 = vld [vmem:[%s2663 + $0x98] sm:$0xff]
        %v2684 = vld [vmem:[%s2663 + $0xa0] sm:$0xff]
        %v2685 = vld [vmem:[%s2663 + $0xa8] sm:$0xff]
        %v2686 = vld [vmem:[%s2663 + $0xb0] sm:$0xff]
        %v2687 = vld [vmem:[%s2663 + $0xb8] sm:$0xff]
        %v2688 = vld [vmem:[%s2663 + $0xc0] sm:$0xff]
        %v2689 = vld [vmem:[%s2663 + $0xc8] sm:$0xff]
        %v2690 = vld [vmem:[%s2663 + $0xd0] sm:$0xff]
        %v2691 = vld [vmem:[%s2663 + $0xd8] sm:$0xff]
        %v2692 = vld [vmem:[%s2663 + $0xe0] sm:$0xff]
        %v2693 = vld [vmem:[%s2663 + $0xe8] sm:$0xff]
        %v2694 = vld [vmem:[%s2663 + $0xf0] sm:$0xff]
        %v2695 = vld [vmem:[%s2663 + $0xf8] sm:$0xff]
        %v2696 = vld [vmem:[%s2663 + $0x100] sm:$0xff]
        %v2697 = vld [vmem:[%s2663 + $0x108] sm:$0xff]
        %v2698 = vld [vmem:[%s2663 + $0x110] sm:$0xff]
        %v2699 = vld [vmem:[%s2663 + $0x118] sm:$0xff]
        %v2700 = vld [vmem:[%s2663 + $0x120] sm:$0xff]
        %v2701 = vld [vmem:[%s2663 + $0x128] sm:$0xff]
        %v2702 = vld [vmem:[%s2663 + $0x130] sm:$0xff]
        %v2703 = vld [vmem:[%s2663 + $0x138] sm:$0xff]
        %v2704 = vld [vmem:[%s2663 + $0x140] sm:$0xff]
        %v2705 = vld [vmem:[%s2663 + $0x148] sm:$0xff]
        %v2706 = vld [vmem:[%s2663 + $0x150] sm:$0xff]
        %v2707 = vld [vmem:[%s2663 + $0x158] sm:$0xff]
        %v2708 = vld [vmem:[%s2663 + $0x160] sm:$0xff]
        %v2709 = vld [vmem:[%s2663 + $0x168] sm:$0xff]
        %v2710 = vld [vmem:[%s2663 + $0x170] sm:$0xff]
        %v2711 = vld [vmem:[%s2663 + $0x178] sm:$0xff]
        %v2712 = vld [vmem:[%s2663 + $0x180] sm:$0xff]
        %v2713 = vld [vmem:[%s2663 + $0x188] sm:$0xff]
        %v2714 = vld [vmem:[%s2663 + $0x190] sm:$0xff]
        %v2715 = vld [vmem:[%s2663 + $0x198] sm:$0xff]
        %v2716 = vld [vmem:[%s2663 + $0x1a0] sm:$0xff]
        %v2717 = vld [vmem:[%s2663 + $0x1a8] sm:$0xff]
        %v2718 = vld [vmem:[%s2663 + $0x1b0] sm:$0xff]
        %v2719 = vld [vmem:[%s2663 + $0x1b8] sm:$0xff]
        %v2720 = vld [vmem:[%s2663 + $0x1c0] sm:$0xff]
        %v2721 = vld [vmem:[%s2663 + $0x1c8] sm:$0xff]
        %v2722 = vld [vmem:[%s2663 + $0x1d0] sm:$0xff]
        %v2723 = vld [vmem:[%s2663 + $0x1d8] sm:$0xff]
        %v2724 = vld [vmem:[%s2663 + $0x1e0] sm:$0xff]
        %v2725 = vld [vmem:[%s2663 + $0x1e8] sm:$0xff]
        %v2726 = vld [vmem:[%s2663 + $0x1f0] sm:$0xff]
        %v2727 = vld [vmem:[%s2663 + $0x1f8] sm:$0xff]
        %2728 = vmatprep.subr.mxu0 0.0
        %2729 = vmatpush1.msra.mxu0 %v2679
        %2730 = vmatprep.subr.mxu0 0.0
        %2731 = vmatpush1.msra.mxu0 %v2678
        %2732 = vmatprep.subr.mxu0 0.0
        %2733 = vmatpush1.msra.mxu0 %v2677
        %2734 = vmatprep.subr.mxu0 0.0
        %2735 = vmatpush1.msra.mxu0 %v2676
        %2736 = vmatprep.subr.mxu0 0.0
        %2737 = vmatpush1.msra.mxu0 %v2675
        %2738 = vmatprep.subr.mxu0 0.0
        %2739 = vmatpush1.msra.mxu0 %v2674
        %2740 = vmatprep.subr.mxu0 0.0
        %2741 = vmatpush1.msra.mxu0 %v2673
        %2742 = vmatprep.subr.mxu0 0.0
        %2743 = vmatpush1.msra.mxu0 %v2672
        %2744 = vmatprep.subr.mxu0 0.0
        %2745 = vmatpush1.msra.mxu0 %v2671
        %2746 = vmatprep.subr.mxu0 0.0
        %2747 = vmatpush1.msra.mxu0 %v2670
        %2748 = vmatprep.subr.mxu0 0.0
        %2749 = vmatpush1.msra.mxu0 %v2669
        %2750 = vmatprep.subr.mxu0 0.0
        %2751 = vmatpush1.msra.mxu0 %v2668
        %2752 = vmatprep.subr.mxu0 0.0
        %2753 = vmatpush1.msra.mxu0 %v2667
        %2754 = vmatprep.subr.mxu0 0.0
        %2755 = vmatpush1.msra.mxu0 %v2666
        %2756 = vmatprep.subr.mxu0 0.0
        %2757 = vmatpush1.msra.mxu0 %v2665
        %2758 = vmatprep.subr.mxu0 0.0
        %2759 = vmatpush1.msra.mxu0 %v2664
        %2760 = vmatprep.subr.mxu0 0.0
        %2761 = vmatpush2.msra.mxu0 %v2695
        %2762 = vmatprep.subr.mxu0 0.0
        %2763 = vmatpush2.msra.mxu0 %v2694
        %2764 = vmatprep.subr.mxu0 0.0
        %2765 = vmatpush2.msra.mxu0 %v2693
        %2766 = vmatprep.subr.mxu0 0.0
        %2767 = vmatpush2.msra.mxu0 %v2692
        %2768 = vmatprep.subr.mxu0 0.0
        %2769 = vmatpush2.msra.mxu0 %v2691
        %2770 = vmatprep.subr.mxu0 0.0
        %2771 = vmatpush2.msra.mxu0 %v2690
        %2772 = vmatprep.subr.mxu0 0.0
        %2773 = vmatpush2.msra.mxu0 %v2689
        %2774 = vmatprep.subr.mxu0 0.0
        %2775 = vmatpush2.msra.mxu0 %v2688
        %2776 = vmatprep.subr.mxu0 0.0
        %2777 = vmatpush2.msra.mxu0 %v2687
        %2778 = vmatprep.subr.mxu0 0.0
        %2779 = vmatpush2.msra.mxu0 %v2686
        %2780 = vmatprep.subr.mxu0 0.0
        %2781 = vmatpush2.msra.mxu0 %v2685
        %2782 = vmatprep.subr.mxu0 0.0
        %2783 = vmatpush2.msra.mxu0 %v2684
        %2784 = vmatprep.subr.mxu0 0.0
        %2785 = vmatpush2.msra.mxu0 %v2683
        %2786 = vmatprep.subr.mxu0 0.0
        %2787 = vmatpush2.msra.mxu0 %v2682
        %2788 = vmatprep.subr.mxu0 0.0
        %2789 = vmatpush2.msra.mxu0 %v2681
        %2790 = vmatprep.subr.mxu0 0.0
        %2791 = vmatpush2.msra.mxu0 %v2680
        %2792 = vmatprep.mubr.f32.mxu0 %v2555
        %2793 = vmatmul.mubr.f32.gmra.mxu0 %v2519
        %v2794 = vpop.f32.mrf.mxu0
        %v2795 = vadd.f32 %v519, %v2794
        %v2796 = vpop.f32.mrf.mxu0
        %2797 = vmatprep.mubr.f32.mxu0 %v2556
        %2798 = vmatmul.mubr.f32.gmra.mxu0 %v2520
        %v2799 = vpop.f32.mrf.mxu0
        %v2800 = vadd.f32 %v519, %v2799
        %v2801 = vpop.f32.mrf.mxu0
        %2802 = vmatprep.mubr.f32.mxu0 %v2557
        %2803 = vmatmul.mubr.f32.gmra.mxu0 %v2521
        %v2804 = vpop.f32.mrf.mxu0
        %v2805 = vadd.f32 %v519, %v2804
        %v2806 = vpop.f32.mrf.mxu0
        %2807 = vmatprep.mubr.f32.mxu0 %v2558
        %2808 = vmatmul.mubr.f32.gmra.mxu0 %v2522
        %v2809 = vpop.f32.mrf.mxu0
        %v2810 = vadd.f32 %v519, %v2809
        %v2811 = vpop.f32.mrf.mxu0
        %2812 = vmatprep.mubr.f32.mxu0 %v2559
        %2813 = vmatmul.mubr.f32.gmra.mxu0 %v2523
        %v2814 = vpop.f32.mrf.mxu0
        %v2815 = vadd.f32 %v519, %v2814
        %v2816 = vpop.f32.mrf.mxu0
        %2817 = vmatprep.mubr.f32.mxu0 %v2560
        %2818 = vmatmul.mubr.f32.gmra.mxu0 %v2524
        %v2819 = vpop.f32.mrf.mxu0
        %v2820 = vadd.f32 %v519, %v2819
        %v2821 = vpop.f32.mrf.mxu0
        %2822 = vmatprep.mubr.f32.mxu0 %v2561
        %2823 = vmatmul.mubr.f32.gmra.mxu0 %v2525
        %v2824 = vpop.f32.mrf.mxu0
        %v2825 = vadd.f32 %v519, %v2824
        %v2826 = vpop.f32.mrf.mxu0
        %2827 = vmatprep.mubr.f32.mxu0 %v2562
        %2828 = vmatmul.mubr.f32.gmra.mxu0 %v2526
        %v2829 = vpop.f32.mrf.mxu0
        %v2830 = vadd.f32 %v519, %v2829
        %v2831 = vpop.f32.mrf.mxu0
        %2832 = vmatprep.mubr.f32.mxu0 %v2563
        %2833 = vmatmul.mubr.f32.gmra.mxu0 %v2527
        %v2834 = vpop.f32.mrf.mxu0
        %v2835 = vadd.f32 %v519, %v2834
        %v2836 = vpop.f32.mrf.mxu0
        %2837 = vmatprep.mubr.f32.mxu0 %v2564
        %2838 = vmatmul.mubr.f32.gmra.mxu0 %v2528
        %v2839 = vpop.f32.mrf.mxu0
        %v2840 = vadd.f32 %v519, %v2839
        %v2841 = vpop.f32.mrf.mxu0
        %2842 = vmatprep.mubr.f32.mxu0 %v2565
        %2843 = vmatmul.mubr.f32.gmra.mxu0 %v2529
        %v2844 = vpop.f32.mrf.mxu0
        %v2845 = vadd.f32 %v519, %v2844
        %v2846 = vpop.f32.mrf.mxu0
        %2847 = vmatprep.mubr.f32.mxu0 %v2566
        %2848 = vmatmul.mubr.f32.gmra.mxu0 %v2530
        %v2849 = vpop.f32.mrf.mxu0
        %v2850 = vadd.f32 %v519, %v2849
        %v2851 = vpop.f32.mrf.mxu0
        %2852 = vmatprep.mubr.f32.mxu0 %v2567
        %2853 = vmatmul.mubr.f32.gmra.mxu0 %v2531
        %v2854 = vpop.f32.mrf.mxu0
        %v2855 = vadd.f32 %v519, %v2854
        %v2856 = vpop.f32.mrf.mxu0
        %2857 = vmatprep.mubr.f32.mxu0 %v2568
        %2858 = vmatmul.mubr.f32.gmra.mxu0 %v2532
        %v2859 = vpop.f32.mrf.mxu0
        %v2860 = vadd.f32 %v519, %v2859
        %v2861 = vpop.f32.mrf.mxu0
        %2862 = vmatprep.mubr.f32.mxu0 %v2569
        %2863 = vmatmul.mubr.f32.gmra.mxu0 %v2533
        %v2864 = vpop.f32.mrf.mxu0
        %v2865 = vadd.f32 %v519, %v2864
        %v2866 = vpop.f32.mrf.mxu0
        %2867 = vmatprep.mubr.f32.mxu0 %v2570
        %2868 = vmatmul.mubr.f32.gmra.mxu0 %v2534
        %v2869 = vpop.f32.mrf.mxu0
        %v2870 = vadd.f32 %v519, %v2869
        %v2871 = vpop.f32.mrf.mxu0
        %2872 = vmatprep.mubr.f32.mxu0 %v2571
        %2873 = vmatmul.mubr.f32.gmra.mxu0 %v2535
        %v2874 = vpop.f32.mrf.mxu0
        %v2875 = vadd.f32 %v519, %v2874
        %v2876 = vpop.f32.mrf.mxu0
        %2877 = vmatprep.mubr.f32.mxu0 %v2572
        %2878 = vmatmul.mubr.f32.gmra.mxu0 %v2536
        %v2879 = vpop.f32.mrf.mxu0
        %v2880 = vadd.f32 %v519, %v2879
        %v2881 = vpop.f32.mrf.mxu0
        %2882 = vmatprep.mubr.f32.mxu0 %v2573
        %2883 = vmatmul.mubr.f32.gmra.mxu0 %v2537
        %v2884 = vpop.f32.mrf.mxu0
        %v2885 = vadd.f32 %v519, %v2884
        %v2886 = vpop.f32.mrf.mxu0
        %2887 = vmatprep.mubr.f32.mxu0 %v2574
        %2888 = vmatmul.mubr.f32.gmra.mxu0 %v2538
        %v2889 = vpop.f32.mrf.mxu0
        %v2890 = vadd.f32 %v519, %v2889
        %v2891 = vpop.f32.mrf.mxu0
        %2892 = vmatprep.mubr.f32.mxu0 %v2575
        %2893 = vmatmul.mubr.f32.gmra.mxu0 %v2539
        %v2894 = vpop.f32.mrf.mxu0
        %v2895 = vadd.f32 %v519, %v2894
        %v2896 = vpop.f32.mrf.mxu0
        %2897 = vmatprep.mubr.f32.mxu0 %v2576
        %2898 = vmatmul.mubr.f32.gmra.mxu0 %v2540
        %v2899 = vpop.f32.mrf.mxu0
        %v2900 = vadd.f32 %v519, %v2899
        %v2901 = vpop.f32.mrf.mxu0
        %2902 = vmatprep.mubr.f32.mxu0 %v2577
        %2903 = vmatmul.mubr.f32.gmra.mxu0 %v2541
        %v2904 = vpop.f32.mrf.mxu0
        %v2905 = vadd.f32 %v519, %v2904
        %v2906 = vpop.f32.mrf.mxu0
        %2907 = vmatprep.mubr.f32.mxu0 %v2578
        %2908 = vmatmul.mubr.f32.gmra.mxu0 %v2542
        %v2909 = vpop.f32.mrf.mxu0
        %v2910 = vadd.f32 %v519, %v2909
        %v2911 = vpop.f32.mrf.mxu0
        %2912 = vmatprep.mubr.f32.mxu0 %v2579
        %2913 = vmatmul.mubr.f32.gmra.mxu0 %v2543
        %v2914 = vpop.f32.mrf.mxu0
        %v2915 = vadd.f32 %v519, %v2914
        %v2916 = vpop.f32.mrf.mxu0
        %2917 = vmatprep.mubr.f32.mxu0 %v2580
        %2918 = vmatmul.mubr.f32.gmra.mxu0 %v2544
        %v2919 = vpop.f32.mrf.mxu0
        %v2920 = vadd.f32 %v519, %v2919
        %v2921 = vpop.f32.mrf.mxu0
        %2922 = vmatprep.mubr.f32.mxu0 %v2581
        %2923 = vmatmul.mubr.f32.gmra.mxu0 %v2545
        %v2924 = vpop.f32.mrf.mxu0
        %v2925 = vadd.f32 %v519, %v2924
        %v2926 = vpop.f32.mrf.mxu0
        %2927 = vmatprep.mubr.f32.mxu0 %v2582
        %2928 = vmatmul.mubr.f32.gmra.mxu0 %v2546
        %v2929 = vpop.f32.mrf.mxu0
        %v2930 = vadd.f32 %v519, %v2929
        %v2931 = vpop.f32.mrf.mxu0
        %2932 = vmatprep.mubr.f32.mxu0 %v2583
        %2933 = vmatmul.mubr.f32.gmra.mxu0 %v2547
        %v2934 = vpop.f32.mrf.mxu0
        %v2935 = vadd.f32 %v519, %v2934
        %v2936 = vpop.f32.mrf.mxu0
        %2937 = vmatprep.mubr.f32.mxu0 %v2584
        %2938 = vmatmul.mubr.f32.gmra.mxu0 %v2548
        %v2939 = vpop.f32.mrf.mxu0
        %v2940 = vadd.f32 %v519, %v2939
        %v2941 = vpop.f32.mrf.mxu0
        %2942 = vmatprep.mubr.f32.mxu0 %v2585
        %2943 = vmatmul.mubr.f32.gmra.mxu0 %v2549
        %v2944 = vpop.f32.mrf.mxu0
        %v2945 = vadd.f32 %v519, %v2944
        %v2946 = vpop.f32.mrf.mxu0
        %2947 = vmatprep.mubr.f32.mxu0 %v2586
        %2948 = vmatmul.mubr.f32.gmra.mxu0 %v2550
        %v2949 = vpop.f32.mrf.mxu0
        %v2950 = vadd.f32 %v519, %v2949
        %v2951 = vpop.f32.mrf.mxu0
        %2952 = vmatprep.mubr.f32.mxu0 %v2587
        %2953 = vmatmul.mubr.f32.gmra.mxu0 %v2551
        %v2954 = vpop.f32.mrf.mxu0
        %v2955 = vadd.f32 %v519, %v2954
        %v2956 = vpop.f32.mrf.mxu0
        %2957 = vmatprep.mubr.f32.mxu0 %v2588
        %2958 = vmatmul.mubr.f32.gmra.mxu0 %v2552
        %v2959 = vpop.f32.mrf.mxu0
        %v2960 = vadd.f32 %v519, %v2959
        %v2961 = vpop.f32.mrf.mxu0
        %2962 = vmatprep.mubr.f32.mxu0 %v2589
        %2963 = vmatmul.mubr.f32.gmra.mxu0 %v2553
        %v2964 = vpop.f32.mrf.mxu0
        %v2965 = vadd.f32 %v519, %v2964
        %v2966 = vpop.f32.mrf.mxu0
        %2967 = vmatprep.mubr.f32.mxu0 %v2590
        %2968 = vmatmul.mubr.f32.gmra.mxu0 %v2554
        %v2969 = vpop.f32.mrf.mxu0
        %v2970 = vadd.f32 %v519, %v2969
        %v2971 = vpop.f32.mrf.mxu0
        %2972 = vdwg.mxu0
        %2973 = vmatprep.subr.mxu0 0.0
        %2974 = vmatpush1.msra.mxu0 %v2711
        %2975 = vmatprep.subr.mxu0 0.0
        %2976 = vmatpush1.msra.mxu0 %v2710
        %2977 = vmatprep.subr.mxu0 0.0
        %2978 = vmatpush1.msra.mxu0 %v2709
        %2979 = vmatprep.subr.mxu0 0.0
        %2980 = vmatpush1.msra.mxu0 %v2708
        %2981 = vmatprep.subr.mxu0 0.0
        %2982 = vmatpush1.msra.mxu0 %v2707
        %2983 = vmatprep.subr.mxu0 0.0
        %2984 = vmatpush1.msra.mxu0 %v2706
        %2985 = vmatprep.subr.mxu0 0.0
        %2986 = vmatpush1.msra.mxu0 %v2705
        %2987 = vmatprep.subr.mxu0 0.0
        %2988 = vmatpush1.msra.mxu0 %v2704
        %2989 = vmatprep.subr.mxu0 0.0
        %2990 = vmatpush1.msra.mxu0 %v2703
        %2991 = vmatprep.subr.mxu0 0.0
        %2992 = vmatpush1.msra.mxu0 %v2702
        %2993 = vmatprep.subr.mxu0 0.0
        %2994 = vmatpush1.msra.mxu0 %v2701
        %2995 = vmatprep.subr.mxu0 0.0
        %2996 = vmatpush1.msra.mxu0 %v2700
        %2997 = vmatprep.subr.mxu0 0.0
        %2998 = vmatpush1.msra.mxu0 %v2699
        %2999 = vmatprep.subr.mxu0 0.0
        %3000 = vmatpush1.msra.mxu0 %v2698
        %3001 = vmatprep.subr.mxu0 0.0
        %3002 = vmatpush1.msra.mxu0 %v2697
        %3003 = vmatprep.subr.mxu0 0.0
        %3004 = vmatpush1.msra.mxu0 %v2696
        %3005 = vmatprep.subr.mxu0 0.0
        %3006 = vmatpush2.msra.mxu0 %v2727
        %3007 = vmatprep.subr.mxu0 0.0
        %3008 = vmatpush2.msra.mxu0 %v2726
        %3009 = vmatprep.subr.mxu0 0.0
        %3010 = vmatpush2.msra.mxu0 %v2725
        %3011 = vmatprep.subr.mxu0 0.0
        %3012 = vmatpush2.msra.mxu0 %v2724
        %3013 = vmatprep.subr.mxu0 0.0
        %3014 = vmatpush2.msra.mxu0 %v2723
        %3015 = vmatprep.subr.mxu0 0.0
        %3016 = vmatpush2.msra.mxu0 %v2722
        %3017 = vmatprep.subr.mxu0 0.0
        %3018 = vmatpush2.msra.mxu0 %v2721
        %3019 = vmatprep.subr.mxu0 0.0
        %3020 = vmatpush2.msra.mxu0 %v2720
        %3021 = vmatprep.subr.mxu0 0.0
        %3022 = vmatpush2.msra.mxu0 %v2719
        %3023 = vmatprep.subr.mxu0 0.0
        %3024 = vmatpush2.msra.mxu0 %v2718
        %3025 = vmatprep.subr.mxu0 0.0
        %3026 = vmatpush2.msra.mxu0 %v2717
        %3027 = vmatprep.subr.mxu0 0.0
        %3028 = vmatpush2.msra.mxu0 %v2716
        %3029 = vmatprep.subr.mxu0 0.0
        %3030 = vmatpush2.msra.mxu0 %v2715
        %3031 = vmatprep.subr.mxu0 0.0
        %3032 = vmatpush2.msra.mxu0 %v2714
        %3033 = vmatprep.subr.mxu0 0.0
        %3034 = vmatpush2.msra.mxu0 %v2713
        %3035 = vmatprep.subr.mxu0 0.0
        %3036 = vmatpush2.msra.mxu0 %v2712
        %3037 = vmatprep.mubr.f32.mxu0 %v2627
        %3038 = vmatmul.mubr.f32.gmra.mxu0 %v2591
        %v3039 = vpop.f32.mrf.mxu0
        %v3040 = vadd.f32 %v2795, %v3039
        %v3041 = vpop.f32.mrf.mxu0
        %3042 = vmatprep.mubr.f32.mxu0 %v2628
        %3043 = vmatmul.mubr.f32.gmra.mxu0 %v2592
        %v3044 = vpop.f32.mrf.mxu0
        %v3045 = vadd.f32 %v2800, %v3044
        %v3046 = vpop.f32.mrf.mxu0
        %3047 = vmatprep.mubr.f32.mxu0 %v2629
        %3048 = vmatmul.mubr.f32.gmra.mxu0 %v2593
        %v3049 = vpop.f32.mrf.mxu0
        %v3050 = vadd.f32 %v2805, %v3049
        %v3051 = vpop.f32.mrf.mxu0
        %3052 = vmatprep.mubr.f32.mxu0 %v2630
        %3053 = vmatmul.mubr.f32.gmra.mxu0 %v2594
        %v3054 = vpop.f32.mrf.mxu0
        %v3055 = vadd.f32 %v2810, %v3054
        %v3056 = vpop.f32.mrf.mxu0
        %3057 = vmatprep.mubr.f32.mxu0 %v2631
        %3058 = vmatmul.mubr.f32.gmra.mxu0 %v2595
        %v3059 = vpop.f32.mrf.mxu0
        %v3060 = vadd.f32 %v2815, %v3059
        %v3061 = vpop.f32.mrf.mxu0
        %3062 = vmatprep.mubr.f32.mxu0 %v2632
        %3063 = vmatmul.mubr.f32.gmra.mxu0 %v2596
        %v3064 = vpop.f32.mrf.mxu0
        %v3065 = vadd.f32 %v2820, %v3064
        %v3066 = vpop.f32.mrf.mxu0
        %3067 = vmatprep.mubr.f32.mxu0 %v2633
        %3068 = vmatmul.mubr.f32.gmra.mxu0 %v2597
        %v3069 = vpop.f32.mrf.mxu0
        %v3070 = vadd.f32 %v2825, %v3069
        %v3071 = vpop.f32.mrf.mxu0
        %3072 = vmatprep.mubr.f32.mxu0 %v2634
        %3073 = vmatmul.mubr.f32.gmra.mxu0 %v2598
        %v3074 = vpop.f32.mrf.mxu0
        %v3075 = vadd.f32 %v2830, %v3074
        %v3076 = vpop.f32.mrf.mxu0
        %3077 = vmatprep.mubr.f32.mxu0 %v2635
        %3078 = vmatmul.mubr.f32.gmra.mxu0 %v2599
        %v3079 = vpop.f32.mrf.mxu0
        %v3080 = vadd.f32 %v2835, %v3079
        %v3081 = vpop.f32.mrf.mxu0
        %3082 = vmatprep.mubr.f32.mxu0 %v2636
        %3083 = vmatmul.mubr.f32.gmra.mxu0 %v2600
        %v3084 = vpop.f32.mrf.mxu0
        %v3085 = vadd.f32 %v2840, %v3084
        %v3086 = vpop.f32.mrf.mxu0
        %3087 = vmatprep.mubr.f32.mxu0 %v2637
        %3088 = vmatmul.mubr.f32.gmra.mxu0 %v2601
        %v3089 = vpop.f32.mrf.mxu0
        %v3090 = vadd.f32 %v2845, %v3089
        %v3091 = vpop.f32.mrf.mxu0
        %3092 = vmatprep.mubr.f32.mxu0 %v2638
        %3093 = vmatmul.mubr.f32.gmra.mxu0 %v2602
        %v3094 = vpop.f32.mrf.mxu0
        %v3095 = vadd.f32 %v2850, %v3094
        %v3096 = vpop.f32.mrf.mxu0
        %3097 = vmatprep.mubr.f32.mxu0 %v2639
        %3098 = vmatmul.mubr.f32.gmra.mxu0 %v2603
        %v3099 = vpop.f32.mrf.mxu0
        %v3100 = vadd.f32 %v2855, %v3099
        %v3101 = vpop.f32.mrf.mxu0
        %3102 = vmatprep.mubr.f32.mxu0 %v2640
        %3103 = vmatmul.mubr.f32.gmra.mxu0 %v2604
        %v3104 = vpop.f32.mrf.mxu0
        %v3105 = vadd.f32 %v2860, %v3104
        %v3106 = vpop.f32.mrf.mxu0
        %3107 = vmatprep.mubr.f32.mxu0 %v2641
        %3108 = vmatmul.mubr.f32.gmra.mxu0 %v2605
        %v3109 = vpop.f32.mrf.mxu0
        %v3110 = vadd.f32 %v2865, %v3109
        %v3111 = vpop.f32.mrf.mxu0
        %3112 = vmatprep.mubr.f32.mxu0 %v2642
        %3113 = vmatmul.mubr.f32.gmra.mxu0 %v2606
        %v3114 = vpop.f32.mrf.mxu0
        %v3115 = vadd.f32 %v2870, %v3114
        %v3116 = vpop.f32.mrf.mxu0
        %3117 = vmatprep.mubr.f32.mxu0 %v2643
        %3118 = vmatmul.mubr.f32.gmra.mxu0 %v2607
        %v3119 = vpop.f32.mrf.mxu0
        %v3120 = vadd.f32 %v2875, %v3119
        %v3121 = vpop.f32.mrf.mxu0
        %3122 = vmatprep.mubr.f32.mxu0 %v2644
        %3123 = vmatmul.mubr.f32.gmra.mxu0 %v2608
        %v3124 = vpop.f32.mrf.mxu0
        %v3125 = vadd.f32 %v2880, %v3124
        %v3126 = vpop.f32.mrf.mxu0
        %3127 = vmatprep.mubr.f32.mxu0 %v2645
        %3128 = vmatmul.mubr.f32.gmra.mxu0 %v2609
        %v3129 = vpop.f32.mrf.mxu0
        %v3130 = vadd.f32 %v2885, %v3129
        %v3131 = vpop.f32.mrf.mxu0
        %3132 = vmatprep.mubr.f32.mxu0 %v2646
        %3133 = vmatmul.mubr.f32.gmra.mxu0 %v2610
        %v3134 = vpop.f32.mrf.mxu0
        %v3135 = vadd.f32 %v2890, %v3134
        %v3136 = vpop.f32.mrf.mxu0
        %3137 = vmatprep.mubr.f32.mxu0 %v2647
        %3138 = vmatmul.mubr.f32.gmra.mxu0 %v2611
        %v3139 = vpop.f32.mrf.mxu0
        %v3140 = vadd.f32 %v2895, %v3139
        %v3141 = vpop.f32.mrf.mxu0
        %3142 = vmatprep.mubr.f32.mxu0 %v2648
        %3143 = vmatmul.mubr.f32.gmra.mxu0 %v2612
        %v3144 = vpop.f32.mrf.mxu0
        %v3145 = vadd.f32 %v2900, %v3144
        %v3146 = vpop.f32.mrf.mxu0
        %3147 = vmatprep.mubr.f32.mxu0 %v2649
        %3148 = vmatmul.mubr.f32.gmra.mxu0 %v2613
        %v3149 = vpop.f32.mrf.mxu0
        %v3150 = vadd.f32 %v2905, %v3149
        %v3151 = vpop.f32.mrf.mxu0
        %3152 = vmatprep.mubr.f32.mxu0 %v2650
        %3153 = vmatmul.mubr.f32.gmra.mxu0 %v2614
        %v3154 = vpop.f32.mrf.mxu0
        %v3155 = vadd.f32 %v2910, %v3154
        %v3156 = vpop.f32.mrf.mxu0
        %3157 = vmatprep.mubr.f32.mxu0 %v2651
        %3158 = vmatmul.mubr.f32.gmra.mxu0 %v2615
        %v3159 = vpop.f32.mrf.mxu0
        %v3160 = vadd.f32 %v2915, %v3159
        %v3161 = vpop.f32.mrf.mxu0
        %3162 = vmatprep.mubr.f32.mxu0 %v2652
        %3163 = vmatmul.mubr.f32.gmra.mxu0 %v2616
        %v3164 = vpop.f32.mrf.mxu0
        %v3165 = vadd.f32 %v2920, %v3164
        %v3166 = vpop.f32.mrf.mxu0
        %3167 = vmatprep.mubr.f32.mxu0 %v2653
        %3168 = vmatmul.mubr.f32.gmra.mxu0 %v2617
        %v3169 = vpop.f32.mrf.mxu0
        %v3170 = vadd.f32 %v2925, %v3169
        %v3171 = vpop.f32.mrf.mxu0
        %3172 = vmatprep.mubr.f32.mxu0 %v2654
        %3173 = vmatmul.mubr.f32.gmra.mxu0 %v2618
        %v3174 = vpop.f32.mrf.mxu0
        %v3175 = vadd.f32 %v2930, %v3174
        %v3176 = vpop.f32.mrf.mxu0
        %3177 = vmatprep.mubr.f32.mxu0 %v2655
        %3178 = vmatmul.mubr.f32.gmra.mxu0 %v2619
        %v3179 = vpop.f32.mrf.mxu0
        %v3180 = vadd.f32 %v2935, %v3179
        %v3181 = vpop.f32.mrf.mxu0
        %3182 = vmatprep.mubr.f32.mxu0 %v2656
        %3183 = vmatmul.mubr.f32.gmra.mxu0 %v2620
        %v3184 = vpop.f32.mrf.mxu0
        %v3185 = vadd.f32 %v2940, %v3184
        %v3186 = vpop.f32.mrf.mxu0
        %3187 = vmatprep.mubr.f32.mxu0 %v2657
        %3188 = vmatmul.mubr.f32.gmra.mxu0 %v2621
        %v3189 = vpop.f32.mrf.mxu0
        %v3190 = vadd.f32 %v2945, %v3189
        %v3191 = vpop.f32.mrf.mxu0
        %3192 = vmatprep.mubr.f32.mxu0 %v2658
        %3193 = vmatmul.mubr.f32.gmra.mxu0 %v2622
        %v3194 = vpop.f32.mrf.mxu0
        %v3195 = vadd.f32 %v2950, %v3194
        %v3196 = vpop.f32.mrf.mxu0
        %3197 = vmatprep.mubr.f32.mxu0 %v2659
        %3198 = vmatmul.mubr.f32.gmra.mxu0 %v2623
        %v3199 = vpop.f32.mrf.mxu0
        %v3200 = vadd.f32 %v2955, %v3199
        %v3201 = vpop.f32.mrf.mxu0
        %3202 = vmatprep.mubr.f32.mxu0 %v2660
        %3203 = vmatmul.mubr.f32.gmra.mxu0 %v2624
        %v3204 = vpop.f32.mrf.mxu0
        %v3205 = vadd.f32 %v2960, %v3204
        %v3206 = vpop.f32.mrf.mxu0
        %3207 = vmatprep.mubr.f32.mxu0 %v2661
        %3208 = vmatmul.mubr.f32.gmra.mxu0 %v2625
        %v3209 = vpop.f32.mrf.mxu0
        %v3210 = vadd.f32 %v2965, %v3209
        %v3211 = vpop.f32.mrf.mxu0
        %3212 = vmatprep.mubr.f32.mxu0 %v2662
        %3213 = vmatmul.mubr.f32.gmra.mxu0 %v2626
        %v3214 = vpop.f32.mrf.mxu0
        %v3215 = vadd.f32 %v2970, %v3214
        %v3216 = vpop.f32.mrf.mxu0
        %3217 = vdwg.mxu0
        %s3218 = scalar_lea.vmem %s164, 864 [#allocation9]
        %3219 = vst [vmem:[%s3218] sm:$0xff] %v3040
        %3220 = vst [vmem:[%s3218 + $0x8] sm:$0xff] %v3045
        %3221 = vst [vmem:[%s3218 + $0x10] sm:$0xff] %v3050
        %3222 = vst [vmem:[%s3218 + $0x18] sm:$0xff] %v3055
        %3223 = vst [vmem:[%s3218 + $0x20] sm:$0xff] %v3060
        %3224 = vst [vmem:[%s3218 + $0x28] sm:$0xff] %v3065
        %3225 = vst [vmem:[%s3218 + $0x30] sm:$0xff] %v3070
        %3226 = vst [vmem:[%s3218 + $0x38] sm:$0xff] %v3075
        %3227 = vst [vmem:[%s3218 + $0x40] sm:$0xff] %v3080
        %3228 = vst [vmem:[%s3218 + $0x48] sm:$0xff] %v3085
        %3229 = vst [vmem:[%s3218 + $0x50] sm:$0xff] %v3090
        %3230 = vst [vmem:[%s3218 + $0x58] sm:$0xff] %v3095
        %3231 = vst [vmem:[%s3218 + $0x60] sm:$0xff] %v3100
        %3232 = vst [vmem:[%s3218 + $0x68] sm:$0xff] %v3105
        %3233 = vst [vmem:[%s3218 + $0x70] sm:$0xff] %v3110
        %3234 = vst [vmem:[%s3218 + $0x78] sm:$0xff] %v3115
        %3235 = vst [vmem:[%s3218 + $0x80] sm:$0xff] %v3120
        %3236 = vst [vmem:[%s3218 + $0x88] sm:$0xff] %v3125
        %3237 = vst [vmem:[%s3218 + $0x90] sm:$0xff] %v3130
        %3238 = vst [vmem:[%s3218 + $0x98] sm:$0xff] %v3135
        %3239 = vst [vmem:[%s3218 + $0xa0] sm:$0xff] %v3140
        %3240 = vst [vmem:[%s3218 + $0xa8] sm:$0xff] %v3145
        %3241 = vst [vmem:[%s3218 + $0xb0] sm:$0xff] %v3150
        %3242 = vst [vmem:[%s3218 + $0xb8] sm:$0xff] %v3155
        %3243 = vst [vmem:[%s3218 + $0xc0] sm:$0xff] %v3160
        %3244 = vst [vmem:[%s3218 + $0xc8] sm:$0xff] %v3165
        %3245 = vst [vmem:[%s3218 + $0xd0] sm:$0xff] %v3170
        %3246 = vst [vmem:[%s3218 + $0xd8] sm:$0xff] %v3175
        %3247 = vst [vmem:[%s3218 + $0xe0] sm:$0xff] %v3180
        %3248 = vst [vmem:[%s3218 + $0xe8] sm:$0xff] %v3185
        %3249 = vst [vmem:[%s3218 + $0xf0] sm:$0xff] %v3190
        %3250 = vst [vmem:[%s3218 + $0xf8] sm:$0xff] %v3195
        %3251 = vst [vmem:[%s3218 + $0x100] sm:$0xff] %v3200
        %3252 = vst [vmem:[%s3218 + $0x108] sm:$0xff] %v3205
        %3253 = vst [vmem:[%s3218 + $0x110] sm:$0xff] %v3210
        %3254 = vst [vmem:[%s3218 + $0x118] sm:$0xff] %v3215
        %s3255 = sand.u32 %s83, 1
        %s3256 = scalar_lea.sflag [#allocation6], %s3255
        %s3257 = sand.u32 %s83, 1
        %s3258 = smul.addr %s3257, 1152
        %s3259 = scalar_lea.vmem [#allocation9], %s3258
        // Predicated region
        $region74: #{tpu_custom_call.1} parent=27 // pred_check
          %p3260 = pneg %p93
        $region75: #{tpu_custom_call.1} parent=27 // pred_check_branch
          %3262 = sbr.rel (%p3260) target = $region77
        $region76: #{tpu_custom_call.1} parent=27 // pred_region
          %s3264 = ssub.s32 18432, 18432
          %3265 = vsyncadd %s3256, %s3264
          %s3266 = smul.addr %s24, 36
          %s3267 = smul.addr %s23, 144
          %s3268 = sadd.s32 %s3266, %s3267
          %s3269 = smul.addr %s3268, 128
          %s3270 = scalar_lea.hbm %s3, %s3269
          %s3271 = sshll.u32 %s3259, 4
          %s3272 = int_to_ptr.vmem [resolvable:$true] %s3271
          %3277 = dma.vmem_to_hbm [thread:$0]  %s3272, 18432, %s3270, %s3256, 128, 128, 8
        $region77: #{tpu_custom_call.1} parent=27 // pred_fallthru
          _
      $region28: #{tpu_custom_call.1} parent=5 // pred_fallthru
        _
      %p3278 = scmp.le.s32.totalorder 2, %s14
      // Predicated region
      $region78: #{tpu_custom_call.1} parent=5 // pred_check
        %p3279 = pneg %p3278
      $region79: #{tpu_custom_call.1} parent=5 // pred_check_branch
        %3281 = sbr.rel (%p3279) target = $region81
      $region80: #{tpu_custom_call.1} parent=5 // pred_region
        %s3282 = ssub.s32 %s14, 2
        // Predicated region
        $region82: #{tpu_custom_call.1} parent=80 // pred_check
          %p3283 = pneg %p99
        $region83: #{tpu_custom_call.1} parent=80 // pred_check_branch
          %3285 = sbr.rel (%p3283) target = $region85
        $region84: #{tpu_custom_call.1} parent=80 // pred_region
          %s3286 = sand.u32 %s84, 1
          %s3287 = scalar_lea.sflag [#allocation6], %s3286
          %s3288 = sand.u32 %s84, 1
          %s3289 = smul.addr %s3288, 1152
          %s3290 = scalar_lea.vmem [#allocation9], %s3289
          %3291 = dma.done %s3287, 18432
        $region85: #{tpu_custom_call.1} parent=80 // pred_fallthru
          _
      $region81: #{tpu_custom_call.1} parent=5 // pred_fallthru
        _
    $region6: #{tpu_custom_call.1} parent=1 // loop_footer
      %s18 = sadd.s32 1, %s14
    $region7: #{tpu_custom_call.1} parent=1 // loop_footer_branch
      %13 = sbr.rel target = $region3
    $region8: #{tpu_custom_call.1} parent=1 // loop_exit
      _
    %3292 = vsyncpa [#allocation5], 1
    %s3293 = scalar_lea.sflag [#allocation5], 1
    %3294 = vsyncpa %s3293, 1
    %3295 = vsyncpa [#allocation8], 1
    %3296 = vsyncpa [#allocation6], 1
    %s3297 = scalar_lea.sflag [#allocation6], 1
    %3298 = vsyncpa %s3297, 1
  %3299 = vsyncmov [#allocation3]
  %s3300 = vpop.sfrf %3299
  %p3301 = scmp.eq.s32.totalorder %s3300, 0
  %p3302 = pneg %p3301
  %3304 = shalt.err (%p3302)

</llo_original>
